<compile_context>
chip_gen: v7x
topology: tpu7x:2x2x1
jax: 0.10.0
libtpu: 0.0.40
codegen_flags: <defaults>
</compile_context>

<pallas_src>
import math
import functools

import jax
import jax.numpy as jnp
from jax.experimental import pallas as pl
from jax.experimental.pallas import tpu as pltpu

BN_EPS = 1e-5          # nn.BatchNorm2d default
LANE = 128             # every channel axis is zero-padded to the 128-lane vreg width

# Synthetic inverted_residual_setting (MBConvConfig fields:
# expand_ratio, kernel, stride, input_channels, out_channels, num_layers)
SETTING = [
    dict(expand_ratio=1, kernel=3, stride=1, input_channels=8, out_channels=8, num_layers=1),
    dict(expand_ratio=4, kernel=3, stride=2, input_channels=8, out_channels=16, num_layers=2),
]
LAST_CHANNEL = None    # -> 4 * last out_channels = 64


# ----------------------------- small init helpers -----------------------------

def _pad2(a, rows, cols):
    r, c = a.shape
    return jnp.pad(a, ((0, rows - r), (0, cols - c)))


def _pad_row(v, cols):
    return jnp.pad(v, (0, cols - v.shape[0])).reshape(1, cols)


def bn_fold(c):
    # fresh BatchNorm2d in eval mode: gamma=1, beta=0, running_mean=0, running_var=1
    gamma = jnp.ones((c,), jnp.float32)
    beta = jnp.zeros((c,), jnp.float32)
    mean = jnp.zeros((c,), jnp.float32)
    var = jnp.ones((c,), jnp.float32)
    scale = gamma / jnp.sqrt(var + BN_EPS)
    shift = beta - mean * scale
    return scale, shift


def _stride2_sel(H, W):
    """(Ho*Wo, H*W) 0/1 matrix selecting the stride-2 output positions of a dense
    stride-1 conv result (rows are (h,w)-row-major within one image)."""
    Ho, Wo = H // 2, W // 2
    r = jnp.arange(Ho * Wo)
    c = (r // Wo) * (2 * W) + (r % Wo) * 2
    s = jnp.zeros((Ho * Wo, H * W), jnp.float32).at[r, c].set(1.0)
    return s.astype(jnp.bfloat16)


# ----------------------------- in-kernel helpers -----------------------------

def _edge_masks(H, W):
    """Row/column validity masks for a 3x3 / pad-1 conv on one image's (H*W, L) slab."""
    M = H * W
    idx = jax.lax.broadcasted_iota(jnp.int32, (M, 1), 0)
    if W & (W - 1) == 0:                                  # power-of-two fast path
        col = jnp.bitwise_and(idx, W - 1)
        row = jnp.right_shift(idx, W.bit_length() - 1)
    else:
        col = jax.lax.rem(idx, W)
        row = jax.lax.div(idx, W)
    rmask = (row >= 1, None, row <= H - 2)                # ki = 0, 1, 2
    cmask = (col >= 1, None, col <= W - 2)                # kj = 0, 1, 2
    return rmask, cmask


def _tap_mask(rmask, cmask, ki, kj):
    m = None
    if ki != 1:
        m = rmask[ki]
    if kj != 1:
        m = cmask[kj] if m is None else jnp.logical_and(m, cmask[kj])
    return m


# ----------------------------- fused Pallas kernel -----------------------------

def _effnet_kernel(*refs, layout, blocks_cfg, stem_hw, pad):
    """One grid step == one image: stem -> all MBConv blocks -> last 1x1 conv."""
    o_ref, scr_ref = refs[-2], refs[-1]

    def R(name):
        return refs[layout[name]]

    def conv3x3(src_rows, H, W, tap_fn):
        """3x3 / pad-1 conv over a (H*W, LANE) slab of one image.

        The slab is written once into the shared row-halo scratch (one bulk store)
        and the 9 taps are read back as shifted (M, LANE) views.  Taps that would
        cross an image boundary are zeroed with jnp.where (NaN-safe, so scratch
        rows outside the freshly written window never need initialization)."""
        M = H * W
        scr_ref[pl.ds(pad, M), :] = src_rows
        rmask, cmask = _edge_masks(H, W)
        acc = jnp.zeros((M, LANE), jnp.float32)
        for k in range(9):
            ki, kj = divmod(k, 3)
            d = (ki - 1) * W + (kj - 1)
            tap = scr_ref[pl.ds(pad + d, M), :]
            m = _tap_mask(rmask, cmask, ki, kj)
            if m is not None:
                tap = jnp.where(m, tap, 0.0)
            acc = acc + tap_fn(k, tap)
        return acc

    # ---------------- stem: 3x3 s2 conv + folded BN + SiLU (dense, then subsample)
    H, W = stem_hw
    stem_w = R("stem_w")                                   # (9, 128, 128) bf16 ref
    acc = conv3x3(
        R("x")[...], H, W,
        lambda k, tap, _w=stem_w: jnp.dot(tap.astype(jnp.bfloat16), _w[k],
                                          preferred_element_type=jnp.float32))
    acc = acc + R("stem_shift")[...]
    acc = acc * jax.nn.sigmoid(acc)                        # SiLU
    h = jnp.dot(R("stem_sel")[...], acc.astype(jnp.bfloat16),
                preferred_element_type=jnp.float32)        # stride-2 row selection
    H, W = H // 2, W // 2

    # ---------------- MBConv blocks
    for b, cfg in enumerate(blocks_cfg):
        def P(name, _b=b):
            return refs[layout["b%d_%s" % (_b, name)]]

        x_in = h                                           # (H*W, 128) block input

        # 1x1 expand + folded BN + SiLU (skipped when expand_ratio == 1)
        if cfg["has_expand"]:
            y = jnp.dot(x_in.astype(jnp.bfloat16), P("exp_w")[...],
                        preferred_element_type=jnp.float32) + P("exp_shift")[...]
            y = y * jax.nn.sigmoid(y)
        else:
            y = x_in

        # 3x3 depthwise + folded BN + SiLU: 9 shifted, masked FMAs (VPU only)
        dw_w = P("dw_w")                                   # (9, 128) f32 ref
        acc = conv3x3(y, H, W, lambda k, tap, _w=dw_w: tap * _w[k])
        acc = acc + P("dw_shift")[...]
        acc = acc * jax.nn.sigmoid(acc)                    # dense (H*W, 128)
        if cfg["stride"] == 2:
            dw = jnp.dot(P("dw_sel")[...], acc.astype(jnp.bfloat16),
                         preferred_element_type=jnp.float32)   # (Ho*Wo, 128)
        else:
            dw = acc

        # squeeze-excitation (pool -> SiLU fc -> sigmoid gate), batched epilogue
        pooled = jnp.mean(dw, axis=0, keepdims=True)       # (1, 128)
        s = jnp.dot(pooled.astype(jnp.bfloat16), P("se_w1")[...],
                    preferred_element_type=jnp.float32) + P("se_b1")[...]
        s = s * jax.nn.sigmoid(s)                          # SiLU
        gate = jax.nn.sigmoid(
            jnp.dot(s.astype(jnp.bfloat16), P("se_w2")[...],
                    preferred_element_type=jnp.float32) + P("se_b2")[...])
        # gate is sigmoid(0)=0.5 in padded lanes, harmless because dw is exactly 0 there.

        # 1x1 projection + folded BN (+ residual; eval: StochasticDepth == identity)
        out = jnp.dot((dw * gate).astype(jnp.bfloat16), P("proj_w")[...],
                      preferred_element_type=jnp.float32) + P("proj_shift")[...]
        if cfg["use_res"]:
            out = out + x_in
        h = out
        H, W = cfg["Ho"], cfg["Wo"]

    # ---------------- last 1x1 conv + folded BN + SiLU
    y = jnp.dot(h.astype(jnp.bfloat16), R("last_w")[...],
                preferred_element_type=jnp.float32) + R("last_shift")[...]
    y = y * jax.nn.sigmoid(y)
    o_ref[...] = y.astype(o_ref.dtype)                     # lane-dense (Ho*Wo, 128)


# ----------------------------- parameter construction -----------------------------

def init_params(key, input_hw=(16, 16)):
    keys = iter(jax.random.split(key, 64))

    def conv_w(shape):  # torch layout (O, I/groups, kh, kw); kaiming_normal_ fan_out
        o, _, kh, kw = shape
        std = math.sqrt(2.0 / (o * kh * kw))
        return std * jax.random.normal(next(keys), shape, dtype=jnp.float32)

    flat, layout = [], {"x": 0}

    def add(name, arr):
        layout[name] = len(flat) + 1       # refs = (x, *flat, o_ref, scratch)
        flat.append(arr)

    in_h, in_w = input_hw

    # stem: Conv2dNormActivation(3, C0, k=3, s=2, p=1) + BN + SiLU (BN folded)
    c0 = SETTING[0]["input_channels"]
    w = conv_w((c0, 3, 3, 3))
    sc, sh = bn_fold(c0)
    taps = jnp.transpose(w, (2, 3, 1, 0)).reshape(9, 3, c0) * sc[None, None, :]
    stem_w = jnp.zeros((9, LANE, LANE), jnp.float32).at[:, :3, :c0].set(taps)
    add("stem_w", stem_w.astype(jnp.bfloat16))
    add("stem_shift", _pad_row(sh, LANE))
    add("stem_sel", _stride2_sel(in_h, in_w))

    H, W = in_h // 2, in_w // 2
    blocks_cfg = []
    b = 0
    for cnf in SETTING:
        for layer_idx in range(cnf["num_layers"]):
            in_ch = cnf["input_channels"] if layer_idx == 0 else cnf["out_channels"]
            stride = cnf["stride"] if layer_idx == 0 else 1
            out_ch = cnf["out_channels"]
            exp_ch = in_ch * cnf["expand_ratio"]
            sq_ch = max(1, in_ch // 4)
            pfx = "b%d_" % b
            has_expand = exp_ch != in_ch

            if has_expand:                                  # expand 1x1 + BN + SiLU
                we = conv_w((exp_ch, in_ch, 1, 1))[:, :, 0, 0].T   # (in, exp)
                sc, sh = bn_fold(exp_ch)
                add(pfx + "exp_w", _pad2(we * sc[None, :], LANE, LANE).astype(jnp.bfloat16))
                add(pfx + "exp_shift", _pad_row(sh, LANE))

            # depthwise 3x3 + BN + SiLU (scale folded into taps)
            wd = conv_w((exp_ch, 1, 3, 3))
            wd = jnp.transpose(wd[:, 0], (1, 2, 0)).reshape(9, exp_ch)
            sc, sh = bn_fold(exp_ch)
            add(pfx + "dw_w", jnp.pad(wd * sc[None, :], ((0, 0), (0, LANE - exp_ch))))
            add(pfx + "dw_shift", _pad_row(sh, LANE))
            if stride == 2:
                add(pfx + "dw_sel", _stride2_sel(H, W))

            # squeeze-excitation (1x1 convs with zero-init bias)
            w1 = conv_w((sq_ch, exp_ch, 1, 1))[:, :, 0, 0].T        # (exp, sq)
            w2 = conv_w((exp_ch, sq_ch, 1, 1))[:, :, 0, 0].T        # (sq, exp)
            add(pfx + "se_w1", _pad2(w1, LANE, LANE).astype(jnp.bfloat16))
            add(pfx + "se_b1", _pad_row(jnp.zeros((sq_ch,), jnp.float32), LANE))
            add(pfx + "se_w2", _pad2(w2, LANE, LANE).astype(jnp.bfloat16))
            add(pfx + "se_b2", _pad_row(jnp.zeros((exp_ch,), jnp.float32), LANE))

            # project 1x1 + BN (no activation)
            wp = conv_w((out_ch, exp_ch, 1, 1))[:, :, 0, 0].T       # (exp, out)
            sc, sh = bn_fold(out_ch)
            add(pfx + "proj_w", _pad2(wp * sc[None, :], LANE, LANE).astype(jnp.bfloat16))
            add(pfx + "proj_shift", _pad_row(sh, LANE))

            Ho = (H - 1) // stride + 1
            Wo = (W - 1) // stride + 1
            blocks_cfg.append(dict(stride=stride, Ho=Ho, Wo=Wo,
                                   has_expand=has_expand,
                                   use_res=(stride == 1 and in_ch == out_ch)))
            H, W = Ho, Wo
            b += 1

    # last conv: Conv2dNormActivation(last_in, last_out, k=1) + BN + SiLU
    last_in = SETTING[-1]["out_channels"]
    last_out = LAST_CHANNEL if LAST_CHANNEL is not None else 4 * last_in
    wl = conv_w((last_out, last_in, 1, 1))[:, :, 0, 0].T
    sc, sh = bn_fold(last_out)
    add("last_w", _pad2(wl * sc[None, :], LANE, LANE).astype(jnp.bfloat16))
    add("last_shift", _pad_row(sh, LANE))

    return dict(flat=tuple(flat), layout=layout, blocks_cfg=tuple(blocks_cfg),
                input_hw=(in_h, in_w), out_hw=(H, W), last_out=last_out)


# ----------------------------- forward wrapper -----------------------------

def custom_efficientnet_forward(x_nchw, params):
    """forward(x) = self.features(x); input NCHW, output NCHW.  Single pallas_call."""
    N, C, Hin, Win = x_nchw.shape
    assert (Hin, Win) == tuple(params["input_hw"])
    M_in = Hin * Win
    Hl, Wl = params["out_hw"]
    M_out = Hl * Wl
    c_out = params["last_out"]
    pad = Win + 1                                           # row-halo for 3x3 taps

    # lane-dense input slab: (N*H*W, 128) f32, channels 0..2 real, rest zero
    x = jnp.transpose(x_nchw, (0, 2, 3, 1)).astype(jnp.float32).reshape(N * M_in, C)
    x = jnp.pad(x, ((0, 0), (0, LANE - C)))

    args = (x,) + tuple(params["flat"])

    def _full_spec(a):
        nd = a.ndim
        return pl.BlockSpec(a.shape, lambda n, _nd=nd: (0,) * _nd)

    in_specs = [pl.BlockSpec((M_in, LANE), lambda n: (n, 0))]          # per-image block
    in_specs += [_full_spec(a) for a in params["flat"]]

    kern = functools.partial(_effnet_kernel, layout=params["layout"],
                             blocks_cfg=params["blocks_cfg"],
                             stem_hw=(Hin, Win), pad=pad)

    # advisory cost estimate (per image, then scaled by N)
    flops = 18 * M_in * LANE * LANE + 2 * (M_in // 4) * M_in * LANE
    trans = 2 * M_in * LANE
    Hc, Wc = Hin // 2, Win // 2
    for cfg in params["blocks_cfg"]:
        M = Hc * Wc
        Mo = cfg["Ho"] * cfg["Wo"]
        if cfg["has_expand"]:
            flops += 2 * M * LANE * LANE
        flops += 18 * M * LANE
        if cfg["stride"] == 2:
            flops += 2 * Mo * M * LANE
        flops += 2 * Mo * LANE * LANE + 4 * LANE * LANE
        trans += (2 * M + 3 * Mo + 2) * LANE
        Hc, Wc = cfg["Ho"], cfg["Wo"]
    flops += 2 * M_out * LANE * LANE
    trans += M_out * LANE
    bytes_accessed = sum(int(a.size) * a.dtype.itemsize for a in args) \
        + 4 * N * M_out * LANE

    out2d = pl.pallas_call(
        kern,
        out_shape=jax.ShapeDtypeStruct((N * M_out, LANE), jnp.float32),
        grid=(N,),                                         # one image per grid step
        in_specs=in_specs,
        out_specs=pl.BlockSpec((M_out, LANE), lambda n: (n, 0)),
        scratch_shapes=[pltpu.VMEM((2 * pad + M_in, LANE), jnp.float32)],
        compiler_params=pltpu.CompilerParams(
            dimension_semantics=("parallel",),             # megacore on v7x
            vmem_limit_bytes=32 * 1024 * 1024),
        cost_estimate=pl.CostEstimate(flops=int(N * flops),
                                      transcendentals=int(N * trans),
                                      bytes_accessed=int(bytes_accessed)),
    )(*args)

    out = out2d[:, :c_out].reshape(N, Hl, Wl, c_out)
    return jnp.transpose(out, (0, 3, 1, 2))                # -> NCHW


if __name__ == "__main__":
    key = jax.random.PRNGKey(0)
    k_params, k_x = jax.random.split(key)
    params = init_params(k_params, input_hw=(16, 16))
    x = jax.random.normal(k_x, (2, 3, 16, 16), dtype=jnp.float32)      # NCHW input

    fwd = jax.jit(lambda inp: custom_efficientnet_forward(inp, params))
    out = jax.block_until_ready(fwd(x))

    expected = (2, params["last_out"], params["out_hw"][0], params["out_hw"][1])
    assert out.shape == expected, (out.shape, expected)                 # (2, 64, 4, 4)
    assert bool(jnp.all(jnp.isfinite(out)))
    print("KERNEL_OK")
</pallas_src>

<mosaic_0001>
module attributes {stable_mosaic.version = 11 : i64} {
  func.func @_effnet_kernel(%arg0: i32, %arg1: memref<256x128xf32, #tpu.memory_space<vmem>>, %arg2: memref<9x128x128xbf16, #tpu.memory_space<vmem>>, %arg3: memref<1x128xf32, #tpu.memory_space<vmem>>, %arg4: memref<64x256xbf16, #tpu.memory_space<vmem>>, %arg5: memref<9x128xf32, #tpu.memory_space<vmem>>, %arg6: memref<1x128xf32, #tpu.memory_space<vmem>>, %arg7: memref<128x128xbf16, #tpu.memory_space<vmem>>, %arg8: memref<1x128xf32, #tpu.memory_space<vmem>>, %arg9: memref<128x128xbf16, #tpu.memory_space<vmem>>, %arg10: memref<1x128xf32, #tpu.memory_space<vmem>>, %arg11: memref<128x128xbf16, #tpu.memory_space<vmem>>, %arg12: memref<1x128xf32, #tpu.memory_space<vmem>>, %arg13: memref<128x128xbf16, #tpu.memory_space<vmem>>, %arg14: memref<1x128xf32, #tpu.memory_space<vmem>>, %arg15: memref<9x128xf32, #tpu.memory_space<vmem>>, %arg16: memref<1x128xf32, #tpu.memory_space<vmem>>, %arg17: memref<16x64xbf16, #tpu.memory_space<vmem>>, %arg18: memref<128x128xbf16, #tpu.memory_space<vmem>>, %arg19: memref<1x128xf32, #tpu.memory_space<vmem>>, %arg20: memref<128x128xbf16, #tpu.memory_space<vmem>>, %arg21: memref<1x128xf32, #tpu.memory_space<vmem>>, %arg22: memref<128x128xbf16, #tpu.memory_space<vmem>>, %arg23: memref<1x128xf32, #tpu.memory_space<vmem>>, %arg24: memref<128x128xbf16, #tpu.memory_space<vmem>>, %arg25: memref<1x128xf32, #tpu.memory_space<vmem>>, %arg26: memref<9x128xf32, #tpu.memory_space<vmem>>, %arg27: memref<1x128xf32, #tpu.memory_space<vmem>>, %arg28: memref<128x128xbf16, #tpu.memory_space<vmem>>, %arg29: memref<1x128xf32, #tpu.memory_space<vmem>>, %arg30: memref<128x128xbf16, #tpu.memory_space<vmem>>, %arg31: memref<1x128xf32, #tpu.memory_space<vmem>>, %arg32: memref<128x128xbf16, #tpu.memory_space<vmem>>, %arg33: memref<1x128xf32, #tpu.memory_space<vmem>>, %arg34: memref<128x128xbf16, #tpu.memory_space<vmem>>, %arg35: memref<1x128xf32, #tpu.memory_space<vmem>>, %arg36: memref<16x128xf32, #tpu.memory_space<vmem>>, %arg37: memref<290x128xf32, #tpu.memory_space<vmem>>) attributes {dimension_semantics = [#tpu.dimension_semantics<parallel>], iteration_bounds = array<i64: 2>, scalar_prefetch = 0 : i64, scratch_operands = 1 : i64, tpu.core_type = #tpu.core_type<tc>, window_params = [{transform_indices = @transform_0, window_bounds = array<i64: 256, 128>}, {pipeline_mode = #tpu.pipeline_mode<synchronous>, transform_indices = @transform_1, window_bounds = array<i64: 9, 128, 128>}, {pipeline_mode = #tpu.pipeline_mode<synchronous>, transform_indices = @transform_2, window_bounds = array<i64: 1, 128>}, {pipeline_mode = #tpu.pipeline_mode<synchronous>, transform_indices = @transform_3, window_bounds = array<i64: 64, 256>}, {pipeline_mode = #tpu.pipeline_mode<synchronous>, transform_indices = @transform_4, window_bounds = array<i64: 9, 128>}, {pipeline_mode = #tpu.pipeline_mode<synchronous>, transform_indices = @transform_5, window_bounds = array<i64: 1, 128>}, {pipeline_mode = #tpu.pipeline_mode<synchronous>, transform_indices = @transform_6, window_bounds = array<i64: 128, 128>}, {pipeline_mode = #tpu.pipeline_mode<synchronous>, transform_indices = @transform_7, window_bounds = array<i64: 1, 128>}, {pipeline_mode = #tpu.pipeline_mode<synchronous>, transform_indices = @transform_8, window_bounds = array<i64: 128, 128>}, {pipeline_mode = #tpu.pipeline_mode<synchronous>, transform_indices = @transform_9, window_bounds = array<i64: 1, 128>}, {pipeline_mode = #tpu.pipeline_mode<synchronous>, transform_indices = @transform_10, window_bounds = array<i64: 128, 128>}, {pipeline_mode = #tpu.pipeline_mode<synchronous>, transform_indices = @transform_11, window_bounds = array<i64: 1, 128>}, {pipeline_mode = #tpu.pipeline_mode<synchronous>, transform_indices = @transform_12, window_bounds = array<i64: 128, 128>}, {pipeline_mode = #tpu.pipeline_mode<synchronous>, transform_indices = @transform_13, window_bounds = array<i64: 1, 128>}, {pipeline_mode = #tpu.pipeline_mode<synchronous>, transform_indices = @transform_14, window_bounds = array<i64: 9, 128>}, {pipeline_mode = #tpu.pipeline_mode<synchronous>, transform_indices = @transform_15, window_bounds = array<i64: 1, 128>}, {pipeline_mode = #tpu.pipeline_mode<synchronous>, transform_indices = @transform_16, window_bounds = array<i64: 16, 64>}, {pipeline_mode = #tpu.pipeline_mode<synchronous>, transform_indices = @transform_17, window_bounds = array<i64: 128, 128>}, {pipeline_mode = #tpu.pipeline_mode<synchronous>, transform_indices = @transform_18, window_bounds = array<i64: 1, 128>}, {pipeline_mode = #tpu.pipeline_mode<synchronous>, transform_indices = @transform_19, window_bounds = array<i64: 128, 128>}, {pipeline_mode = #tpu.pipeline_mode<synchronous>, transform_indices = @transform_20, window_bounds = array<i64: 1, 128>}, {pipeline_mode = #tpu.pipeline_mode<synchronous>, transform_indices = @transform_21, window_bounds = array<i64: 128, 128>}, {pipeline_mode = #tpu.pipeline_mode<synchronous>, transform_indices = @transform_22, window_bounds = array<i64: 1, 128>}, {pipeline_mode = #tpu.pipeline_mode<synchronous>, transform_indices = @transform_23, window_bounds = array<i64: 128, 128>}, {pipeline_mode = #tpu.pipeline_mode<synchronous>, transform_indices = @transform_24, window_bounds = array<i64: 1, 128>}, {pipeline_mode = #tpu.pipeline_mode<synchronous>, transform_indices = @transform_25, window_bounds = array<i64: 9, 128>}, {pipeline_mode = #tpu.pipeline_mode<synchronous>, transform_indices = @transform_26, window_bounds = array<i64: 1, 128>}, {pipeline_mode = #tpu.pipeline_mode<synchronous>, transform_indices = @transform_27, window_bounds = array<i64: 128, 128>}, {pipeline_mode = #tpu.pipeline_mode<synchronous>, transform_indices = @transform_28, window_bounds = array<i64: 1, 128>}, {pipeline_mode = #tpu.pipeline_mode<synchronous>, transform_indices = @transform_29, window_bounds = array<i64: 128, 128>}, {pipeline_mode = #tpu.pipeline_mode<synchronous>, transform_indices = @transform_30, window_bounds = array<i64: 1, 128>}, {pipeline_mode = #tpu.pipeline_mode<synchronous>, transform_indices = @transform_31, window_bounds = array<i64: 128, 128>}, {pipeline_mode = #tpu.pipeline_mode<synchronous>, transform_indices = @transform_32, window_bounds = array<i64: 1, 128>}, {pipeline_mode = #tpu.pipeline_mode<synchronous>, transform_indices = @transform_33, window_bounds = array<i64: 128, 128>}, {pipeline_mode = #tpu.pipeline_mode<synchronous>, transform_indices = @transform_34, window_bounds = array<i64: 1, 128>}, {transform_indices = @transform_35, window_bounds = array<i64: 16, 128>}]} {
    %c0 = arith.constant 0 : index
    %c0_0 = arith.constant 0 : index
    %0 = vector.load %arg1[%c0, %c0_0] : memref<256x128xf32, #tpu.memory_space<vmem>>, vector<256x128xf32>
    %c17 = arith.constant 17 : index
    %c0_1 = arith.constant 0 : index
    %1 = vector.load %arg37[%c17, %c0_1] : memref<290x128xf32, #tpu.memory_space<vmem>>, vector<256x128xf32>
    tpu.vector_store %arg37[%c17, %c0_1], %0 {strides = array<i32>} : memref<290x128xf32, #tpu.memory_space<vmem>>, vector<256x128xf32>,
    %2 = tpu.iota {dimensions = array<i32: 0>} : vector<256x1xi32>
    %c15_i32 = arith.constant 15 : i32
    %3 = vector.broadcast %c15_i32 : i32 to vector<256x1xi32>
    %4 = arith.andi %2, %3 : vector<256x1xi32>
    %c4_i32 = arith.constant 4 : i32
    %5 = vector.broadcast %c4_i32 : i32 to vector<256x1xi32>
    %6 = arith.shrsi %2, %5 : vector<256x1xi32>
    %c1_i32 = arith.constant 1 : i32
    %7 = vector.broadcast %c1_i32 : i32 to vector<256x1xi32>
    %8 = arith.cmpi sge, %6, %7 : vector<256x1xi32>
    %c14_i32 = arith.constant 14 : i32
    %9 = vector.broadcast %c14_i32 : i32 to vector<256x1xi32>
    %10 = arith.cmpi sle, %6, %9 : vector<256x1xi32>
    %c1_i32_2 = arith.constant 1 : i32
    %11 = vector.broadcast %c1_i32_2 : i32 to vector<256x1xi32>
    %12 = arith.cmpi sge, %4, %11 : vector<256x1xi32>
    %c14_i32_3 = arith.constant 14 : i32
    %13 = vector.broadcast %c14_i32_3 : i32 to vector<256x1xi32>
    %14 = arith.cmpi sle, %4, %13 : vector<256x1xi32>
    %cst = arith.constant 0.000000e+00 : f32
    %15 = vector.broadcast %cst : f32 to vector<256x128xf32>
    %c0_4 = arith.constant 0 : index
    %c0_5 = arith.constant 0 : index
    %16 = vector.load %arg37[%c0_4, %c0_5] : memref<290x128xf32, #tpu.memory_space<vmem>>, vector<256x128xf32>
    %17 = arith.andi %8, %12 : vector<256x1xi1>
    %cst_6 = arith.constant 0.000000e+00 : f32
    %18 = vector.shape_cast %17 : vector<256x1xi1> to vector<256x1xi1>
    %19 = vector.broadcast %18 : vector<256x1xi1> to vector<256x128xi1>
    %20 = vector.broadcast %cst_6 : f32 to vector<256x128xf32>
    %21 = arith.select %19, %16, %20 : vector<256x128xi1>, vector<256x128xf32>
    %22 = arith.truncf %21 : vector<256x128xf32> to vector<256x128xbf16>
    %c0_7 = arith.constant 0 : index
    %c0_8 = arith.constant 0 : index
    %c0_9 = arith.constant 0 : index
    %23 = vector.load %arg2[%c0_7, %c0_8, %c0_9] : memref<9x128x128xbf16, #tpu.memory_space<vmem>>, vector<1x128x128xbf16>
    %24 = vector.shape_cast %23 : vector<1x128x128xbf16> to vector<128x128xbf16>
    %cst_10 = arith.constant dense<0.000000e+00> : vector<256x128xf32>
    %25 = tpu.matmul %22, %24, %cst_10 {dimension_numbers = #tpu.dot_dimension_numbers<[1], [0], [0], [1], [0, 0, 1, 1], [], []>} : vector<256x128xbf16>, vector<128x128xbf16>, vector<256x128xf32> -> vector<256x128xf32>
    %26 = arith.addf %15, %25 : vector<256x128xf32>
    %c1 = arith.constant 1 : index
    %c0_11 = arith.constant 0 : index
    %27 = vector.load %arg37[%c1, %c0_11] : memref<290x128xf32, #tpu.memory_space<vmem>>, vector<256x128xf32>
    %cst_12 = arith.constant 0.000000e+00 : f32
    %28 = vector.shape_cast %8 : vector<256x1xi1> to vector<256x1xi1>
    %29 = vector.broadcast %28 : vector<256x1xi1> to vector<256x128xi1>
    %30 = vector.broadcast %cst_12 : f32 to vector<256x128xf32>
    %31 = arith.select %29, %27, %30 : vector<256x128xi1>, vector<256x128xf32>
    %32 = arith.truncf %31 : vector<256x128xf32> to vector<256x128xbf16>
    %c1_13 = arith.constant 1 : index
    %c0_14 = arith.constant 0 : index
    %c0_15 = arith.constant 0 : index
    %33 = vector.load %arg2[%c1_13, %c0_14, %c0_15] : memref<9x128x128xbf16, #tpu.memory_space<vmem>>, vector<1x128x128xbf16>
    %34 = vector.shape_cast %33 : vector<1x128x128xbf16> to vector<128x128xbf16>
    %cst_16 = arith.constant dense<0.000000e+00> : vector<256x128xf32>
    %35 = tpu.matmul %32, %34, %cst_16 {dimension_numbers = #tpu.dot_dimension_numbers<[1], [0], [0], [1], [0, 0, 1, 1], [], []>} : vector<256x128xbf16>, vector<128x128xbf16>, vector<256x128xf32> -> vector<256x128xf32>
    %36 = arith.addf %26, %35 : vector<256x128xf32>
    %c2 = arith.constant 2 : index
    %c0_17 = arith.constant 0 : index
    %37 = vector.load %arg37[%c2, %c0_17] : memref<290x128xf32, #tpu.memory_space<vmem>>, vector<256x128xf32>
    %38 = arith.andi %8, %14 : vector<256x1xi1>
    %cst_18 = arith.constant 0.000000e+00 : f32
    %39 = vector.shape_cast %38 : vector<256x1xi1> to vector<256x1xi1>
    %40 = vector.broadcast %39 : vector<256x1xi1> to vector<256x128xi1>
    %41 = vector.broadcast %cst_18 : f32 to vector<256x128xf32>
    %42 = arith.select %40, %37, %41 : vector<256x128xi1>, vector<256x128xf32>
    %43 = arith.truncf %42 : vector<256x128xf32> to vector<256x128xbf16>
    %c2_19 = arith.constant 2 : index
    %c0_20 = arith.constant 0 : index
    %c0_21 = arith.constant 0 : index
    %44 = vector.load %arg2[%c2_19, %c0_20, %c0_21] : memref<9x128x128xbf16, #tpu.memory_space<vmem>>, vector<1x128x128xbf16>
    %45 = vector.shape_cast %44 : vector<1x128x128xbf16> to vector<128x128xbf16>
    %cst_22 = arith.constant dense<0.000000e+00> : vector<256x128xf32>
    %46 = tpu.matmul %43, %45, %cst_22 {dimension_numbers = #tpu.dot_dimension_numbers<[1], [0], [0], [1], [0, 0, 1, 1], [], []>} : vector<256x128xbf16>, vector<128x128xbf16>, vector<256x128xf32> -> vector<256x128xf32>
    %47 = arith.addf %36, %46 : vector<256x128xf32>
    %c16 = arith.constant 16 : index
    %c0_23 = arith.constant 0 : index
    %48 = vector.load %arg37[%c16, %c0_23] : memref<290x128xf32, #tpu.memory_space<vmem>>, vector<256x128xf32>
    %cst_24 = arith.constant 0.000000e+00 : f32
    %49 = vector.shape_cast %12 : vector<256x1xi1> to vector<256x1xi1>
    %50 = vector.broadcast %49 : vector<256x1xi1> to vector<256x128xi1>
    %51 = vector.broadcast %cst_24 : f32 to vector<256x128xf32>
    %52 = arith.select %50, %48, %51 : vector<256x128xi1>, vector<256x128xf32>
    %53 = arith.truncf %52 : vector<256x128xf32> to vector<256x128xbf16>
    %c3 = arith.constant 3 : index
    %c0_25 = arith.constant 0 : index
    %c0_26 = arith.constant 0 : index
    %54 = vector.load %arg2[%c3, %c0_25, %c0_26] : memref<9x128x128xbf16, #tpu.memory_space<vmem>>, vector<1x128x128xbf16>
    %55 = vector.shape_cast %54 : vector<1x128x128xbf16> to vector<128x128xbf16>
    %cst_27 = arith.constant dense<0.000000e+00> : vector<256x128xf32>
    %56 = tpu.matmul %53, %55, %cst_27 {dimension_numbers = #tpu.dot_dimension_numbers<[1], [0], [0], [1], [0, 0, 1, 1], [], []>} : vector<256x128xbf16>, vector<128x128xbf16>, vector<256x128xf32> -> vector<256x128xf32>
    %57 = arith.addf %47, %56 : vector<256x128xf32>
    %c17_28 = arith.constant 17 : index
    %c0_29 = arith.constant 0 : index
    %58 = vector.load %arg37[%c17_28, %c0_29] : memref<290x128xf32, #tpu.memory_space<vmem>>, vector<256x128xf32>
    %59 = arith.truncf %58 : vector<256x128xf32> to vector<256x128xbf16>
    %c4 = arith.constant 4 : index
    %c0_30 = arith.constant 0 : index
    %c0_31 = arith.constant 0 : index
    %60 = vector.load %arg2[%c4, %c0_30, %c0_31] : memref<9x128x128xbf16, #tpu.memory_space<vmem>>, vector<1x128x128xbf16>
    %61 = vector.shape_cast %60 : vector<1x128x128xbf16> to vector<128x128xbf16>
    %cst_32 = arith.constant dense<0.000000e+00> : vector<256x128xf32>
    %62 = tpu.matmul %59, %61, %cst_32 {dimension_numbers = #tpu.dot_dimension_numbers<[1], [0], [0], [1], [0, 0, 1, 1], [], []>} : vector<256x128xbf16>, vector<128x128xbf16>, vector<256x128xf32> -> vector<256x128xf32>
    %63 = arith.addf %57, %62 : vector<256x128xf32>
    %c18 = arith.constant 18 : index
    %c0_33 = arith.constant 0 : index
    %64 = vector.load %arg37[%c18, %c0_33] : memref<290x128xf32, #tpu.memory_space<vmem>>, vector<256x128xf32>
    %cst_34 = arith.constant 0.000000e+00 : f32
    %65 = vector.shape_cast %14 : vector<256x1xi1> to vector<256x1xi1>
    %66 = vector.broadcast %65 : vector<256x1xi1> to vector<256x128xi1>
    %67 = vector.broadcast %cst_34 : f32 to vector<256x128xf32>
    %68 = arith.select %66, %64, %67 : vector<256x128xi1>, vector<256x128xf32>
    %69 = arith.truncf %68 : vector<256x128xf32> to vector<256x128xbf16>
    %c5 = arith.constant 5 : index
    %c0_35 = arith.constant 0 : index
    %c0_36 = arith.constant 0 : index
    %70 = vector.load %arg2[%c5, %c0_35, %c0_36] : memref<9x128x128xbf16, #tpu.memory_space<vmem>>, vector<1x128x128xbf16>
    %71 = vector.shape_cast %70 : vector<1x128x128xbf16> to vector<128x128xbf16>
    %cst_37 = arith.constant dense<0.000000e+00> : vector<256x128xf32>
    %72 = tpu.matmul %69, %71, %cst_37 {dimension_numbers = #tpu.dot_dimension_numbers<[1], [0], [0], [1], [0, 0, 1, 1], [], []>} : vector<256x128xbf16>, vector<128x128xbf16>, vector<256x128xf32> -> vector<256x128xf32>
    %73 = arith.addf %63, %72 : vector<256x128xf32>
    %c32 = arith.constant 32 : index
    %c0_38 = arith.constant 0 : index
    %74 = vector.load %arg37[%c32, %c0_38] : memref<290x128xf32, #tpu.memory_space<vmem>>, vector<256x128xf32>
    %75 = arith.andi %10, %12 : vector<256x1xi1>
    %cst_39 = arith.constant 0.000000e+00 : f32
    %76 = vector.shape_cast %75 : vector<256x1xi1> to vector<256x1xi1>
    %77 = vector.broadcast %76 : vector<256x1xi1> to vector<256x128xi1>
    %78 = vector.broadcast %cst_39 : f32 to vector<256x128xf32>
    %79 = arith.select %77, %74, %78 : vector<256x128xi1>, vector<256x128xf32>
    %80 = arith.truncf %79 : vector<256x128xf32> to vector<256x128xbf16>
    %c6 = arith.constant 6 : index
    %c0_40 = arith.constant 0 : index
    %c0_41 = arith.constant 0 : index
    %81 = vector.load %arg2[%c6, %c0_40, %c0_41] : memref<9x128x128xbf16, #tpu.memory_space<vmem>>, vector<1x128x128xbf16>
    %82 = vector.shape_cast %81 : vector<1x128x128xbf16> to vector<128x128xbf16>
    %cst_42 = arith.constant dense<0.000000e+00> : vector<256x128xf32>
    %83 = tpu.matmul %80, %82, %cst_42 {dimension_numbers = #tpu.dot_dimension_numbers<[1], [0], [0], [1], [0, 0, 1, 1], [], []>} : vector<256x128xbf16>, vector<128x128xbf16>, vector<256x128xf32> -> vector<256x128xf32>
    %84 = arith.addf %73, %83 : vector<256x128xf32>
    %c33 = arith.constant 33 : index
    %c0_43 = arith.constant 0 : index
    %85 = vector.load %arg37[%c33, %c0_43] : memref<290x128xf32, #tpu.memory_space<vmem>>, vector<256x128xf32>
    %cst_44 = arith.constant 0.000000e+00 : f32
    %86 = vector.shape_cast %10 : vector<256x1xi1> to vector<256x1xi1>
    %87 = vector.broadcast %86 : vector<256x1xi1> to vector<256x128xi1>
    %88 = vector.broadcast %cst_44 : f32 to vector<256x128xf32>
    %89 = arith.select %87, %85, %88 : vector<256x128xi1>, vector<256x128xf32>
    %90 = arith.truncf %89 : vector<256x128xf32> to vector<256x128xbf16>
    %c7 = arith.constant 7 : index
    %c0_45 = arith.constant 0 : index
    %c0_46 = arith.constant 0 : index
    %91 = vector.load %arg2[%c7, %c0_45, %c0_46] : memref<9x128x128xbf16, #tpu.memory_space<vmem>>, vector<1x128x128xbf16>
    %92 = vector.shape_cast %91 : vector<1x128x128xbf16> to vector<128x128xbf16>
    %cst_47 = arith.constant dense<0.000000e+00> : vector<256x128xf32>
    %93 = tpu.matmul %90, %92, %cst_47 {dimension_numbers = #tpu.dot_dimension_numbers<[1], [0], [0], [1], [0, 0, 1, 1], [], []>} : vector<256x128xbf16>, vector<128x128xbf16>, vector<256x128xf32> -> vector<256x128xf32>
    %94 = arith.addf %84, %93 : vector<256x128xf32>
    %c34 = arith.constant 34 : index
    %c0_48 = arith.constant 0 : index
    %95 = vector.load %arg37[%c34, %c0_48] : memref<290x128xf32, #tpu.memory_space<vmem>>, vector<256x128xf32>
    %96 = arith.andi %10, %14 : vector<256x1xi1>
    %cst_49 = arith.constant 0.000000e+00 : f32
    %97 = vector.shape_cast %96 : vector<256x1xi1> to vector<256x1xi1>
    %98 = vector.broadcast %97 : vector<256x1xi1> to vector<256x128xi1>
    %99 = vector.broadcast %cst_49 : f32 to vector<256x128xf32>
    %100 = arith.select %98, %95, %99 : vector<256x128xi1>, vector<256x128xf32>
    %101 = arith.truncf %100 : vector<256x128xf32> to vector<256x128xbf16>
    %c8 = arith.constant 8 : index
    %c0_50 = arith.constant 0 : index
    %c0_51 = arith.constant 0 : index
    %102 = vector.load %arg2[%c8, %c0_50, %c0_51] : memref<9x128x128xbf16, #tpu.memory_space<vmem>>, vector<1x128x128xbf16>
    %103 = vector.shape_cast %102 : vector<1x128x128xbf16> to vector<128x128xbf16>
    %cst_52 = arith.constant dense<0.000000e+00> : vector<256x128xf32>
    %104 = tpu.matmul %101, %103, %cst_52 {dimension_numbers = #tpu.dot_dimension_numbers<[1], [0], [0], [1], [0, 0, 1, 1], [], []>} : vector<256x128xbf16>, vector<128x128xbf16>, vector<256x128xf32> -> vector<256x128xf32>
    %105 = arith.addf %94, %104 : vector<256x128xf32>
    %c0_53 = arith.constant 0 : index
    %c0_54 = arith.constant 0 : index
    %106 = vector.load %arg3[%c0_53, %c0_54] : memref<1x128xf32, #tpu.memory_space<vmem>>, vector<1x128xf32>
    %107 = vector.broadcast %106 : vector<1x128xf32> to vector<256x128xf32>
    %108 = arith.addf %105, %107 : vector<256x128xf32>
    %109 = arith.negf %108 : vector<256x128xf32>
    %110 = math.exp %109 : vector<256x128xf32>
    %cst_55 = arith.constant 1.000000e+00 : f32
    %111 = vector.broadcast %cst_55 : f32 to vector<256x128xf32>
    %112 = arith.addf %111, %110 : vector<256x128xf32>
    %113 = arith.divf %111, %112 : vector<256x128xf32>
    %114 = arith.mulf %108, %113 : vector<256x128xf32>
    %c0_56 = arith.constant 0 : index
    %c0_57 = arith.constant 0 : index
    %115 = vector.load %arg4[%c0_56, %c0_57] : memref<64x256xbf16, #tpu.memory_space<vmem>>, vector<64x256xbf16>
    %116 = arith.truncf %114 : vector<256x128xf32> to vector<256x128xbf16>
    %cst_58 = arith.constant dense<0.000000e+00> : vector<64x128xf32>
    %117 = tpu.matmul %115, %116, %cst_58 {dimension_numbers = #tpu.dot_dimension_numbers<[1], [0], [0], [1], [0, 0, 1, 1], [], []>} : vector<64x256xbf16>, vector<256x128xbf16>, vector<64x128xf32> -> vector<64x128xf32>
    %c17_59 = arith.constant 17 : index
    %c0_60 = arith.constant 0 : index
    %118 = vector.load %arg37[%c17_59, %c0_60] : memref<290x128xf32, #tpu.memory_space<vmem>>, vector<64x128xf32>
    tpu.vector_store %arg37[%c17_59, %c0_60], %117 {strides = array<i32>} : memref<290x128xf32, #tpu.memory_space<vmem>>, vector<64x128xf32>,
    %119 = tpu.iota {dimensions = array<i32: 0>} : vector<64x1xi32>
    %c7_i32 = arith.constant 7 : i32
    %120 = vector.broadcast %c7_i32 : i32 to vector<64x1xi32>
    %121 = arith.andi %119, %120 : vector<64x1xi32>
    %c3_i32 = arith.constant 3 : i32
    %122 = vector.broadcast %c3_i32 : i32 to vector<64x1xi32>
    %123 = arith.shrsi %119, %122 : vector<64x1xi32>
    %c1_i32_61 = arith.constant 1 : i32
    %124 = vector.broadcast %c1_i32_61 : i32 to vector<64x1xi32>
    %125 = arith.cmpi sge, %123, %124 : vector<64x1xi32>
    %c6_i32 = arith.constant 6 : i32
    %126 = vector.broadcast %c6_i32 : i32 to vector<64x1xi32>
    %127 = arith.cmpi sle, %123, %126 : vector<64x1xi32>
    %c1_i32_62 = arith.constant 1 : i32
    %128 = vector.broadcast %c1_i32_62 : i32 to vector<64x1xi32>
    %129 = arith.cmpi sge, %121, %128 : vector<64x1xi32>
    %c6_i32_63 = arith.constant 6 : i32
    %130 = vector.broadcast %c6_i32_63 : i32 to vector<64x1xi32>
    %131 = arith.cmpi sle, %121, %130 : vector<64x1xi32>
    %cst_64 = arith.constant 0.000000e+00 : f32
    %132 = vector.broadcast %cst_64 : f32 to vector<64x128xf32>
    %c8_65 = arith.constant 8 : index
    %c0_66 = arith.constant 0 : index
    %133 = vector.load %arg37[%c8_65, %c0_66] : memref<290x128xf32, #tpu.memory_space<vmem>>, vector<64x128xf32>
    %134 = arith.andi %125, %129 : vector<64x1xi1>
    %cst_67 = arith.constant 0.000000e+00 : f32
    %135 = vector.shape_cast %134 : vector<64x1xi1> to vector<64x1xi1>
    %136 = vector.broadcast %135 : vector<64x1xi1> to vector<64x128xi1>
    %137 = vector.broadcast %cst_67 : f32 to vector<64x128xf32>
    %138 = arith.select %136, %133, %137 : vector<64x128xi1>, vector<64x128xf32>
    %c0_68 = arith.constant 0 : index
    %c0_69 = arith.constant 0 : index
    %139 = vector.load %arg5[%c0_68, %c0_69] : memref<9x128xf32, #tpu.memory_space<vmem>>, vector<1x128xf32>
    %140 = vector.shape_cast %139 : vector<1x128xf32> to vector<128xf32>
    %141 = vector.shape_cast %140 : vector<128xf32> to vector<1x128xf32>
    %142 = vector.broadcast %141 : vector<1x128xf32> to vector<64x128xf32>
    %143 = arith.mulf %138, %142 : vector<64x128xf32>
    %144 = arith.addf %132, %143 : vector<64x128xf32>
    %c9 = arith.constant 9 : index
    %c0_70 = arith.constant 0 : index
    %145 = vector.load %arg37[%c9, %c0_70] : memref<290x128xf32, #tpu.memory_space<vmem>>, vector<64x128xf32>
    %cst_71 = arith.constant 0.000000e+00 : f32
    %146 = vector.shape_cast %125 : vector<64x1xi1> to vector<64x1xi1>
    %147 = vector.broadcast %146 : vector<64x1xi1> to vector<64x128xi1>
    %148 = vector.broadcast %cst_71 : f32 to vector<64x128xf32>
    %149 = arith.select %147, %145, %148 : vector<64x128xi1>, vector<64x128xf32>
    %c1_72 = arith.constant 1 : index
    %c0_73 = arith.constant 0 : index
    %150 = vector.load %arg5[%c1_72, %c0_73] : memref<9x128xf32, #tpu.memory_space<vmem>>, vector<1x128xf32>
    %151 = vector.shape_cast %150 : vector<1x128xf32> to vector<128xf32>
    %152 = vector.shape_cast %151 : vector<128xf32> to vector<1x128xf32>
    %153 = vector.broadcast %152 : vector<1x128xf32> to vector<64x128xf32>
    %154 = arith.mulf %149, %153 : vector<64x128xf32>
    %155 = arith.addf %144, %154 : vector<64x128xf32>
    %c10 = arith.constant 10 : index
    %c0_74 = arith.constant 0 : index
    %156 = vector.load %arg37[%c10, %c0_74] : memref<290x128xf32, #tpu.memory_space<vmem>>, vector<64x128xf32>
    %157 = arith.andi %125, %131 : vector<64x1xi1>
    %cst_75 = arith.constant 0.000000e+00 : f32
    %158 = vector.shape_cast %157 : vector<64x1xi1> to vector<64x1xi1>
    %159 = vector.broadcast %158 : vector<64x1xi1> to vector<64x128xi1>
    %160 = vector.broadcast %cst_75 : f32 to vector<64x128xf32>
    %161 = arith.select %159, %156, %160 : vector<64x128xi1>, vector<64x128xf32>
    %c2_76 = arith.constant 2 : index
    %c0_77 = arith.constant 0 : index
    %162 = vector.load %arg5[%c2_76, %c0_77] : memref<9x128xf32, #tpu.memory_space<vmem>>, vector<1x128xf32>
    %163 = vector.shape_cast %162 : vector<1x128xf32> to vector<128xf32>
    %164 = vector.shape_cast %163 : vector<128xf32> to vector<1x128xf32>
    %165 = vector.broadcast %164 : vector<1x128xf32> to vector<64x128xf32>
    %166 = arith.mulf %161, %165 : vector<64x128xf32>
    %167 = arith.addf %155, %166 : vector<64x128xf32>
    %c16_78 = arith.constant 16 : index
    %c0_79 = arith.constant 0 : index
    %168 = vector.load %arg37[%c16_78, %c0_79] : memref<290x128xf32, #tpu.memory_space<vmem>>, vector<64x128xf32>
    %cst_80 = arith.constant 0.000000e+00 : f32
    %169 = vector.shape_cast %129 : vector<64x1xi1> to vector<64x1xi1>
    %170 = vector.broadcast %169 : vector<64x1xi1> to vector<64x128xi1>
    %171 = vector.broadcast %cst_80 : f32 to vector<64x128xf32>
    %172 = arith.select %170, %168, %171 : vector<64x128xi1>, vector<64x128xf32>
    %c3_81 = arith.constant 3 : index
    %c0_82 = arith.constant 0 : index
    %173 = vector.load %arg5[%c3_81, %c0_82] : memref<9x128xf32, #tpu.memory_space<vmem>>, vector<1x128xf32>
    %174 = vector.shape_cast %173 : vector<1x128xf32> to vector<128xf32>
    %175 = vector.shape_cast %174 : vector<128xf32> to vector<1x128xf32>
    %176 = vector.broadcast %175 : vector<1x128xf32> to vector<64x128xf32>
    %177 = arith.mulf %172, %176 : vector<64x128xf32>
    %178 = arith.addf %167, %177 : vector<64x128xf32>
    %c17_83 = arith.constant 17 : index
    %c0_84 = arith.constant 0 : index
    %179 = vector.load %arg37[%c17_83, %c0_84] : memref<290x128xf32, #tpu.memory_space<vmem>>, vector<64x128xf32>
    %c4_85 = arith.constant 4 : index
    %c0_86 = arith.constant 0 : index
    %180 = vector.load %arg5[%c4_85, %c0_86] : memref<9x128xf32, #tpu.memory_space<vmem>>, vector<1x128xf32>
    %181 = vector.shape_cast %180 : vector<1x128xf32> to vector<128xf32>
    %182 = vector.shape_cast %181 : vector<128xf32> to vector<1x128xf32>
    %183 = vector.broadcast %182 : vector<1x128xf32> to vector<64x128xf32>
    %184 = arith.mulf %179, %183 : vector<64x128xf32>
    %185 = arith.addf %178, %184 : vector<64x128xf32>
    %c18_87 = arith.constant 18 : index
    %c0_88 = arith.constant 0 : index
    %186 = vector.load %arg37[%c18_87, %c0_88] : memref<290x128xf32, #tpu.memory_space<vmem>>, vector<64x128xf32>
    %cst_89 = arith.constant 0.000000e+00 : f32
    %187 = vector.shape_cast %131 : vector<64x1xi1> to vector<64x1xi1>
    %188 = vector.broadcast %187 : vector<64x1xi1> to vector<64x128xi1>
    %189 = vector.broadcast %cst_89 : f32 to vector<64x128xf32>
    %190 = arith.select %188, %186, %189 : vector<64x128xi1>, vector<64x128xf32>
    %c5_90 = arith.constant 5 : index
    %c0_91 = arith.constant 0 : index
    %191 = vector.load %arg5[%c5_90, %c0_91] : memref<9x128xf32, #tpu.memory_space<vmem>>, vector<1x128xf32>
    %192 = vector.shape_cast %191 : vector<1x128xf32> to vector<128xf32>
    %193 = vector.shape_cast %192 : vector<128xf32> to vector<1x128xf32>
    %194 = vector.broadcast %193 : vector<1x128xf32> to vector<64x128xf32>
    %195 = arith.mulf %190, %194 : vector<64x128xf32>
    %196 = arith.addf %185, %195 : vector<64x128xf32>
    %c24 = arith.constant 24 : index
    %c0_92 = arith.constant 0 : index
    %197 = vector.load %arg37[%c24, %c0_92] : memref<290x128xf32, #tpu.memory_space<vmem>>, vector<64x128xf32>
    %198 = arith.andi %127, %129 : vector<64x1xi1>
    %cst_93 = arith.constant 0.000000e+00 : f32
    %199 = vector.shape_cast %198 : vector<64x1xi1> to vector<64x1xi1>
    %200 = vector.broadcast %199 : vector<64x1xi1> to vector<64x128xi1>
    %201 = vector.broadcast %cst_93 : f32 to vector<64x128xf32>
    %202 = arith.select %200, %197, %201 : vector<64x128xi1>, vector<64x128xf32>
    %c6_94 = arith.constant 6 : index
    %c0_95 = arith.constant 0 : index
    %203 = vector.load %arg5[%c6_94, %c0_95] : memref<9x128xf32, #tpu.memory_space<vmem>>, vector<1x128xf32>
    %204 = vector.shape_cast %203 : vector<1x128xf32> to vector<128xf32>
    %205 = vector.shape_cast %204 : vector<128xf32> to vector<1x128xf32>
    %206 = vector.broadcast %205 : vector<1x128xf32> to vector<64x128xf32>
    %207 = arith.mulf %202, %206 : vector<64x128xf32>
    %208 = arith.addf %196, %207 : vector<64x128xf32>
    %c25 = arith.constant 25 : index
    %c0_96 = arith.constant 0 : index
    %209 = vector.load %arg37[%c25, %c0_96] : memref<290x128xf32, #tpu.memory_space<vmem>>, vector<64x128xf32>
    %cst_97 = arith.constant 0.000000e+00 : f32
    %210 = vector.shape_cast %127 : vector<64x1xi1> to vector<64x1xi1>
    %211 = vector.broadcast %210 : vector<64x1xi1> to vector<64x128xi1>
    %212 = vector.broadcast %cst_97 : f32 to vector<64x128xf32>
    %213 = arith.select %211, %209, %212 : vector<64x128xi1>, vector<64x128xf32>
    %c7_98 = arith.constant 7 : index
    %c0_99 = arith.constant 0 : index
    %214 = vector.load %arg5[%c7_98, %c0_99] : memref<9x128xf32, #tpu.memory_space<vmem>>, vector<1x128xf32>
    %215 = vector.shape_cast %214 : vector<1x128xf32> to vector<128xf32>
    %216 = vector.shape_cast %215 : vector<128xf32> to vector<1x128xf32>
    %217 = vector.broadcast %216 : vector<1x128xf32> to vector<64x128xf32>
    %218 = arith.mulf %213, %217 : vector<64x128xf32>
    %219 = arith.addf %208, %218 : vector<64x128xf32>
    %c26 = arith.constant 26 : index
    %c0_100 = arith.constant 0 : index
    %220 = vector.load %arg37[%c26, %c0_100] : memref<290x128xf32, #tpu.memory_space<vmem>>, vector<64x128xf32>
    %221 = arith.andi %127, %131 : vector<64x1xi1>
    %cst_101 = arith.constant 0.000000e+00 : f32
    %222 = vector.shape_cast %221 : vector<64x1xi1> to vector<64x1xi1>
    %223 = vector.broadcast %222 : vector<64x1xi1> to vector<64x128xi1>
    %224 = vector.broadcast %cst_101 : f32 to vector<64x128xf32>
    %225 = arith.select %223, %220, %224 : vector<64x128xi1>, vector<64x128xf32>
    %c8_102 = arith.constant 8 : index
    %c0_103 = arith.constant 0 : index
    %226 = vector.load %arg5[%c8_102, %c0_103] : memref<9x128xf32, #tpu.memory_space<vmem>>, vector<1x128xf32>
    %227 = vector.shape_cast %226 : vector<1x128xf32> to vector<128xf32>
    %228 = vector.shape_cast %227 : vector<128xf32> to vector<1x128xf32>
    %229 = vector.broadcast %228 : vector<1x128xf32> to vector<64x128xf32>
    %230 = arith.mulf %225, %229 : vector<64x128xf32>
    %231 = arith.addf %219, %230 : vector<64x128xf32>
    %c0_104 = arith.constant 0 : index
    %c0_105 = arith.constant 0 : index
    %232 = vector.load %arg6[%c0_104, %c0_105] : memref<1x128xf32, #tpu.memory_space<vmem>>, vector<1x128xf32>
    %233 = vector.broadcast %232 : vector<1x128xf32> to vector<64x128xf32>
    %234 = arith.addf %231, %233 : vector<64x128xf32>
    %235 = arith.negf %234 : vector<64x128xf32>
    %236 = math.exp %235 : vector<64x128xf32>
    %cst_106 = arith.constant 1.000000e+00 : f32
    %237 = vector.broadcast %cst_106 : f32 to vector<64x128xf32>
    %238 = arith.addf %237, %236 : vector<64x128xf32>
    %239 = arith.divf %237, %238 : vector<64x128xf32>
    %240 = arith.mulf %234, %239 : vector<64x128xf32>
    %cst_107 = arith.constant dense<0.000000e+00> : vector<128xf32>
    %241 = vector.multi_reduction <add>, %240, %cst_107 [0] : vector<64x128xf32> to vector<128xf32>
    %242 = vector.shape_cast %241 : vector<128xf32> to vector<1x128xf32>
    %cst_108 = arith.constant 6.400000e+01 : f32
    %243 = vector.broadcast %cst_108 : f32 to vector<1x128xf32>
    %244 = arith.divf %242, %243 : vector<1x128xf32>
    %245 = arith.truncf %244 : vector<1x128xf32> to vector<1x128xbf16>
    %c0_109 = arith.constant 0 : index
    %c0_110 = arith.constant 0 : index
    %246 = vector.load %arg7[%c0_109, %c0_110] : memref<128x128xbf16, #tpu.memory_space<vmem>>, vector<128x128xbf16>
    %cst_111 = arith.constant dense<0.000000e+00> : vector<1x128xf32>
    %247 = tpu.matmul %245, %246, %cst_111 {dimension_numbers = #tpu.dot_dimension_numbers<[1], [0], [0], [1], [0, 0, 1, 1], [], []>} : vector<1x128xbf16>, vector<128x128xbf16>, vector<1x128xf32> -> vector<1x128xf32>
    %c0_112 = arith.constant 0 : index
    %c0_113 = arith.constant 0 : index
    %248 = vector.load %arg8[%c0_112, %c0_113] : memref<1x128xf32, #tpu.memory_space<vmem>>, vector<1x128xf32>
    %249 = arith.addf %247, %248 : vector<1x128xf32>
    %250 = arith.negf %249 : vector<1x128xf32>
    %251 = math.exp %250 : vector<1x128xf32>
    %cst_114 = arith.constant 1.000000e+00 : f32
    %252 = vector.broadcast %cst_114 : f32 to vector<1x128xf32>
    %253 = arith.addf %252, %251 : vector<1x128xf32>
    %254 = arith.divf %252, %253 : vector<1x128xf32>
    %255 = arith.mulf %249, %254 : vector<1x128xf32>
    %256 = arith.truncf %255 : vector<1x128xf32> to vector<1x128xbf16>
    %c0_115 = arith.constant 0 : index
    %c0_116 = arith.constant 0 : index
    %257 = vector.load %arg9[%c0_115, %c0_116] : memref<128x128xbf16, #tpu.memory_space<vmem>>, vector<128x128xbf16>
    %cst_117 = arith.constant dense<0.000000e+00> : vector<1x128xf32>
    %258 = tpu.matmul %256, %257, %cst_117 {dimension_numbers = #tpu.dot_dimension_numbers<[1], [0], [0], [1], [0, 0, 1, 1], [], []>} : vector<1x128xbf16>, vector<128x128xbf16>, vector<1x128xf32> -> vector<1x128xf32>
    %c0_118 = arith.constant 0 : index
    %c0_119 = arith.constant 0 : index
    %259 = vector.load %arg10[%c0_118, %c0_119] : memref<1x128xf32, #tpu.memory_space<vmem>>, vector<1x128xf32>
    %260 = arith.addf %258, %259 : vector<1x128xf32>
    %261 = arith.negf %260 : vector<1x128xf32>
    %262 = math.exp %261 : vector<1x128xf32>
    %cst_120 = arith.constant 1.000000e+00 : f32
    %263 = vector.broadcast %cst_120 : f32 to vector<1x128xf32>
    %264 = arith.addf %263, %262 : vector<1x128xf32>
    %265 = arith.divf %263, %264 : vector<1x128xf32>
    %266 = vector.broadcast %265 : vector<1x128xf32> to vector<64x128xf32>
    %267 = arith.mulf %240, %266 : vector<64x128xf32>
    %268 = arith.truncf %267 : vector<64x128xf32> to vector<64x128xbf16>
    %c0_121 = arith.constant 0 : index
    %c0_122 = arith.constant 0 : index
    %269 = vector.load %arg11[%c0_121, %c0_122] : memref<128x128xbf16, #tpu.memory_space<vmem>>, vector<128x128xbf16>
    %cst_123 = arith.constant dense<0.000000e+00> : vector<64x128xf32>
    %270 = tpu.matmul %268, %269, %cst_123 {dimension_numbers = #tpu.dot_dimension_numbers<[1], [0], [0], [1], [0, 0, 1, 1], [], []>} : vector<64x128xbf16>, vector<128x128xbf16>, vector<64x128xf32> -> vector<64x128xf32>
    %c0_124 = arith.constant 0 : index
    %c0_125 = arith.constant 0 : index
    %271 = vector.load %arg12[%c0_124, %c0_125] : memref<1x128xf32, #tpu.memory_space<vmem>>, vector<1x128xf32>
    %272 = vector.broadcast %271 : vector<1x128xf32> to vector<64x128xf32>
    %273 = arith.addf %270, %272 : vector<64x128xf32>
    %274 = arith.addf %273, %117 : vector<64x128xf32>
    %275 = arith.truncf %274 : vector<64x128xf32> to vector<64x128xbf16>
    %c0_126 = arith.constant 0 : index
    %c0_127 = arith.constant 0 : index
    %276 = vector.load %arg13[%c0_126, %c0_127] : memref<128x128xbf16, #tpu.memory_space<vmem>>, vector<128x128xbf16>
    %cst_128 = arith.constant dense<0.000000e+00> : vector<64x128xf32>
    %277 = tpu.matmul %275, %276, %cst_128 {dimension_numbers = #tpu.dot_dimension_numbers<[1], [0], [0], [1], [0, 0, 1, 1], [], []>} : vector<64x128xbf16>, vector<128x128xbf16>, vector<64x128xf32> -> vector<64x128xf32>
    %c0_129 = arith.constant 0 : index
    %c0_130 = arith.constant 0 : index
    %278 = vector.load %arg14[%c0_129, %c0_130] : memref<1x128xf32, #tpu.memory_space<vmem>>, vector<1x128xf32>
    %279 = vector.broadcast %278 : vector<1x128xf32> to vector<64x128xf32>
    %280 = arith.addf %277, %279 : vector<64x128xf32>
    %281 = arith.negf %280 : vector<64x128xf32>
    %282 = math.exp %281 : vector<64x128xf32>
    %cst_131 = arith.constant 1.000000e+00 : f32
    %283 = vector.broadcast %cst_131 : f32 to vector<64x128xf32>
    %284 = arith.addf %283, %282 : vector<64x128xf32>
    %285 = arith.divf %283, %284 : vector<64x128xf32>
    %286 = arith.mulf %280, %285 : vector<64x128xf32>
    %c17_132 = arith.constant 17 : index
    %c0_133 = arith.constant 0 : index
    %287 = vector.load %arg37[%c17_132, %c0_133] : memref<290x128xf32, #tpu.memory_space<vmem>>, vector<64x128xf32>
    tpu.vector_store %arg37[%c17_132, %c0_133], %286 {strides = array<i32>} : memref<290x128xf32, #tpu.memory_space<vmem>>, vector<64x128xf32>,
    %288 = tpu.iota {dimensions = array<i32: 0>} : vector<64x1xi32>
    %c7_i32_134 = arith.constant 7 : i32
    %289 = vector.broadcast %c7_i32_134 : i32 to vector<64x1xi32>
    %290 = arith.andi %288, %289 : vector<64x1xi32>
    %c3_i32_135 = arith.constant 3 : i32
    %291 = vector.broadcast %c3_i32_135 : i32 to vector<64x1xi32>
    %292 = arith.shrsi %288, %291 : vector<64x1xi32>
    %c1_i32_136 = arith.constant 1 : i32
    %293 = vector.broadcast %c1_i32_136 : i32 to vector<64x1xi32>
    %294 = arith.cmpi sge, %292, %293 : vector<64x1xi32>
    %c6_i32_137 = arith.constant 6 : i32
    %295 = vector.broadcast %c6_i32_137 : i32 to vector<64x1xi32>
    %296 = arith.cmpi sle, %292, %295 : vector<64x1xi32>
    %c1_i32_138 = arith.constant 1 : i32
    %297 = vector.broadcast %c1_i32_138 : i32 to vector<64x1xi32>
    %298 = arith.cmpi sge, %290, %297 : vector<64x1xi32>
    %c6_i32_139 = arith.constant 6 : i32
    %299 = vector.broadcast %c6_i32_139 : i32 to vector<64x1xi32>
    %300 = arith.cmpi sle, %290, %299 : vector<64x1xi32>
    %cst_140 = arith.constant 0.000000e+00 : f32
    %301 = vector.broadcast %cst_140 : f32 to vector<64x128xf32>
    %c8_141 = arith.constant 8 : index
    %c0_142 = arith.constant 0 : index
    %302 = vector.load %arg37[%c8_141, %c0_142] : memref<290x128xf32, #tpu.memory_space<vmem>>, vector<64x128xf32>
    %303 = arith.andi %294, %298 : vector<64x1xi1>
    %cst_143 = arith.constant 0.000000e+00 : f32
    %304 = vector.shape_cast %303 : vector<64x1xi1> to vector<64x1xi1>
    %305 = vector.broadcast %304 : vector<64x1xi1> to vector<64x128xi1>
    %306 = vector.broadcast %cst_143 : f32 to vector<64x128xf32>
    %307 = arith.select %305, %302, %306 : vector<64x128xi1>, vector<64x128xf32>
    %c0_144 = arith.constant 0 : index
    %c0_145 = arith.constant 0 : index
    %308 = vector.load %arg15[%c0_144, %c0_145] : memref<9x128xf32, #tpu.memory_space<vmem>>, vector<1x128xf32>
    %309 = vector.shape_cast %308 : vector<1x128xf32> to vector<128xf32>
    %310 = vector.shape_cast %309 : vector<128xf32> to vector<1x128xf32>
    %311 = vector.broadcast %310 : vector<1x128xf32> to vector<64x128xf32>
    %312 = arith.mulf %307, %311 : vector<64x128xf32>
    %313 = arith.addf %301, %312 : vector<64x128xf32>
    %c9_146 = arith.constant 9 : index
    %c0_147 = arith.constant 0 : index
    %314 = vector.load %arg37[%c9_146, %c0_147] : memref<290x128xf32, #tpu.memory_space<vmem>>, vector<64x128xf32>
    %cst_148 = arith.constant 0.000000e+00 : f32
    %315 = vector.shape_cast %294 : vector<64x1xi1> to vector<64x1xi1>
    %316 = vector.broadcast %315 : vector<64x1xi1> to vector<64x128xi1>
    %317 = vector.broadcast %cst_148 : f32 to vector<64x128xf32>
    %318 = arith.select %316, %314, %317 : vector<64x128xi1>, vector<64x128xf32>
    %c1_149 = arith.constant 1 : index
    %c0_150 = arith.constant 0 : index
    %319 = vector.load %arg15[%c1_149, %c0_150] : memref<9x128xf32, #tpu.memory_space<vmem>>, vector<1x128xf32>
    %320 = vector.shape_cast %319 : vector<1x128xf32> to vector<128xf32>
    %321 = vector.shape_cast %320 : vector<128xf32> to vector<1x128xf32>
    %322 = vector.broadcast %321 : vector<1x128xf32> to vector<64x128xf32>
    %323 = arith.mulf %318, %322 : vector<64x128xf32>
    %324 = arith.addf %313, %323 : vector<64x128xf32>
    %c10_151 = arith.constant 10 : index
    %c0_152 = arith.constant 0 : index
    %325 = vector.load %arg37[%c10_151, %c0_152] : memref<290x128xf32, #tpu.memory_space<vmem>>, vector<64x128xf32>
    %326 = arith.andi %294, %300 : vector<64x1xi1>
    %cst_153 = arith.constant 0.000000e+00 : f32
    %327 = vector.shape_cast %326 : vector<64x1xi1> to vector<64x1xi1>
    %328 = vector.broadcast %327 : vector<64x1xi1> to vector<64x128xi1>
    %329 = vector.broadcast %cst_153 : f32 to vector<64x128xf32>
    %330 = arith.select %328, %325, %329 : vector<64x128xi1>, vector<64x128xf32>
    %c2_154 = arith.constant 2 : index
    %c0_155 = arith.constant 0 : index
    %331 = vector.load %arg15[%c2_154, %c0_155] : memref<9x128xf32, #tpu.memory_space<vmem>>, vector<1x128xf32>
    %332 = vector.shape_cast %331 : vector<1x128xf32> to vector<128xf32>
    %333 = vector.shape_cast %332 : vector<128xf32> to vector<1x128xf32>
    %334 = vector.broadcast %333 : vector<1x128xf32> to vector<64x128xf32>
    %335 = arith.mulf %330, %334 : vector<64x128xf32>
    %336 = arith.addf %324, %335 : vector<64x128xf32>
    %c16_156 = arith.constant 16 : index
    %c0_157 = arith.constant 0 : index
    %337 = vector.load %arg37[%c16_156, %c0_157] : memref<290x128xf32, #tpu.memory_space<vmem>>, vector<64x128xf32>
    %cst_158 = arith.constant 0.000000e+00 : f32
    %338 = vector.shape_cast %298 : vector<64x1xi1> to vector<64x1xi1>
    %339 = vector.broadcast %338 : vector<64x1xi1> to vector<64x128xi1>
    %340 = vector.broadcast %cst_158 : f32 to vector<64x128xf32>
    %341 = arith.select %339, %337, %340 : vector<64x128xi1>, vector<64x128xf32>
    %c3_159 = arith.constant 3 : index
    %c0_160 = arith.constant 0 : index
    %342 = vector.load %arg15[%c3_159, %c0_160] : memref<9x128xf32, #tpu.memory_space<vmem>>, vector<1x128xf32>
    %343 = vector.shape_cast %342 : vector<1x128xf32> to vector<128xf32>
    %344 = vector.shape_cast %343 : vector<128xf32> to vector<1x128xf32>
    %345 = vector.broadcast %344 : vector<1x128xf32> to vector<64x128xf32>
    %346 = arith.mulf %341, %345 : vector<64x128xf32>
    %347 = arith.addf %336, %346 : vector<64x128xf32>
    %c17_161 = arith.constant 17 : index
    %c0_162 = arith.constant 0 : index
    %348 = vector.load %arg37[%c17_161, %c0_162] : memref<290x128xf32, #tpu.memory_space<vmem>>, vector<64x128xf32>
    %c4_163 = arith.constant 4 : index
    %c0_164 = arith.constant 0 : index
    %349 = vector.load %arg15[%c4_163, %c0_164] : memref<9x128xf32, #tpu.memory_space<vmem>>, vector<1x128xf32>
    %350 = vector.shape_cast %349 : vector<1x128xf32> to vector<128xf32>
    %351 = vector.shape_cast %350 : vector<128xf32> to vector<1x128xf32>
    %352 = vector.broadcast %351 : vector<1x128xf32> to vector<64x128xf32>
    %353 = arith.mulf %348, %352 : vector<64x128xf32>
    %354 = arith.addf %347, %353 : vector<64x128xf32>
    %c18_165 = arith.constant 18 : index
    %c0_166 = arith.constant 0 : index
    %355 = vector.load %arg37[%c18_165, %c0_166] : memref<290x128xf32, #tpu.memory_space<vmem>>, vector<64x128xf32>
    %cst_167 = arith.constant 0.000000e+00 : f32
    %356 = vector.shape_cast %300 : vector<64x1xi1> to vector<64x1xi1>
    %357 = vector.broadcast %356 : vector<64x1xi1> to vector<64x128xi1>
    %358 = vector.broadcast %cst_167 : f32 to vector<64x128xf32>
    %359 = arith.select %357, %355, %358 : vector<64x128xi1>, vector<64x128xf32>
    %c5_168 = arith.constant 5 : index
    %c0_169 = arith.constant 0 : index
    %360 = vector.load %arg15[%c5_168, %c0_169] : memref<9x128xf32, #tpu.memory_space<vmem>>, vector<1x128xf32>
    %361 = vector.shape_cast %360 : vector<1x128xf32> to vector<128xf32>
    %362 = vector.shape_cast %361 : vector<128xf32> to vector<1x128xf32>
    %363 = vector.broadcast %362 : vector<1x128xf32> to vector<64x128xf32>
    %364 = arith.mulf %359, %363 : vector<64x128xf32>
    %365 = arith.addf %354, %364 : vector<64x128xf32>
    %c24_170 = arith.constant 24 : index
    %c0_171 = arith.constant 0 : index
    %366 = vector.load %arg37[%c24_170, %c0_171] : memref<290x128xf32, #tpu.memory_space<vmem>>, vector<64x128xf32>
    %367 = arith.andi %296, %298 : vector<64x1xi1>
    %cst_172 = arith.constant 0.000000e+00 : f32
    %368 = vector.shape_cast %367 : vector<64x1xi1> to vector<64x1xi1>
    %369 = vector.broadcast %368 : vector<64x1xi1> to vector<64x128xi1>
    %370 = vector.broadcast %cst_172 : f32 to vector<64x128xf32>
    %371 = arith.select %369, %366, %370 : vector<64x128xi1>, vector<64x128xf32>
    %c6_173 = arith.constant 6 : index
    %c0_174 = arith.constant 0 : index
    %372 = vector.load %arg15[%c6_173, %c0_174] : memref<9x128xf32, #tpu.memory_space<vmem>>, vector<1x128xf32>
    %373 = vector.shape_cast %372 : vector<1x128xf32> to vector<128xf32>
    %374 = vector.shape_cast %373 : vector<128xf32> to vector<1x128xf32>
    %375 = vector.broadcast %374 : vector<1x128xf32> to vector<64x128xf32>
    %376 = arith.mulf %371, %375 : vector<64x128xf32>
    %377 = arith.addf %365, %376 : vector<64x128xf32>
    %c25_175 = arith.constant 25 : index
    %c0_176 = arith.constant 0 : index
    %378 = vector.load %arg37[%c25_175, %c0_176] : memref<290x128xf32, #tpu.memory_space<vmem>>, vector<64x128xf32>
    %cst_177 = arith.constant 0.000000e+00 : f32
    %379 = vector.shape_cast %296 : vector<64x1xi1> to vector<64x1xi1>
    %380 = vector.broadcast %379 : vector<64x1xi1> to vector<64x128xi1>
    %381 = vector.broadcast %cst_177 : f32 to vector<64x128xf32>
    %382 = arith.select %380, %378, %381 : vector<64x128xi1>, vector<64x128xf32>
    %c7_178 = arith.constant 7 : index
    %c0_179 = arith.constant 0 : index
    %383 = vector.load %arg15[%c7_178, %c0_179] : memref<9x128xf32, #tpu.memory_space<vmem>>, vector<1x128xf32>
    %384 = vector.shape_cast %383 : vector<1x128xf32> to vector<128xf32>
    %385 = vector.shape_cast %384 : vector<128xf32> to vector<1x128xf32>
    %386 = vector.broadcast %385 : vector<1x128xf32> to vector<64x128xf32>
    %387 = arith.mulf %382, %386 : vector<64x128xf32>
    %388 = arith.addf %377, %387 : vector<64x128xf32>
    %c26_180 = arith.constant 26 : index
    %c0_181 = arith.constant 0 : index
    %389 = vector.load %arg37[%c26_180, %c0_181] : memref<290x128xf32, #tpu.memory_space<vmem>>, vector<64x128xf32>
    %390 = arith.andi %296, %300 : vector<64x1xi1>
    %cst_182 = arith.constant 0.000000e+00 : f32
    %391 = vector.shape_cast %390 : vector<64x1xi1> to vector<64x1xi1>
    %392 = vector.broadcast %391 : vector<64x1xi1> to vector<64x128xi1>
    %393 = vector.broadcast %cst_182 : f32 to vector<64x128xf32>
    %394 = arith.select %392, %389, %393 : vector<64x128xi1>, vector<64x128xf32>
    %c8_183 = arith.constant 8 : index
    %c0_184 = arith.constant 0 : index
    %395 = vector.load %arg15[%c8_183, %c0_184] : memref<9x128xf32, #tpu.memory_space<vmem>>, vector<1x128xf32>
    %396 = vector.shape_cast %395 : vector<1x128xf32> to vector<128xf32>
    %397 = vector.shape_cast %396 : vector<128xf32> to vector<1x128xf32>
    %398 = vector.broadcast %397 : vector<1x128xf32> to vector<64x128xf32>
    %399 = arith.mulf %394, %398 : vector<64x128xf32>
    %400 = arith.addf %388, %399 : vector<64x128xf32>
    %c0_185 = arith.constant 0 : index
    %c0_186 = arith.constant 0 : index
    %401 = vector.load %arg16[%c0_185, %c0_186] : memref<1x128xf32, #tpu.memory_space<vmem>>, vector<1x128xf32>
    %402 = vector.broadcast %401 : vector<1x128xf32> to vector<64x128xf32>
    %403 = arith.addf %400, %402 : vector<64x128xf32>
    %404 = arith.negf %403 : vector<64x128xf32>
    %405 = math.exp %404 : vector<64x128xf32>
    %cst_187 = arith.constant 1.000000e+00 : f32
    %406 = vector.broadcast %cst_187 : f32 to vector<64x128xf32>
    %407 = arith.addf %406, %405 : vector<64x128xf32>
    %408 = arith.divf %406, %407 : vector<64x128xf32>
    %409 = arith.mulf %403, %408 : vector<64x128xf32>
    %c0_188 = arith.constant 0 : index
    %c0_189 = arith.constant 0 : index
    %410 = vector.load %arg17[%c0_188, %c0_189] : memref<16x64xbf16, #tpu.memory_space<vmem>>, vector<16x64xbf16>
    %411 = arith.truncf %409 : vector<64x128xf32> to vector<64x128xbf16>
    %cst_190 = arith.constant dense<0.000000e+00> : vector<16x128xf32>
    %412 = tpu.matmul %410, %411, %cst_190 {dimension_numbers = #tpu.dot_dimension_numbers<[1], [0], [0], [1], [0, 0, 1, 1], [], []>} : vector<16x64xbf16>, vector<64x128xbf16>, vector<16x128xf32> -> vector<16x128xf32>
    %cst_191 = arith.constant dense<0.000000e+00> : vector<128xf32>
    %413 = vector.multi_reduction <add>, %412, %cst_191 [0] : vector<16x128xf32> to vector<128xf32>
    %414 = vector.shape_cast %413 : vector<128xf32> to vector<1x128xf32>
    %cst_192 = arith.constant 1.600000e+01 : f32
    %415 = vector.broadcast %cst_192 : f32 to vector<1x128xf32>
    %416 = arith.divf %414, %415 : vector<1x128xf32>
    %417 = arith.truncf %416 : vector<1x128xf32> to vector<1x128xbf16>
    %c0_193 = arith.constant 0 : index
    %c0_194 = arith.constant 0 : index
    %418 = vector.load %arg18[%c0_193, %c0_194] : memref<128x128xbf16, #tpu.memory_space<vmem>>, vector<128x128xbf16>
    %cst_195 = arith.constant dense<0.000000e+00> : vector<1x128xf32>
    %419 = tpu.matmul %417, %418, %cst_195 {dimension_numbers = #tpu.dot_dimension_numbers<[1], [0], [0], [1], [0, 0, 1, 1], [], []>} : vector<1x128xbf16>, vector<128x128xbf16>, vector<1x128xf32> -> vector<1x128xf32>
    %c0_196 = arith.constant 0 : index
    %c0_197 = arith.constant 0 : index
    %420 = vector.load %arg19[%c0_196, %c0_197] : memref<1x128xf32, #tpu.memory_space<vmem>>, vector<1x128xf32>
    %421 = arith.addf %419, %420 : vector<1x128xf32>
    %422 = arith.negf %421 : vector<1x128xf32>
    %423 = math.exp %422 : vector<1x128xf32>
    %cst_198 = arith.constant 1.000000e+00 : f32
    %424 = vector.broadcast %cst_198 : f32 to vector<1x128xf32>
    %425 = arith.addf %424, %423 : vector<1x128xf32>
    %426 = arith.divf %424, %425 : vector<1x128xf32>
    %427 = arith.mulf %421, %426 : vector<1x128xf32>
    %428 = arith.truncf %427 : vector<1x128xf32> to vector<1x128xbf16>
    %c0_199 = arith.constant 0 : index
    %c0_200 = arith.constant 0 : index
    %429 = vector.load %arg20[%c0_199, %c0_200] : memref<128x128xbf16, #tpu.memory_space<vmem>>, vector<128x128xbf16>
    %cst_201 = arith.constant dense<0.000000e+00> : vector<1x128xf32>
    %430 = tpu.matmul %428, %429, %cst_201 {dimension_numbers = #tpu.dot_dimension_numbers<[1], [0], [0], [1], [0, 0, 1, 1], [], []>} : vector<1x128xbf16>, vector<128x128xbf16>, vector<1x128xf32> -> vector<1x128xf32>
    %c0_202 = arith.constant 0 : index
    %c0_203 = arith.constant 0 : index
    %431 = vector.load %arg21[%c0_202, %c0_203] : memref<1x128xf32, #tpu.memory_space<vmem>>, vector<1x128xf32>
    %432 = arith.addf %430, %431 : vector<1x128xf32>
    %433 = arith.negf %432 : vector<1x128xf32>
    %434 = math.exp %433 : vector<1x128xf32>
    %cst_204 = arith.constant 1.000000e+00 : f32
    %435 = vector.broadcast %cst_204 : f32 to vector<1x128xf32>
    %436 = arith.addf %435, %434 : vector<1x128xf32>
    %437 = arith.divf %435, %436 : vector<1x128xf32>
    %438 = vector.broadcast %437 : vector<1x128xf32> to vector<16x128xf32>
    %439 = arith.mulf %412, %438 : vector<16x128xf32>
    %440 = arith.truncf %439 : vector<16x128xf32> to vector<16x128xbf16>
    %c0_205 = arith.constant 0 : index
    %c0_206 = arith.constant 0 : index
    %441 = vector.load %arg22[%c0_205, %c0_206] : memref<128x128xbf16, #tpu.memory_space<vmem>>, vector<128x128xbf16>
    %cst_207 = arith.constant dense<0.000000e+00> : vector<16x128xf32>
    %442 = tpu.matmul %440, %441, %cst_207 {dimension_numbers = #tpu.dot_dimension_numbers<[1], [0], [0], [1], [0, 0, 1, 1], [], []>} : vector<16x128xbf16>, vector<128x128xbf16>, vector<16x128xf32> -> vector<16x128xf32>
    %c0_208 = arith.constant 0 : index
    %c0_209 = arith.constant 0 : index
    %443 = vector.load %arg23[%c0_208, %c0_209] : memref<1x128xf32, #tpu.memory_space<vmem>>, vector<1x128xf32>
    %444 = vector.broadcast %443 : vector<1x128xf32> to vector<16x128xf32>
    %445 = arith.addf %442, %444 : vector<16x128xf32>
    %446 = arith.truncf %445 : vector<16x128xf32> to vector<16x128xbf16>
    %c0_210 = arith.constant 0 : index
    %c0_211 = arith.constant 0 : index
    %447 = vector.load %arg24[%c0_210, %c0_211] : memref<128x128xbf16, #tpu.memory_space<vmem>>, vector<128x128xbf16>
    %cst_212 = arith.constant dense<0.000000e+00> : vector<16x128xf32>
    %448 = tpu.matmul %446, %447, %cst_212 {dimension_numbers = #tpu.dot_dimension_numbers<[1], [0], [0], [1], [0, 0, 1, 1], [], []>} : vector<16x128xbf16>, vector<128x128xbf16>, vector<16x128xf32> -> vector<16x128xf32>
    %c0_213 = arith.constant 0 : index
    %c0_214 = arith.constant 0 : index
    %449 = vector.load %arg25[%c0_213, %c0_214] : memref<1x128xf32, #tpu.memory_space<vmem>>, vector<1x128xf32>
    %450 = vector.broadcast %449 : vector<1x128xf32> to vector<16x128xf32>
    %451 = arith.addf %448, %450 : vector<16x128xf32>
    %452 = arith.negf %451 : vector<16x128xf32>
    %453 = math.exp %452 : vector<16x128xf32>
    %cst_215 = arith.constant 1.000000e+00 : f32
    %454 = vector.broadcast %cst_215 : f32 to vector<16x128xf32>
    %455 = arith.addf %454, %453 : vector<16x128xf32>
    %456 = arith.divf %454, %455 : vector<16x128xf32>
    %457 = arith.mulf %451, %456 : vector<16x128xf32>
    %c17_216 = arith.constant 17 : index
    %c0_217 = arith.constant 0 : index
    %458 = vector.load %arg37[%c17_216, %c0_217] : memref<290x128xf32, #tpu.memory_space<vmem>>, vector<16x128xf32>
    tpu.vector_store %arg37[%c17_216, %c0_217], %457 {strides = array<i32>} : memref<290x128xf32, #tpu.memory_space<vmem>>, vector<16x128xf32>,
    %459 = tpu.iota {dimensions = array<i32: 0>} : vector<16x1xi32>
    %c3_i32_218 = arith.constant 3 : i32
    %460 = vector.broadcast %c3_i32_218 : i32 to vector<16x1xi32>
    %461 = arith.andi %459, %460 : vector<16x1xi32>
    %c2_i32 = arith.constant 2 : i32
    %462 = vector.broadcast %c2_i32 : i32 to vector<16x1xi32>
    %463 = arith.shrsi %459, %462 : vector<16x1xi32>
    %c1_i32_219 = arith.constant 1 : i32
    %464 = vector.broadcast %c1_i32_219 : i32 to vector<16x1xi32>
    %465 = arith.cmpi sge, %463, %464 : vector<16x1xi32>
    %c2_i32_220 = arith.constant 2 : i32
    %466 = vector.broadcast %c2_i32_220 : i32 to vector<16x1xi32>
    %467 = arith.cmpi sle, %463, %466 : vector<16x1xi32>
    %c1_i32_221 = arith.constant 1 : i32
    %468 = vector.broadcast %c1_i32_221 : i32 to vector<16x1xi32>
    %469 = arith.cmpi sge, %461, %468 : vector<16x1xi32>
    %c2_i32_222 = arith.constant 2 : i32
    %470 = vector.broadcast %c2_i32_222 : i32 to vector<16x1xi32>
    %471 = arith.cmpi sle, %461, %470 : vector<16x1xi32>
    %cst_223 = arith.constant 0.000000e+00 : f32
    %472 = vector.broadcast %cst_223 : f32 to vector<16x128xf32>
    %c12 = arith.constant 12 : index
    %c0_224 = arith.constant 0 : index
    %473 = vector.load %arg37[%c12, %c0_224] : memref<290x128xf32, #tpu.memory_space<vmem>>, vector<16x128xf32>
    %474 = arith.andi %465, %469 : vector<16x1xi1>
    %cst_225 = arith.constant 0.000000e+00 : f32
    %475 = vector.shape_cast %474 : vector<16x1xi1> to vector<16x1xi1>
    %476 = vector.broadcast %475 : vector<16x1xi1> to vector<16x128xi1>
    %477 = vector.broadcast %cst_225 : f32 to vector<16x128xf32>
    %478 = arith.select %476, %473, %477 : vector<16x128xi1>, vector<16x128xf32>
    %c0_226 = arith.constant 0 : index
    %c0_227 = arith.constant 0 : index
    %479 = vector.load %arg26[%c0_226, %c0_227] : memref<9x128xf32, #tpu.memory_space<vmem>>, vector<1x128xf32>
    %480 = vector.shape_cast %479 : vector<1x128xf32> to vector<128xf32>
    %481 = vector.shape_cast %480 : vector<128xf32> to vector<1x128xf32>
    %482 = vector.broadcast %481 : vector<1x128xf32> to vector<16x128xf32>
    %483 = arith.mulf %478, %482 : vector<16x128xf32>
    %484 = arith.addf %472, %483 : vector<16x128xf32>
    %c13 = arith.constant 13 : index
    %c0_228 = arith.constant 0 : index
    %485 = vector.load %arg37[%c13, %c0_228] : memref<290x128xf32, #tpu.memory_space<vmem>>, vector<16x128xf32>
    %cst_229 = arith.constant 0.000000e+00 : f32
    %486 = vector.shape_cast %465 : vector<16x1xi1> to vector<16x1xi1>
    %487 = vector.broadcast %486 : vector<16x1xi1> to vector<16x128xi1>
    %488 = vector.broadcast %cst_229 : f32 to vector<16x128xf32>
    %489 = arith.select %487, %485, %488 : vector<16x128xi1>, vector<16x128xf32>
    %c1_230 = arith.constant 1 : index
    %c0_231 = arith.constant 0 : index
    %490 = vector.load %arg26[%c1_230, %c0_231] : memref<9x128xf32, #tpu.memory_space<vmem>>, vector<1x128xf32>
    %491 = vector.shape_cast %490 : vector<1x128xf32> to vector<128xf32>
    %492 = vector.shape_cast %491 : vector<128xf32> to vector<1x128xf32>
    %493 = vector.broadcast %492 : vector<1x128xf32> to vector<16x128xf32>
    %494 = arith.mulf %489, %493 : vector<16x128xf32>
    %495 = arith.addf %484, %494 : vector<16x128xf32>
    %c14 = arith.constant 14 : index
    %c0_232 = arith.constant 0 : index
    %496 = vector.load %arg37[%c14, %c0_232] : memref<290x128xf32, #tpu.memory_space<vmem>>, vector<16x128xf32>
    %497 = arith.andi %465, %471 : vector<16x1xi1>
    %cst_233 = arith.constant 0.000000e+00 : f32
    %498 = vector.shape_cast %497 : vector<16x1xi1> to vector<16x1xi1>
    %499 = vector.broadcast %498 : vector<16x1xi1> to vector<16x128xi1>
    %500 = vector.broadcast %cst_233 : f32 to vector<16x128xf32>
    %501 = arith.select %499, %496, %500 : vector<16x128xi1>, vector<16x128xf32>
    %c2_234 = arith.constant 2 : index
    %c0_235 = arith.constant 0 : index
    %502 = vector.load %arg26[%c2_234, %c0_235] : memref<9x128xf32, #tpu.memory_space<vmem>>, vector<1x128xf32>
    %503 = vector.shape_cast %502 : vector<1x128xf32> to vector<128xf32>
    %504 = vector.shape_cast %503 : vector<128xf32> to vector<1x128xf32>
    %505 = vector.broadcast %504 : vector<1x128xf32> to vector<16x128xf32>
    %506 = arith.mulf %501, %505 : vector<16x128xf32>
    %507 = arith.addf %495, %506 : vector<16x128xf32>
    %c16_236 = arith.constant 16 : index
    %c0_237 = arith.constant 0 : index
    %508 = vector.load %arg37[%c16_236, %c0_237] : memref<290x128xf32, #tpu.memory_space<vmem>>, vector<16x128xf32>
    %cst_238 = arith.constant 0.000000e+00 : f32
    %509 = vector.shape_cast %469 : vector<16x1xi1> to vector<16x1xi1>
    %510 = vector.broadcast %509 : vector<16x1xi1> to vector<16x128xi1>
    %511 = vector.broadcast %cst_238 : f32 to vector<16x128xf32>
    %512 = arith.select %510, %508, %511 : vector<16x128xi1>, vector<16x128xf32>
    %c3_239 = arith.constant 3 : index
    %c0_240 = arith.constant 0 : index
    %513 = vector.load %arg26[%c3_239, %c0_240] : memref<9x128xf32, #tpu.memory_space<vmem>>, vector<1x128xf32>
    %514 = vector.shape_cast %513 : vector<1x128xf32> to vector<128xf32>
    %515 = vector.shape_cast %514 : vector<128xf32> to vector<1x128xf32>
    %516 = vector.broadcast %515 : vector<1x128xf32> to vector<16x128xf32>
    %517 = arith.mulf %512, %516 : vector<16x128xf32>
    %518 = arith.addf %507, %517 : vector<16x128xf32>
    %c17_241 = arith.constant 17 : index
    %c0_242 = arith.constant 0 : index
    %519 = vector.load %arg37[%c17_241, %c0_242] : memref<290x128xf32, #tpu.memory_space<vmem>>, vector<16x128xf32>
    %c4_243 = arith.constant 4 : index
    %c0_244 = arith.constant 0 : index
    %520 = vector.load %arg26[%c4_243, %c0_244] : memref<9x128xf32, #tpu.memory_space<vmem>>, vector<1x128xf32>
    %521 = vector.shape_cast %520 : vector<1x128xf32> to vector<128xf32>
    %522 = vector.shape_cast %521 : vector<128xf32> to vector<1x128xf32>
    %523 = vector.broadcast %522 : vector<1x128xf32> to vector<16x128xf32>
    %524 = arith.mulf %519, %523 : vector<16x128xf32>
    %525 = arith.addf %518, %524 : vector<16x128xf32>
    %c18_245 = arith.constant 18 : index
    %c0_246 = arith.constant 0 : index
    %526 = vector.load %arg37[%c18_245, %c0_246] : memref<290x128xf32, #tpu.memory_space<vmem>>, vector<16x128xf32>
    %cst_247 = arith.constant 0.000000e+00 : f32
    %527 = vector.shape_cast %471 : vector<16x1xi1> to vector<16x1xi1>
    %528 = vector.broadcast %527 : vector<16x1xi1> to vector<16x128xi1>
    %529 = vector.broadcast %cst_247 : f32 to vector<16x128xf32>
    %530 = arith.select %528, %526, %529 : vector<16x128xi1>, vector<16x128xf32>
    %c5_248 = arith.constant 5 : index
    %c0_249 = arith.constant 0 : index
    %531 = vector.load %arg26[%c5_248, %c0_249] : memref<9x128xf32, #tpu.memory_space<vmem>>, vector<1x128xf32>
    %532 = vector.shape_cast %531 : vector<1x128xf32> to vector<128xf32>
    %533 = vector.shape_cast %532 : vector<128xf32> to vector<1x128xf32>
    %534 = vector.broadcast %533 : vector<1x128xf32> to vector<16x128xf32>
    %535 = arith.mulf %530, %534 : vector<16x128xf32>
    %536 = arith.addf %525, %535 : vector<16x128xf32>
    %c20 = arith.constant 20 : index
    %c0_250 = arith.constant 0 : index
    %537 = vector.load %arg37[%c20, %c0_250] : memref<290x128xf32, #tpu.memory_space<vmem>>, vector<16x128xf32>
    %538 = arith.andi %467, %469 : vector<16x1xi1>
    %cst_251 = arith.constant 0.000000e+00 : f32
    %539 = vector.shape_cast %538 : vector<16x1xi1> to vector<16x1xi1>
    %540 = vector.broadcast %539 : vector<16x1xi1> to vector<16x128xi1>
    %541 = vector.broadcast %cst_251 : f32 to vector<16x128xf32>
    %542 = arith.select %540, %537, %541 : vector<16x128xi1>, vector<16x128xf32>
    %c6_252 = arith.constant 6 : index
    %c0_253 = arith.constant 0 : index
    %543 = vector.load %arg26[%c6_252, %c0_253] : memref<9x128xf32, #tpu.memory_space<vmem>>, vector<1x128xf32>
    %544 = vector.shape_cast %543 : vector<1x128xf32> to vector<128xf32>
    %545 = vector.shape_cast %544 : vector<128xf32> to vector<1x128xf32>
    %546 = vector.broadcast %545 : vector<1x128xf32> to vector<16x128xf32>
    %547 = arith.mulf %542, %546 : vector<16x128xf32>
    %548 = arith.addf %536, %547 : vector<16x128xf32>
    %c21 = arith.constant 21 : index
    %c0_254 = arith.constant 0 : index
    %549 = vector.load %arg37[%c21, %c0_254] : memref<290x128xf32, #tpu.memory_space<vmem>>, vector<16x128xf32>
    %cst_255 = arith.constant 0.000000e+00 : f32
    %550 = vector.shape_cast %467 : vector<16x1xi1> to vector<16x1xi1>
    %551 = vector.broadcast %550 : vector<16x1xi1> to vector<16x128xi1>
    %552 = vector.broadcast %cst_255 : f32 to vector<16x128xf32>
    %553 = arith.select %551, %549, %552 : vector<16x128xi1>, vector<16x128xf32>
    %c7_256 = arith.constant 7 : index
    %c0_257 = arith.constant 0 : index
    %554 = vector.load %arg26[%c7_256, %c0_257] : memref<9x128xf32, #tpu.memory_space<vmem>>, vector<1x128xf32>
    %555 = vector.shape_cast %554 : vector<1x128xf32> to vector<128xf32>
    %556 = vector.shape_cast %555 : vector<128xf32> to vector<1x128xf32>
    %557 = vector.broadcast %556 : vector<1x128xf32> to vector<16x128xf32>
    %558 = arith.mulf %553, %557 : vector<16x128xf32>
    %559 = arith.addf %548, %558 : vector<16x128xf32>
    %c22 = arith.constant 22 : index
    %c0_258 = arith.constant 0 : index
    %560 = vector.load %arg37[%c22, %c0_258] : memref<290x128xf32, #tpu.memory_space<vmem>>, vector<16x128xf32>
    %561 = arith.andi %467, %471 : vector<16x1xi1>
    %cst_259 = arith.constant 0.000000e+00 : f32
    %562 = vector.shape_cast %561 : vector<16x1xi1> to vector<16x1xi1>
    %563 = vector.broadcast %562 : vector<16x1xi1> to vector<16x128xi1>
    %564 = vector.broadcast %cst_259 : f32 to vector<16x128xf32>
    %565 = arith.select %563, %560, %564 : vector<16x128xi1>, vector<16x128xf32>
    %c8_260 = arith.constant 8 : index
    %c0_261 = arith.constant 0 : index
    %566 = vector.load %arg26[%c8_260, %c0_261] : memref<9x128xf32, #tpu.memory_space<vmem>>, vector<1x128xf32>
    %567 = vector.shape_cast %566 : vector<1x128xf32> to vector<128xf32>
    %568 = vector.shape_cast %567 : vector<128xf32> to vector<1x128xf32>
    %569 = vector.broadcast %568 : vector<1x128xf32> to vector<16x128xf32>
    %570 = arith.mulf %565, %569 : vector<16x128xf32>
    %571 = arith.addf %559, %570 : vector<16x128xf32>
    %c0_262 = arith.constant 0 : index
    %c0_263 = arith.constant 0 : index
    %572 = vector.load %arg27[%c0_262, %c0_263] : memref<1x128xf32, #tpu.memory_space<vmem>>, vector<1x128xf32>
    %573 = vector.broadcast %572 : vector<1x128xf32> to vector<16x128xf32>
    %574 = arith.addf %571, %573 : vector<16x128xf32>
    %575 = arith.negf %574 : vector<16x128xf32>
    %576 = math.exp %575 : vector<16x128xf32>
    %cst_264 = arith.constant 1.000000e+00 : f32
    %577 = vector.broadcast %cst_264 : f32 to vector<16x128xf32>
    %578 = arith.addf %577, %576 : vector<16x128xf32>
    %579 = arith.divf %577, %578 : vector<16x128xf32>
    %580 = arith.mulf %574, %579 : vector<16x128xf32>
    %cst_265 = arith.constant dense<0.000000e+00> : vector<128xf32>
    %581 = vector.multi_reduction <add>, %580, %cst_265 [0] : vector<16x128xf32> to vector<128xf32>
    %582 = vector.shape_cast %581 : vector<128xf32> to vector<1x128xf32>
    %cst_266 = arith.constant 1.600000e+01 : f32
    %583 = vector.broadcast %cst_266 : f32 to vector<1x128xf32>
    %584 = arith.divf %582, %583 : vector<1x128xf32>
    %585 = arith.truncf %584 : vector<1x128xf32> to vector<1x128xbf16>
    %c0_267 = arith.constant 0 : index
    %c0_268 = arith.constant 0 : index
    %586 = vector.load %arg28[%c0_267, %c0_268] : memref<128x128xbf16, #tpu.memory_space<vmem>>, vector<128x128xbf16>
    %cst_269 = arith.constant dense<0.000000e+00> : vector<1x128xf32>
    %587 = tpu.matmul %585, %586, %cst_269 {dimension_numbers = #tpu.dot_dimension_numbers<[1], [0], [0], [1], [0, 0, 1, 1], [], []>} : vector<1x128xbf16>, vector<128x128xbf16>, vector<1x128xf32> -> vector<1x128xf32>
    %c0_270 = arith.constant 0 : index
    %c0_271 = arith.constant 0 : index
    %588 = vector.load %arg29[%c0_270, %c0_271] : memref<1x128xf32, #tpu.memory_space<vmem>>, vector<1x128xf32>
    %589 = arith.addf %587, %588 : vector<1x128xf32>
    %590 = arith.negf %589 : vector<1x128xf32>
    %591 = math.exp %590 : vector<1x128xf32>
    %cst_272 = arith.constant 1.000000e+00 : f32
    %592 = vector.broadcast %cst_272 : f32 to vector<1x128xf32>
    %593 = arith.addf %592, %591 : vector<1x128xf32>
    %594 = arith.divf %592, %593 : vector<1x128xf32>
    %595 = arith.mulf %589, %594 : vector<1x128xf32>
    %596 = arith.truncf %595 : vector<1x128xf32> to vector<1x128xbf16>
    %c0_273 = arith.constant 0 : index
    %c0_274 = arith.constant 0 : index
    %597 = vector.load %arg30[%c0_273, %c0_274] : memref<128x128xbf16, #tpu.memory_space<vmem>>, vector<128x128xbf16>
    %cst_275 = arith.constant dense<0.000000e+00> : vector<1x128xf32>
    %598 = tpu.matmul %596, %597, %cst_275 {dimension_numbers = #tpu.dot_dimension_numbers<[1], [0], [0], [1], [0, 0, 1, 1], [], []>} : vector<1x128xbf16>, vector<128x128xbf16>, vector<1x128xf32> -> vector<1x128xf32>
    %c0_276 = arith.constant 0 : index
    %c0_277 = arith.constant 0 : index
    %599 = vector.load %arg31[%c0_276, %c0_277] : memref<1x128xf32, #tpu.memory_space<vmem>>, vector<1x128xf32>
    %600 = arith.addf %598, %599 : vector<1x128xf32>
    %601 = arith.negf %600 : vector<1x128xf32>
    %602 = math.exp %601 : vector<1x128xf32>
    %cst_278 = arith.constant 1.000000e+00 : f32
    %603 = vector.broadcast %cst_278 : f32 to vector<1x128xf32>
    %604 = arith.addf %603, %602 : vector<1x128xf32>
    %605 = arith.divf %603, %604 : vector<1x128xf32>
    %606 = vector.broadcast %605 : vector<1x128xf32> to vector<16x128xf32>
    %607 = arith.mulf %580, %606 : vector<16x128xf32>
    %608 = arith.truncf %607 : vector<16x128xf32> to vector<16x128xbf16>
    %c0_279 = arith.constant 0 : index
    %c0_280 = arith.constant 0 : index
    %609 = vector.load %arg32[%c0_279, %c0_280] : memref<128x128xbf16, #tpu.memory_space<vmem>>, vector<128x128xbf16>
    %cst_281 = arith.constant dense<0.000000e+00> : vector<16x128xf32>
    %610 = tpu.matmul %608, %609, %cst_281 {dimension_numbers = #tpu.dot_dimension_numbers<[1], [0], [0], [1], [0, 0, 1, 1], [], []>} : vector<16x128xbf16>, vector<128x128xbf16>, vector<16x128xf32> -> vector<16x128xf32>
    %c0_282 = arith.constant 0 : index
    %c0_283 = arith.constant 0 : index
    %611 = vector.load %arg33[%c0_282, %c0_283] : memref<1x128xf32, #tpu.memory_space<vmem>>, vector<1x128xf32>
    %612 = vector.broadcast %611 : vector<1x128xf32> to vector<16x128xf32>
    %613 = arith.addf %610, %612 : vector<16x128xf32>
    %614 = arith.addf %613, %445 : vector<16x128xf32>
    %615 = arith.truncf %614 : vector<16x128xf32> to vector<16x128xbf16>
    %c0_284 = arith.constant 0 : index
    %c0_285 = arith.constant 0 : index
    %616 = vector.load %arg34[%c0_284, %c0_285] : memref<128x128xbf16, #tpu.memory_space<vmem>>, vector<128x128xbf16>
    %cst_286 = arith.constant dense<0.000000e+00> : vector<16x128xf32>
    %617 = tpu.matmul %615, %616, %cst_286 {dimension_numbers = #tpu.dot_dimension_numbers<[1], [0], [0], [1], [0, 0, 1, 1], [], []>} : vector<16x128xbf16>, vector<128x128xbf16>, vector<16x128xf32> -> vector<16x128xf32>
    %c0_287 = arith.constant 0 : index
    %c0_288 = arith.constant 0 : index
    %618 = vector.load %arg35[%c0_287, %c0_288] : memref<1x128xf32, #tpu.memory_space<vmem>>, vector<1x128xf32>
    %619 = vector.broadcast %618 : vector<1x128xf32> to vector<16x128xf32>
    %620 = arith.addf %617, %619 : vector<16x128xf32>
    %621 = arith.negf %620 : vector<16x128xf32>
    %622 = math.exp %621 : vector<16x128xf32>
    %cst_289 = arith.constant 1.000000e+00 : f32
    %623 = vector.broadcast %cst_289 : f32 to vector<16x128xf32>
    %624 = arith.addf %623, %622 : vector<16x128xf32>
    %625 = arith.divf %623, %624 : vector<16x128xf32>
    %626 = arith.mulf %620, %625 : vector<16x128xf32>
    %c0_290 = arith.constant 0 : index
    %c0_291 = arith.constant 0 : index
    %627 = vector.load %arg36[%c0_290, %c0_291] : memref<16x128xf32, #tpu.memory_space<vmem>>, vector<16x128xf32>
    tpu.vector_store %arg36[%c0_290, %c0_291], %626 {strides = array<i32>} : memref<16x128xf32, #tpu.memory_space<vmem>>, vector<16x128xf32>,
    return
  }
  func.func @transform_0(%arg0: i32) -> (i32, i32) {
    %c0_i32 = arith.constant 0 : i32
    %c0_i32_0 = arith.constant 0 : i32
    return %arg0, %c0_i32 : i32, i32
  }
  func.func @transform_1(%arg0: i32) -> (i32, i32, i32) {
    %c0_i32 = arith.constant 0 : i32
    %c0_i32_0 = arith.constant 0 : i32
    %c0_i32_1 = arith.constant 0 : i32
    %c0_i32_2 = arith.constant 0 : i32
    return %c0_i32, %c0_i32_0, %c0_i32_1 : i32, i32, i32
  }
  func.func @transform_2(%arg0: i32) -> (i32, i32) {
    %c0_i32 = arith.constant 0 : i32
    %c0_i32_0 = arith.constant 0 : i32
    %c0_i32_1 = arith.constant 0 : i32
    return %c0_i32, %c0_i32_0 : i32, i32
  }
  func.func @transform_3(%arg0: i32) -> (i32, i32) {
    %c0_i32 = arith.constant 0 : i32
    %c0_i32_0 = arith.constant 0 : i32
    %c0_i32_1 = arith.constant 0 : i32
    return %c0_i32, %c0_i32_0 : i32, i32
  }
  func.func @transform_4(%arg0: i32) -> (i32, i32) {
    %c0_i32 = arith.constant 0 : i32
    %c0_i32_0 = arith.constant 0 : i32
    %c0_i32_1 = arith.constant 0 : i32
    return %c0_i32, %c0_i32_0 : i32, i32
  }
  func.func @transform_5(%arg0: i32) -> (i32, i32) {
    %c0_i32 = arith.constant 0 : i32
    %c0_i32_0 = arith.constant 0 : i32
    %c0_i32_1 = arith.constant 0 : i32
    return %c0_i32, %c0_i32_0 : i32, i32
  }
  func.func @transform_6(%arg0: i32) -> (i32, i32) {
    %c0_i32 = arith.constant 0 : i32
    %c0_i32_0 = arith.constant 0 : i32
    %c0_i32_1 = arith.constant 0 : i32
    return %c0_i32, %c0_i32_0 : i32, i32
  }
  func.func @transform_7(%arg0: i32) -> (i32, i32) {
    %c0_i32 = arith.constant 0 : i32
    %c0_i32_0 = arith.constant 0 : i32
    %c0_i32_1 = arith.constant 0 : i32
    return %c0_i32, %c0_i32_0 : i32, i32
  }
  func.func @transform_8(%arg0: i32) -> (i32, i32) {
    %c0_i32 = arith.constant 0 : i32
    %c0_i32_0 = arith.constant 0 : i32
    %c0_i32_1 = arith.constant 0 : i32
    return %c0_i32, %c0_i32_0 : i32, i32
  }
  func.func @transform_9(%arg0: i32) -> (i32, i32) {
    %c0_i32 = arith.constant 0 : i32
    %c0_i32_0 = arith.constant 0 : i32
    %c0_i32_1 = arith.constant 0 : i32
    return %c0_i32, %c0_i32_0 : i32, i32
  }
  func.func @transform_10(%arg0: i32) -> (i32, i32) {
    %c0_i32 = arith.constant 0 : i32
    %c0_i32_0 = arith.constant 0 : i32
    %c0_i32_1 = arith.constant 0 : i32
    return %c0_i32, %c0_i32_0 : i32, i32
  }
  func.func @transform_11(%arg0: i32) -> (i32, i32) {
    %c0_i32 = arith.constant 0 : i32
    %c0_i32_0 = arith.constant 0 : i32
    %c0_i32_1 = arith.constant 0 : i32
    return %c0_i32, %c0_i32_0 : i32, i32
  }
  func.func @transform_12(%arg0: i32) -> (i32, i32) {
    %c0_i32 = arith.constant 0 : i32
    %c0_i32_0 = arith.constant 0 : i32
    %c0_i32_1 = arith.constant 0 : i32
    return %c0_i32, %c0_i32_0 : i32, i32
  }
  func.func @transform_13(%arg0: i32) -> (i32, i32) {
    %c0_i32 = arith.constant 0 : i32
    %c0_i32_0 = arith.constant 0 : i32
    %c0_i32_1 = arith.constant 0 : i32
    return %c0_i32, %c0_i32_0 : i32, i32
  }
  func.func @transform_14(%arg0: i32) -> (i32, i32) {
    %c0_i32 = arith.constant 0 : i32
    %c0_i32_0 = arith.constant 0 : i32
    %c0_i32_1 = arith.constant 0 : i32
    return %c0_i32, %c0_i32_0 : i32, i32
  }
  func.func @transform_15(%arg0: i32) -> (i32, i32) {
    %c0_i32 = arith.constant 0 : i32
    %c0_i32_0 = arith.constant 0 : i32
    %c0_i32_1 = arith.constant 0 : i32
    return %c0_i32, %c0_i32_0 : i32, i32
  }
  func.func @transform_16(%arg0: i32) -> (i32, i32) {
    %c0_i32 = arith.constant 0 : i32
    %c0_i32_0 = arith.constant 0 : i32
    %c0_i32_1 = arith.constant 0 : i32
    return %c0_i32, %c0_i32_0 : i32, i32
  }
  func.func @transform_17(%arg0: i32) -> (i32, i32) {
    %c0_i32 = arith.constant 0 : i32
    %c0_i32_0 = arith.constant 0 : i32
    %c0_i32_1 = arith.constant 0 : i32
    return %c0_i32, %c0_i32_0 : i32, i32
  }
  func.func @transform_18(%arg0: i32) -> (i32, i32) {
    %c0_i32 = arith.constant 0 : i32
    %c0_i32_0 = arith.constant 0 : i32
    %c0_i32_1 = arith.constant 0 : i32
    return %c0_i32, %c0_i32_0 : i32, i32
  }
  func.func @transform_19(%arg0: i32) -> (i32, i32) {
    %c0_i32 = arith.constant 0 : i32
    %c0_i32_0 = arith.constant 0 : i32
    %c0_i32_1 = arith.constant 0 : i32
    return %c0_i32, %c0_i32_0 : i32, i32
  }
  func.func @transform_20(%arg0: i32) -> (i32, i32) {
    %c0_i32 = arith.constant 0 : i32
    %c0_i32_0 = arith.constant 0 : i32
    %c0_i32_1 = arith.constant 0 : i32
    return %c0_i32, %c0_i32_0 : i32, i32
  }
  func.func @transform_21(%arg0: i32) -> (i32, i32) {
    %c0_i32 = arith.constant 0 : i32
    %c0_i32_0 = arith.constant 0 : i32
    %c0_i32_1 = arith.constant 0 : i32
    return %c0_i32, %c0_i32_0 : i32, i32
  }
  func.func @transform_22(%arg0: i32) -> (i32, i32) {
    %c0_i32 = arith.constant 0 : i32
    %c0_i32_0 = arith.constant 0 : i32
    %c0_i32_1 = arith.constant 0 : i32
    return %c0_i32, %c0_i32_0 : i32, i32
  }
  func.func @transform_23(%arg0: i32) -> (i32, i32) {
    %c0_i32 = arith.constant 0 : i32
    %c0_i32_0 = arith.constant 0 : i32
    %c0_i32_1 = arith.constant 0 : i32
    return %c0_i32, %c0_i32_0 : i32, i32
  }
  func.func @transform_24(%arg0: i32) -> (i32, i32) {
    %c0_i32 = arith.constant 0 : i32
    %c0_i32_0 = arith.constant 0 : i32
    %c0_i32_1 = arith.constant 0 : i32
    return %c0_i32, %c0_i32_0 : i32, i32
  }
  func.func @transform_25(%arg0: i32) -> (i32, i32) {
    %c0_i32 = arith.constant 0 : i32
    %c0_i32_0 = arith.constant 0 : i32
    %c0_i32_1 = arith.constant 0 : i32
    return %c0_i32, %c0_i32_0 : i32, i32
  }
  func.func @transform_26(%arg0: i32) -> (i32, i32) {
    %c0_i32 = arith.constant 0 : i32
    %c0_i32_0 = arith.constant 0 : i32
    %c0_i32_1 = arith.constant 0 : i32
    return %c0_i32, %c0_i32_0 : i32, i32
  }
  func.func @transform_27(%arg0: i32) -> (i32, i32) {
    %c0_i32 = arith.constant 0 : i32
    %c0_i32_0 = arith.constant 0 : i32
    %c0_i32_1 = arith.constant 0 : i32
    return %c0_i32, %c0_i32_0 : i32, i32
  }
  func.func @transform_28(%arg0: i32) -> (i32, i32) {
    %c0_i32 = arith.constant 0 : i32
    %c0_i32_0 = arith.constant 0 : i32
    %c0_i32_1 = arith.constant 0 : i32
    return %c0_i32, %c0_i32_0 : i32, i32
  }
  func.func @transform_29(%arg0: i32) -> (i32, i32) {
    %c0_i32 = arith.constant 0 : i32
    %c0_i32_0 = arith.constant 0 : i32
    %c0_i32_1 = arith.constant 0 : i32
    return %c0_i32, %c0_i32_0 : i32, i32
  }
  func.func @transform_30(%arg0: i32) -> (i32, i32) {
    %c0_i32 = arith.constant 0 : i32
    %c0_i32_0 = arith.constant 0 : i32
    %c0_i32_1 = arith.constant 0 : i32
    return %c0_i32, %c0_i32_0 : i32, i32
  }
  func.func @transform_31(%arg0: i32) -> (i32, i32) {
    %c0_i32 = arith.constant 0 : i32
    %c0_i32_0 = arith.constant 0 : i32
    %c0_i32_1 = arith.constant 0 : i32
    return %c0_i32, %c0_i32_0 : i32, i32
  }
  func.func @transform_32(%arg0: i32) -> (i32, i32) {
    %c0_i32 = arith.constant 0 : i32
    %c0_i32_0 = arith.constant 0 : i32
    %c0_i32_1 = arith.constant 0 : i32
    return %c0_i32, %c0_i32_0 : i32, i32
  }
  func.func @transform_33(%arg0: i32) -> (i32, i32) {
    %c0_i32 = arith.constant 0 : i32
    %c0_i32_0 = arith.constant 0 : i32
    %c0_i32_1 = arith.constant 0 : i32
    return %c0_i32, %c0_i32_0 : i32, i32
  }
  func.func @transform_34(%arg0: i32) -> (i32, i32) {
    %c0_i32 = arith.constant 0 : i32
    %c0_i32_0 = arith.constant 0 : i32
    %c0_i32_1 = arith.constant 0 : i32
    return %c0_i32, %c0_i32_0 : i32, i32
  }
  func.func @transform_35(%arg0: i32) -> (i32, i32) {
    %c0_i32 = arith.constant 0 : i32
    %c0_i32_0 = arith.constant 0 : i32
    return %arg0, %c0_i32 : i32, i32
  }
}

</mosaic_0001>

<llo_original>
// kernel: _lambda_.1
$region0: #{_lambda_.1}
  #allocation0 [shape = 'u32[]', space=smem, size = 0x4, offset = 0x4, fixed_abs, tag = 'smem constant byte address 0x4 - core index']
  #allocation1 [shape = 'u32[144,128]{1,0:T(1,128)}', space=vmem, size = 0x12000, scoped, tag = 'internal scratch']
  #allocation2 [shape = 'f32[290,128]{1,0:T(8,128)}', space=vmem, size = 0x25000, scoped, tag = 'scratch operand']
  %s0 = inlined_call_operand.smem [shape: u32[36], index: -1, kind: input, shape index: {}]
  %s1 = sld [smem:[%s0]]
  %s2 = scalar_lea.smem %s0, 1
  %s3 = sld [smem:[%s2]]
  %s4 = scalar_lea.smem %s0, 2
  %s5 = sld [smem:[%s4]]
  %s6 = scalar_lea.smem %s0, 3
  %s7 = sld [smem:[%s6]]
  %s8 = scalar_lea.smem %s0, 4
  %s9 = sld [smem:[%s8]]
  %s10 = scalar_lea.smem %s0, 5
  %s11 = sld [smem:[%s10]]
  %s12 = scalar_lea.smem %s0, 6
  %s13 = sld [smem:[%s12]]
  %s14 = scalar_lea.smem %s0, 7
  %s15 = sld [smem:[%s14]]
  %s16 = scalar_lea.smem %s0, 8
  %s17 = sld [smem:[%s16]]
  %s18 = scalar_lea.smem %s0, 9
  %s19 = sld [smem:[%s18]]
  %s20 = scalar_lea.smem %s0, 10
  %s21 = sld [smem:[%s20]]
  %s22 = scalar_lea.smem %s0, 11
  %s23 = sld [smem:[%s22]]
  %s24 = scalar_lea.smem %s0, 12
  %s25 = sld [smem:[%s24]]
  %s26 = scalar_lea.smem %s0, 13
  %s27 = sld [smem:[%s26]]
  %s28 = scalar_lea.smem %s0, 14
  %s29 = sld [smem:[%s28]]
  %s30 = scalar_lea.smem %s0, 15
  %s31 = sld [smem:[%s30]]
  %s32 = scalar_lea.smem %s0, 16
  %s33 = sld [smem:[%s32]]
  %s34 = scalar_lea.smem %s0, 17
  %s35 = sld [smem:[%s34]]
  %s36 = scalar_lea.smem %s0, 18
  %s37 = sld [smem:[%s36]]
  %s38 = scalar_lea.smem %s0, 19
  %s39 = sld [smem:[%s38]]
  %s40 = scalar_lea.smem %s0, 20
  %s41 = sld [smem:[%s40]]
  %s42 = scalar_lea.smem %s0, 21
  %s43 = sld [smem:[%s42]]
  %s44 = scalar_lea.smem %s0, 22
  %s45 = sld [smem:[%s44]]
  %s46 = scalar_lea.smem %s0, 23
  %s47 = sld [smem:[%s46]]
  %s48 = scalar_lea.smem %s0, 24
  %s49 = sld [smem:[%s48]]
  %s50 = scalar_lea.smem %s0, 25
  %s51 = sld [smem:[%s50]]
  %s52 = scalar_lea.smem %s0, 26
  %s53 = sld [smem:[%s52]]
  %s54 = scalar_lea.smem %s0, 27
  %s55 = sld [smem:[%s54]]
  %s56 = scalar_lea.smem %s0, 28
  %s57 = sld [smem:[%s56]]
  %s58 = scalar_lea.smem %s0, 29
  %s59 = sld [smem:[%s58]]
  %s60 = scalar_lea.smem %s0, 30
  %s61 = sld [smem:[%s60]]
  %s62 = scalar_lea.smem %s0, 31
  %s63 = sld [smem:[%s62]]
  %s64 = scalar_lea.smem %s0, 32
  %s65 = sld [smem:[%s64]]
  %s66 = scalar_lea.smem %s0, 33
  %s67 = sld [smem:[%s66]]
  %s68 = scalar_lea.smem %s0, 34
  %s69 = sld [smem:[%s68]]
  %s70 = scalar_lea.smem %s0, 35
  %s71 = sld [smem:[%s70]]
  %s72 = sld [smem:[#allocation0]]
  $region173: #{_lambda_.1} parent=0
    _
  %s74 = ssub.s32 1, %s72
  %s75 = scalar_select 0, %s74, %s72
  $region1: #{_lambda_.1} parent=0
    #allocation3 [shape = 'u8[16384]{0}', space=vmem, size = 0x4000, scoped, tag = 'output window, operand 0']
    #allocation4 [shape = 's32[2]{0}', space=sflag, size = 0x8, scoped, tag = 'scoped memory for _lambda_.1']
    %76 = vsyncpa [#allocation4], 0
    %s77 = scalar_lea.sflag [#allocation4], 1
    %78 = vsyncpa %s77, 0
    loop: start=0, step=1, limit=4
    $region2: #{_lambda_.1} parent=1 // loop_pre_header
      _
    $region3: #{_lambda_.1} parent=1 // loop_header
      %s80 = sphi 0, %s84
      %p81 = scmp.ge.s32.totalorder %s80, 4
      %s90 = sphi 0, %s92
      %s93 = sphi 0, %s90
      %s94 = sphi 0, %s93
      %s110 = sphi 0, %s94
      %s114 = sphi 0, %s114
      %s116 = sphi 0, %s114
      %s117 = sphi 0, %s116
      %s131 = sphi 0, %s117
      %s135 = sphi 0, %s135
      %s137 = sphi 0, %s135
      %s138 = sphi 0, %s137
      %s152 = sphi 0, %s138
      %s156 = sphi 0, %s156
      %s158 = sphi 0, %s156
      %s159 = sphi 0, %s158
      %s173 = sphi 0, %s159
      %s177 = sphi 0, %s177
      %s179 = sphi 0, %s177
      %s180 = sphi 0, %s179
      %s194 = sphi 0, %s180
      %s198 = sphi 0, %s198
      %s200 = sphi 0, %s198
      %s201 = sphi 0, %s200
      %s215 = sphi 0, %s201
      %s219 = sphi 0, %s219
      %s221 = sphi 0, %s219
      %s222 = sphi 0, %s221
      %s236 = sphi 0, %s222
      %s240 = sphi 0, %s240
      %s242 = sphi 0, %s240
      %s243 = sphi 0, %s242
      %s257 = sphi 0, %s243
      %s261 = sphi 0, %s261
      %s263 = sphi 0, %s261
      %s264 = sphi 0, %s263
      %s278 = sphi 0, %s264
      %s282 = sphi 0, %s282
      %s284 = sphi 0, %s282
      %s285 = sphi 0, %s284
      %s299 = sphi 0, %s285
      %s303 = sphi 0, %s303
      %s305 = sphi 0, %s303
      %s306 = sphi 0, %s305
      %s320 = sphi 0, %s306
      %s324 = sphi 0, %s324
      %s326 = sphi 0, %s324
      %s327 = sphi 0, %s326
      %s341 = sphi 0, %s327
      %s345 = sphi 0, %s345
      %s347 = sphi 0, %s345
      %s348 = sphi 0, %s347
      %s362 = sphi 0, %s348
      %s366 = sphi 0, %s366
      %s368 = sphi 0, %s366
      %s369 = sphi 0, %s368
      %s383 = sphi 0, %s369
      %s387 = sphi 0, %s387
      %s389 = sphi 0, %s387
      %s390 = sphi 0, %s389
      %s404 = sphi 0, %s390
      %s408 = sphi 0, %s408
      %s410 = sphi 0, %s408
      %s411 = sphi 0, %s410
      %s425 = sphi 0, %s411
      %s429 = sphi 0, %s429
      %s431 = sphi 0, %s429
      %s432 = sphi 0, %s431
      %s446 = sphi 0, %s432
      %s450 = sphi 0, %s450
      %s452 = sphi 0, %s450
      %s453 = sphi 0, %s452
      %s467 = sphi 0, %s453
      %s471 = sphi 0, %s471
      %s473 = sphi 0, %s471
      %s474 = sphi 0, %s473
      %s488 = sphi 0, %s474
      %s492 = sphi 0, %s492
      %s494 = sphi 0, %s492
      %s495 = sphi 0, %s494
      %s509 = sphi 0, %s495
      %s513 = sphi 0, %s513
      %s515 = sphi 0, %s513
      %s516 = sphi 0, %s515
      %s530 = sphi 0, %s516
      %s534 = sphi 0, %s534
      %s536 = sphi 0, %s534
      %s537 = sphi 0, %s536
      %s551 = sphi 0, %s537
      %s555 = sphi 0, %s555
      %s557 = sphi 0, %s555
      %s558 = sphi 0, %s557
      %s572 = sphi 0, %s558
      %s576 = sphi 0, %s576
      %s578 = sphi 0, %s576
      %s579 = sphi 0, %s578
      %s593 = sphi 0, %s579
      %s597 = sphi 0, %s597
      %s599 = sphi 0, %s597
      %s600 = sphi 0, %s599
      %s614 = sphi 0, %s600
      %s618 = sphi 0, %s618
      %s620 = sphi 0, %s618
      %s621 = sphi 0, %s620
      %s635 = sphi 0, %s621
      %s639 = sphi 0, %s639
      %s641 = sphi 0, %s639
      %s642 = sphi 0, %s641
      %s656 = sphi 0, %s642
      %s660 = sphi 0, %s660
      %s662 = sphi 0, %s660
      %s663 = sphi 0, %s662
      %s677 = sphi 0, %s663
      %s681 = sphi 0, %s681
      %s683 = sphi 0, %s681
      %s684 = sphi 0, %s683
      %s698 = sphi 0, %s684
      %s702 = sphi 0, %s702
      %s704 = sphi 0, %s702
      %s705 = sphi 0, %s704
      %s719 = sphi 0, %s705
      %s723 = sphi 0, %s723
      %s725 = sphi 0, %s723
      %s726 = sphi 0, %s725
      %s740 = sphi 0, %s726
      %s744 = sphi 0, %s744
      %s746 = sphi 0, %s744
      %s747 = sphi 0, %s746
      %s761 = sphi 0, %s747
      %s765 = sphi 0, %s765
      %s767 = sphi 0, %s765
      %s768 = sphi 0, %s767
      %s782 = sphi 0, %s768
      %s786 = sphi 0, %s786
      %s788 = sphi 0, %s786
      %s789 = sphi 0, %s788
      %s803 = sphi 0, %s789
      %s807 = sphi 0, %s807
      %s809 = sphi 0, %s807
      %s810 = sphi 0, %s809
      %s824 = sphi 0, %s810
      %s830 = sphi 0, %s832
      %s833 = sphi 0, %s830
      %s834 = sphi 0, %s833
      %s850 = sphi 0, %s834
    $region4: #{_lambda_.1} parent=1 // loop_header_branch
      %83 = sbr.rel (%p81) target = $region8
    $region5: #{_lambda_.1} parent=1 // loop_body
      %s85 = ssub.s32 %s80, 1
      %s86 = ssub.s32 %s80, 2
      %s87 = sadd.s32 %s80, 1
      %s88 = ssub.s32 %s80, %s87
      %p89 = scmp.eq.s32.totalorder %s88, 0
      %s91 = sadd.s32 %s90, 1
      %s92 = scalar_select %p89, %s90, %s91
      %p95 = pneg %p89
      %p96 = scmp.eq.s32.totalorder %s80, 1
      %p97 = por %p95, %p96
      %p98 = scmp.ne.s32.totalorder %s90, %s93
      %p99 = scmp.eq.s32.totalorder %s80, 0
      %p100 = por %p98, %p99
      %p101 = scmp.ne.s32.totalorder %s90, %s93
      %p102 = scmp.eq.s32.totalorder %s85, 1
      %p103 = por %p101, %p102
      %p104 = scmp.ne.s32.totalorder %s93, %s94
      %p105 = scmp.eq.s32.totalorder %s85, 0
      %p106 = por %p104, %p105
      %p107 = scmp.ne.s32.totalorder %s93, %s94
      %p108 = scmp.eq.s32.totalorder %s86, 1
      %p109 = por %p107, %p108
      %p111 = scmp.ne.s32.totalorder %s94, %s110
      %p112 = scmp.eq.s32.totalorder %s86, 0
      %p113 = por %p111, %p112
      %s115 = sadd.s32 %s114, 1
      %p118 = scmp.eq.s32.totalorder %s80, 1
      %p119 = scmp.ne.s32.totalorder %s114, %s116
      %p120 = scmp.eq.s32.totalorder %s80, 0
      %p121 = por %p119, %p120
      %p122 = scmp.ne.s32.totalorder %s114, %s116
      %p123 = scmp.eq.s32.totalorder %s85, 1
      %p124 = por %p122, %p123
      %p125 = scmp.ne.s32.totalorder %s116, %s117
      %p126 = scmp.eq.s32.totalorder %s85, 0
      %p127 = por %p125, %p126
      %p128 = scmp.ne.s32.totalorder %s116, %s117
      %p129 = scmp.eq.s32.totalorder %s86, 1
      %p130 = por %p128, %p129
      %p132 = scmp.ne.s32.totalorder %s117, %s131
      %p133 = scmp.eq.s32.totalorder %s86, 0
      %p134 = por %p132, %p133
      %s136 = sadd.s32 %s135, 1
      %p139 = scmp.eq.s32.totalorder %s80, 1
      %p140 = scmp.ne.s32.totalorder %s135, %s137
      %p141 = scmp.eq.s32.totalorder %s80, 0
      %p142 = por %p140, %p141
      %p143 = scmp.ne.s32.totalorder %s135, %s137
      %p144 = scmp.eq.s32.totalorder %s85, 1
      %p145 = por %p143, %p144
      %p146 = scmp.ne.s32.totalorder %s137, %s138
      %p147 = scmp.eq.s32.totalorder %s85, 0
      %p148 = por %p146, %p147
      %p149 = scmp.ne.s32.totalorder %s137, %s138
      %p150 = scmp.eq.s32.totalorder %s86, 1
      %p151 = por %p149, %p150
      %p153 = scmp.ne.s32.totalorder %s138, %s152
      %p154 = scmp.eq.s32.totalorder %s86, 0
      %p155 = por %p153, %p154
      %s157 = sadd.s32 %s156, 1
      %p160 = scmp.eq.s32.totalorder %s80, 1
      %p161 = scmp.ne.s32.totalorder %s156, %s158
      %p162 = scmp.eq.s32.totalorder %s80, 0
      %p163 = por %p161, %p162
      %p164 = scmp.ne.s32.totalorder %s156, %s158
      %p165 = scmp.eq.s32.totalorder %s85, 1
      %p166 = por %p164, %p165
      %p167 = scmp.ne.s32.totalorder %s158, %s159
      %p168 = scmp.eq.s32.totalorder %s85, 0
      %p169 = por %p167, %p168
      %p170 = scmp.ne.s32.totalorder %s158, %s159
      %p171 = scmp.eq.s32.totalorder %s86, 1
      %p172 = por %p170, %p171
      %p174 = scmp.ne.s32.totalorder %s159, %s173
      %p175 = scmp.eq.s32.totalorder %s86, 0
      %p176 = por %p174, %p175
      %s178 = sadd.s32 %s177, 1
      %p181 = scmp.eq.s32.totalorder %s80, 1
      %p182 = scmp.ne.s32.totalorder %s177, %s179
      %p183 = scmp.eq.s32.totalorder %s80, 0
      %p184 = por %p182, %p183
      %p185 = scmp.ne.s32.totalorder %s177, %s179
      %p186 = scmp.eq.s32.totalorder %s85, 1
      %p187 = por %p185, %p186
      %p188 = scmp.ne.s32.totalorder %s179, %s180
      %p189 = scmp.eq.s32.totalorder %s85, 0
      %p190 = por %p188, %p189
      %p191 = scmp.ne.s32.totalorder %s179, %s180
      %p192 = scmp.eq.s32.totalorder %s86, 1
      %p193 = por %p191, %p192
      %p195 = scmp.ne.s32.totalorder %s180, %s194
      %p196 = scmp.eq.s32.totalorder %s86, 0
      %p197 = por %p195, %p196
      %s199 = sadd.s32 %s198, 1
      %p202 = scmp.eq.s32.totalorder %s80, 1
      %p203 = scmp.ne.s32.totalorder %s198, %s200
      %p204 = scmp.eq.s32.totalorder %s80, 0
      %p205 = por %p203, %p204
      %p206 = scmp.ne.s32.totalorder %s198, %s200
      %p207 = scmp.eq.s32.totalorder %s85, 1
      %p208 = por %p206, %p207
      %p209 = scmp.ne.s32.totalorder %s200, %s201
      %p210 = scmp.eq.s32.totalorder %s85, 0
      %p211 = por %p209, %p210
      %p212 = scmp.ne.s32.totalorder %s200, %s201
      %p213 = scmp.eq.s32.totalorder %s86, 1
      %p214 = por %p212, %p213
      %p216 = scmp.ne.s32.totalorder %s201, %s215
      %p217 = scmp.eq.s32.totalorder %s86, 0
      %p218 = por %p216, %p217
      %s220 = sadd.s32 %s219, 1
      %p223 = scmp.eq.s32.totalorder %s80, 1
      %p224 = scmp.ne.s32.totalorder %s219, %s221
      %p225 = scmp.eq.s32.totalorder %s80, 0
      %p226 = por %p224, %p225
      %p227 = scmp.ne.s32.totalorder %s219, %s221
      %p228 = scmp.eq.s32.totalorder %s85, 1
      %p229 = por %p227, %p228
      %p230 = scmp.ne.s32.totalorder %s221, %s222
      %p231 = scmp.eq.s32.totalorder %s85, 0
      %p232 = por %p230, %p231
      %p233 = scmp.ne.s32.totalorder %s221, %s222
      %p234 = scmp.eq.s32.totalorder %s86, 1
      %p235 = por %p233, %p234
      %p237 = scmp.ne.s32.totalorder %s222, %s236
      %p238 = scmp.eq.s32.totalorder %s86, 0
      %p239 = por %p237, %p238
      %s241 = sadd.s32 %s240, 1
      %p244 = scmp.eq.s32.totalorder %s80, 1
      %p245 = scmp.ne.s32.totalorder %s240, %s242
      %p246 = scmp.eq.s32.totalorder %s80, 0
      %p247 = por %p245, %p246
      %p248 = scmp.ne.s32.totalorder %s240, %s242
      %p249 = scmp.eq.s32.totalorder %s85, 1
      %p250 = por %p248, %p249
      %p251 = scmp.ne.s32.totalorder %s242, %s243
      %p252 = scmp.eq.s32.totalorder %s85, 0
      %p253 = por %p251, %p252
      %p254 = scmp.ne.s32.totalorder %s242, %s243
      %p255 = scmp.eq.s32.totalorder %s86, 1
      %p256 = por %p254, %p255
      %p258 = scmp.ne.s32.totalorder %s243, %s257
      %p259 = scmp.eq.s32.totalorder %s86, 0
      %p260 = por %p258, %p259
      %s262 = sadd.s32 %s261, 1
      %p265 = scmp.eq.s32.totalorder %s80, 1
      %p266 = scmp.ne.s32.totalorder %s261, %s263
      %p267 = scmp.eq.s32.totalorder %s80, 0
      %p268 = por %p266, %p267
      %p269 = scmp.ne.s32.totalorder %s261, %s263
      %p270 = scmp.eq.s32.totalorder %s85, 1
      %p271 = por %p269, %p270
      %p272 = scmp.ne.s32.totalorder %s263, %s264
      %p273 = scmp.eq.s32.totalorder %s85, 0
      %p274 = por %p272, %p273
      %p275 = scmp.ne.s32.totalorder %s263, %s264
      %p276 = scmp.eq.s32.totalorder %s86, 1
      %p277 = por %p275, %p276
      %p279 = scmp.ne.s32.totalorder %s264, %s278
      %p280 = scmp.eq.s32.totalorder %s86, 0
      %p281 = por %p279, %p280
      %s283 = sadd.s32 %s282, 1
      %p286 = scmp.eq.s32.totalorder %s80, 1
      %p287 = scmp.ne.s32.totalorder %s282, %s284
      %p288 = scmp.eq.s32.totalorder %s80, 0
      %p289 = por %p287, %p288
      %p290 = scmp.ne.s32.totalorder %s282, %s284
      %p291 = scmp.eq.s32.totalorder %s85, 1
      %p292 = por %p290, %p291
      %p293 = scmp.ne.s32.totalorder %s284, %s285
      %p294 = scmp.eq.s32.totalorder %s85, 0
      %p295 = por %p293, %p294
      %p296 = scmp.ne.s32.totalorder %s284, %s285
      %p297 = scmp.eq.s32.totalorder %s86, 1
      %p298 = por %p296, %p297
      %p300 = scmp.ne.s32.totalorder %s285, %s299
      %p301 = scmp.eq.s32.totalorder %s86, 0
      %p302 = por %p300, %p301
      %s304 = sadd.s32 %s303, 1
      %p307 = scmp.eq.s32.totalorder %s80, 1
      %p308 = scmp.ne.s32.totalorder %s303, %s305
      %p309 = scmp.eq.s32.totalorder %s80, 0
      %p310 = por %p308, %p309
      %p311 = scmp.ne.s32.totalorder %s303, %s305
      %p312 = scmp.eq.s32.totalorder %s85, 1
      %p313 = por %p311, %p312
      %p314 = scmp.ne.s32.totalorder %s305, %s306
      %p315 = scmp.eq.s32.totalorder %s85, 0
      %p316 = por %p314, %p315
      %p317 = scmp.ne.s32.totalorder %s305, %s306
      %p318 = scmp.eq.s32.totalorder %s86, 1
      %p319 = por %p317, %p318
      %p321 = scmp.ne.s32.totalorder %s306, %s320
      %p322 = scmp.eq.s32.totalorder %s86, 0
      %p323 = por %p321, %p322
      %s325 = sadd.s32 %s324, 1
      %p328 = scmp.eq.s32.totalorder %s80, 1
      %p329 = scmp.ne.s32.totalorder %s324, %s326
      %p330 = scmp.eq.s32.totalorder %s80, 0
      %p331 = por %p329, %p330
      %p332 = scmp.ne.s32.totalorder %s324, %s326
      %p333 = scmp.eq.s32.totalorder %s85, 1
      %p334 = por %p332, %p333
      %p335 = scmp.ne.s32.totalorder %s326, %s327
      %p336 = scmp.eq.s32.totalorder %s85, 0
      %p337 = por %p335, %p336
      %p338 = scmp.ne.s32.totalorder %s326, %s327
      %p339 = scmp.eq.s32.totalorder %s86, 1
      %p340 = por %p338, %p339
      %p342 = scmp.ne.s32.totalorder %s327, %s341
      %p343 = scmp.eq.s32.totalorder %s86, 0
      %p344 = por %p342, %p343
      %s346 = sadd.s32 %s345, 1
      %p349 = scmp.eq.s32.totalorder %s80, 1
      %p350 = scmp.ne.s32.totalorder %s345, %s347
      %p351 = scmp.eq.s32.totalorder %s80, 0
      %p352 = por %p350, %p351
      %p353 = scmp.ne.s32.totalorder %s345, %s347
      %p354 = scmp.eq.s32.totalorder %s85, 1
      %p355 = por %p353, %p354
      %p356 = scmp.ne.s32.totalorder %s347, %s348
      %p357 = scmp.eq.s32.totalorder %s85, 0
      %p358 = por %p356, %p357
      %p359 = scmp.ne.s32.totalorder %s347, %s348
      %p360 = scmp.eq.s32.totalorder %s86, 1
      %p361 = por %p359, %p360
      %p363 = scmp.ne.s32.totalorder %s348, %s362
      %p364 = scmp.eq.s32.totalorder %s86, 0
      %p365 = por %p363, %p364
      %s367 = sadd.s32 %s366, 1
      %p370 = scmp.eq.s32.totalorder %s80, 1
      %p371 = scmp.ne.s32.totalorder %s366, %s368
      %p372 = scmp.eq.s32.totalorder %s80, 0
      %p373 = por %p371, %p372
      %p374 = scmp.ne.s32.totalorder %s366, %s368
      %p375 = scmp.eq.s32.totalorder %s85, 1
      %p376 = por %p374, %p375
      %p377 = scmp.ne.s32.totalorder %s368, %s369
      %p378 = scmp.eq.s32.totalorder %s85, 0
      %p379 = por %p377, %p378
      %p380 = scmp.ne.s32.totalorder %s368, %s369
      %p381 = scmp.eq.s32.totalorder %s86, 1
      %p382 = por %p380, %p381
      %p384 = scmp.ne.s32.totalorder %s369, %s383
      %p385 = scmp.eq.s32.totalorder %s86, 0
      %p386 = por %p384, %p385
      %s388 = sadd.s32 %s387, 1
      %p391 = scmp.eq.s32.totalorder %s80, 1
      %p392 = scmp.ne.s32.totalorder %s387, %s389
      %p393 = scmp.eq.s32.totalorder %s80, 0
      %p394 = por %p392, %p393
      %p395 = scmp.ne.s32.totalorder %s387, %s389
      %p396 = scmp.eq.s32.totalorder %s85, 1
      %p397 = por %p395, %p396
      %p398 = scmp.ne.s32.totalorder %s389, %s390
      %p399 = scmp.eq.s32.totalorder %s85, 0
      %p400 = por %p398, %p399
      %p401 = scmp.ne.s32.totalorder %s389, %s390
      %p402 = scmp.eq.s32.totalorder %s86, 1
      %p403 = por %p401, %p402
      %p405 = scmp.ne.s32.totalorder %s390, %s404
      %p406 = scmp.eq.s32.totalorder %s86, 0
      %p407 = por %p405, %p406
      %s409 = sadd.s32 %s408, 1
      %p412 = scmp.eq.s32.totalorder %s80, 1
      %p413 = scmp.ne.s32.totalorder %s408, %s410
      %p414 = scmp.eq.s32.totalorder %s80, 0
      %p415 = por %p413, %p414
      %p416 = scmp.ne.s32.totalorder %s408, %s410
      %p417 = scmp.eq.s32.totalorder %s85, 1
      %p418 = por %p416, %p417
      %p419 = scmp.ne.s32.totalorder %s410, %s411
      %p420 = scmp.eq.s32.totalorder %s85, 0
      %p421 = por %p419, %p420
      %p422 = scmp.ne.s32.totalorder %s410, %s411
      %p423 = scmp.eq.s32.totalorder %s86, 1
      %p424 = por %p422, %p423
      %p426 = scmp.ne.s32.totalorder %s411, %s425
      %p427 = scmp.eq.s32.totalorder %s86, 0
      %p428 = por %p426, %p427
      %s430 = sadd.s32 %s429, 1
      %p433 = scmp.eq.s32.totalorder %s80, 1
      %p434 = scmp.ne.s32.totalorder %s429, %s431
      %p435 = scmp.eq.s32.totalorder %s80, 0
      %p436 = por %p434, %p435
      %p437 = scmp.ne.s32.totalorder %s429, %s431
      %p438 = scmp.eq.s32.totalorder %s85, 1
      %p439 = por %p437, %p438
      %p440 = scmp.ne.s32.totalorder %s431, %s432
      %p441 = scmp.eq.s32.totalorder %s85, 0
      %p442 = por %p440, %p441
      %p443 = scmp.ne.s32.totalorder %s431, %s432
      %p444 = scmp.eq.s32.totalorder %s86, 1
      %p445 = por %p443, %p444
      %p447 = scmp.ne.s32.totalorder %s432, %s446
      %p448 = scmp.eq.s32.totalorder %s86, 0
      %p449 = por %p447, %p448
      %s451 = sadd.s32 %s450, 1
      %p454 = scmp.eq.s32.totalorder %s80, 1
      %p455 = scmp.ne.s32.totalorder %s450, %s452
      %p456 = scmp.eq.s32.totalorder %s80, 0
      %p457 = por %p455, %p456
      %p458 = scmp.ne.s32.totalorder %s450, %s452
      %p459 = scmp.eq.s32.totalorder %s85, 1
      %p460 = por %p458, %p459
      %p461 = scmp.ne.s32.totalorder %s452, %s453
      %p462 = scmp.eq.s32.totalorder %s85, 0
      %p463 = por %p461, %p462
      %p464 = scmp.ne.s32.totalorder %s452, %s453
      %p465 = scmp.eq.s32.totalorder %s86, 1
      %p466 = por %p464, %p465
      %p468 = scmp.ne.s32.totalorder %s453, %s467
      %p469 = scmp.eq.s32.totalorder %s86, 0
      %p470 = por %p468, %p469
      %s472 = sadd.s32 %s471, 1
      %p475 = scmp.eq.s32.totalorder %s80, 1
      %p476 = scmp.ne.s32.totalorder %s471, %s473
      %p477 = scmp.eq.s32.totalorder %s80, 0
      %p478 = por %p476, %p477
      %p479 = scmp.ne.s32.totalorder %s471, %s473
      %p480 = scmp.eq.s32.totalorder %s85, 1
      %p481 = por %p479, %p480
      %p482 = scmp.ne.s32.totalorder %s473, %s474
      %p483 = scmp.eq.s32.totalorder %s85, 0
      %p484 = por %p482, %p483
      %p485 = scmp.ne.s32.totalorder %s473, %s474
      %p486 = scmp.eq.s32.totalorder %s86, 1
      %p487 = por %p485, %p486
      %p489 = scmp.ne.s32.totalorder %s474, %s488
      %p490 = scmp.eq.s32.totalorder %s86, 0
      %p491 = por %p489, %p490
      %s493 = sadd.s32 %s492, 1
      %p496 = scmp.eq.s32.totalorder %s80, 1
      %p497 = scmp.ne.s32.totalorder %s492, %s494
      %p498 = scmp.eq.s32.totalorder %s80, 0
      %p499 = por %p497, %p498
      %p500 = scmp.ne.s32.totalorder %s492, %s494
      %p501 = scmp.eq.s32.totalorder %s85, 1
      %p502 = por %p500, %p501
      %p503 = scmp.ne.s32.totalorder %s494, %s495
      %p504 = scmp.eq.s32.totalorder %s85, 0
      %p505 = por %p503, %p504
      %p506 = scmp.ne.s32.totalorder %s494, %s495
      %p507 = scmp.eq.s32.totalorder %s86, 1
      %p508 = por %p506, %p507
      %p510 = scmp.ne.s32.totalorder %s495, %s509
      %p511 = scmp.eq.s32.totalorder %s86, 0
      %p512 = por %p510, %p511
      %s514 = sadd.s32 %s513, 1
      %p517 = scmp.eq.s32.totalorder %s80, 1
      %p518 = scmp.ne.s32.totalorder %s513, %s515
      %p519 = scmp.eq.s32.totalorder %s80, 0
      %p520 = por %p518, %p519
      %p521 = scmp.ne.s32.totalorder %s513, %s515
      %p522 = scmp.eq.s32.totalorder %s85, 1
      %p523 = por %p521, %p522
      %p524 = scmp.ne.s32.totalorder %s515, %s516
      %p525 = scmp.eq.s32.totalorder %s85, 0
      %p526 = por %p524, %p525
      %p527 = scmp.ne.s32.totalorder %s515, %s516
      %p528 = scmp.eq.s32.totalorder %s86, 1
      %p529 = por %p527, %p528
      %p531 = scmp.ne.s32.totalorder %s516, %s530
      %p532 = scmp.eq.s32.totalorder %s86, 0
      %p533 = por %p531, %p532
      %s535 = sadd.s32 %s534, 1
      %p538 = scmp.eq.s32.totalorder %s80, 1
      %p539 = scmp.ne.s32.totalorder %s534, %s536
      %p540 = scmp.eq.s32.totalorder %s80, 0
      %p541 = por %p539, %p540
      %p542 = scmp.ne.s32.totalorder %s534, %s536
      %p543 = scmp.eq.s32.totalorder %s85, 1
      %p544 = por %p542, %p543
      %p545 = scmp.ne.s32.totalorder %s536, %s537
      %p546 = scmp.eq.s32.totalorder %s85, 0
      %p547 = por %p545, %p546
      %p548 = scmp.ne.s32.totalorder %s536, %s537
      %p549 = scmp.eq.s32.totalorder %s86, 1
      %p550 = por %p548, %p549
      %p552 = scmp.ne.s32.totalorder %s537, %s551
      %p553 = scmp.eq.s32.totalorder %s86, 0
      %p554 = por %p552, %p553
      %s556 = sadd.s32 %s555, 1
      %p559 = scmp.eq.s32.totalorder %s80, 1
      %p560 = scmp.ne.s32.totalorder %s555, %s557
      %p561 = scmp.eq.s32.totalorder %s80, 0
      %p562 = por %p560, %p561
      %p563 = scmp.ne.s32.totalorder %s555, %s557
      %p564 = scmp.eq.s32.totalorder %s85, 1
      %p565 = por %p563, %p564
      %p566 = scmp.ne.s32.totalorder %s557, %s558
      %p567 = scmp.eq.s32.totalorder %s85, 0
      %p568 = por %p566, %p567
      %p569 = scmp.ne.s32.totalorder %s557, %s558
      %p570 = scmp.eq.s32.totalorder %s86, 1
      %p571 = por %p569, %p570
      %p573 = scmp.ne.s32.totalorder %s558, %s572
      %p574 = scmp.eq.s32.totalorder %s86, 0
      %p575 = por %p573, %p574
      %s577 = sadd.s32 %s576, 1
      %p580 = scmp.eq.s32.totalorder %s80, 1
      %p581 = scmp.ne.s32.totalorder %s576, %s578
      %p582 = scmp.eq.s32.totalorder %s80, 0
      %p583 = por %p581, %p582
      %p584 = scmp.ne.s32.totalorder %s576, %s578
      %p585 = scmp.eq.s32.totalorder %s85, 1
      %p586 = por %p584, %p585
      %p587 = scmp.ne.s32.totalorder %s578, %s579
      %p588 = scmp.eq.s32.totalorder %s85, 0
      %p589 = por %p587, %p588
      %p590 = scmp.ne.s32.totalorder %s578, %s579
      %p591 = scmp.eq.s32.totalorder %s86, 1
      %p592 = por %p590, %p591
      %p594 = scmp.ne.s32.totalorder %s579, %s593
      %p595 = scmp.eq.s32.totalorder %s86, 0
      %p596 = por %p594, %p595
      %s598 = sadd.s32 %s597, 1
      %p601 = scmp.eq.s32.totalorder %s80, 1
      %p602 = scmp.ne.s32.totalorder %s597, %s599
      %p603 = scmp.eq.s32.totalorder %s80, 0
      %p604 = por %p602, %p603
      %p605 = scmp.ne.s32.totalorder %s597, %s599
      %p606 = scmp.eq.s32.totalorder %s85, 1
      %p607 = por %p605, %p606
      %p608 = scmp.ne.s32.totalorder %s599, %s600
      %p609 = scmp.eq.s32.totalorder %s85, 0
      %p610 = por %p608, %p609
      %p611 = scmp.ne.s32.totalorder %s599, %s600
      %p612 = scmp.eq.s32.totalorder %s86, 1
      %p613 = por %p611, %p612
      %p615 = scmp.ne.s32.totalorder %s600, %s614
      %p616 = scmp.eq.s32.totalorder %s86, 0
      %p617 = por %p615, %p616
      %s619 = sadd.s32 %s618, 1
      %p622 = scmp.eq.s32.totalorder %s80, 1
      %p623 = scmp.ne.s32.totalorder %s618, %s620
      %p624 = scmp.eq.s32.totalorder %s80, 0
      %p625 = por %p623, %p624
      %p626 = scmp.ne.s32.totalorder %s618, %s620
      %p627 = scmp.eq.s32.totalorder %s85, 1
      %p628 = por %p626, %p627
      %p629 = scmp.ne.s32.totalorder %s620, %s621
      %p630 = scmp.eq.s32.totalorder %s85, 0
      %p631 = por %p629, %p630
      %p632 = scmp.ne.s32.totalorder %s620, %s621
      %p633 = scmp.eq.s32.totalorder %s86, 1
      %p634 = por %p632, %p633
      %p636 = scmp.ne.s32.totalorder %s621, %s635
      %p637 = scmp.eq.s32.totalorder %s86, 0
      %p638 = por %p636, %p637
      %s640 = sadd.s32 %s639, 1
      %p643 = scmp.eq.s32.totalorder %s80, 1
      %p644 = scmp.ne.s32.totalorder %s639, %s641
      %p645 = scmp.eq.s32.totalorder %s80, 0
      %p646 = por %p644, %p645
      %p647 = scmp.ne.s32.totalorder %s639, %s641
      %p648 = scmp.eq.s32.totalorder %s85, 1
      %p649 = por %p647, %p648
      %p650 = scmp.ne.s32.totalorder %s641, %s642
      %p651 = scmp.eq.s32.totalorder %s85, 0
      %p652 = por %p650, %p651
      %p653 = scmp.ne.s32.totalorder %s641, %s642
      %p654 = scmp.eq.s32.totalorder %s86, 1
      %p655 = por %p653, %p654
      %p657 = scmp.ne.s32.totalorder %s642, %s656
      %p658 = scmp.eq.s32.totalorder %s86, 0
      %p659 = por %p657, %p658
      %s661 = sadd.s32 %s660, 1
      %p664 = scmp.eq.s32.totalorder %s80, 1
      %p665 = scmp.ne.s32.totalorder %s660, %s662
      %p666 = scmp.eq.s32.totalorder %s80, 0
      %p667 = por %p665, %p666
      %p668 = scmp.ne.s32.totalorder %s660, %s662
      %p669 = scmp.eq.s32.totalorder %s85, 1
      %p670 = por %p668, %p669
      %p671 = scmp.ne.s32.totalorder %s662, %s663
      %p672 = scmp.eq.s32.totalorder %s85, 0
      %p673 = por %p671, %p672
      %p674 = scmp.ne.s32.totalorder %s662, %s663
      %p675 = scmp.eq.s32.totalorder %s86, 1
      %p676 = por %p674, %p675
      %p678 = scmp.ne.s32.totalorder %s663, %s677
      %p679 = scmp.eq.s32.totalorder %s86, 0
      %p680 = por %p678, %p679
      %s682 = sadd.s32 %s681, 1
      %p685 = scmp.eq.s32.totalorder %s80, 1
      %p686 = scmp.ne.s32.totalorder %s681, %s683
      %p687 = scmp.eq.s32.totalorder %s80, 0
      %p688 = por %p686, %p687
      %p689 = scmp.ne.s32.totalorder %s681, %s683
      %p690 = scmp.eq.s32.totalorder %s85, 1
      %p691 = por %p689, %p690
      %p692 = scmp.ne.s32.totalorder %s683, %s684
      %p693 = scmp.eq.s32.totalorder %s85, 0
      %p694 = por %p692, %p693
      %p695 = scmp.ne.s32.totalorder %s683, %s684
      %p696 = scmp.eq.s32.totalorder %s86, 1
      %p697 = por %p695, %p696
      %p699 = scmp.ne.s32.totalorder %s684, %s698
      %p700 = scmp.eq.s32.totalorder %s86, 0
      %p701 = por %p699, %p700
      %s703 = sadd.s32 %s702, 1
      %p706 = scmp.eq.s32.totalorder %s80, 1
      %p707 = scmp.ne.s32.totalorder %s702, %s704
      %p708 = scmp.eq.s32.totalorder %s80, 0
      %p709 = por %p707, %p708
      %p710 = scmp.ne.s32.totalorder %s702, %s704
      %p711 = scmp.eq.s32.totalorder %s85, 1
      %p712 = por %p710, %p711
      %p713 = scmp.ne.s32.totalorder %s704, %s705
      %p714 = scmp.eq.s32.totalorder %s85, 0
      %p715 = por %p713, %p714
      %p716 = scmp.ne.s32.totalorder %s704, %s705
      %p717 = scmp.eq.s32.totalorder %s86, 1
      %p718 = por %p716, %p717
      %p720 = scmp.ne.s32.totalorder %s705, %s719
      %p721 = scmp.eq.s32.totalorder %s86, 0
      %p722 = por %p720, %p721
      %s724 = sadd.s32 %s723, 1
      %p727 = scmp.eq.s32.totalorder %s80, 1
      %p728 = scmp.ne.s32.totalorder %s723, %s725
      %p729 = scmp.eq.s32.totalorder %s80, 0
      %p730 = por %p728, %p729
      %p731 = scmp.ne.s32.totalorder %s723, %s725
      %p732 = scmp.eq.s32.totalorder %s85, 1
      %p733 = por %p731, %p732
      %p734 = scmp.ne.s32.totalorder %s725, %s726
      %p735 = scmp.eq.s32.totalorder %s85, 0
      %p736 = por %p734, %p735
      %p737 = scmp.ne.s32.totalorder %s725, %s726
      %p738 = scmp.eq.s32.totalorder %s86, 1
      %p739 = por %p737, %p738
      %p741 = scmp.ne.s32.totalorder %s726, %s740
      %p742 = scmp.eq.s32.totalorder %s86, 0
      %p743 = por %p741, %p742
      %s745 = sadd.s32 %s744, 1
      %p748 = scmp.eq.s32.totalorder %s80, 1
      %p749 = scmp.ne.s32.totalorder %s744, %s746
      %p750 = scmp.eq.s32.totalorder %s80, 0
      %p751 = por %p749, %p750
      %p752 = scmp.ne.s32.totalorder %s744, %s746
      %p753 = scmp.eq.s32.totalorder %s85, 1
      %p754 = por %p752, %p753
      %p755 = scmp.ne.s32.totalorder %s746, %s747
      %p756 = scmp.eq.s32.totalorder %s85, 0
      %p757 = por %p755, %p756
      %p758 = scmp.ne.s32.totalorder %s746, %s747
      %p759 = scmp.eq.s32.totalorder %s86, 1
      %p760 = por %p758, %p759
      %p762 = scmp.ne.s32.totalorder %s747, %s761
      %p763 = scmp.eq.s32.totalorder %s86, 0
      %p764 = por %p762, %p763
      %s766 = sadd.s32 %s765, 1
      %p769 = scmp.eq.s32.totalorder %s80, 1
      %p770 = scmp.ne.s32.totalorder %s765, %s767
      %p771 = scmp.eq.s32.totalorder %s80, 0
      %p772 = por %p770, %p771
      %p773 = scmp.ne.s32.totalorder %s765, %s767
      %p774 = scmp.eq.s32.totalorder %s85, 1
      %p775 = por %p773, %p774
      %p776 = scmp.ne.s32.totalorder %s767, %s768
      %p777 = scmp.eq.s32.totalorder %s85, 0
      %p778 = por %p776, %p777
      %p779 = scmp.ne.s32.totalorder %s767, %s768
      %p780 = scmp.eq.s32.totalorder %s86, 1
      %p781 = por %p779, %p780
      %p783 = scmp.ne.s32.totalorder %s768, %s782
      %p784 = scmp.eq.s32.totalorder %s86, 0
      %p785 = por %p783, %p784
      %s787 = sadd.s32 %s786, 1
      %p790 = scmp.eq.s32.totalorder %s80, 1
      %p791 = scmp.ne.s32.totalorder %s786, %s788
      %p792 = scmp.eq.s32.totalorder %s80, 0
      %p793 = por %p791, %p792
      %p794 = scmp.ne.s32.totalorder %s786, %s788
      %p795 = scmp.eq.s32.totalorder %s85, 1
      %p796 = por %p794, %p795
      %p797 = scmp.ne.s32.totalorder %s788, %s789
      %p798 = scmp.eq.s32.totalorder %s85, 0
      %p799 = por %p797, %p798
      %p800 = scmp.ne.s32.totalorder %s788, %s789
      %p801 = scmp.eq.s32.totalorder %s86, 1
      %p802 = por %p800, %p801
      %p804 = scmp.ne.s32.totalorder %s789, %s803
      %p805 = scmp.eq.s32.totalorder %s86, 0
      %p806 = por %p804, %p805
      %s808 = sadd.s32 %s807, 1
      %p811 = scmp.eq.s32.totalorder %s80, 1
      %p812 = scmp.ne.s32.totalorder %s807, %s809
      %p813 = scmp.eq.s32.totalorder %s80, 0
      %p814 = por %p812, %p813
      %p815 = scmp.ne.s32.totalorder %s807, %s809
      %p816 = scmp.eq.s32.totalorder %s85, 1
      %p817 = por %p815, %p816
      %p818 = scmp.ne.s32.totalorder %s809, %s810
      %p819 = scmp.eq.s32.totalorder %s85, 0
      %p820 = por %p818, %p819
      %p821 = scmp.ne.s32.totalorder %s809, %s810
      %p822 = scmp.eq.s32.totalorder %s86, 1
      %p823 = por %p821, %p822
      %p825 = scmp.ne.s32.totalorder %s810, %s824
      %p826 = scmp.eq.s32.totalorder %s86, 0
      %p827 = por %p825, %p826
      %s828 = ssub.s32 %s80, %s87
      %p829 = scmp.eq.s32.totalorder %s828, 0
      %s831 = sadd.s32 %s830, 1
      %s832 = scalar_select %p829, %s830, %s831
      %p835 = pneg %p829
      %p836 = scmp.eq.s32.totalorder %s80, 1
      %p837 = por %p835, %p836
      %p838 = scmp.ne.s32.totalorder %s830, %s833
      %p839 = scmp.eq.s32.totalorder %s80, 0
      %p840 = por %p838, %p839
      %p841 = scmp.ne.s32.totalorder %s830, %s833
      %p842 = scmp.eq.s32.totalorder %s85, 1
      %p843 = por %p841, %p842
      %p844 = scmp.ne.s32.totalorder %s833, %s834
      %p845 = scmp.eq.s32.totalorder %s85, 0
      %p846 = por %p844, %p845
      %p847 = scmp.ne.s32.totalorder %s833, %s834
      %p848 = scmp.eq.s32.totalorder %s86, 1
      %p849 = por %p847, %p848
      %p851 = scmp.ne.s32.totalorder %s834, %s850
      %p852 = scmp.eq.s32.totalorder %s86, 0
      %p853 = por %p851, %p852
      %p854 = scmp.le.s32.totalorder 1, %s80
      %p855 = scmp.lt.s32.totalorder %s80, 3
      %p856 = pnand %p854, %p855
      %p857 = pneg %p856
      // Predicated region
      $region9: #{_lambda_.1} parent=5 // pred_check
        _
      $region10: #{_lambda_.1} parent=5 // pred_check_branch
        %859 = sbr.rel (%p856) target = $region12
      $region11: #{_lambda_.1} parent=5 // pred_region
        %s860 = ssub.s32 %s80, 1
        // Predicated region
        $region13: #{_lambda_.1} parent=11 // pred_check
          %p861 = pneg %p127
        $region14: #{_lambda_.1} parent=11 // pred_check_branch
          %863 = sbr.rel (%p861) target = $region16
        $region15: #{_lambda_.1} parent=11 // pred_region
          _
        $region16: #{_lambda_.1} parent=11 // pred_fallthru
          _
        // Predicated region
        $region17: #{_lambda_.1} parent=11 // pred_check
          %p864 = pneg %p148
        $region18: #{_lambda_.1} parent=11 // pred_check_branch
          %866 = sbr.rel (%p864) target = $region20
        $region19: #{_lambda_.1} parent=11 // pred_region
          _
        $region20: #{_lambda_.1} parent=11 // pred_fallthru
          _
        // Predicated region
        $region21: #{_lambda_.1} parent=11 // pred_check
          %p867 = pneg %p169
        $region22: #{_lambda_.1} parent=11 // pred_check_branch
          %869 = sbr.rel (%p867) target = $region24
        $region23: #{_lambda_.1} parent=11 // pred_region
          _
        $region24: #{_lambda_.1} parent=11 // pred_fallthru
          _
        // Predicated region
        $region25: #{_lambda_.1} parent=11 // pred_check
          %p870 = pneg %p190
        $region26: #{_lambda_.1} parent=11 // pred_check_branch
          %872 = sbr.rel (%p870) target = $region28
        $region27: #{_lambda_.1} parent=11 // pred_region
          _
        $region28: #{_lambda_.1} parent=11 // pred_fallthru
          _
        // Predicated region
        $region29: #{_lambda_.1} parent=11 // pred_check
          %p873 = pneg %p211
        $region30: #{_lambda_.1} parent=11 // pred_check_branch
          %875 = sbr.rel (%p873) target = $region32
        $region31: #{_lambda_.1} parent=11 // pred_region
          _
        $region32: #{_lambda_.1} parent=11 // pred_fallthru
          _
        // Predicated region
        $region33: #{_lambda_.1} parent=11 // pred_check
          %p876 = pneg %p232
        $region34: #{_lambda_.1} parent=11 // pred_check_branch
          %878 = sbr.rel (%p876) target = $region36
        $region35: #{_lambda_.1} parent=11 // pred_region
          _
        $region36: #{_lambda_.1} parent=11 // pred_fallthru
          _
        // Predicated region
        $region37: #{_lambda_.1} parent=11 // pred_check
          %p879 = pneg %p253
        $region38: #{_lambda_.1} parent=11 // pred_check_branch
          %881 = sbr.rel (%p879) target = $region40
        $region39: #{_lambda_.1} parent=11 // pred_region
          _
        $region40: #{_lambda_.1} parent=11 // pred_fallthru
          _
        // Predicated region
        $region41: #{_lambda_.1} parent=11 // pred_check
          %p882 = pneg %p274
        $region42: #{_lambda_.1} parent=11 // pred_check_branch
          %884 = sbr.rel (%p882) target = $region44
        $region43: #{_lambda_.1} parent=11 // pred_region
          _
        $region44: #{_lambda_.1} parent=11 // pred_fallthru
          _
        // Predicated region
        $region45: #{_lambda_.1} parent=11 // pred_check
          %p885 = pneg %p295
        $region46: #{_lambda_.1} parent=11 // pred_check_branch
          %887 = sbr.rel (%p885) target = $region48
        $region47: #{_lambda_.1} parent=11 // pred_region
          _
        $region48: #{_lambda_.1} parent=11 // pred_fallthru
          _
        // Predicated region
        $region49: #{_lambda_.1} parent=11 // pred_check
          %p888 = pneg %p316
        $region50: #{_lambda_.1} parent=11 // pred_check_branch
          %890 = sbr.rel (%p888) target = $region52
        $region51: #{_lambda_.1} parent=11 // pred_region
          _
        $region52: #{_lambda_.1} parent=11 // pred_fallthru
          _
        // Predicated region
        $region53: #{_lambda_.1} parent=11 // pred_check
          %p891 = pneg %p337
        $region54: #{_lambda_.1} parent=11 // pred_check_branch
          %893 = sbr.rel (%p891) target = $region56
        $region55: #{_lambda_.1} parent=11 // pred_region
          _
        $region56: #{_lambda_.1} parent=11 // pred_fallthru
          _
        // Predicated region
        $region57: #{_lambda_.1} parent=11 // pred_check
          %p894 = pneg %p358
        $region58: #{_lambda_.1} parent=11 // pred_check_branch
          %896 = sbr.rel (%p894) target = $region60
        $region59: #{_lambda_.1} parent=11 // pred_region
          _
        $region60: #{_lambda_.1} parent=11 // pred_fallthru
          _
        // Predicated region
        $region61: #{_lambda_.1} parent=11 // pred_check
          %p897 = pneg %p379
        $region62: #{_lambda_.1} parent=11 // pred_check_branch
          %899 = sbr.rel (%p897) target = $region64
        $region63: #{_lambda_.1} parent=11 // pred_region
          _
        $region64: #{_lambda_.1} parent=11 // pred_fallthru
          _
        // Predicated region
        $region65: #{_lambda_.1} parent=11 // pred_check
          %p900 = pneg %p400
        $region66: #{_lambda_.1} parent=11 // pred_check_branch
          %902 = sbr.rel (%p900) target = $region68
        $region67: #{_lambda_.1} parent=11 // pred_region
          _
        $region68: #{_lambda_.1} parent=11 // pred_fallthru
          _
        // Predicated region
        $region69: #{_lambda_.1} parent=11 // pred_check
          %p903 = pneg %p421
        $region70: #{_lambda_.1} parent=11 // pred_check_branch
          %905 = sbr.rel (%p903) target = $region72
        $region71: #{_lambda_.1} parent=11 // pred_region
          _
        $region72: #{_lambda_.1} parent=11 // pred_fallthru
          _
        // Predicated region
        $region73: #{_lambda_.1} parent=11 // pred_check
          %p906 = pneg %p442
        $region74: #{_lambda_.1} parent=11 // pred_check_branch
          %908 = sbr.rel (%p906) target = $region76
        $region75: #{_lambda_.1} parent=11 // pred_region
          _
        $region76: #{_lambda_.1} parent=11 // pred_fallthru
          _
        // Predicated region
        $region77: #{_lambda_.1} parent=11 // pred_check
          %p909 = pneg %p463
        $region78: #{_lambda_.1} parent=11 // pred_check_branch
          %911 = sbr.rel (%p909) target = $region80
        $region79: #{_lambda_.1} parent=11 // pred_region
          _
        $region80: #{_lambda_.1} parent=11 // pred_fallthru
          _
        // Predicated region
        $region81: #{_lambda_.1} parent=11 // pred_check
          %p912 = pneg %p484
        $region82: #{_lambda_.1} parent=11 // pred_check_branch
          %914 = sbr.rel (%p912) target = $region84
        $region83: #{_lambda_.1} parent=11 // pred_region
          _
        $region84: #{_lambda_.1} parent=11 // pred_fallthru
          _
        // Predicated region
        $region85: #{_lambda_.1} parent=11 // pred_check
          %p915 = pneg %p505
        $region86: #{_lambda_.1} parent=11 // pred_check_branch
          %917 = sbr.rel (%p915) target = $region88
        $region87: #{_lambda_.1} parent=11 // pred_region
          _
        $region88: #{_lambda_.1} parent=11 // pred_fallthru
          _
        // Predicated region
        $region89: #{_lambda_.1} parent=11 // pred_check
          %p918 = pneg %p526
        $region90: #{_lambda_.1} parent=11 // pred_check_branch
          %920 = sbr.rel (%p918) target = $region92
        $region91: #{_lambda_.1} parent=11 // pred_region
          _
        $region92: #{_lambda_.1} parent=11 // pred_fallthru
          _
        // Predicated region
        $region93: #{_lambda_.1} parent=11 // pred_check
          %p921 = pneg %p547
        $region94: #{_lambda_.1} parent=11 // pred_check_branch
          %923 = sbr.rel (%p921) target = $region96
        $region95: #{_lambda_.1} parent=11 // pred_region
          _
        $region96: #{_lambda_.1} parent=11 // pred_fallthru
          _
        // Predicated region
        $region97: #{_lambda_.1} parent=11 // pred_check
          %p924 = pneg %p568
        $region98: #{_lambda_.1} parent=11 // pred_check_branch
          %926 = sbr.rel (%p924) target = $region100
        $region99: #{_lambda_.1} parent=11 // pred_region
          _
        $region100: #{_lambda_.1} parent=11 // pred_fallthru
          _
        // Predicated region
        $region101: #{_lambda_.1} parent=11 // pred_check
          %p927 = pneg %p589
        $region102: #{_lambda_.1} parent=11 // pred_check_branch
          %929 = sbr.rel (%p927) target = $region104
        $region103: #{_lambda_.1} parent=11 // pred_region
          _
        $region104: #{_lambda_.1} parent=11 // pred_fallthru
          _
        // Predicated region
        $region105: #{_lambda_.1} parent=11 // pred_check
          %p930 = pneg %p610
        $region106: #{_lambda_.1} parent=11 // pred_check_branch
          %932 = sbr.rel (%p930) target = $region108
        $region107: #{_lambda_.1} parent=11 // pred_region
          _
        $region108: #{_lambda_.1} parent=11 // pred_fallthru
          _
        // Predicated region
        $region109: #{_lambda_.1} parent=11 // pred_check
          %p933 = pneg %p631
        $region110: #{_lambda_.1} parent=11 // pred_check_branch
          %935 = sbr.rel (%p933) target = $region112
        $region111: #{_lambda_.1} parent=11 // pred_region
          _
        $region112: #{_lambda_.1} parent=11 // pred_fallthru
          _
        // Predicated region
        $region113: #{_lambda_.1} parent=11 // pred_check
          %p936 = pneg %p652
        $region114: #{_lambda_.1} parent=11 // pred_check_branch
          %938 = sbr.rel (%p936) target = $region116
        $region115: #{_lambda_.1} parent=11 // pred_region
          _
        $region116: #{_lambda_.1} parent=11 // pred_fallthru
          _
        // Predicated region
        $region117: #{_lambda_.1} parent=11 // pred_check
          %p939 = pneg %p673
        $region118: #{_lambda_.1} parent=11 // pred_check_branch
          %941 = sbr.rel (%p939) target = $region120
        $region119: #{_lambda_.1} parent=11 // pred_region
          _
        $region120: #{_lambda_.1} parent=11 // pred_fallthru
          _
        // Predicated region
        $region121: #{_lambda_.1} parent=11 // pred_check
          %p942 = pneg %p694
        $region122: #{_lambda_.1} parent=11 // pred_check_branch
          %944 = sbr.rel (%p942) target = $region124
        $region123: #{_lambda_.1} parent=11 // pred_region
          _
        $region124: #{_lambda_.1} parent=11 // pred_fallthru
          _
        // Predicated region
        $region125: #{_lambda_.1} parent=11 // pred_check
          %p945 = pneg %p715
        $region126: #{_lambda_.1} parent=11 // pred_check_branch
          %947 = sbr.rel (%p945) target = $region128
        $region127: #{_lambda_.1} parent=11 // pred_region
          _
        $region128: #{_lambda_.1} parent=11 // pred_fallthru
          _
        // Predicated region
        $region129: #{_lambda_.1} parent=11 // pred_check
          %p948 = pneg %p736
        $region130: #{_lambda_.1} parent=11 // pred_check_branch
          %950 = sbr.rel (%p948) target = $region132
        $region131: #{_lambda_.1} parent=11 // pred_region
          _
        $region132: #{_lambda_.1} parent=11 // pred_fallthru
          _
        // Predicated region
        $region133: #{_lambda_.1} parent=11 // pred_check
          %p951 = pneg %p757
        $region134: #{_lambda_.1} parent=11 // pred_check_branch
          %953 = sbr.rel (%p951) target = $region136
        $region135: #{_lambda_.1} parent=11 // pred_region
          _
        $region136: #{_lambda_.1} parent=11 // pred_fallthru
          _
        // Predicated region
        $region137: #{_lambda_.1} parent=11 // pred_check
          %p954 = pneg %p778
        $region138: #{_lambda_.1} parent=11 // pred_check_branch
          %956 = sbr.rel (%p954) target = $region140
        $region139: #{_lambda_.1} parent=11 // pred_region
          _
        $region140: #{_lambda_.1} parent=11 // pred_fallthru
          _
        // Predicated region
        $region141: #{_lambda_.1} parent=11 // pred_check
          %p957 = pneg %p799
        $region142: #{_lambda_.1} parent=11 // pred_check_branch
          %959 = sbr.rel (%p957) target = $region144
        $region143: #{_lambda_.1} parent=11 // pred_region
          _
        $region144: #{_lambda_.1} parent=11 // pred_fallthru
          _
        // Predicated region
        $region145: #{_lambda_.1} parent=11 // pred_check
          %p960 = pneg %p820
        $region146: #{_lambda_.1} parent=11 // pred_check_branch
          %962 = sbr.rel (%p960) target = $region148
        $region147: #{_lambda_.1} parent=11 // pred_region
          _
        $region148: #{_lambda_.1} parent=11 // pred_fallthru
          _
      $region12: #{_lambda_.1} parent=5 // pred_fallthru
        _
      %p963 = scmp.lt.s32.totalorder %s80, 2
      // Predicated region
      $region149: #{_lambda_.1} parent=5 // pred_check
        %p964 = pneg %p963
      $region150: #{_lambda_.1} parent=5 // pred_check_branch
        %966 = sbr.rel (%p964) target = $region152
      $region151: #{_lambda_.1} parent=5 // pred_region
        // Predicated region
        $region153: #{_lambda_.1} parent=151 // pred_check
          %p967 = pneg %p100
        $region154: #{_lambda_.1} parent=151 // pred_check_branch
          %969 = sbr.rel (%p967) target = $region156
        $region155: #{_lambda_.1} parent=151 // pred_region
          %s970 = smul.u32 32, %s80
          %p971 = scmp.lt.s32.totalorder %s970, 63
          %s972 = scalar_select %p971, %s970, 63
          %s973 = smul.addr %s972, 8
          %s974 = scalar_lea.vmem %s1, %s973
          %s975 = smul.u32 32, %s80
        $region156: #{_lambda_.1} parent=151 // pred_fallthru
          _
      $region152: #{_lambda_.1} parent=5 // pred_fallthru
        _
      %p976 = scmp.le.s32.totalorder 1, %s80
      %p977 = scmp.lt.s32.totalorder %s80, 3
      %p978 = pnand %p976, %p977
      %p979 = pneg %p978
      // Predicated region
      $region157: #{_lambda_.1} parent=5 // pred_check
        _
      $region158: #{_lambda_.1} parent=5 // pred_check_branch
        %981 = sbr.rel (%p978) target = $region160
      $region159: #{_lambda_.1} parent=5 // pred_region
        %s982 = ssub.s32 %s80, 1
        %s983 = smul.u32 32, %s85
        %p984 = scmp.lt.s32.totalorder %s983, 63
        %s985 = scalar_select %p984, %s983, 63
        %s986 = smul.addr %s985, 8
        %s987 = scalar_lea.vmem %s1, %s986
        %p988 = pneg %p106
        %p989 = pneg %p103
        %p990 = pneg %p127
        %p991 = pneg %p124
        %p992 = pneg %p148
        %p993 = pneg %p145
        %p994 = pneg %p169
        %p995 = pneg %p166
        %p996 = pneg %p190
        %p997 = pneg %p187
        %p998 = pneg %p211
        %p999 = pneg %p208
        %p1000 = pneg %p232
        %p1001 = pneg %p229
        %p1002 = pneg %p253
        %p1003 = pneg %p250
        %p1004 = pneg %p274
        %p1005 = pneg %p271
        %p1006 = pneg %p295
        %p1007 = pneg %p292
        %p1008 = pneg %p316
        %p1009 = pneg %p313
        %p1010 = pneg %p337
        %p1011 = pneg %p334
        %p1012 = pneg %p358
        %p1013 = pneg %p355
        %p1014 = pneg %p379
        %p1015 = pneg %p376
        %p1016 = pneg %p400
        %p1017 = pneg %p397
        %p1018 = pneg %p421
        %p1019 = pneg %p418
        %p1020 = pneg %p442
        %p1021 = pneg %p439
        %p1022 = pneg %p463
        %p1023 = pneg %p460
        %p1024 = pneg %p484
        %p1025 = pneg %p481
        %p1026 = pneg %p505
        %p1027 = pneg %p502
        %p1028 = pneg %p526
        %p1029 = pneg %p523
        %p1030 = pneg %p547
        %p1031 = pneg %p544
        %p1032 = pneg %p568
        %p1033 = pneg %p565
        %p1034 = pneg %p589
        %p1035 = pneg %p586
        %p1036 = pneg %p610
        %p1037 = pneg %p607
        %p1038 = pneg %p631
        %p1039 = pneg %p628
        %p1040 = pneg %p652
        %p1041 = pneg %p649
        %p1042 = pneg %p673
        %p1043 = pneg %p670
        %p1044 = pneg %p694
        %p1045 = pneg %p691
        %p1046 = pneg %p715
        %p1047 = pneg %p712
        %p1048 = pneg %p736
        %p1049 = pneg %p733
        %p1050 = pneg %p757
        %p1051 = pneg %p754
        %p1052 = pneg %p778
        %p1053 = pneg %p775
        %p1054 = pneg %p799
        %p1055 = pneg %p796
        %p1056 = pneg %p820
        %p1057 = pneg %p817
        %p1058 = pneg %p846
        %p1059 = pneg %p843
        %s1060 = sand.u32 %s833, 1
        %s1061 = scalar_lea.sflag [#allocation4], %s1060
        %s1062 = sand.u32 %s833, 1
        %s1063 = smul.addr %s1062, 16
        %s1064 = scalar_lea.vmem [#allocation3], %s1063
        %s1065 = smul.u32 32, %s85
        %p1066 = scmp.lt.s32.totalorder %s1065, 63
        %s1067 = scalar_select %p1066, %s1065, 63
        %s1068 = smul.addr %s1067, 8
        %s1069 = scalar_lea.vmem %s1, %s1068
        %s1070 = smul.u32 32, %s85
        %s1071 = smul.u32 2, %s85
        %v1073 = vld [vmem:[%s1069] sm:$0xff]
        %v1074 = vld [vmem:[%s1069 + $0x8] sm:$0xff]
        %v1075 = vld [vmem:[%s1069 + $0x10] sm:$0xff]
        %v1076 = vld [vmem:[%s1069 + $0x18] sm:$0xff]
        %v1077 = vld [vmem:[%s1069 + $0x20] sm:$0xff]
        %v1078 = vld [vmem:[%s1069 + $0x28] sm:$0xff]
        %v1079 = vld [vmem:[%s1069 + $0x30] sm:$0xff]
        %v1080 = vld [vmem:[%s1069 + $0x38] sm:$0xff]
        %v1081 = vld [vmem:[%s1069 + $0x40] sm:$0xff]
        %v1082 = vld [vmem:[%s1069 + $0x48] sm:$0xff]
        %v1083 = vld [vmem:[%s1069 + $0x50] sm:$0xff]
        %v1084 = vld [vmem:[%s1069 + $0x58] sm:$0xff]
        %v1085 = vld [vmem:[%s1069 + $0x60] sm:$0xff]
        %v1086 = vld [vmem:[%s1069 + $0x68] sm:$0xff]
        %v1087 = vld [vmem:[%s1069 + $0x70] sm:$0xff]
        %v1088 = vld [vmem:[%s1069 + $0x78] sm:$0xff]
        %v1089 = vld [vmem:[%s1069 + $0x80] sm:$0xff]
        %v1090 = vld [vmem:[%s1069 + $0x88] sm:$0xff]
        %v1091 = vld [vmem:[%s1069 + $0x90] sm:$0xff]
        %v1092 = vld [vmem:[%s1069 + $0x98] sm:$0xff]
        %v1093 = vld [vmem:[%s1069 + $0xa0] sm:$0xff]
        %v1094 = vld [vmem:[%s1069 + $0xa8] sm:$0xff]
        %v1095 = vld [vmem:[%s1069 + $0xb0] sm:$0xff]
        %v1096 = vld [vmem:[%s1069 + $0xb8] sm:$0xff]
        %v1097 = vld [vmem:[%s1069 + $0xc0] sm:$0xff]
        %v1098 = vld [vmem:[%s1069 + $0xc8] sm:$0xff]
        %v1099 = vld [vmem:[%s1069 + $0xd0] sm:$0xff]
        %v1100 = vld [vmem:[%s1069 + $0xd8] sm:$0xff]
        %v1101 = vld [vmem:[%s1069 + $0xe0] sm:$0xff]
        %v1102 = vld [vmem:[%s1069 + $0xe8] sm:$0xff]
        %v1103 = vld [vmem:[%s1069 + $0xf0] sm:$0xff]
        %v1104 = vld [vmem:[%s1069 + $0xf8] sm:$0xff]
        %1105 = vst [vmem:[#allocation2 + $0x11] sm:$0xff] %v1073
        %1106 = vst [vmem:[#allocation2 + $0x19] sm:$0xff] %v1074
        %1107 = vst [vmem:[#allocation2 + $0x21] sm:$0xff] %v1075
        %1108 = vst [vmem:[#allocation2 + $0x29] sm:$0xff] %v1076
        %1109 = vst [vmem:[#allocation2 + $0x31] sm:$0xff] %v1077
        %1110 = vst [vmem:[#allocation2 + $0x39] sm:$0xff] %v1078
        %1111 = vst [vmem:[#allocation2 + $0x41] sm:$0xff] %v1079
        %1112 = vst [vmem:[#allocation2 + $0x49] sm:$0xff] %v1080
        %1113 = vst [vmem:[#allocation2 + $0x51] sm:$0xff] %v1081
        %1114 = vst [vmem:[#allocation2 + $0x59] sm:$0xff] %v1082
        %1115 = vst [vmem:[#allocation2 + $0x61] sm:$0xff] %v1083
        %1116 = vst [vmem:[#allocation2 + $0x69] sm:$0xff] %v1084
        %1117 = vst [vmem:[#allocation2 + $0x71] sm:$0xff] %v1085
        %1118 = vst [vmem:[#allocation2 + $0x79] sm:$0xff] %v1086
        %1119 = vst [vmem:[#allocation2 + $0x81] sm:$0xff] %v1087
        %1120 = vst [vmem:[#allocation2 + $0x89] sm:$0xff] %v1088
        %1121 = vst [vmem:[#allocation2 + $0x91] sm:$0xff] %v1089
        %1122 = vst [vmem:[#allocation2 + $0x99] sm:$0xff] %v1090
        %1123 = vst [vmem:[#allocation2 + $0xa1] sm:$0xff] %v1091
        %1124 = vst [vmem:[#allocation2 + $0xa9] sm:$0xff] %v1092
        %1125 = vst [vmem:[#allocation2 + $0xb1] sm:$0xff] %v1093
        %1126 = vst [vmem:[#allocation2 + $0xb9] sm:$0xff] %v1094
        %1127 = vst [vmem:[#allocation2 + $0xc1] sm:$0xff] %v1095
        %1128 = vst [vmem:[#allocation2 + $0xc9] sm:$0xff] %v1096
        %1129 = vst [vmem:[#allocation2 + $0xd1] sm:$0xff] %v1097
        %1130 = vst [vmem:[#allocation2 + $0xd9] sm:$0xff] %v1098
        %1131 = vst [vmem:[#allocation2 + $0xe1] sm:$0xff] %v1099
        %1132 = vst [vmem:[#allocation2 + $0xe9] sm:$0xff] %v1100
        %1133 = vst [vmem:[#allocation2 + $0xf1] sm:$0xff] %v1101
        %1134 = vst [vmem:[#allocation2 + $0xf9] sm:$0xff] %v1102
        %1135 = vst [vmem:[#allocation2 + $0x101] sm:$0xff] %v1103
        %1136 = vst [vmem:[#allocation2 + $0x109] sm:$0xff] %v1104
        %v1137 = vlaneseq
        %v1138 = vshrl.u32 %v1137, 7
        %v1139 = vadd.s32 %v1138, 8
        %v1140 = vadd.s32 %v1138, 16
        %v1141 = vadd.s32 %v1138, 24
        %v1142 = vadd.s32 %v1138, 32
        %v1143 = vadd.s32 %v1138, 40
        %v1144 = vadd.s32 %v1138, 48
        %v1145 = vadd.s32 %v1138, 56
        %v1146 = vadd.s32 %v1138, 64
        %v1147 = vadd.s32 %v1138, 72
        %v1148 = vadd.s32 %v1138, 80
        %v1149 = vadd.s32 %v1138, 88
        %v1150 = vadd.s32 %v1138, 96
        %v1151 = vadd.s32 %v1138, 104
        %v1152 = vadd.s32 %v1138, 112
        %v1153 = vadd.s32 %v1138, 120
        %v1154 = vadd.s32 %v1138, 128
        %v1155 = vadd.s32 %v1138, 136
        %v1156 = vadd.s32 %v1138, 144
        %v1157 = vadd.s32 %v1138, 152
        %v1158 = vadd.s32 %v1138, 160
        %v1159 = vadd.s32 %v1138, 168
        %v1160 = vadd.s32 %v1138, 176
        %v1161 = vadd.s32 %v1138, 184
        %v1162 = vadd.s32 %v1138, 192
        %v1163 = vadd.s32 %v1138, 200
        %v1164 = vadd.s32 %v1138, 208
        %v1165 = vadd.s32 %v1138, 216
        %v1166 = vadd.s32 %v1138, 224
        %v1167 = vadd.s32 %v1138, 232
        %v1168 = vadd.s32 %v1138, 240
        %v1169 = vadd.s32 %v1138, 248
        %v1170 = vand.u32 %v1138, 15
        %v1171 = vand.u32 %v1139, 15
        %v1172 = vand.u32 %v1140, 15
        %v1173 = vand.u32 %v1141, 15
        %v1174 = vand.u32 %v1142, 15
        %v1175 = vand.u32 %v1143, 15
        %v1176 = vand.u32 %v1144, 15
        %v1177 = vand.u32 %v1145, 15
        %v1178 = vand.u32 %v1146, 15
        %v1179 = vand.u32 %v1147, 15
        %v1180 = vand.u32 %v1148, 15
        %v1181 = vand.u32 %v1149, 15
        %v1182 = vand.u32 %v1150, 15
        %v1183 = vand.u32 %v1151, 15
        %v1184 = vand.u32 %v1152, 15
        %v1185 = vand.u32 %v1153, 15
        %v1186 = vand.u32 %v1154, 15
        %v1187 = vand.u32 %v1155, 15
        %v1188 = vand.u32 %v1156, 15
        %v1189 = vand.u32 %v1157, 15
        %v1190 = vand.u32 %v1158, 15
        %v1191 = vand.u32 %v1159, 15
        %v1192 = vand.u32 %v1160, 15
        %v1193 = vand.u32 %v1161, 15
        %v1194 = vand.u32 %v1162, 15
        %v1195 = vand.u32 %v1163, 15
        %v1196 = vand.u32 %v1164, 15
        %v1197 = vand.u32 %v1165, 15
        %v1198 = vand.u32 %v1166, 15
        %v1199 = vand.u32 %v1167, 15
        %v1200 = vand.u32 %v1168, 15
        %v1201 = vand.u32 %v1169, 15
        %v1202 = vshra.s32 %v1138, 4
        %v1203 = vshra.s32 %v1139, 4
        %v1204 = vshra.s32 %v1140, 4
        %v1205 = vshra.s32 %v1141, 4
        %v1206 = vshra.s32 %v1142, 4
        %v1207 = vshra.s32 %v1143, 4
        %v1208 = vshra.s32 %v1144, 4
        %v1209 = vshra.s32 %v1145, 4
        %v1210 = vshra.s32 %v1146, 4
        %v1211 = vshra.s32 %v1147, 4
        %v1212 = vshra.s32 %v1148, 4
        %v1213 = vshra.s32 %v1149, 4
        %v1214 = vshra.s32 %v1150, 4
        %v1215 = vshra.s32 %v1151, 4
        %v1216 = vshra.s32 %v1152, 4
        %v1217 = vshra.s32 %v1153, 4
        %v1218 = vshra.s32 %v1154, 4
        %v1219 = vshra.s32 %v1155, 4
        %v1220 = vshra.s32 %v1156, 4
        %v1221 = vshra.s32 %v1157, 4
        %v1222 = vshra.s32 %v1158, 4
        %v1223 = vshra.s32 %v1159, 4
        %v1224 = vshra.s32 %v1160, 4
        %v1225 = vshra.s32 %v1161, 4
        %v1226 = vshra.s32 %v1162, 4
        %v1227 = vshra.s32 %v1163, 4
        %v1228 = vshra.s32 %v1164, 4
        %v1229 = vshra.s32 %v1165, 4
        %v1230 = vshra.s32 %v1166, 4
        %v1231 = vshra.s32 %v1167, 4
        %v1232 = vshra.s32 %v1168, 4
        %v1233 = vshra.s32 %v1169, 4
        %vm1234 = vcmp.ge.s32.totalorder %v1202, 1
        %vm1235 = vcmp.ge.s32.totalorder %v1203, 1
        %vm1236 = vcmp.ge.s32.totalorder %v1204, 1
        %vm1237 = vcmp.ge.s32.totalorder %v1205, 1
        %vm1238 = vcmp.ge.s32.totalorder %v1206, 1
        %vm1239 = vcmp.ge.s32.totalorder %v1207, 1
        %vm1240 = vcmp.ge.s32.totalorder %v1208, 1
        %vm1241 = vcmp.ge.s32.totalorder %v1209, 1
        %vm1242 = vcmp.ge.s32.totalorder %v1210, 1
        %vm1243 = vcmp.ge.s32.totalorder %v1211, 1
        %vm1244 = vcmp.ge.s32.totalorder %v1212, 1
        %vm1245 = vcmp.ge.s32.totalorder %v1213, 1
        %vm1246 = vcmp.ge.s32.totalorder %v1214, 1
        %vm1247 = vcmp.ge.s32.totalorder %v1215, 1
        %vm1248 = vcmp.ge.s32.totalorder %v1216, 1
        %vm1249 = vcmp.ge.s32.totalorder %v1217, 1
        %vm1250 = vcmp.ge.s32.totalorder %v1218, 1
        %vm1251 = vcmp.ge.s32.totalorder %v1219, 1
        %vm1252 = vcmp.ge.s32.totalorder %v1220, 1
        %vm1253 = vcmp.ge.s32.totalorder %v1221, 1
        %vm1254 = vcmp.ge.s32.totalorder %v1222, 1
        %vm1255 = vcmp.ge.s32.totalorder %v1223, 1
        %vm1256 = vcmp.ge.s32.totalorder %v1224, 1
        %vm1257 = vcmp.ge.s32.totalorder %v1225, 1
        %vm1258 = vcmp.ge.s32.totalorder %v1226, 1
        %vm1259 = vcmp.ge.s32.totalorder %v1227, 1
        %vm1260 = vcmp.ge.s32.totalorder %v1228, 1
        %vm1261 = vcmp.ge.s32.totalorder %v1229, 1
        %vm1262 = vcmp.ge.s32.totalorder %v1230, 1
        %vm1263 = vcmp.ge.s32.totalorder %v1231, 1
        %vm1264 = vcmp.ge.s32.totalorder %v1232, 1
        %vm1265 = vcmp.ge.s32.totalorder %v1233, 1
        %vm1266 = vcmp.le.s32.totalorder %v1202, 14
        %vm1267 = vcmp.le.s32.totalorder %v1203, 14
        %vm1268 = vcmp.le.s32.totalorder %v1204, 14
        %vm1269 = vcmp.le.s32.totalorder %v1205, 14
        %vm1270 = vcmp.le.s32.totalorder %v1206, 14
        %vm1271 = vcmp.le.s32.totalorder %v1207, 14
        %vm1272 = vcmp.le.s32.totalorder %v1208, 14
        %vm1273 = vcmp.le.s32.totalorder %v1209, 14
        %vm1274 = vcmp.le.s32.totalorder %v1210, 14
        %vm1275 = vcmp.le.s32.totalorder %v1211, 14
        %vm1276 = vcmp.le.s32.totalorder %v1212, 14
        %vm1277 = vcmp.le.s32.totalorder %v1213, 14
        %vm1278 = vcmp.le.s32.totalorder %v1214, 14
        %vm1279 = vcmp.le.s32.totalorder %v1215, 14
        %vm1280 = vcmp.le.s32.totalorder %v1216, 14
        %vm1281 = vcmp.le.s32.totalorder %v1217, 14
        %vm1282 = vcmp.le.s32.totalorder %v1218, 14
        %vm1283 = vcmp.le.s32.totalorder %v1219, 14
        %vm1284 = vcmp.le.s32.totalorder %v1220, 14
        %vm1285 = vcmp.le.s32.totalorder %v1221, 14
        %vm1286 = vcmp.le.s32.totalorder %v1222, 14
        %vm1287 = vcmp.le.s32.totalorder %v1223, 14
        %vm1288 = vcmp.le.s32.totalorder %v1224, 14
        %vm1289 = vcmp.le.s32.totalorder %v1225, 14
        %vm1290 = vcmp.le.s32.totalorder %v1226, 14
        %vm1291 = vcmp.le.s32.totalorder %v1227, 14
        %vm1292 = vcmp.le.s32.totalorder %v1228, 14
        %vm1293 = vcmp.le.s32.totalorder %v1229, 14
        %vm1294 = vcmp.le.s32.totalorder %v1230, 14
        %vm1295 = vcmp.le.s32.totalorder %v1231, 14
        %vm1296 = vcmp.le.s32.totalorder %v1232, 14
        %vm1297 = vcmp.le.s32.totalorder %v1233, 14
        %vm1298 = vcmp.ge.s32.totalorder %v1170, 1
        %vm1299 = vcmp.ge.s32.totalorder %v1171, 1
        %vm1300 = vcmp.ge.s32.totalorder %v1172, 1
        %vm1301 = vcmp.ge.s32.totalorder %v1173, 1
        %vm1302 = vcmp.ge.s32.totalorder %v1174, 1
        %vm1303 = vcmp.ge.s32.totalorder %v1175, 1
        %vm1304 = vcmp.ge.s32.totalorder %v1176, 1
        %vm1305 = vcmp.ge.s32.totalorder %v1177, 1
        %vm1306 = vcmp.ge.s32.totalorder %v1178, 1
        %vm1307 = vcmp.ge.s32.totalorder %v1179, 1
        %vm1308 = vcmp.ge.s32.totalorder %v1180, 1
        %vm1309 = vcmp.ge.s32.totalorder %v1181, 1
        %vm1310 = vcmp.ge.s32.totalorder %v1182, 1
        %vm1311 = vcmp.ge.s32.totalorder %v1183, 1
        %vm1312 = vcmp.ge.s32.totalorder %v1184, 1
        %vm1313 = vcmp.ge.s32.totalorder %v1185, 1
        %vm1314 = vcmp.ge.s32.totalorder %v1186, 1
        %vm1315 = vcmp.ge.s32.totalorder %v1187, 1
        %vm1316 = vcmp.ge.s32.totalorder %v1188, 1
        %vm1317 = vcmp.ge.s32.totalorder %v1189, 1
        %vm1318 = vcmp.ge.s32.totalorder %v1190, 1
        %vm1319 = vcmp.ge.s32.totalorder %v1191, 1
        %vm1320 = vcmp.ge.s32.totalorder %v1192, 1
        %vm1321 = vcmp.ge.s32.totalorder %v1193, 1
        %vm1322 = vcmp.ge.s32.totalorder %v1194, 1
        %vm1323 = vcmp.ge.s32.totalorder %v1195, 1
        %vm1324 = vcmp.ge.s32.totalorder %v1196, 1
        %vm1325 = vcmp.ge.s32.totalorder %v1197, 1
        %vm1326 = vcmp.ge.s32.totalorder %v1198, 1
        %vm1327 = vcmp.ge.s32.totalorder %v1199, 1
        %vm1328 = vcmp.ge.s32.totalorder %v1200, 1
        %vm1329 = vcmp.ge.s32.totalorder %v1201, 1
        %vm1330 = vcmp.le.s32.totalorder %v1170, 14
        %vm1331 = vcmp.le.s32.totalorder %v1171, 14
        %vm1332 = vcmp.le.s32.totalorder %v1172, 14
        %vm1333 = vcmp.le.s32.totalorder %v1173, 14
        %vm1334 = vcmp.le.s32.totalorder %v1174, 14
        %vm1335 = vcmp.le.s32.totalorder %v1175, 14
        %vm1336 = vcmp.le.s32.totalorder %v1176, 14
        %vm1337 = vcmp.le.s32.totalorder %v1177, 14
        %vm1338 = vcmp.le.s32.totalorder %v1178, 14
        %vm1339 = vcmp.le.s32.totalorder %v1179, 14
        %vm1340 = vcmp.le.s32.totalorder %v1180, 14
        %vm1341 = vcmp.le.s32.totalorder %v1181, 14
        %vm1342 = vcmp.le.s32.totalorder %v1182, 14
        %vm1343 = vcmp.le.s32.totalorder %v1183, 14
        %vm1344 = vcmp.le.s32.totalorder %v1184, 14
        %vm1345 = vcmp.le.s32.totalorder %v1185, 14
        %vm1346 = vcmp.le.s32.totalorder %v1186, 14
        %vm1347 = vcmp.le.s32.totalorder %v1187, 14
        %vm1348 = vcmp.le.s32.totalorder %v1188, 14
        %vm1349 = vcmp.le.s32.totalorder %v1189, 14
        %vm1350 = vcmp.le.s32.totalorder %v1190, 14
        %vm1351 = vcmp.le.s32.totalorder %v1191, 14
        %vm1352 = vcmp.le.s32.totalorder %v1192, 14
        %vm1353 = vcmp.le.s32.totalorder %v1193, 14
        %vm1354 = vcmp.le.s32.totalorder %v1194, 14
        %vm1355 = vcmp.le.s32.totalorder %v1195, 14
        %vm1356 = vcmp.le.s32.totalorder %v1196, 14
        %vm1357 = vcmp.le.s32.totalorder %v1197, 14
        %vm1358 = vcmp.le.s32.totalorder %v1198, 14
        %vm1359 = vcmp.le.s32.totalorder %v1199, 14
        %vm1360 = vcmp.le.s32.totalorder %v1200, 14
        %vm1361 = vcmp.le.s32.totalorder %v1201, 14
        %v1362 = vld [vmem:[#allocation2] sm:$0xff]
        %v1363 = vld [vmem:[#allocation2 + $0x8] sm:$0xff]
        %v1364 = vld [vmem:[#allocation2 + $0x10] sm:$0xff]
        %v1365 = vld [vmem:[#allocation2 + $0x18] sm:$0xff]
        %v1366 = vld [vmem:[#allocation2 + $0x20] sm:$0xff]
        %v1367 = vld [vmem:[#allocation2 + $0x28] sm:$0xff]
        %v1368 = vld [vmem:[#allocation2 + $0x30] sm:$0xff]
        %v1369 = vld [vmem:[#allocation2 + $0x38] sm:$0xff]
        %v1370 = vld [vmem:[#allocation2 + $0x40] sm:$0xff]
        %v1371 = vld [vmem:[#allocation2 + $0x48] sm:$0xff]
        %v1372 = vld [vmem:[#allocation2 + $0x50] sm:$0xff]
        %v1373 = vld [vmem:[#allocation2 + $0x58] sm:$0xff]
        %v1374 = vld [vmem:[#allocation2 + $0x60] sm:$0xff]
        %v1375 = vld [vmem:[#allocation2 + $0x68] sm:$0xff]
        %v1376 = vld [vmem:[#allocation2 + $0x70] sm:$0xff]
        %v1377 = vld [vmem:[#allocation2 + $0x78] sm:$0xff]
        %v1378 = vld [vmem:[#allocation2 + $0x80] sm:$0xff]
        %v1379 = vld [vmem:[#allocation2 + $0x88] sm:$0xff]
        %v1380 = vld [vmem:[#allocation2 + $0x90] sm:$0xff]
        %v1381 = vld [vmem:[#allocation2 + $0x98] sm:$0xff]
        %v1382 = vld [vmem:[#allocation2 + $0xa0] sm:$0xff]
        %v1383 = vld [vmem:[#allocation2 + $0xa8] sm:$0xff]
        %v1384 = vld [vmem:[#allocation2 + $0xb0] sm:$0xff]
        %v1385 = vld [vmem:[#allocation2 + $0xb8] sm:$0xff]
        %v1386 = vld [vmem:[#allocation2 + $0xc0] sm:$0xff]
        %v1387 = vld [vmem:[#allocation2 + $0xc8] sm:$0xff]
        %v1388 = vld [vmem:[#allocation2 + $0xd0] sm:$0xff]
        %v1389 = vld [vmem:[#allocation2 + $0xd8] sm:$0xff]
        %v1390 = vld [vmem:[#allocation2 + $0xe0] sm:$0xff]
        %v1391 = vld [vmem:[#allocation2 + $0xe8] sm:$0xff]
        %v1392 = vld [vmem:[#allocation2 + $0xf0] sm:$0xff]
        %v1393 = vld [vmem:[#allocation2 + $0xf8] sm:$0xff]
        %vm1394 = vmand %vm1234, %vm1298
        %vm1395 = vmand %vm1235, %vm1299
        %vm1396 = vmand %vm1236, %vm1300
        %vm1397 = vmand %vm1237, %vm1301
        %vm1398 = vmand %vm1238, %vm1302
        %vm1399 = vmand %vm1239, %vm1303
        %vm1400 = vmand %vm1240, %vm1304
        %vm1401 = vmand %vm1241, %vm1305
        %vm1402 = vmand %vm1242, %vm1306
        %vm1403 = vmand %vm1243, %vm1307
        %vm1404 = vmand %vm1244, %vm1308
        %vm1405 = vmand %vm1245, %vm1309
        %vm1406 = vmand %vm1246, %vm1310
        %vm1407 = vmand %vm1247, %vm1311
        %vm1408 = vmand %vm1248, %vm1312
        %vm1409 = vmand %vm1249, %vm1313
        %vm1410 = vmand %vm1250, %vm1314
        %vm1411 = vmand %vm1251, %vm1315
        %vm1412 = vmand %vm1252, %vm1316
        %vm1413 = vmand %vm1253, %vm1317
        %vm1414 = vmand %vm1254, %vm1318
        %vm1415 = vmand %vm1255, %vm1319
        %vm1416 = vmand %vm1256, %vm1320
        %vm1417 = vmand %vm1257, %vm1321
        %vm1418 = vmand %vm1258, %vm1322
        %vm1419 = vmand %vm1259, %vm1323
        %vm1420 = vmand %vm1260, %vm1324
        %vm1421 = vmand %vm1261, %vm1325
        %vm1422 = vmand %vm1262, %vm1326
        %vm1423 = vmand %vm1263, %vm1327
        %vm1424 = vmand %vm1264, %vm1328
        %vm1425 = vmand %vm1265, %vm1329
        %v1426 = vsel %vm1394, 1, 0
        %v1427 = vsel %vm1395, 1, 0
        %v1428 = vsel %vm1396, 1, 0
        %v1429 = vsel %vm1397, 1, 0
        %v1430 = vsel %vm1398, 1, 0
        %v1431 = vsel %vm1399, 1, 0
        %v1432 = vsel %vm1400, 1, 0
        %v1433 = vsel %vm1401, 1, 0
        %v1434 = vsel %vm1402, 1, 0
        %v1435 = vsel %vm1403, 1, 0
        %v1436 = vsel %vm1404, 1, 0
        %v1437 = vsel %vm1405, 1, 0
        %v1438 = vsel %vm1406, 1, 0
        %v1439 = vsel %vm1407, 1, 0
        %v1440 = vsel %vm1408, 1, 0
        %v1441 = vsel %vm1409, 1, 0
        %v1442 = vsel %vm1410, 1, 0
        %v1443 = vsel %vm1411, 1, 0
        %v1444 = vsel %vm1412, 1, 0
        %v1445 = vsel %vm1413, 1, 0
        %v1446 = vsel %vm1414, 1, 0
        %v1447 = vsel %vm1415, 1, 0
        %v1448 = vsel %vm1416, 1, 0
        %v1449 = vsel %vm1417, 1, 0
        %v1450 = vsel %vm1418, 1, 0
        %v1451 = vsel %vm1419, 1, 0
        %v1452 = vsel %vm1420, 1, 0
        %v1453 = vsel %vm1421, 1, 0
        %v1454 = vsel %vm1422, 1, 0
        %v1455 = vsel %vm1423, 1, 0
        %v1456 = vsel %vm1424, 1, 0
        %v1457 = vsel %vm1425, 1, 0
        %vm1458 = vcmp.eq.s32.totalorder %v1426, 1
        %vm1459 = vcmp.eq.s32.totalorder %v1427, 1
        %vm1460 = vcmp.eq.s32.totalorder %v1428, 1
        %vm1461 = vcmp.eq.s32.totalorder %v1429, 1
        %vm1462 = vcmp.eq.s32.totalorder %v1430, 1
        %vm1463 = vcmp.eq.s32.totalorder %v1431, 1
        %vm1464 = vcmp.eq.s32.totalorder %v1432, 1
        %vm1465 = vcmp.eq.s32.totalorder %v1433, 1
        %vm1466 = vcmp.eq.s32.totalorder %v1434, 1
        %vm1467 = vcmp.eq.s32.totalorder %v1435, 1
        %vm1468 = vcmp.eq.s32.totalorder %v1436, 1
        %vm1469 = vcmp.eq.s32.totalorder %v1437, 1
        %vm1470 = vcmp.eq.s32.totalorder %v1438, 1
        %vm1471 = vcmp.eq.s32.totalorder %v1439, 1
        %vm1472 = vcmp.eq.s32.totalorder %v1440, 1
        %vm1473 = vcmp.eq.s32.totalorder %v1441, 1
        %vm1474 = vcmp.eq.s32.totalorder %v1442, 1
        %vm1475 = vcmp.eq.s32.totalorder %v1443, 1
        %vm1476 = vcmp.eq.s32.totalorder %v1444, 1
        %vm1477 = vcmp.eq.s32.totalorder %v1445, 1
        %vm1478 = vcmp.eq.s32.totalorder %v1446, 1
        %vm1479 = vcmp.eq.s32.totalorder %v1447, 1
        %vm1480 = vcmp.eq.s32.totalorder %v1448, 1
        %vm1481 = vcmp.eq.s32.totalorder %v1449, 1
        %vm1482 = vcmp.eq.s32.totalorder %v1450, 1
        %vm1483 = vcmp.eq.s32.totalorder %v1451, 1
        %vm1484 = vcmp.eq.s32.totalorder %v1452, 1
        %vm1485 = vcmp.eq.s32.totalorder %v1453, 1
        %vm1486 = vcmp.eq.s32.totalorder %v1454, 1
        %vm1487 = vcmp.eq.s32.totalorder %v1455, 1
        %vm1488 = vcmp.eq.s32.totalorder %v1456, 1
        %vm1489 = vcmp.eq.s32.totalorder %v1457, 1
        %v1490 = vsel %vm1458, %v1362, 0.0
        %v1491 = vsel %vm1459, %v1363, 0.0
        %v1492 = vsel %vm1460, %v1364, 0.0
        %v1493 = vsel %vm1461, %v1365, 0.0
        %v1494 = vsel %vm1462, %v1366, 0.0
        %v1495 = vsel %vm1463, %v1367, 0.0
        %v1496 = vsel %vm1464, %v1368, 0.0
        %v1497 = vsel %vm1465, %v1369, 0.0
        %v1498 = vsel %vm1466, %v1370, 0.0
        %v1499 = vsel %vm1467, %v1371, 0.0
        %v1500 = vsel %vm1468, %v1372, 0.0
        %v1501 = vsel %vm1469, %v1373, 0.0
        %v1502 = vsel %vm1470, %v1374, 0.0
        %v1503 = vsel %vm1471, %v1375, 0.0
        %v1504 = vsel %vm1472, %v1376, 0.0
        %v1505 = vsel %vm1473, %v1377, 0.0
        %v1506 = vsel %vm1474, %v1378, 0.0
        %v1507 = vsel %vm1475, %v1379, 0.0
        %v1508 = vsel %vm1476, %v1380, 0.0
        %v1509 = vsel %vm1477, %v1381, 0.0
        %v1510 = vsel %vm1478, %v1382, 0.0
        %v1511 = vsel %vm1479, %v1383, 0.0
        %v1512 = vsel %vm1480, %v1384, 0.0
        %v1513 = vsel %vm1481, %v1385, 0.0
        %v1514 = vsel %vm1482, %v1386, 0.0
        %v1515 = vsel %vm1483, %v1387, 0.0
        %v1516 = vsel %vm1484, %v1388, 0.0
        %v1517 = vsel %vm1485, %v1389, 0.0
        %v1518 = vsel %vm1486, %v1390, 0.0
        %v1519 = vsel %vm1487, %v1391, 0.0
        %v1520 = vsel %vm1488, %v1392, 0.0
        %v1521 = vsel %vm1489, %v1393, 0.0
        %v1522 = vpack.c.bf16 %v1491, %v1490
        %v1523 = vpack.c.bf16 %v1493, %v1492
        %v1524 = vpack.c.bf16 %v1495, %v1494
        %v1525 = vpack.c.bf16 %v1497, %v1496
        %v1526 = vpack.c.bf16 %v1499, %v1498
        %v1527 = vpack.c.bf16 %v1501, %v1500
        %v1528 = vpack.c.bf16 %v1503, %v1502
        %v1529 = vpack.c.bf16 %v1505, %v1504
        %v1530 = vpack.c.bf16 %v1507, %v1506
        %v1531 = vpack.c.bf16 %v1509, %v1508
        %v1532 = vpack.c.bf16 %v1511, %v1510
        %v1533 = vpack.c.bf16 %v1513, %v1512
        %v1534 = vpack.c.bf16 %v1515, %v1514
        %v1535 = vpack.c.bf16 %v1517, %v1516
        %v1536 = vpack.c.bf16 %v1519, %v1518
        %v1537 = vpack.c.bf16 %v1521, %v1520
        %v1538 = vld [vmem:[%s3] sm:$0xf]
        %v1539 = vld [vmem:[%s3 + $0x4] sm:$0xf]
        %v1540 = vld [vmem:[%s3 + $0x8] sm:$0xf]
        %v1541 = vld [vmem:[%s3 + $0xc] sm:$0xf]
        %v1542 = vld [vmem:[%s3 + $0x10] sm:$0xf]
        %v1543 = vld [vmem:[%s3 + $0x14] sm:$0xf]
        %v1544 = vld [vmem:[%s3 + $0x18] sm:$0xf]
        %v1545 = vld [vmem:[%s3 + $0x1c] sm:$0xf]
        %v1546 = vld [vmem:[%s3 + $0x20] sm:$0xf]
        %v1547 = vld [vmem:[%s3 + $0x24] sm:$0xf]
        %v1548 = vld [vmem:[%s3 + $0x28] sm:$0xf]
        %v1549 = vld [vmem:[%s3 + $0x2c] sm:$0xf]
        %v1550 = vld [vmem:[%s3 + $0x30] sm:$0xf]
        %v1551 = vld [vmem:[%s3 + $0x34] sm:$0xf]
        %v1552 = vld [vmem:[%s3 + $0x38] sm:$0xf]
        %v1553 = vld [vmem:[%s3 + $0x3c] sm:$0xf]
        %v1554 = vld [vmem:[#allocation2 + $0x1] sm:$0xff]
        %v1555 = vld [vmem:[#allocation2 + $0x9] sm:$0xff]
        %v1556 = vld [vmem:[#allocation2 + $0x11] sm:$0xff]
        %v1557 = vld [vmem:[#allocation2 + $0x19] sm:$0xff]
        %v1558 = vld [vmem:[#allocation2 + $0x21] sm:$0xff]
        %v1559 = vld [vmem:[#allocation2 + $0x29] sm:$0xff]
        %v1560 = vld [vmem:[#allocation2 + $0x31] sm:$0xff]
        %v1561 = vld [vmem:[#allocation2 + $0x39] sm:$0xff]
        %v1562 = vld [vmem:[#allocation2 + $0x41] sm:$0xff]
        %v1563 = vld [vmem:[#allocation2 + $0x49] sm:$0xff]
        %v1564 = vld [vmem:[#allocation2 + $0x51] sm:$0xff]
        %v1565 = vld [vmem:[#allocation2 + $0x59] sm:$0xff]
        %v1566 = vld [vmem:[#allocation2 + $0x61] sm:$0xff]
        %v1567 = vld [vmem:[#allocation2 + $0x69] sm:$0xff]
        %v1568 = vld [vmem:[#allocation2 + $0x71] sm:$0xff]
        %v1569 = vld [vmem:[#allocation2 + $0x79] sm:$0xff]
        %v1570 = vld [vmem:[#allocation2 + $0x81] sm:$0xff]
        %v1571 = vld [vmem:[#allocation2 + $0x89] sm:$0xff]
        %v1572 = vld [vmem:[#allocation2 + $0x91] sm:$0xff]
        %v1573 = vld [vmem:[#allocation2 + $0x99] sm:$0xff]
        %v1574 = vld [vmem:[#allocation2 + $0xa1] sm:$0xff]
        %v1575 = vld [vmem:[#allocation2 + $0xa9] sm:$0xff]
        %v1576 = vld [vmem:[#allocation2 + $0xb1] sm:$0xff]
        %v1577 = vld [vmem:[#allocation2 + $0xb9] sm:$0xff]
        %v1578 = vld [vmem:[#allocation2 + $0xc1] sm:$0xff]
        %v1579 = vld [vmem:[#allocation2 + $0xc9] sm:$0xff]
        %v1580 = vld [vmem:[#allocation2 + $0xd1] sm:$0xff]
        %v1581 = vld [vmem:[#allocation2 + $0xd9] sm:$0xff]
        %v1582 = vld [vmem:[#allocation2 + $0xe1] sm:$0xff]
        %v1583 = vld [vmem:[#allocation2 + $0xe9] sm:$0xff]
        %v1584 = vld [vmem:[#allocation2 + $0xf1] sm:$0xff]
        %v1585 = vld [vmem:[#allocation2 + $0xf9] sm:$0xff]
        %v1586 = vsel %vm1234, 1, 0
        %v1587 = vsel %vm1235, 1, 0
        %v1588 = vsel %vm1236, 1, 0
        %v1589 = vsel %vm1237, 1, 0
        %v1590 = vsel %vm1238, 1, 0
        %v1591 = vsel %vm1239, 1, 0
        %v1592 = vsel %vm1240, 1, 0
        %v1593 = vsel %vm1241, 1, 0
        %v1594 = vsel %vm1242, 1, 0
        %v1595 = vsel %vm1243, 1, 0
        %v1596 = vsel %vm1244, 1, 0
        %v1597 = vsel %vm1245, 1, 0
        %v1598 = vsel %vm1246, 1, 0
        %v1599 = vsel %vm1247, 1, 0
        %v1600 = vsel %vm1248, 1, 0
        %v1601 = vsel %vm1249, 1, 0
        %v1602 = vsel %vm1250, 1, 0
        %v1603 = vsel %vm1251, 1, 0
        %v1604 = vsel %vm1252, 1, 0
        %v1605 = vsel %vm1253, 1, 0
        %v1606 = vsel %vm1254, 1, 0
        %v1607 = vsel %vm1255, 1, 0
        %v1608 = vsel %vm1256, 1, 0
        %v1609 = vsel %vm1257, 1, 0
        %v1610 = vsel %vm1258, 1, 0
        %v1611 = vsel %vm1259, 1, 0
        %v1612 = vsel %vm1260, 1, 0
        %v1613 = vsel %vm1261, 1, 0
        %v1614 = vsel %vm1262, 1, 0
        %v1615 = vsel %vm1263, 1, 0
        %v1616 = vsel %vm1264, 1, 0
        %v1617 = vsel %vm1265, 1, 0
        %vm1618 = vcmp.eq.s32.totalorder %v1586, 1
        %vm1619 = vcmp.eq.s32.totalorder %v1587, 1
        %vm1620 = vcmp.eq.s32.totalorder %v1588, 1
        %vm1621 = vcmp.eq.s32.totalorder %v1589, 1
        %vm1622 = vcmp.eq.s32.totalorder %v1590, 1
        %vm1623 = vcmp.eq.s32.totalorder %v1591, 1
        %vm1624 = vcmp.eq.s32.totalorder %v1592, 1
        %vm1625 = vcmp.eq.s32.totalorder %v1593, 1
        %vm1626 = vcmp.eq.s32.totalorder %v1594, 1
        %vm1627 = vcmp.eq.s32.totalorder %v1595, 1
        %vm1628 = vcmp.eq.s32.totalorder %v1596, 1
        %vm1629 = vcmp.eq.s32.totalorder %v1597, 1
        %vm1630 = vcmp.eq.s32.totalorder %v1598, 1
        %vm1631 = vcmp.eq.s32.totalorder %v1599, 1
        %vm1632 = vcmp.eq.s32.totalorder %v1600, 1
        %vm1633 = vcmp.eq.s32.totalorder %v1601, 1
        %vm1634 = vcmp.eq.s32.totalorder %v1602, 1
        %vm1635 = vcmp.eq.s32.totalorder %v1603, 1
        %vm1636 = vcmp.eq.s32.totalorder %v1604, 1
        %vm1637 = vcmp.eq.s32.totalorder %v1605, 1
        %vm1638 = vcmp.eq.s32.totalorder %v1606, 1
        %vm1639 = vcmp.eq.s32.totalorder %v1607, 1
        %vm1640 = vcmp.eq.s32.totalorder %v1608, 1
        %vm1641 = vcmp.eq.s32.totalorder %v1609, 1
        %vm1642 = vcmp.eq.s32.totalorder %v1610, 1
        %vm1643 = vcmp.eq.s32.totalorder %v1611, 1
        %vm1644 = vcmp.eq.s32.totalorder %v1612, 1
        %vm1645 = vcmp.eq.s32.totalorder %v1613, 1
        %vm1646 = vcmp.eq.s32.totalorder %v1614, 1
        %vm1647 = vcmp.eq.s32.totalorder %v1615, 1
        %vm1648 = vcmp.eq.s32.totalorder %v1616, 1
        %vm1649 = vcmp.eq.s32.totalorder %v1617, 1
        %v1650 = vsel %vm1618, %v1554, 0.0
        %v1651 = vsel %vm1619, %v1555, 0.0
        %v1652 = vsel %vm1620, %v1556, 0.0
        %v1653 = vsel %vm1621, %v1557, 0.0
        %v1654 = vsel %vm1622, %v1558, 0.0
        %v1655 = vsel %vm1623, %v1559, 0.0
        %v1656 = vsel %vm1624, %v1560, 0.0
        %v1657 = vsel %vm1625, %v1561, 0.0
        %v1658 = vsel %vm1626, %v1562, 0.0
        %v1659 = vsel %vm1627, %v1563, 0.0
        %v1660 = vsel %vm1628, %v1564, 0.0
        %v1661 = vsel %vm1629, %v1565, 0.0
        %v1662 = vsel %vm1630, %v1566, 0.0
        %v1663 = vsel %vm1631, %v1567, 0.0
        %v1664 = vsel %vm1632, %v1568, 0.0
        %v1665 = vsel %vm1633, %v1569, 0.0
        %v1666 = vsel %vm1634, %v1570, 0.0
        %v1667 = vsel %vm1635, %v1571, 0.0
        %v1668 = vsel %vm1636, %v1572, 0.0
        %v1669 = vsel %vm1637, %v1573, 0.0
        %v1670 = vsel %vm1638, %v1574, 0.0
        %v1671 = vsel %vm1639, %v1575, 0.0
        %v1672 = vsel %vm1640, %v1576, 0.0
        %v1673 = vsel %vm1641, %v1577, 0.0
        %v1674 = vsel %vm1642, %v1578, 0.0
        %v1675 = vsel %vm1643, %v1579, 0.0
        %v1676 = vsel %vm1644, %v1580, 0.0
        %v1677 = vsel %vm1645, %v1581, 0.0
        %v1678 = vsel %vm1646, %v1582, 0.0
        %v1679 = vsel %vm1647, %v1583, 0.0
        %v1680 = vsel %vm1648, %v1584, 0.0
        %v1681 = vsel %vm1649, %v1585, 0.0
        %v1682 = vpack.c.bf16 %v1651, %v1650
        %v1683 = vpack.c.bf16 %v1653, %v1652
        %v1684 = vpack.c.bf16 %v1655, %v1654
        %v1685 = vpack.c.bf16 %v1657, %v1656
        %v1686 = vpack.c.bf16 %v1659, %v1658
        %v1687 = vpack.c.bf16 %v1661, %v1660
        %v1688 = vpack.c.bf16 %v1663, %v1662
        %v1689 = vpack.c.bf16 %v1665, %v1664
        %v1690 = vpack.c.bf16 %v1667, %v1666
        %v1691 = vpack.c.bf16 %v1669, %v1668
        %v1692 = vpack.c.bf16 %v1671, %v1670
        %v1693 = vpack.c.bf16 %v1673, %v1672
        %v1694 = vpack.c.bf16 %v1675, %v1674
        %v1695 = vpack.c.bf16 %v1677, %v1676
        %v1696 = vpack.c.bf16 %v1679, %v1678
        %v1697 = vpack.c.bf16 %v1681, %v1680
        %s1698 = scalar_lea.vmem %s3, 64
        %v1699 = vld [vmem:[%s1698] sm:$0xf]
        %v1700 = vld [vmem:[%s1698 + $0x4] sm:$0xf]
        %v1701 = vld [vmem:[%s1698 + $0x8] sm:$0xf]
        %v1702 = vld [vmem:[%s1698 + $0xc] sm:$0xf]
        %v1703 = vld [vmem:[%s1698 + $0x10] sm:$0xf]
        %v1704 = vld [vmem:[%s1698 + $0x14] sm:$0xf]
        %v1705 = vld [vmem:[%s1698 + $0x18] sm:$0xf]
        %v1706 = vld [vmem:[%s1698 + $0x1c] sm:$0xf]
        %v1707 = vld [vmem:[%s1698 + $0x20] sm:$0xf]
        %v1708 = vld [vmem:[%s1698 + $0x24] sm:$0xf]
        %v1709 = vld [vmem:[%s1698 + $0x28] sm:$0xf]
        %v1710 = vld [vmem:[%s1698 + $0x2c] sm:$0xf]
        %v1711 = vld [vmem:[%s1698 + $0x30] sm:$0xf]
        %v1712 = vld [vmem:[%s1698 + $0x34] sm:$0xf]
        %v1713 = vld [vmem:[%s1698 + $0x38] sm:$0xf]
        %v1714 = vld [vmem:[%s1698 + $0x3c] sm:$0xf]
        %v1731 = vunpack.c.l.b16 %v1699
        %v1732 = vunpack.c.l.b16 %v1700
        %v1733 = vunpack.c.l.b16 %v1701
        %v1734 = vunpack.c.l.b16 %v1702
        %v1735 = vunpack.c.l.b16 %v1703
        %v1736 = vunpack.c.l.b16 %v1704
        %v1737 = vunpack.c.l.b16 %v1705
        %v1738 = vunpack.c.l.b16 %v1706
        %v1739 = vunpack.c.l.b16 %v1707
        %v1740 = vunpack.c.l.b16 %v1708
        %v1741 = vunpack.c.l.b16 %v1709
        %v1742 = vunpack.c.l.b16 %v1710
        %v1743 = vunpack.c.l.b16 %v1711
        %v1744 = vunpack.c.l.b16 %v1712
        %v1745 = vunpack.c.l.b16 %v1713
        %v1746 = vunpack.c.l.b16 %v1714
        %v1747 = vpack.c.b16 %v1732, %v1731
        %v1748 = vpack.c.b16 %v1734, %v1733
        %v1749 = vpack.c.b16 %v1736, %v1735
        %v1750 = vpack.c.b16 %v1738, %v1737
        %v1751 = vpack.c.b16 %v1740, %v1739
        %v1752 = vpack.c.b16 %v1742, %v1741
        %v1753 = vpack.c.b16 %v1744, %v1743
        %v1754 = vpack.c.b16 %v1746, %v1745
        %1763 = vmatprep.subr.bf16.mxu0 0
        %1764 = vmatpush1.bf16.msra.mxu0 %v1747
        %1765 = vmatprep.subr.bf16.mxu0 0
        %1766 = vmatpush1.bf16.msra.mxu0 %v1748
        %1767 = vmatprep.subr.bf16.mxu0 0
        %1768 = vmatpush1.bf16.msra.mxu0 %v1749
        %1769 = vmatprep.subr.bf16.mxu0 0
        %1770 = vmatpush1.bf16.msra.mxu0 %v1750
        %1771 = vmatprep.subr.bf16.mxu0 0
        %1772 = vmatpush1.bf16.msra.mxu0 %v1751
        %1773 = vmatprep.subr.bf16.mxu0 0
        %1774 = vmatpush1.bf16.msra.mxu0 %v1752
        %1775 = vmatprep.subr.bf16.mxu0 0
        %1776 = vmatpush1.bf16.msra.mxu0 %v1753
        %1777 = vmatprep.subr.bf16.mxu0 0
        %1778 = vmatpush1.bf16.msra.mxu0 %v1754
        %1779 = vmatprep.subr.bf16.mxu0 0
        %1780 = vmatpush1.bf16.msra.mxu0 0
        %1781 = vmatprep.subr.bf16.mxu0 0
        %1782 = vmatpush1.bf16.msra.mxu0 0
        %1783 = vmatprep.subr.bf16.mxu0 0
        %1784 = vmatpush1.bf16.msra.mxu0 0
        %1785 = vmatprep.subr.bf16.mxu0 0
        %1786 = vmatpush1.bf16.msra.mxu0 0
        %1787 = vmatprep.subr.bf16.mxu0 0
        %1788 = vmatpush1.bf16.msra.mxu0 0
        %1789 = vmatprep.subr.bf16.mxu0 0
        %1790 = vmatpush1.bf16.msra.mxu0 0
        %1791 = vmatprep.subr.bf16.mxu0 0
        %1792 = vmatpush1.bf16.msra.mxu0 0
        %1793 = vmatprep.subr.bf16.mxu0 0
        %1794 = vmatpush1.bf16.msra.mxu0 0
        %1795 = vmatprep.mubr.bf16.mxu0 0
        %1796 = vmatmul.mubr.bf16.gmra.mrb[0].mxu0 %v1682
        %v1797 = vpop.f32.mrb[0].mxu0
        %v1798 = vadd.f32 0.0, %v1797
        %v1799 = vpop.f32.mrb[0].mxu0
        %v1800 = vpop.f32.mrb[0].mxu0
        %v1801 = vadd.f32 0.0, %v1800
        %v1802 = vpop.f32.mrb[0].mxu0
        %1803 = vmatprep.mubr.bf16.mxu0 0
        %1804 = vmatmul.mubr.bf16.gmra.mrb[0].mxu0 %v1683
        %v1805 = vpop.f32.mrb[0].mxu0
        %v1806 = vadd.f32 0.0, %v1805
        %v1807 = vpop.f32.mrb[0].mxu0
        %v1808 = vpop.f32.mrb[0].mxu0
        %v1809 = vadd.f32 0.0, %v1808
        %v1810 = vpop.f32.mrb[0].mxu0
        %1811 = vmatprep.mubr.bf16.mxu0 0
        %1812 = vmatmul.mubr.bf16.gmra.mrb[0].mxu0 %v1684
        %v1813 = vpop.f32.mrb[0].mxu0
        %v1814 = vadd.f32 0.0, %v1813
        %v1815 = vpop.f32.mrb[0].mxu0
        %v1816 = vpop.f32.mrb[0].mxu0
        %v1817 = vadd.f32 0.0, %v1816
        %v1818 = vpop.f32.mrb[0].mxu0
        %1819 = vmatprep.mubr.bf16.mxu0 0
        %1820 = vmatmul.mubr.bf16.gmra.mrb[0].mxu0 %v1685
        %v1821 = vpop.f32.mrb[0].mxu0
        %v1822 = vadd.f32 0.0, %v1821
        %v1823 = vpop.f32.mrb[0].mxu0
        %v1824 = vpop.f32.mrb[0].mxu0
        %v1825 = vadd.f32 0.0, %v1824
        %v1826 = vpop.f32.mrb[0].mxu0
        %1827 = vmatprep.mubr.bf16.mxu0 0
        %1828 = vmatmul.mubr.bf16.gmra.mrb[0].mxu0 %v1686
        %v1829 = vpop.f32.mrb[0].mxu0
        %v1830 = vadd.f32 0.0, %v1829
        %v1831 = vpop.f32.mrb[0].mxu0
        %v1832 = vpop.f32.mrb[0].mxu0
        %v1833 = vadd.f32 0.0, %v1832
        %v1834 = vpop.f32.mrb[0].mxu0
        %1835 = vmatprep.mubr.bf16.mxu0 0
        %1836 = vmatmul.mubr.bf16.gmra.mrb[0].mxu0 %v1687
        %v1837 = vpop.f32.mrb[0].mxu0
        %v1838 = vadd.f32 0.0, %v1837
        %v1839 = vpop.f32.mrb[0].mxu0
        %v1840 = vpop.f32.mrb[0].mxu0
        %v1841 = vadd.f32 0.0, %v1840
        %v1842 = vpop.f32.mrb[0].mxu0
        %1843 = vmatprep.mubr.bf16.mxu0 0
        %1844 = vmatmul.mubr.bf16.gmra.mrb[0].mxu0 %v1688
        %v1845 = vpop.f32.mrb[0].mxu0
        %v1846 = vadd.f32 0.0, %v1845
        %v1847 = vpop.f32.mrb[0].mxu0
        %v1848 = vpop.f32.mrb[0].mxu0
        %v1849 = vadd.f32 0.0, %v1848
        %v1850 = vpop.f32.mrb[0].mxu0
        %1851 = vmatprep.mubr.bf16.mxu0 0
        %1852 = vmatmul.mubr.bf16.gmra.mrb[0].mxu0 %v1689
        %v1853 = vpop.f32.mrb[0].mxu0
        %v1854 = vadd.f32 0.0, %v1853
        %v1855 = vpop.f32.mrb[0].mxu0
        %v1856 = vpop.f32.mrb[0].mxu0
        %v1857 = vadd.f32 0.0, %v1856
        %v1858 = vpop.f32.mrb[0].mxu0
        %1859 = vmatprep.mubr.bf16.mxu0 0
        %1860 = vmatmul.mubr.bf16.gmra.mrb[0].mxu0 %v1690
        %v1861 = vpop.f32.mrb[0].mxu0
        %v1862 = vadd.f32 0.0, %v1861
        %v1863 = vpop.f32.mrb[0].mxu0
        %v1864 = vpop.f32.mrb[0].mxu0
        %v1865 = vadd.f32 0.0, %v1864
        %v1866 = vpop.f32.mrb[0].mxu0
        %1867 = vmatprep.mubr.bf16.mxu0 0
        %1868 = vmatmul.mubr.bf16.gmra.mrb[0].mxu0 %v1691
        %v1869 = vpop.f32.mrb[0].mxu0
        %v1870 = vadd.f32 0.0, %v1869
        %v1871 = vpop.f32.mrb[0].mxu0
        %v1872 = vpop.f32.mrb[0].mxu0
        %v1873 = vadd.f32 0.0, %v1872
        %v1874 = vpop.f32.mrb[0].mxu0
        %1875 = vmatprep.mubr.bf16.mxu0 0
        %1876 = vmatmul.mubr.bf16.gmra.mrb[0].mxu0 %v1692
        %v1877 = vpop.f32.mrb[0].mxu0
        %v1878 = vadd.f32 0.0, %v1877
        %v1879 = vpop.f32.mrb[0].mxu0
        %v1880 = vpop.f32.mrb[0].mxu0
        %v1881 = vadd.f32 0.0, %v1880
        %v1882 = vpop.f32.mrb[0].mxu0
        %1883 = vmatprep.mubr.bf16.mxu0 0
        %1884 = vmatmul.mubr.bf16.gmra.mrb[0].mxu0 %v1693
        %v1885 = vpop.f32.mrb[0].mxu0
        %v1886 = vadd.f32 0.0, %v1885
        %v1887 = vpop.f32.mrb[0].mxu0
        %v1888 = vpop.f32.mrb[0].mxu0
        %v1889 = vadd.f32 0.0, %v1888
        %v1890 = vpop.f32.mrb[0].mxu0
        %1891 = vmatprep.mubr.bf16.mxu0 0
        %1892 = vmatmul.mubr.bf16.gmra.mrb[0].mxu0 %v1694
        %v1893 = vpop.f32.mrb[0].mxu0
        %v1894 = vadd.f32 0.0, %v1893
        %v1895 = vpop.f32.mrb[0].mxu0
        %v1896 = vpop.f32.mrb[0].mxu0
        %v1897 = vadd.f32 0.0, %v1896
        %v1898 = vpop.f32.mrb[0].mxu0
        %1899 = vmatprep.mubr.bf16.mxu0 0
        %1900 = vmatmul.mubr.bf16.gmra.mrb[0].mxu0 %v1695
        %v1901 = vpop.f32.mrb[0].mxu0
        %v1902 = vadd.f32 0.0, %v1901
        %v1903 = vpop.f32.mrb[0].mxu0
        %v1904 = vpop.f32.mrb[0].mxu0
        %v1905 = vadd.f32 0.0, %v1904
        %v1906 = vpop.f32.mrb[0].mxu0
        %1907 = vmatprep.mubr.bf16.mxu0 0
        %1908 = vmatmul.mubr.bf16.gmra.mrb[0].mxu0 %v1696
        %v1909 = vpop.f32.mrb[0].mxu0
        %v1910 = vadd.f32 0.0, %v1909
        %v1911 = vpop.f32.mrb[0].mxu0
        %v1912 = vpop.f32.mrb[0].mxu0
        %v1913 = vadd.f32 0.0, %v1912
        %v1914 = vpop.f32.mrb[0].mxu0
        %1915 = vmatprep.mubr.bf16.mxu0 0
        %1916 = vmatmul.mubr.bf16.gmra.mrb[0].mxu0 %v1697
        %v1917 = vpop.f32.mrb[0].mxu0
        %v1918 = vadd.f32 0.0, %v1917
        %v1919 = vpop.f32.mrb[0].mxu0
        %v1920 = vpop.f32.mrb[0].mxu0
        %v1921 = vadd.f32 0.0, %v1920
        %v1922 = vpop.f32.mrb[0].mxu0
        %1923 = vdwg.mxu0
        %v1940 = vunpack.c.l.b16 %v1538
        %v1941 = vunpack.c.l.b16 %v1539
        %v1942 = vunpack.c.l.b16 %v1540
        %v1943 = vunpack.c.l.b16 %v1541
        %v1944 = vunpack.c.l.b16 %v1542
        %v1945 = vunpack.c.l.b16 %v1543
        %v1946 = vunpack.c.l.b16 %v1544
        %v1947 = vunpack.c.l.b16 %v1545
        %v1948 = vunpack.c.l.b16 %v1546
        %v1949 = vunpack.c.l.b16 %v1547
        %v1950 = vunpack.c.l.b16 %v1548
        %v1951 = vunpack.c.l.b16 %v1549
        %v1952 = vunpack.c.l.b16 %v1550
        %v1953 = vunpack.c.l.b16 %v1551
        %v1954 = vunpack.c.l.b16 %v1552
        %v1955 = vunpack.c.l.b16 %v1553
        %v1956 = vpack.c.b16 %v1941, %v1940
        %v1957 = vpack.c.b16 %v1943, %v1942
        %v1958 = vpack.c.b16 %v1945, %v1944
        %v1959 = vpack.c.b16 %v1947, %v1946
        %v1960 = vpack.c.b16 %v1949, %v1948
        %v1961 = vpack.c.b16 %v1951, %v1950
        %v1962 = vpack.c.b16 %v1953, %v1952
        %v1963 = vpack.c.b16 %v1955, %v1954
        %1972 = vmatprep.subr.bf16.mxu0 0
        %1973 = vmatpush1.bf16.msra.mxu0 %v1956
        %1974 = vmatprep.subr.bf16.mxu0 0
        %1975 = vmatpush1.bf16.msra.mxu0 %v1957
        %1976 = vmatprep.subr.bf16.mxu0 0
        %1977 = vmatpush1.bf16.msra.mxu0 %v1958
        %1978 = vmatprep.subr.bf16.mxu0 0
        %1979 = vmatpush1.bf16.msra.mxu0 %v1959
        %1980 = vmatprep.subr.bf16.mxu0 0
        %1981 = vmatpush1.bf16.msra.mxu0 %v1960
        %1982 = vmatprep.subr.bf16.mxu0 0
        %1983 = vmatpush1.bf16.msra.mxu0 %v1961
        %1984 = vmatprep.subr.bf16.mxu0 0
        %1985 = vmatpush1.bf16.msra.mxu0 %v1962
        %1986 = vmatprep.subr.bf16.mxu0 0
        %1987 = vmatpush1.bf16.msra.mxu0 %v1963
        %1988 = vmatprep.subr.bf16.mxu0 0
        %1989 = vmatpush1.bf16.msra.mxu0 0
        %1990 = vmatprep.subr.bf16.mxu0 0
        %1991 = vmatpush1.bf16.msra.mxu0 0
        %1992 = vmatprep.subr.bf16.mxu0 0
        %1993 = vmatpush1.bf16.msra.mxu0 0
        %1994 = vmatprep.subr.bf16.mxu0 0
        %1995 = vmatpush1.bf16.msra.mxu0 0
        %1996 = vmatprep.subr.bf16.mxu0 0
        %1997 = vmatpush1.bf16.msra.mxu0 0
        %1998 = vmatprep.subr.bf16.mxu0 0
        %1999 = vmatpush1.bf16.msra.mxu0 0
        %2000 = vmatprep.subr.bf16.mxu0 0
        %2001 = vmatpush1.bf16.msra.mxu0 0
        %2002 = vmatprep.subr.bf16.mxu0 0
        %2003 = vmatpush1.bf16.msra.mxu0 0
        %2004 = vmatprep.mubr.bf16.mxu0 0
        %2005 = vmatmul.mubr.bf16.gmra.mrb[0].mxu0 %v1522
        %v2006 = vpop.f32.mrb[0].mxu0
        %v2007 = vadd.f32 %v1798, %v2006
        %v2008 = vpop.f32.mrb[0].mxu0
        %v2009 = vpop.f32.mrb[0].mxu0
        %v2010 = vadd.f32 %v1801, %v2009
        %v2011 = vpop.f32.mrb[0].mxu0
        %2012 = vmatprep.mubr.bf16.mxu0 0
        %2013 = vmatmul.mubr.bf16.gmra.mrb[0].mxu0 %v1523
        %v2014 = vpop.f32.mrb[0].mxu0
        %v2015 = vadd.f32 %v1806, %v2014
        %v2016 = vpop.f32.mrb[0].mxu0
        %v2017 = vpop.f32.mrb[0].mxu0
        %v2018 = vadd.f32 %v1809, %v2017
        %v2019 = vpop.f32.mrb[0].mxu0
        %2020 = vmatprep.mubr.bf16.mxu0 0
        %2021 = vmatmul.mubr.bf16.gmra.mrb[0].mxu0 %v1524
        %v2022 = vpop.f32.mrb[0].mxu0
        %v2023 = vadd.f32 %v1814, %v2022
        %v2024 = vpop.f32.mrb[0].mxu0
        %v2025 = vpop.f32.mrb[0].mxu0
        %v2026 = vadd.f32 %v1817, %v2025
        %v2027 = vpop.f32.mrb[0].mxu0
        %2028 = vmatprep.mubr.bf16.mxu0 0
        %2029 = vmatmul.mubr.bf16.gmra.mrb[0].mxu0 %v1525
        %v2030 = vpop.f32.mrb[0].mxu0
        %v2031 = vadd.f32 %v1822, %v2030
        %v2032 = vpop.f32.mrb[0].mxu0
        %v2033 = vpop.f32.mrb[0].mxu0
        %v2034 = vadd.f32 %v1825, %v2033
        %v2035 = vpop.f32.mrb[0].mxu0
        %2036 = vmatprep.mubr.bf16.mxu0 0
        %2037 = vmatmul.mubr.bf16.gmra.mrb[0].mxu0 %v1526
        %v2038 = vpop.f32.mrb[0].mxu0
        %v2039 = vadd.f32 %v1830, %v2038
        %v2040 = vpop.f32.mrb[0].mxu0
        %v2041 = vpop.f32.mrb[0].mxu0
        %v2042 = vadd.f32 %v1833, %v2041
        %v2043 = vpop.f32.mrb[0].mxu0
        %2044 = vmatprep.mubr.bf16.mxu0 0
        %2045 = vmatmul.mubr.bf16.gmra.mrb[0].mxu0 %v1527
        %v2046 = vpop.f32.mrb[0].mxu0
        %v2047 = vadd.f32 %v1838, %v2046
        %v2048 = vpop.f32.mrb[0].mxu0
        %v2049 = vpop.f32.mrb[0].mxu0
        %v2050 = vadd.f32 %v1841, %v2049
        %v2051 = vpop.f32.mrb[0].mxu0
        %2052 = vmatprep.mubr.bf16.mxu0 0
        %2053 = vmatmul.mubr.bf16.gmra.mrb[0].mxu0 %v1528
        %v2054 = vpop.f32.mrb[0].mxu0
        %v2055 = vadd.f32 %v1846, %v2054
        %v2056 = vpop.f32.mrb[0].mxu0
        %v2057 = vpop.f32.mrb[0].mxu0
        %v2058 = vadd.f32 %v1849, %v2057
        %v2059 = vpop.f32.mrb[0].mxu0
        %2060 = vmatprep.mubr.bf16.mxu0 0
        %2061 = vmatmul.mubr.bf16.gmra.mrb[0].mxu0 %v1529
        %v2062 = vpop.f32.mrb[0].mxu0
        %v2063 = vadd.f32 %v1854, %v2062
        %v2064 = vpop.f32.mrb[0].mxu0
        %v2065 = vpop.f32.mrb[0].mxu0
        %v2066 = vadd.f32 %v1857, %v2065
        %v2067 = vpop.f32.mrb[0].mxu0
        %2068 = vmatprep.mubr.bf16.mxu0 0
        %2069 = vmatmul.mubr.bf16.gmra.mrb[0].mxu0 %v1530
        %v2070 = vpop.f32.mrb[0].mxu0
        %v2071 = vadd.f32 %v1862, %v2070
        %v2072 = vpop.f32.mrb[0].mxu0
        %v2073 = vpop.f32.mrb[0].mxu0
        %v2074 = vadd.f32 %v1865, %v2073
        %v2075 = vpop.f32.mrb[0].mxu0
        %2076 = vmatprep.mubr.bf16.mxu0 0
        %2077 = vmatmul.mubr.bf16.gmra.mrb[0].mxu0 %v1531
        %v2078 = vpop.f32.mrb[0].mxu0
        %v2079 = vadd.f32 %v1870, %v2078
        %v2080 = vpop.f32.mrb[0].mxu0
        %v2081 = vpop.f32.mrb[0].mxu0
        %v2082 = vadd.f32 %v1873, %v2081
        %v2083 = vpop.f32.mrb[0].mxu0
        %2084 = vmatprep.mubr.bf16.mxu0 0
        %2085 = vmatmul.mubr.bf16.gmra.mrb[0].mxu0 %v1532
        %v2086 = vpop.f32.mrb[0].mxu0
        %v2087 = vadd.f32 %v1878, %v2086
        %v2088 = vpop.f32.mrb[0].mxu0
        %v2089 = vpop.f32.mrb[0].mxu0
        %v2090 = vadd.f32 %v1881, %v2089
        %v2091 = vpop.f32.mrb[0].mxu0
        %2092 = vmatprep.mubr.bf16.mxu0 0
        %2093 = vmatmul.mubr.bf16.gmra.mrb[0].mxu0 %v1533
        %v2094 = vpop.f32.mrb[0].mxu0
        %v2095 = vadd.f32 %v1886, %v2094
        %v2096 = vpop.f32.mrb[0].mxu0
        %v2097 = vpop.f32.mrb[0].mxu0
        %v2098 = vadd.f32 %v1889, %v2097
        %v2099 = vpop.f32.mrb[0].mxu0
        %2100 = vmatprep.mubr.bf16.mxu0 0
        %2101 = vmatmul.mubr.bf16.gmra.mrb[0].mxu0 %v1534
        %v2102 = vpop.f32.mrb[0].mxu0
        %v2103 = vadd.f32 %v1894, %v2102
        %v2104 = vpop.f32.mrb[0].mxu0
        %v2105 = vpop.f32.mrb[0].mxu0
        %v2106 = vadd.f32 %v1897, %v2105
        %v2107 = vpop.f32.mrb[0].mxu0
        %2108 = vmatprep.mubr.bf16.mxu0 0
        %2109 = vmatmul.mubr.bf16.gmra.mrb[0].mxu0 %v1535
        %v2110 = vpop.f32.mrb[0].mxu0
        %v2111 = vadd.f32 %v1902, %v2110
        %v2112 = vpop.f32.mrb[0].mxu0
        %v2113 = vpop.f32.mrb[0].mxu0
        %v2114 = vadd.f32 %v1905, %v2113
        %v2115 = vpop.f32.mrb[0].mxu0
        %2116 = vmatprep.mubr.bf16.mxu0 0
        %2117 = vmatmul.mubr.bf16.gmra.mrb[0].mxu0 %v1536
        %v2118 = vpop.f32.mrb[0].mxu0
        %v2119 = vadd.f32 %v1910, %v2118
        %v2120 = vpop.f32.mrb[0].mxu0
        %v2121 = vpop.f32.mrb[0].mxu0
        %v2122 = vadd.f32 %v1913, %v2121
        %v2123 = vpop.f32.mrb[0].mxu0
        %2124 = vmatprep.mubr.bf16.mxu0 0
        %2125 = vmatmul.mubr.bf16.gmra.mrb[0].mxu0 %v1537
        %v2126 = vpop.f32.mrb[0].mxu0
        %v2127 = vadd.f32 %v1918, %v2126
        %v2128 = vpop.f32.mrb[0].mxu0
        %v2129 = vpop.f32.mrb[0].mxu0
        %v2130 = vadd.f32 %v1921, %v2129
        %v2131 = vpop.f32.mrb[0].mxu0
        %2132 = vdwg.mxu0
        %v2133 = vld [vmem:[#allocation2 + $0x2] sm:$0xff]
        %v2134 = vld [vmem:[#allocation2 + $0xa] sm:$0xff]
        %v2135 = vld [vmem:[#allocation2 + $0x12] sm:$0xff]
        %v2136 = vld [vmem:[#allocation2 + $0x1a] sm:$0xff]
        %v2137 = vld [vmem:[#allocation2 + $0x22] sm:$0xff]
        %v2138 = vld [vmem:[#allocation2 + $0x2a] sm:$0xff]
        %v2139 = vld [vmem:[#allocation2 + $0x32] sm:$0xff]
        %v2140 = vld [vmem:[#allocation2 + $0x3a] sm:$0xff]
        %v2141 = vld [vmem:[#allocation2 + $0x42] sm:$0xff]
        %v2142 = vld [vmem:[#allocation2 + $0x4a] sm:$0xff]
        %v2143 = vld [vmem:[#allocation2 + $0x52] sm:$0xff]
        %v2144 = vld [vmem:[#allocation2 + $0x5a] sm:$0xff]
        %v2145 = vld [vmem:[#allocation2 + $0x62] sm:$0xff]
        %v2146 = vld [vmem:[#allocation2 + $0x6a] sm:$0xff]
        %v2147 = vld [vmem:[#allocation2 + $0x72] sm:$0xff]
        %v2148 = vld [vmem:[#allocation2 + $0x7a] sm:$0xff]
        %v2149 = vld [vmem:[#allocation2 + $0x82] sm:$0xff]
        %v2150 = vld [vmem:[#allocation2 + $0x8a] sm:$0xff]
        %v2151 = vld [vmem:[#allocation2 + $0x92] sm:$0xff]
        %v2152 = vld [vmem:[#allocation2 + $0x9a] sm:$0xff]
        %v2153 = vld [vmem:[#allocation2 + $0xa2] sm:$0xff]
        %v2154 = vld [vmem:[#allocation2 + $0xaa] sm:$0xff]
        %v2155 = vld [vmem:[#allocation2 + $0xb2] sm:$0xff]
        %v2156 = vld [vmem:[#allocation2 + $0xba] sm:$0xff]
        %v2157 = vld [vmem:[#allocation2 + $0xc2] sm:$0xff]
        %v2158 = vld [vmem:[#allocation2 + $0xca] sm:$0xff]
        %v2159 = vld [vmem:[#allocation2 + $0xd2] sm:$0xff]
        %v2160 = vld [vmem:[#allocation2 + $0xda] sm:$0xff]
        %v2161 = vld [vmem:[#allocation2 + $0xe2] sm:$0xff]
        %v2162 = vld [vmem:[#allocation2 + $0xea] sm:$0xff]
        %v2163 = vld [vmem:[#allocation2 + $0xf2] sm:$0xff]
        %v2164 = vld [vmem:[#allocation2 + $0xfa] sm:$0xff]
        %vm2165 = vmand %vm1234, %vm1330
        %vm2166 = vmand %vm1235, %vm1331
        %vm2167 = vmand %vm1236, %vm1332
        %vm2168 = vmand %vm1237, %vm1333
        %vm2169 = vmand %vm1238, %vm1334
        %vm2170 = vmand %vm1239, %vm1335
        %vm2171 = vmand %vm1240, %vm1336
        %vm2172 = vmand %vm1241, %vm1337
        %vm2173 = vmand %vm1242, %vm1338
        %vm2174 = vmand %vm1243, %vm1339
        %vm2175 = vmand %vm1244, %vm1340
        %vm2176 = vmand %vm1245, %vm1341
        %vm2177 = vmand %vm1246, %vm1342
        %vm2178 = vmand %vm1247, %vm1343
        %vm2179 = vmand %vm1248, %vm1344
        %vm2180 = vmand %vm1249, %vm1345
        %vm2181 = vmand %vm1250, %vm1346
        %vm2182 = vmand %vm1251, %vm1347
        %vm2183 = vmand %vm1252, %vm1348
        %vm2184 = vmand %vm1253, %vm1349
        %vm2185 = vmand %vm1254, %vm1350
        %vm2186 = vmand %vm1255, %vm1351
        %vm2187 = vmand %vm1256, %vm1352
        %vm2188 = vmand %vm1257, %vm1353
        %vm2189 = vmand %vm1258, %vm1354
        %vm2190 = vmand %vm1259, %vm1355
        %vm2191 = vmand %vm1260, %vm1356
        %vm2192 = vmand %vm1261, %vm1357
        %vm2193 = vmand %vm1262, %vm1358
        %vm2194 = vmand %vm1263, %vm1359
        %vm2195 = vmand %vm1264, %vm1360
        %vm2196 = vmand %vm1265, %vm1361
        %v2197 = vsel %vm2165, 1, 0
        %v2198 = vsel %vm2166, 1, 0
        %v2199 = vsel %vm2167, 1, 0
        %v2200 = vsel %vm2168, 1, 0
        %v2201 = vsel %vm2169, 1, 0
        %v2202 = vsel %vm2170, 1, 0
        %v2203 = vsel %vm2171, 1, 0
        %v2204 = vsel %vm2172, 1, 0
        %v2205 = vsel %vm2173, 1, 0
        %v2206 = vsel %vm2174, 1, 0
        %v2207 = vsel %vm2175, 1, 0
        %v2208 = vsel %vm2176, 1, 0
        %v2209 = vsel %vm2177, 1, 0
        %v2210 = vsel %vm2178, 1, 0
        %v2211 = vsel %vm2179, 1, 0
        %v2212 = vsel %vm2180, 1, 0
        %v2213 = vsel %vm2181, 1, 0
        %v2214 = vsel %vm2182, 1, 0
        %v2215 = vsel %vm2183, 1, 0
        %v2216 = vsel %vm2184, 1, 0
        %v2217 = vsel %vm2185, 1, 0
        %v2218 = vsel %vm2186, 1, 0
        %v2219 = vsel %vm2187, 1, 0
        %v2220 = vsel %vm2188, 1, 0
        %v2221 = vsel %vm2189, 1, 0
        %v2222 = vsel %vm2190, 1, 0
        %v2223 = vsel %vm2191, 1, 0
        %v2224 = vsel %vm2192, 1, 0
        %v2225 = vsel %vm2193, 1, 0
        %v2226 = vsel %vm2194, 1, 0
        %v2227 = vsel %vm2195, 1, 0
        %v2228 = vsel %vm2196, 1, 0
        %vm2229 = vcmp.eq.s32.totalorder %v2197, 1
        %vm2230 = vcmp.eq.s32.totalorder %v2198, 1
        %vm2231 = vcmp.eq.s32.totalorder %v2199, 1
        %vm2232 = vcmp.eq.s32.totalorder %v2200, 1
        %vm2233 = vcmp.eq.s32.totalorder %v2201, 1
        %vm2234 = vcmp.eq.s32.totalorder %v2202, 1
        %vm2235 = vcmp.eq.s32.totalorder %v2203, 1
        %vm2236 = vcmp.eq.s32.totalorder %v2204, 1
        %vm2237 = vcmp.eq.s32.totalorder %v2205, 1
        %vm2238 = vcmp.eq.s32.totalorder %v2206, 1
        %vm2239 = vcmp.eq.s32.totalorder %v2207, 1
        %vm2240 = vcmp.eq.s32.totalorder %v2208, 1
        %vm2241 = vcmp.eq.s32.totalorder %v2209, 1
        %vm2242 = vcmp.eq.s32.totalorder %v2210, 1
        %vm2243 = vcmp.eq.s32.totalorder %v2211, 1
        %vm2244 = vcmp.eq.s32.totalorder %v2212, 1
        %vm2245 = vcmp.eq.s32.totalorder %v2213, 1
        %vm2246 = vcmp.eq.s32.totalorder %v2214, 1
        %vm2247 = vcmp.eq.s32.totalorder %v2215, 1
        %vm2248 = vcmp.eq.s32.totalorder %v2216, 1
        %vm2249 = vcmp.eq.s32.totalorder %v2217, 1
        %vm2250 = vcmp.eq.s32.totalorder %v2218, 1
        %vm2251 = vcmp.eq.s32.totalorder %v2219, 1
        %vm2252 = vcmp.eq.s32.totalorder %v2220, 1
        %vm2253 = vcmp.eq.s32.totalorder %v2221, 1
        %vm2254 = vcmp.eq.s32.totalorder %v2222, 1
        %vm2255 = vcmp.eq.s32.totalorder %v2223, 1
        %vm2256 = vcmp.eq.s32.totalorder %v2224, 1
        %vm2257 = vcmp.eq.s32.totalorder %v2225, 1
        %vm2258 = vcmp.eq.s32.totalorder %v2226, 1
        %vm2259 = vcmp.eq.s32.totalorder %v2227, 1
        %vm2260 = vcmp.eq.s32.totalorder %v2228, 1
        %v2261 = vsel %vm2229, %v2133, 0.0
        %v2262 = vsel %vm2230, %v2134, 0.0
        %v2263 = vsel %vm2231, %v2135, 0.0
        %v2264 = vsel %vm2232, %v2136, 0.0
        %v2265 = vsel %vm2233, %v2137, 0.0
        %v2266 = vsel %vm2234, %v2138, 0.0
        %v2267 = vsel %vm2235, %v2139, 0.0
        %v2268 = vsel %vm2236, %v2140, 0.0
        %v2269 = vsel %vm2237, %v2141, 0.0
        %v2270 = vsel %vm2238, %v2142, 0.0
        %v2271 = vsel %vm2239, %v2143, 0.0
        %v2272 = vsel %vm2240, %v2144, 0.0
        %v2273 = vsel %vm2241, %v2145, 0.0
        %v2274 = vsel %vm2242, %v2146, 0.0
        %v2275 = vsel %vm2243, %v2147, 0.0
        %v2276 = vsel %vm2244, %v2148, 0.0
        %v2277 = vsel %vm2245, %v2149, 0.0
        %v2278 = vsel %vm2246, %v2150, 0.0
        %v2279 = vsel %vm2247, %v2151, 0.0
        %v2280 = vsel %vm2248, %v2152, 0.0
        %v2281 = vsel %vm2249, %v2153, 0.0
        %v2282 = vsel %vm2250, %v2154, 0.0
        %v2283 = vsel %vm2251, %v2155, 0.0
        %v2284 = vsel %vm2252, %v2156, 0.0
        %v2285 = vsel %vm2253, %v2157, 0.0
        %v2286 = vsel %vm2254, %v2158, 0.0
        %v2287 = vsel %vm2255, %v2159, 0.0
        %v2288 = vsel %vm2256, %v2160, 0.0
        %v2289 = vsel %vm2257, %v2161, 0.0
        %v2290 = vsel %vm2258, %v2162, 0.0
        %v2291 = vsel %vm2259, %v2163, 0.0
        %v2292 = vsel %vm2260, %v2164, 0.0
        %v2293 = vpack.c.bf16 %v2262, %v2261
        %v2294 = vpack.c.bf16 %v2264, %v2263
        %v2295 = vpack.c.bf16 %v2266, %v2265
        %v2296 = vpack.c.bf16 %v2268, %v2267
        %v2297 = vpack.c.bf16 %v2270, %v2269
        %v2298 = vpack.c.bf16 %v2272, %v2271
        %v2299 = vpack.c.bf16 %v2274, %v2273
        %v2300 = vpack.c.bf16 %v2276, %v2275
        %v2301 = vpack.c.bf16 %v2278, %v2277
        %v2302 = vpack.c.bf16 %v2280, %v2279
        %v2303 = vpack.c.bf16 %v2282, %v2281
        %v2304 = vpack.c.bf16 %v2284, %v2283
        %v2305 = vpack.c.bf16 %v2286, %v2285
        %v2306 = vpack.c.bf16 %v2288, %v2287
        %v2307 = vpack.c.bf16 %v2290, %v2289
        %v2308 = vpack.c.bf16 %v2292, %v2291
        %s2309 = scalar_lea.vmem %s3, 128
        %v2310 = vld [vmem:[%s2309] sm:$0xf]
        %v2311 = vld [vmem:[%s2309 + $0x4] sm:$0xf]
        %v2312 = vld [vmem:[%s2309 + $0x8] sm:$0xf]
        %v2313 = vld [vmem:[%s2309 + $0xc] sm:$0xf]
        %v2314 = vld [vmem:[%s2309 + $0x10] sm:$0xf]
        %v2315 = vld [vmem:[%s2309 + $0x14] sm:$0xf]
        %v2316 = vld [vmem:[%s2309 + $0x18] sm:$0xf]
        %v2317 = vld [vmem:[%s2309 + $0x1c] sm:$0xf]
        %v2318 = vld [vmem:[%s2309 + $0x20] sm:$0xf]
        %v2319 = vld [vmem:[%s2309 + $0x24] sm:$0xf]
        %v2320 = vld [vmem:[%s2309 + $0x28] sm:$0xf]
        %v2321 = vld [vmem:[%s2309 + $0x2c] sm:$0xf]
        %v2322 = vld [vmem:[%s2309 + $0x30] sm:$0xf]
        %v2323 = vld [vmem:[%s2309 + $0x34] sm:$0xf]
        %v2324 = vld [vmem:[%s2309 + $0x38] sm:$0xf]
        %v2325 = vld [vmem:[%s2309 + $0x3c] sm:$0xf]
        %v2342 = vunpack.c.l.b16 %v2310
        %v2343 = vunpack.c.l.b16 %v2311
        %v2344 = vunpack.c.l.b16 %v2312
        %v2345 = vunpack.c.l.b16 %v2313
        %v2346 = vunpack.c.l.b16 %v2314
        %v2347 = vunpack.c.l.b16 %v2315
        %v2348 = vunpack.c.l.b16 %v2316
        %v2349 = vunpack.c.l.b16 %v2317
        %v2350 = vunpack.c.l.b16 %v2318
        %v2351 = vunpack.c.l.b16 %v2319
        %v2352 = vunpack.c.l.b16 %v2320
        %v2353 = vunpack.c.l.b16 %v2321
        %v2354 = vunpack.c.l.b16 %v2322
        %v2355 = vunpack.c.l.b16 %v2323
        %v2356 = vunpack.c.l.b16 %v2324
        %v2357 = vunpack.c.l.b16 %v2325
        %v2358 = vpack.c.b16 %v2343, %v2342
        %v2359 = vpack.c.b16 %v2345, %v2344
        %v2360 = vpack.c.b16 %v2347, %v2346
        %v2361 = vpack.c.b16 %v2349, %v2348
        %v2362 = vpack.c.b16 %v2351, %v2350
        %v2363 = vpack.c.b16 %v2353, %v2352
        %v2364 = vpack.c.b16 %v2355, %v2354
        %v2365 = vpack.c.b16 %v2357, %v2356
        %2374 = vmatprep.subr.bf16.mxu0 0
        %2375 = vmatpush1.bf16.msra.mxu0 %v2358
        %2376 = vmatprep.subr.bf16.mxu0 0
        %2377 = vmatpush1.bf16.msra.mxu0 %v2359
        %2378 = vmatprep.subr.bf16.mxu0 0
        %2379 = vmatpush1.bf16.msra.mxu0 %v2360
        %2380 = vmatprep.subr.bf16.mxu0 0
        %2381 = vmatpush1.bf16.msra.mxu0 %v2361
        %2382 = vmatprep.subr.bf16.mxu0 0
        %2383 = vmatpush1.bf16.msra.mxu0 %v2362
        %2384 = vmatprep.subr.bf16.mxu0 0
        %2385 = vmatpush1.bf16.msra.mxu0 %v2363
        %2386 = vmatprep.subr.bf16.mxu0 0
        %2387 = vmatpush1.bf16.msra.mxu0 %v2364
        %2388 = vmatprep.subr.bf16.mxu0 0
        %2389 = vmatpush1.bf16.msra.mxu0 %v2365
        %2390 = vmatprep.subr.bf16.mxu0 0
        %2391 = vmatpush1.bf16.msra.mxu0 0
        %2392 = vmatprep.subr.bf16.mxu0 0
        %2393 = vmatpush1.bf16.msra.mxu0 0
        %2394 = vmatprep.subr.bf16.mxu0 0
        %2395 = vmatpush1.bf16.msra.mxu0 0
        %2396 = vmatprep.subr.bf16.mxu0 0
        %2397 = vmatpush1.bf16.msra.mxu0 0
        %2398 = vmatprep.subr.bf16.mxu0 0
        %2399 = vmatpush1.bf16.msra.mxu0 0
        %2400 = vmatprep.subr.bf16.mxu0 0
        %2401 = vmatpush1.bf16.msra.mxu0 0
        %2402 = vmatprep.subr.bf16.mxu0 0
        %2403 = vmatpush1.bf16.msra.mxu0 0
        %2404 = vmatprep.subr.bf16.mxu0 0
        %2405 = vmatpush1.bf16.msra.mxu0 0
        %2406 = vmatprep.mubr.bf16.mxu0 0
        %2407 = vmatmul.mubr.bf16.gmra.mrb[0].mxu0 %v2293
        %v2408 = vpop.f32.mrb[0].mxu0
        %v2409 = vadd.f32 0.0, %v2408
        %v2410 = vpop.f32.mrb[0].mxu0
        %v2411 = vpop.f32.mrb[0].mxu0
        %v2412 = vadd.f32 0.0, %v2411
        %v2413 = vpop.f32.mrb[0].mxu0
        %2414 = vmatprep.mubr.bf16.mxu0 0
        %2415 = vmatmul.mubr.bf16.gmra.mrb[0].mxu0 %v2294
        %v2416 = vpop.f32.mrb[0].mxu0
        %v2417 = vadd.f32 0.0, %v2416
        %v2418 = vpop.f32.mrb[0].mxu0
        %v2419 = vpop.f32.mrb[0].mxu0
        %v2420 = vadd.f32 0.0, %v2419
        %v2421 = vpop.f32.mrb[0].mxu0
        %2422 = vmatprep.mubr.bf16.mxu0 0
        %2423 = vmatmul.mubr.bf16.gmra.mrb[0].mxu0 %v2295
        %v2424 = vpop.f32.mrb[0].mxu0
        %v2425 = vadd.f32 0.0, %v2424
        %v2426 = vpop.f32.mrb[0].mxu0
        %v2427 = vpop.f32.mrb[0].mxu0
        %v2428 = vadd.f32 0.0, %v2427
        %v2429 = vpop.f32.mrb[0].mxu0
        %2430 = vmatprep.mubr.bf16.mxu0 0
        %2431 = vmatmul.mubr.bf16.gmra.mrb[0].mxu0 %v2296
        %v2432 = vpop.f32.mrb[0].mxu0
        %v2433 = vadd.f32 0.0, %v2432
        %v2434 = vpop.f32.mrb[0].mxu0
        %v2435 = vpop.f32.mrb[0].mxu0
        %v2436 = vadd.f32 0.0, %v2435
        %v2437 = vpop.f32.mrb[0].mxu0
        %2438 = vmatprep.mubr.bf16.mxu0 0
        %2439 = vmatmul.mubr.bf16.gmra.mrb[0].mxu0 %v2297
        %v2440 = vpop.f32.mrb[0].mxu0
        %v2441 = vadd.f32 0.0, %v2440
        %v2442 = vpop.f32.mrb[0].mxu0
        %v2443 = vpop.f32.mrb[0].mxu0
        %v2444 = vadd.f32 0.0, %v2443
        %v2445 = vpop.f32.mrb[0].mxu0
        %2446 = vmatprep.mubr.bf16.mxu0 0
        %2447 = vmatmul.mubr.bf16.gmra.mrb[0].mxu0 %v2298
        %v2448 = vpop.f32.mrb[0].mxu0
        %v2449 = vadd.f32 0.0, %v2448
        %v2450 = vpop.f32.mrb[0].mxu0
        %v2451 = vpop.f32.mrb[0].mxu0
        %v2452 = vadd.f32 0.0, %v2451
        %v2453 = vpop.f32.mrb[0].mxu0
        %2454 = vmatprep.mubr.bf16.mxu0 0
        %2455 = vmatmul.mubr.bf16.gmra.mrb[0].mxu0 %v2299
        %v2456 = vpop.f32.mrb[0].mxu0
        %v2457 = vadd.f32 0.0, %v2456
        %v2458 = vpop.f32.mrb[0].mxu0
        %v2459 = vpop.f32.mrb[0].mxu0
        %v2460 = vadd.f32 0.0, %v2459
        %v2461 = vpop.f32.mrb[0].mxu0
        %2462 = vmatprep.mubr.bf16.mxu0 0
        %2463 = vmatmul.mubr.bf16.gmra.mrb[0].mxu0 %v2300
        %v2464 = vpop.f32.mrb[0].mxu0
        %v2465 = vadd.f32 0.0, %v2464
        %v2466 = vpop.f32.mrb[0].mxu0
        %v2467 = vpop.f32.mrb[0].mxu0
        %v2468 = vadd.f32 0.0, %v2467
        %v2469 = vpop.f32.mrb[0].mxu0
        %2470 = vmatprep.mubr.bf16.mxu0 0
        %2471 = vmatmul.mubr.bf16.gmra.mrb[0].mxu0 %v2301
        %v2472 = vpop.f32.mrb[0].mxu0
        %v2473 = vadd.f32 0.0, %v2472
        %v2474 = vpop.f32.mrb[0].mxu0
        %v2475 = vpop.f32.mrb[0].mxu0
        %v2476 = vadd.f32 0.0, %v2475
        %v2477 = vpop.f32.mrb[0].mxu0
        %2478 = vmatprep.mubr.bf16.mxu0 0
        %2479 = vmatmul.mubr.bf16.gmra.mrb[0].mxu0 %v2302
        %v2480 = vpop.f32.mrb[0].mxu0
        %v2481 = vadd.f32 0.0, %v2480
        %v2482 = vpop.f32.mrb[0].mxu0
        %v2483 = vpop.f32.mrb[0].mxu0
        %v2484 = vadd.f32 0.0, %v2483
        %v2485 = vpop.f32.mrb[0].mxu0
        %2486 = vmatprep.mubr.bf16.mxu0 0
        %2487 = vmatmul.mubr.bf16.gmra.mrb[0].mxu0 %v2303
        %v2488 = vpop.f32.mrb[0].mxu0
        %v2489 = vadd.f32 0.0, %v2488
        %v2490 = vpop.f32.mrb[0].mxu0
        %v2491 = vpop.f32.mrb[0].mxu0
        %v2492 = vadd.f32 0.0, %v2491
        %v2493 = vpop.f32.mrb[0].mxu0
        %2494 = vmatprep.mubr.bf16.mxu0 0
        %2495 = vmatmul.mubr.bf16.gmra.mrb[0].mxu0 %v2304
        %v2496 = vpop.f32.mrb[0].mxu0
        %v2497 = vadd.f32 0.0, %v2496
        %v2498 = vpop.f32.mrb[0].mxu0
        %v2499 = vpop.f32.mrb[0].mxu0
        %v2500 = vadd.f32 0.0, %v2499
        %v2501 = vpop.f32.mrb[0].mxu0
        %2502 = vmatprep.mubr.bf16.mxu0 0
        %2503 = vmatmul.mubr.bf16.gmra.mrb[0].mxu0 %v2305
        %v2504 = vpop.f32.mrb[0].mxu0
        %v2505 = vadd.f32 0.0, %v2504
        %v2506 = vpop.f32.mrb[0].mxu0
        %v2507 = vpop.f32.mrb[0].mxu0
        %v2508 = vadd.f32 0.0, %v2507
        %v2509 = vpop.f32.mrb[0].mxu0
        %2510 = vmatprep.mubr.bf16.mxu0 0
        %2511 = vmatmul.mubr.bf16.gmra.mrb[0].mxu0 %v2306
        %v2512 = vpop.f32.mrb[0].mxu0
        %v2513 = vadd.f32 0.0, %v2512
        %v2514 = vpop.f32.mrb[0].mxu0
        %v2515 = vpop.f32.mrb[0].mxu0
        %v2516 = vadd.f32 0.0, %v2515
        %v2517 = vpop.f32.mrb[0].mxu0
        %2518 = vmatprep.mubr.bf16.mxu0 0
        %2519 = vmatmul.mubr.bf16.gmra.mrb[0].mxu0 %v2307
        %v2520 = vpop.f32.mrb[0].mxu0
        %v2521 = vadd.f32 0.0, %v2520
        %v2522 = vpop.f32.mrb[0].mxu0
        %v2523 = vpop.f32.mrb[0].mxu0
        %v2524 = vadd.f32 0.0, %v2523
        %v2525 = vpop.f32.mrb[0].mxu0
        %2526 = vmatprep.mubr.bf16.mxu0 0
        %2527 = vmatmul.mubr.bf16.gmra.mrb[0].mxu0 %v2308
        %v2528 = vpop.f32.mrb[0].mxu0
        %v2529 = vadd.f32 0.0, %v2528
        %v2530 = vpop.f32.mrb[0].mxu0
        %v2531 = vpop.f32.mrb[0].mxu0
        %v2532 = vadd.f32 0.0, %v2531
        %v2533 = vpop.f32.mrb[0].mxu0
        %2534 = vdwg.mxu0
        %v2535 = vadd.f32 %v2007, %v2409
        %v2536 = vadd.f32 %v2010, %v2412
        %v2537 = vadd.f32 %v2015, %v2417
        %v2538 = vadd.f32 %v2018, %v2420
        %v2539 = vadd.f32 %v2023, %v2425
        %v2540 = vadd.f32 %v2026, %v2428
        %v2541 = vadd.f32 %v2031, %v2433
        %v2542 = vadd.f32 %v2034, %v2436
        %v2543 = vadd.f32 %v2039, %v2441
        %v2544 = vadd.f32 %v2042, %v2444
        %v2545 = vadd.f32 %v2047, %v2449
        %v2546 = vadd.f32 %v2050, %v2452
        %v2547 = vadd.f32 %v2055, %v2457
        %v2548 = vadd.f32 %v2058, %v2460
        %v2549 = vadd.f32 %v2063, %v2465
        %v2550 = vadd.f32 %v2066, %v2468
        %v2551 = vadd.f32 %v2071, %v2473
        %v2552 = vadd.f32 %v2074, %v2476
        %v2553 = vadd.f32 %v2079, %v2481
        %v2554 = vadd.f32 %v2082, %v2484
        %v2555 = vadd.f32 %v2087, %v2489
        %v2556 = vadd.f32 %v2090, %v2492
        %v2557 = vadd.f32 %v2095, %v2497
        %v2558 = vadd.f32 %v2098, %v2500
        %v2559 = vadd.f32 %v2103, %v2505
        %v2560 = vadd.f32 %v2106, %v2508
        %v2561 = vadd.f32 %v2111, %v2513
        %v2562 = vadd.f32 %v2114, %v2516
        %v2563 = vadd.f32 %v2119, %v2521
        %v2564 = vadd.f32 %v2122, %v2524
        %v2565 = vadd.f32 %v2127, %v2529
        %v2566 = vadd.f32 %v2130, %v2532
        %v2567 = vld [vmem:[#allocation2 + $0x10] sm:$0xff]
        %v2568 = vld [vmem:[#allocation2 + $0x18] sm:$0xff]
        %v2569 = vld [vmem:[#allocation2 + $0x20] sm:$0xff]
        %v2570 = vld [vmem:[#allocation2 + $0x28] sm:$0xff]
        %v2571 = vld [vmem:[#allocation2 + $0x30] sm:$0xff]
        %v2572 = vld [vmem:[#allocation2 + $0x38] sm:$0xff]
        %v2573 = vld [vmem:[#allocation2 + $0x40] sm:$0xff]
        %v2574 = vld [vmem:[#allocation2 + $0x48] sm:$0xff]
        %v2575 = vld [vmem:[#allocation2 + $0x50] sm:$0xff]
        %v2576 = vld [vmem:[#allocation2 + $0x58] sm:$0xff]
        %v2577 = vld [vmem:[#allocation2 + $0x60] sm:$0xff]
        %v2578 = vld [vmem:[#allocation2 + $0x68] sm:$0xff]
        %v2579 = vld [vmem:[#allocation2 + $0x70] sm:$0xff]
        %v2580 = vld [vmem:[#allocation2 + $0x78] sm:$0xff]
        %v2581 = vld [vmem:[#allocation2 + $0x80] sm:$0xff]
        %v2582 = vld [vmem:[#allocation2 + $0x88] sm:$0xff]
        %v2583 = vld [vmem:[#allocation2 + $0x90] sm:$0xff]
        %v2584 = vld [vmem:[#allocation2 + $0x98] sm:$0xff]
        %v2585 = vld [vmem:[#allocation2 + $0xa0] sm:$0xff]
        %v2586 = vld [vmem:[#allocation2 + $0xa8] sm:$0xff]
        %v2587 = vld [vmem:[#allocation2 + $0xb0] sm:$0xff]
        %v2588 = vld [vmem:[#allocation2 + $0xb8] sm:$0xff]
        %v2589 = vld [vmem:[#allocation2 + $0xc0] sm:$0xff]
        %v2590 = vld [vmem:[#allocation2 + $0xc8] sm:$0xff]
        %v2591 = vld [vmem:[#allocation2 + $0xd0] sm:$0xff]
        %v2592 = vld [vmem:[#allocation2 + $0xd8] sm:$0xff]
        %v2593 = vld [vmem:[#allocation2 + $0xe0] sm:$0xff]
        %v2594 = vld [vmem:[#allocation2 + $0xe8] sm:$0xff]
        %v2595 = vld [vmem:[#allocation2 + $0xf0] sm:$0xff]
        %v2596 = vld [vmem:[#allocation2 + $0xf8] sm:$0xff]
        %v2597 = vld [vmem:[#allocation2 + $0x100] sm:$0xff]
        %v2598 = vld [vmem:[#allocation2 + $0x108] sm:$0xff]
        %v2599 = vsel %vm1298, 1, 0
        %v2600 = vsel %vm1299, 1, 0
        %v2601 = vsel %vm1300, 1, 0
        %v2602 = vsel %vm1301, 1, 0
        %v2603 = vsel %vm1302, 1, 0
        %v2604 = vsel %vm1303, 1, 0
        %v2605 = vsel %vm1304, 1, 0
        %v2606 = vsel %vm1305, 1, 0
        %v2607 = vsel %vm1306, 1, 0
        %v2608 = vsel %vm1307, 1, 0
        %v2609 = vsel %vm1308, 1, 0
        %v2610 = vsel %vm1309, 1, 0
        %v2611 = vsel %vm1310, 1, 0
        %v2612 = vsel %vm1311, 1, 0
        %v2613 = vsel %vm1312, 1, 0
        %v2614 = vsel %vm1313, 1, 0
        %v2615 = vsel %vm1314, 1, 0
        %v2616 = vsel %vm1315, 1, 0
        %v2617 = vsel %vm1316, 1, 0
        %v2618 = vsel %vm1317, 1, 0
        %v2619 = vsel %vm1318, 1, 0
        %v2620 = vsel %vm1319, 1, 0
        %v2621 = vsel %vm1320, 1, 0
        %v2622 = vsel %vm1321, 1, 0
        %v2623 = vsel %vm1322, 1, 0
        %v2624 = vsel %vm1323, 1, 0
        %v2625 = vsel %vm1324, 1, 0
        %v2626 = vsel %vm1325, 1, 0
        %v2627 = vsel %vm1326, 1, 0
        %v2628 = vsel %vm1327, 1, 0
        %v2629 = vsel %vm1328, 1, 0
        %v2630 = vsel %vm1329, 1, 0
        %vm2631 = vcmp.eq.s32.totalorder %v2599, 1
        %vm2632 = vcmp.eq.s32.totalorder %v2600, 1
        %vm2633 = vcmp.eq.s32.totalorder %v2601, 1
        %vm2634 = vcmp.eq.s32.totalorder %v2602, 1
        %vm2635 = vcmp.eq.s32.totalorder %v2603, 1
        %vm2636 = vcmp.eq.s32.totalorder %v2604, 1
        %vm2637 = vcmp.eq.s32.totalorder %v2605, 1
        %vm2638 = vcmp.eq.s32.totalorder %v2606, 1
        %vm2639 = vcmp.eq.s32.totalorder %v2607, 1
        %vm2640 = vcmp.eq.s32.totalorder %v2608, 1
        %vm2641 = vcmp.eq.s32.totalorder %v2609, 1
        %vm2642 = vcmp.eq.s32.totalorder %v2610, 1
        %vm2643 = vcmp.eq.s32.totalorder %v2611, 1
        %vm2644 = vcmp.eq.s32.totalorder %v2612, 1
        %vm2645 = vcmp.eq.s32.totalorder %v2613, 1
        %vm2646 = vcmp.eq.s32.totalorder %v2614, 1
        %vm2647 = vcmp.eq.s32.totalorder %v2615, 1
        %vm2648 = vcmp.eq.s32.totalorder %v2616, 1
        %vm2649 = vcmp.eq.s32.totalorder %v2617, 1
        %vm2650 = vcmp.eq.s32.totalorder %v2618, 1
        %vm2651 = vcmp.eq.s32.totalorder %v2619, 1
        %vm2652 = vcmp.eq.s32.totalorder %v2620, 1
        %vm2653 = vcmp.eq.s32.totalorder %v2621, 1
        %vm2654 = vcmp.eq.s32.totalorder %v2622, 1
        %vm2655 = vcmp.eq.s32.totalorder %v2623, 1
        %vm2656 = vcmp.eq.s32.totalorder %v2624, 1
        %vm2657 = vcmp.eq.s32.totalorder %v2625, 1
        %vm2658 = vcmp.eq.s32.totalorder %v2626, 1
        %vm2659 = vcmp.eq.s32.totalorder %v2627, 1
        %vm2660 = vcmp.eq.s32.totalorder %v2628, 1
        %vm2661 = vcmp.eq.s32.totalorder %v2629, 1
        %vm2662 = vcmp.eq.s32.totalorder %v2630, 1
        %v2663 = vsel %vm2631, %v2567, 0.0
        %v2664 = vsel %vm2632, %v2568, 0.0
        %v2665 = vsel %vm2633, %v2569, 0.0
        %v2666 = vsel %vm2634, %v2570, 0.0
        %v2667 = vsel %vm2635, %v2571, 0.0
        %v2668 = vsel %vm2636, %v2572, 0.0
        %v2669 = vsel %vm2637, %v2573, 0.0
        %v2670 = vsel %vm2638, %v2574, 0.0
        %v2671 = vsel %vm2639, %v2575, 0.0
        %v2672 = vsel %vm2640, %v2576, 0.0
        %v2673 = vsel %vm2641, %v2577, 0.0
        %v2674 = vsel %vm2642, %v2578, 0.0
        %v2675 = vsel %vm2643, %v2579, 0.0
        %v2676 = vsel %vm2644, %v2580, 0.0
        %v2677 = vsel %vm2645, %v2581, 0.0
        %v2678 = vsel %vm2646, %v2582, 0.0
        %v2679 = vsel %vm2647, %v2583, 0.0
        %v2680 = vsel %vm2648, %v2584, 0.0
        %v2681 = vsel %vm2649, %v2585, 0.0
        %v2682 = vsel %vm2650, %v2586, 0.0
        %v2683 = vsel %vm2651, %v2587, 0.0
        %v2684 = vsel %vm2652, %v2588, 0.0
        %v2685 = vsel %vm2653, %v2589, 0.0
        %v2686 = vsel %vm2654, %v2590, 0.0
        %v2687 = vsel %vm2655, %v2591, 0.0
        %v2688 = vsel %vm2656, %v2592, 0.0
        %v2689 = vsel %vm2657, %v2593, 0.0
        %v2690 = vsel %vm2658, %v2594, 0.0
        %v2691 = vsel %vm2659, %v2595, 0.0
        %v2692 = vsel %vm2660, %v2596, 0.0
        %v2693 = vsel %vm2661, %v2597, 0.0
        %v2694 = vsel %vm2662, %v2598, 0.0
        %v2695 = vpack.c.bf16 %v2664, %v2663
        %v2696 = vpack.c.bf16 %v2666, %v2665
        %v2697 = vpack.c.bf16 %v2668, %v2667
        %v2698 = vpack.c.bf16 %v2670, %v2669
        %v2699 = vpack.c.bf16 %v2672, %v2671
        %v2700 = vpack.c.bf16 %v2674, %v2673
        %v2701 = vpack.c.bf16 %v2676, %v2675
        %v2702 = vpack.c.bf16 %v2678, %v2677
        %v2703 = vpack.c.bf16 %v2680, %v2679
        %v2704 = vpack.c.bf16 %v2682, %v2681
        %v2705 = vpack.c.bf16 %v2684, %v2683
        %v2706 = vpack.c.bf16 %v2686, %v2685
        %v2707 = vpack.c.bf16 %v2688, %v2687
        %v2708 = vpack.c.bf16 %v2690, %v2689
        %v2709 = vpack.c.bf16 %v2692, %v2691
        %v2710 = vpack.c.bf16 %v2694, %v2693
        %s2711 = scalar_lea.vmem %s3, 192
        %v2712 = vld [vmem:[%s2711] sm:$0xf]
        %v2713 = vld [vmem:[%s2711 + $0x4] sm:$0xf]
        %v2714 = vld [vmem:[%s2711 + $0x8] sm:$0xf]
        %v2715 = vld [vmem:[%s2711 + $0xc] sm:$0xf]
        %v2716 = vld [vmem:[%s2711 + $0x10] sm:$0xf]
        %v2717 = vld [vmem:[%s2711 + $0x14] sm:$0xf]
        %v2718 = vld [vmem:[%s2711 + $0x18] sm:$0xf]
        %v2719 = vld [vmem:[%s2711 + $0x1c] sm:$0xf]
        %v2720 = vld [vmem:[%s2711 + $0x20] sm:$0xf]
        %v2721 = vld [vmem:[%s2711 + $0x24] sm:$0xf]
        %v2722 = vld [vmem:[%s2711 + $0x28] sm:$0xf]
        %v2723 = vld [vmem:[%s2711 + $0x2c] sm:$0xf]
        %v2724 = vld [vmem:[%s2711 + $0x30] sm:$0xf]
        %v2725 = vld [vmem:[%s2711 + $0x34] sm:$0xf]
        %v2726 = vld [vmem:[%s2711 + $0x38] sm:$0xf]
        %v2727 = vld [vmem:[%s2711 + $0x3c] sm:$0xf]
        %v2744 = vunpack.c.l.b16 %v2712
        %v2745 = vunpack.c.l.b16 %v2713
        %v2746 = vunpack.c.l.b16 %v2714
        %v2747 = vunpack.c.l.b16 %v2715
        %v2748 = vunpack.c.l.b16 %v2716
        %v2749 = vunpack.c.l.b16 %v2717
        %v2750 = vunpack.c.l.b16 %v2718
        %v2751 = vunpack.c.l.b16 %v2719
        %v2752 = vunpack.c.l.b16 %v2720
        %v2753 = vunpack.c.l.b16 %v2721
        %v2754 = vunpack.c.l.b16 %v2722
        %v2755 = vunpack.c.l.b16 %v2723
        %v2756 = vunpack.c.l.b16 %v2724
        %v2757 = vunpack.c.l.b16 %v2725
        %v2758 = vunpack.c.l.b16 %v2726
        %v2759 = vunpack.c.l.b16 %v2727
        %v2760 = vpack.c.b16 %v2745, %v2744
        %v2761 = vpack.c.b16 %v2747, %v2746
        %v2762 = vpack.c.b16 %v2749, %v2748
        %v2763 = vpack.c.b16 %v2751, %v2750
        %v2764 = vpack.c.b16 %v2753, %v2752
        %v2765 = vpack.c.b16 %v2755, %v2754
        %v2766 = vpack.c.b16 %v2757, %v2756
        %v2767 = vpack.c.b16 %v2759, %v2758
        %2776 = vmatprep.subr.bf16.mxu0 0
        %2777 = vmatpush1.bf16.msra.mxu0 %v2760
        %2778 = vmatprep.subr.bf16.mxu0 0
        %2779 = vmatpush1.bf16.msra.mxu0 %v2761
        %2780 = vmatprep.subr.bf16.mxu0 0
        %2781 = vmatpush1.bf16.msra.mxu0 %v2762
        %2782 = vmatprep.subr.bf16.mxu0 0
        %2783 = vmatpush1.bf16.msra.mxu0 %v2763
        %2784 = vmatprep.subr.bf16.mxu0 0
        %2785 = vmatpush1.bf16.msra.mxu0 %v2764
        %2786 = vmatprep.subr.bf16.mxu0 0
        %2787 = vmatpush1.bf16.msra.mxu0 %v2765
        %2788 = vmatprep.subr.bf16.mxu0 0
        %2789 = vmatpush1.bf16.msra.mxu0 %v2766
        %2790 = vmatprep.subr.bf16.mxu0 0
        %2791 = vmatpush1.bf16.msra.mxu0 %v2767
        %2792 = vmatprep.subr.bf16.mxu0 0
        %2793 = vmatpush1.bf16.msra.mxu0 0
        %2794 = vmatprep.subr.bf16.mxu0 0
        %2795 = vmatpush1.bf16.msra.mxu0 0
        %2796 = vmatprep.subr.bf16.mxu0 0
        %2797 = vmatpush1.bf16.msra.mxu0 0
        %2798 = vmatprep.subr.bf16.mxu0 0
        %2799 = vmatpush1.bf16.msra.mxu0 0
        %2800 = vmatprep.subr.bf16.mxu0 0
        %2801 = vmatpush1.bf16.msra.mxu0 0
        %2802 = vmatprep.subr.bf16.mxu0 0
        %2803 = vmatpush1.bf16.msra.mxu0 0
        %2804 = vmatprep.subr.bf16.mxu0 0
        %2805 = vmatpush1.bf16.msra.mxu0 0
        %2806 = vmatprep.subr.bf16.mxu0 0
        %2807 = vmatpush1.bf16.msra.mxu0 0
        %2808 = vmatprep.mubr.bf16.mxu0 0
        %2809 = vmatmul.mubr.bf16.gmra.mrb[0].mxu0 %v2695
        %v2810 = vpop.f32.mrb[0].mxu0
        %v2811 = vadd.f32 0.0, %v2810
        %v2812 = vpop.f32.mrb[0].mxu0
        %v2813 = vpop.f32.mrb[0].mxu0
        %v2814 = vadd.f32 0.0, %v2813
        %v2815 = vpop.f32.mrb[0].mxu0
        %2816 = vmatprep.mubr.bf16.mxu0 0
        %2817 = vmatmul.mubr.bf16.gmra.mrb[0].mxu0 %v2696
        %v2818 = vpop.f32.mrb[0].mxu0
        %v2819 = vadd.f32 0.0, %v2818
        %v2820 = vpop.f32.mrb[0].mxu0
        %v2821 = vpop.f32.mrb[0].mxu0
        %v2822 = vadd.f32 0.0, %v2821
        %v2823 = vpop.f32.mrb[0].mxu0
        %2824 = vmatprep.mubr.bf16.mxu0 0
        %2825 = vmatmul.mubr.bf16.gmra.mrb[0].mxu0 %v2697
        %v2826 = vpop.f32.mrb[0].mxu0
        %v2827 = vadd.f32 0.0, %v2826
        %v2828 = vpop.f32.mrb[0].mxu0
        %v2829 = vpop.f32.mrb[0].mxu0
        %v2830 = vadd.f32 0.0, %v2829
        %v2831 = vpop.f32.mrb[0].mxu0
        %2832 = vmatprep.mubr.bf16.mxu0 0
        %2833 = vmatmul.mubr.bf16.gmra.mrb[0].mxu0 %v2698
        %v2834 = vpop.f32.mrb[0].mxu0
        %v2835 = vadd.f32 0.0, %v2834
        %v2836 = vpop.f32.mrb[0].mxu0
        %v2837 = vpop.f32.mrb[0].mxu0
        %v2838 = vadd.f32 0.0, %v2837
        %v2839 = vpop.f32.mrb[0].mxu0
        %2840 = vmatprep.mubr.bf16.mxu0 0
        %2841 = vmatmul.mubr.bf16.gmra.mrb[0].mxu0 %v2699
        %v2842 = vpop.f32.mrb[0].mxu0
        %v2843 = vadd.f32 0.0, %v2842
        %v2844 = vpop.f32.mrb[0].mxu0
        %v2845 = vpop.f32.mrb[0].mxu0
        %v2846 = vadd.f32 0.0, %v2845
        %v2847 = vpop.f32.mrb[0].mxu0
        %2848 = vmatprep.mubr.bf16.mxu0 0
        %2849 = vmatmul.mubr.bf16.gmra.mrb[0].mxu0 %v2700
        %v2850 = vpop.f32.mrb[0].mxu0
        %v2851 = vadd.f32 0.0, %v2850
        %v2852 = vpop.f32.mrb[0].mxu0
        %v2853 = vpop.f32.mrb[0].mxu0
        %v2854 = vadd.f32 0.0, %v2853
        %v2855 = vpop.f32.mrb[0].mxu0
        %2856 = vmatprep.mubr.bf16.mxu0 0
        %2857 = vmatmul.mubr.bf16.gmra.mrb[0].mxu0 %v2701
        %v2858 = vpop.f32.mrb[0].mxu0
        %v2859 = vadd.f32 0.0, %v2858
        %v2860 = vpop.f32.mrb[0].mxu0
        %v2861 = vpop.f32.mrb[0].mxu0
        %v2862 = vadd.f32 0.0, %v2861
        %v2863 = vpop.f32.mrb[0].mxu0
        %2864 = vmatprep.mubr.bf16.mxu0 0
        %2865 = vmatmul.mubr.bf16.gmra.mrb[0].mxu0 %v2702
        %v2866 = vpop.f32.mrb[0].mxu0
        %v2867 = vadd.f32 0.0, %v2866
        %v2868 = vpop.f32.mrb[0].mxu0
        %v2869 = vpop.f32.mrb[0].mxu0
        %v2870 = vadd.f32 0.0, %v2869
        %v2871 = vpop.f32.mrb[0].mxu0
        %2872 = vmatprep.mubr.bf16.mxu0 0
        %2873 = vmatmul.mubr.bf16.gmra.mrb[0].mxu0 %v2703
        %v2874 = vpop.f32.mrb[0].mxu0
        %v2875 = vadd.f32 0.0, %v2874
        %v2876 = vpop.f32.mrb[0].mxu0
        %v2877 = vpop.f32.mrb[0].mxu0
        %v2878 = vadd.f32 0.0, %v2877
        %v2879 = vpop.f32.mrb[0].mxu0
        %2880 = vmatprep.mubr.bf16.mxu0 0
        %2881 = vmatmul.mubr.bf16.gmra.mrb[0].mxu0 %v2704
        %v2882 = vpop.f32.mrb[0].mxu0
        %v2883 = vadd.f32 0.0, %v2882
        %v2884 = vpop.f32.mrb[0].mxu0
        %v2885 = vpop.f32.mrb[0].mxu0
        %v2886 = vadd.f32 0.0, %v2885
        %v2887 = vpop.f32.mrb[0].mxu0
        %2888 = vmatprep.mubr.bf16.mxu0 0
        %2889 = vmatmul.mubr.bf16.gmra.mrb[0].mxu0 %v2705
        %v2890 = vpop.f32.mrb[0].mxu0
        %v2891 = vadd.f32 0.0, %v2890
        %v2892 = vpop.f32.mrb[0].mxu0
        %v2893 = vpop.f32.mrb[0].mxu0
        %v2894 = vadd.f32 0.0, %v2893
        %v2895 = vpop.f32.mrb[0].mxu0
        %2896 = vmatprep.mubr.bf16.mxu0 0
        %2897 = vmatmul.mubr.bf16.gmra.mrb[0].mxu0 %v2706
        %v2898 = vpop.f32.mrb[0].mxu0
        %v2899 = vadd.f32 0.0, %v2898
        %v2900 = vpop.f32.mrb[0].mxu0
        %v2901 = vpop.f32.mrb[0].mxu0
        %v2902 = vadd.f32 0.0, %v2901
        %v2903 = vpop.f32.mrb[0].mxu0
        %2904 = vmatprep.mubr.bf16.mxu0 0
        %2905 = vmatmul.mubr.bf16.gmra.mrb[0].mxu0 %v2707
        %v2906 = vpop.f32.mrb[0].mxu0
        %v2907 = vadd.f32 0.0, %v2906
        %v2908 = vpop.f32.mrb[0].mxu0
        %v2909 = vpop.f32.mrb[0].mxu0
        %v2910 = vadd.f32 0.0, %v2909
        %v2911 = vpop.f32.mrb[0].mxu0
        %2912 = vmatprep.mubr.bf16.mxu0 0
        %2913 = vmatmul.mubr.bf16.gmra.mrb[0].mxu0 %v2708
        %v2914 = vpop.f32.mrb[0].mxu0
        %v2915 = vadd.f32 0.0, %v2914
        %v2916 = vpop.f32.mrb[0].mxu0
        %v2917 = vpop.f32.mrb[0].mxu0
        %v2918 = vadd.f32 0.0, %v2917
        %v2919 = vpop.f32.mrb[0].mxu0
        %2920 = vmatprep.mubr.bf16.mxu0 0
        %2921 = vmatmul.mubr.bf16.gmra.mrb[0].mxu0 %v2709
        %v2922 = vpop.f32.mrb[0].mxu0
        %v2923 = vadd.f32 0.0, %v2922
        %v2924 = vpop.f32.mrb[0].mxu0
        %v2925 = vpop.f32.mrb[0].mxu0
        %v2926 = vadd.f32 0.0, %v2925
        %v2927 = vpop.f32.mrb[0].mxu0
        %2928 = vmatprep.mubr.bf16.mxu0 0
        %2929 = vmatmul.mubr.bf16.gmra.mrb[0].mxu0 %v2710
        %v2930 = vpop.f32.mrb[0].mxu0
        %v2931 = vadd.f32 0.0, %v2930
        %v2932 = vpop.f32.mrb[0].mxu0
        %v2933 = vpop.f32.mrb[0].mxu0
        %v2934 = vadd.f32 0.0, %v2933
        %v2935 = vpop.f32.mrb[0].mxu0
        %2936 = vdwg.mxu0
        %v2937 = vadd.f32 %v2535, %v2811
        %v2938 = vadd.f32 %v2536, %v2814
        %v2939 = vadd.f32 %v2537, %v2819
        %v2940 = vadd.f32 %v2538, %v2822
        %v2941 = vadd.f32 %v2539, %v2827
        %v2942 = vadd.f32 %v2540, %v2830
        %v2943 = vadd.f32 %v2541, %v2835
        %v2944 = vadd.f32 %v2542, %v2838
        %v2945 = vadd.f32 %v2543, %v2843
        %v2946 = vadd.f32 %v2544, %v2846
        %v2947 = vadd.f32 %v2545, %v2851
        %v2948 = vadd.f32 %v2546, %v2854
        %v2949 = vadd.f32 %v2547, %v2859
        %v2950 = vadd.f32 %v2548, %v2862
        %v2951 = vadd.f32 %v2549, %v2867
        %v2952 = vadd.f32 %v2550, %v2870
        %v2953 = vadd.f32 %v2551, %v2875
        %v2954 = vadd.f32 %v2552, %v2878
        %v2955 = vadd.f32 %v2553, %v2883
        %v2956 = vadd.f32 %v2554, %v2886
        %v2957 = vadd.f32 %v2555, %v2891
        %v2958 = vadd.f32 %v2556, %v2894
        %v2959 = vadd.f32 %v2557, %v2899
        %v2960 = vadd.f32 %v2558, %v2902
        %v2961 = vadd.f32 %v2559, %v2907
        %v2962 = vadd.f32 %v2560, %v2910
        %v2963 = vadd.f32 %v2561, %v2915
        %v2964 = vadd.f32 %v2562, %v2918
        %v2965 = vadd.f32 %v2563, %v2923
        %v2966 = vadd.f32 %v2564, %v2926
        %v2967 = vadd.f32 %v2565, %v2931
        %v2968 = vadd.f32 %v2566, %v2934
        %v2969 = vld [vmem:[#allocation2 + $0x11] sm:$0xff]
        %v2970 = vld [vmem:[#allocation2 + $0x19] sm:$0xff]
        %v2971 = vld [vmem:[#allocation2 + $0x21] sm:$0xff]
        %v2972 = vld [vmem:[#allocation2 + $0x29] sm:$0xff]
        %v2973 = vld [vmem:[#allocation2 + $0x31] sm:$0xff]
        %v2974 = vld [vmem:[#allocation2 + $0x39] sm:$0xff]
        %v2975 = vld [vmem:[#allocation2 + $0x41] sm:$0xff]
        %v2976 = vld [vmem:[#allocation2 + $0x49] sm:$0xff]
        %v2977 = vld [vmem:[#allocation2 + $0x51] sm:$0xff]
        %v2978 = vld [vmem:[#allocation2 + $0x59] sm:$0xff]
        %v2979 = vld [vmem:[#allocation2 + $0x61] sm:$0xff]
        %v2980 = vld [vmem:[#allocation2 + $0x69] sm:$0xff]
        %v2981 = vld [vmem:[#allocation2 + $0x71] sm:$0xff]
        %v2982 = vld [vmem:[#allocation2 + $0x79] sm:$0xff]
        %v2983 = vld [vmem:[#allocation2 + $0x81] sm:$0xff]
        %v2984 = vld [vmem:[#allocation2 + $0x89] sm:$0xff]
        %v2985 = vld [vmem:[#allocation2 + $0x91] sm:$0xff]
        %v2986 = vld [vmem:[#allocation2 + $0x99] sm:$0xff]
        %v2987 = vld [vmem:[#allocation2 + $0xa1] sm:$0xff]
        %v2988 = vld [vmem:[#allocation2 + $0xa9] sm:$0xff]
        %v2989 = vld [vmem:[#allocation2 + $0xb1] sm:$0xff]
        %v2990 = vld [vmem:[#allocation2 + $0xb9] sm:$0xff]
        %v2991 = vld [vmem:[#allocation2 + $0xc1] sm:$0xff]
        %v2992 = vld [vmem:[#allocation2 + $0xc9] sm:$0xff]
        %v2993 = vld [vmem:[#allocation2 + $0xd1] sm:$0xff]
        %v2994 = vld [vmem:[#allocation2 + $0xd9] sm:$0xff]
        %v2995 = vld [vmem:[#allocation2 + $0xe1] sm:$0xff]
        %v2996 = vld [vmem:[#allocation2 + $0xe9] sm:$0xff]
        %v2997 = vld [vmem:[#allocation2 + $0xf1] sm:$0xff]
        %v2998 = vld [vmem:[#allocation2 + $0xf9] sm:$0xff]
        %v2999 = vld [vmem:[#allocation2 + $0x101] sm:$0xff]
        %v3000 = vld [vmem:[#allocation2 + $0x109] sm:$0xff]
        %v3001 = vpack.c.bf16 %v2970, %v2969
        %v3002 = vpack.c.bf16 %v2972, %v2971
        %v3003 = vpack.c.bf16 %v2974, %v2973
        %v3004 = vpack.c.bf16 %v2976, %v2975
        %v3005 = vpack.c.bf16 %v2978, %v2977
        %v3006 = vpack.c.bf16 %v2980, %v2979
        %v3007 = vpack.c.bf16 %v2982, %v2981
        %v3008 = vpack.c.bf16 %v2984, %v2983
        %v3009 = vpack.c.bf16 %v2986, %v2985
        %v3010 = vpack.c.bf16 %v2988, %v2987
        %v3011 = vpack.c.bf16 %v2990, %v2989
        %v3012 = vpack.c.bf16 %v2992, %v2991
        %v3013 = vpack.c.bf16 %v2994, %v2993
        %v3014 = vpack.c.bf16 %v2996, %v2995
        %v3015 = vpack.c.bf16 %v2998, %v2997
        %v3016 = vpack.c.bf16 %v3000, %v2999
        %s3017 = scalar_lea.vmem %s3, 256
        %v3018 = vld [vmem:[%s3017] sm:$0xf]
        %v3019 = vld [vmem:[%s3017 + $0x4] sm:$0xf]
        %v3020 = vld [vmem:[%s3017 + $0x8] sm:$0xf]
        %v3021 = vld [vmem:[%s3017 + $0xc] sm:$0xf]
        %v3022 = vld [vmem:[%s3017 + $0x10] sm:$0xf]
        %v3023 = vld [vmem:[%s3017 + $0x14] sm:$0xf]
        %v3024 = vld [vmem:[%s3017 + $0x18] sm:$0xf]
        %v3025 = vld [vmem:[%s3017 + $0x1c] sm:$0xf]
        %v3026 = vld [vmem:[%s3017 + $0x20] sm:$0xf]
        %v3027 = vld [vmem:[%s3017 + $0x24] sm:$0xf]
        %v3028 = vld [vmem:[%s3017 + $0x28] sm:$0xf]
        %v3029 = vld [vmem:[%s3017 + $0x2c] sm:$0xf]
        %v3030 = vld [vmem:[%s3017 + $0x30] sm:$0xf]
        %v3031 = vld [vmem:[%s3017 + $0x34] sm:$0xf]
        %v3032 = vld [vmem:[%s3017 + $0x38] sm:$0xf]
        %v3033 = vld [vmem:[%s3017 + $0x3c] sm:$0xf]
        %v3050 = vunpack.c.l.b16 %v3018
        %v3051 = vunpack.c.l.b16 %v3019
        %v3052 = vunpack.c.l.b16 %v3020
        %v3053 = vunpack.c.l.b16 %v3021
        %v3054 = vunpack.c.l.b16 %v3022
        %v3055 = vunpack.c.l.b16 %v3023
        %v3056 = vunpack.c.l.b16 %v3024
        %v3057 = vunpack.c.l.b16 %v3025
        %v3058 = vunpack.c.l.b16 %v3026
        %v3059 = vunpack.c.l.b16 %v3027
        %v3060 = vunpack.c.l.b16 %v3028
        %v3061 = vunpack.c.l.b16 %v3029
        %v3062 = vunpack.c.l.b16 %v3030
        %v3063 = vunpack.c.l.b16 %v3031
        %v3064 = vunpack.c.l.b16 %v3032
        %v3065 = vunpack.c.l.b16 %v3033
        %v3066 = vpack.c.b16 %v3051, %v3050
        %v3067 = vpack.c.b16 %v3053, %v3052
        %v3068 = vpack.c.b16 %v3055, %v3054
        %v3069 = vpack.c.b16 %v3057, %v3056
        %v3070 = vpack.c.b16 %v3059, %v3058
        %v3071 = vpack.c.b16 %v3061, %v3060
        %v3072 = vpack.c.b16 %v3063, %v3062
        %v3073 = vpack.c.b16 %v3065, %v3064
        %3082 = vmatprep.subr.bf16.mxu0 0
        %3083 = vmatpush1.bf16.msra.mxu0 %v3066
        %3084 = vmatprep.subr.bf16.mxu0 0
        %3085 = vmatpush1.bf16.msra.mxu0 %v3067
        %3086 = vmatprep.subr.bf16.mxu0 0
        %3087 = vmatpush1.bf16.msra.mxu0 %v3068
        %3088 = vmatprep.subr.bf16.mxu0 0
        %3089 = vmatpush1.bf16.msra.mxu0 %v3069
        %3090 = vmatprep.subr.bf16.mxu0 0
        %3091 = vmatpush1.bf16.msra.mxu0 %v3070
        %3092 = vmatprep.subr.bf16.mxu0 0
        %3093 = vmatpush1.bf16.msra.mxu0 %v3071
        %3094 = vmatprep.subr.bf16.mxu0 0
        %3095 = vmatpush1.bf16.msra.mxu0 %v3072
        %3096 = vmatprep.subr.bf16.mxu0 0
        %3097 = vmatpush1.bf16.msra.mxu0 %v3073
        %3098 = vmatprep.subr.bf16.mxu0 0
        %3099 = vmatpush1.bf16.msra.mxu0 0
        %3100 = vmatprep.subr.bf16.mxu0 0
        %3101 = vmatpush1.bf16.msra.mxu0 0
        %3102 = vmatprep.subr.bf16.mxu0 0
        %3103 = vmatpush1.bf16.msra.mxu0 0
        %3104 = vmatprep.subr.bf16.mxu0 0
        %3105 = vmatpush1.bf16.msra.mxu0 0
        %3106 = vmatprep.subr.bf16.mxu0 0
        %3107 = vmatpush1.bf16.msra.mxu0 0
        %3108 = vmatprep.subr.bf16.mxu0 0
        %3109 = vmatpush1.bf16.msra.mxu0 0
        %3110 = vmatprep.subr.bf16.mxu0 0
        %3111 = vmatpush1.bf16.msra.mxu0 0
        %3112 = vmatprep.subr.bf16.mxu0 0
        %3113 = vmatpush1.bf16.msra.mxu0 0
        %3114 = vmatprep.mubr.bf16.mxu0 0
        %3115 = vmatmul.mubr.bf16.gmra.mrb[0].mxu0 %v3001
        %v3116 = vpop.f32.mrb[0].mxu0
        %v3117 = vadd.f32 0.0, %v3116
        %v3118 = vpop.f32.mrb[0].mxu0
        %v3119 = vpop.f32.mrb[0].mxu0
        %v3120 = vadd.f32 0.0, %v3119
        %v3121 = vpop.f32.mrb[0].mxu0
        %3122 = vmatprep.mubr.bf16.mxu0 0
        %3123 = vmatmul.mubr.bf16.gmra.mrb[0].mxu0 %v3002
        %v3124 = vpop.f32.mrb[0].mxu0
        %v3125 = vadd.f32 0.0, %v3124
        %v3126 = vpop.f32.mrb[0].mxu0
        %v3127 = vpop.f32.mrb[0].mxu0
        %v3128 = vadd.f32 0.0, %v3127
        %v3129 = vpop.f32.mrb[0].mxu0
        %3130 = vmatprep.mubr.bf16.mxu0 0
        %3131 = vmatmul.mubr.bf16.gmra.mrb[0].mxu0 %v3003
        %v3132 = vpop.f32.mrb[0].mxu0
        %v3133 = vadd.f32 0.0, %v3132
        %v3134 = vpop.f32.mrb[0].mxu0
        %v3135 = vpop.f32.mrb[0].mxu0
        %v3136 = vadd.f32 0.0, %v3135
        %v3137 = vpop.f32.mrb[0].mxu0
        %3138 = vmatprep.mubr.bf16.mxu0 0
        %3139 = vmatmul.mubr.bf16.gmra.mrb[0].mxu0 %v3004
        %v3140 = vpop.f32.mrb[0].mxu0
        %v3141 = vadd.f32 0.0, %v3140
        %v3142 = vpop.f32.mrb[0].mxu0
        %v3143 = vpop.f32.mrb[0].mxu0
        %v3144 = vadd.f32 0.0, %v3143
        %v3145 = vpop.f32.mrb[0].mxu0
        %3146 = vmatprep.mubr.bf16.mxu0 0
        %3147 = vmatmul.mubr.bf16.gmra.mrb[0].mxu0 %v3005
        %v3148 = vpop.f32.mrb[0].mxu0
        %v3149 = vadd.f32 0.0, %v3148
        %v3150 = vpop.f32.mrb[0].mxu0
        %v3151 = vpop.f32.mrb[0].mxu0
        %v3152 = vadd.f32 0.0, %v3151
        %v3153 = vpop.f32.mrb[0].mxu0
        %3154 = vmatprep.mubr.bf16.mxu0 0
        %3155 = vmatmul.mubr.bf16.gmra.mrb[0].mxu0 %v3006
        %v3156 = vpop.f32.mrb[0].mxu0
        %v3157 = vadd.f32 0.0, %v3156
        %v3158 = vpop.f32.mrb[0].mxu0
        %v3159 = vpop.f32.mrb[0].mxu0
        %v3160 = vadd.f32 0.0, %v3159
        %v3161 = vpop.f32.mrb[0].mxu0
        %3162 = vmatprep.mubr.bf16.mxu0 0
        %3163 = vmatmul.mubr.bf16.gmra.mrb[0].mxu0 %v3007
        %v3164 = vpop.f32.mrb[0].mxu0
        %v3165 = vadd.f32 0.0, %v3164
        %v3166 = vpop.f32.mrb[0].mxu0
        %v3167 = vpop.f32.mrb[0].mxu0
        %v3168 = vadd.f32 0.0, %v3167
        %v3169 = vpop.f32.mrb[0].mxu0
        %3170 = vmatprep.mubr.bf16.mxu0 0
        %3171 = vmatmul.mubr.bf16.gmra.mrb[0].mxu0 %v3008
        %v3172 = vpop.f32.mrb[0].mxu0
        %v3173 = vadd.f32 0.0, %v3172
        %v3174 = vpop.f32.mrb[0].mxu0
        %v3175 = vpop.f32.mrb[0].mxu0
        %v3176 = vadd.f32 0.0, %v3175
        %v3177 = vpop.f32.mrb[0].mxu0
        %3178 = vmatprep.mubr.bf16.mxu0 0
        %3179 = vmatmul.mubr.bf16.gmra.mrb[0].mxu0 %v3009
        %v3180 = vpop.f32.mrb[0].mxu0
        %v3181 = vadd.f32 0.0, %v3180
        %v3182 = vpop.f32.mrb[0].mxu0
        %v3183 = vpop.f32.mrb[0].mxu0
        %v3184 = vadd.f32 0.0, %v3183
        %v3185 = vpop.f32.mrb[0].mxu0
        %3186 = vmatprep.mubr.bf16.mxu0 0
        %3187 = vmatmul.mubr.bf16.gmra.mrb[0].mxu0 %v3010
        %v3188 = vpop.f32.mrb[0].mxu0
        %v3189 = vadd.f32 0.0, %v3188
        %v3190 = vpop.f32.mrb[0].mxu0
        %v3191 = vpop.f32.mrb[0].mxu0
        %v3192 = vadd.f32 0.0, %v3191
        %v3193 = vpop.f32.mrb[0].mxu0
        %3194 = vmatprep.mubr.bf16.mxu0 0
        %3195 = vmatmul.mubr.bf16.gmra.mrb[0].mxu0 %v3011
        %v3196 = vpop.f32.mrb[0].mxu0
        %v3197 = vadd.f32 0.0, %v3196
        %v3198 = vpop.f32.mrb[0].mxu0
        %v3199 = vpop.f32.mrb[0].mxu0
        %v3200 = vadd.f32 0.0, %v3199
        %v3201 = vpop.f32.mrb[0].mxu0
        %3202 = vmatprep.mubr.bf16.mxu0 0
        %3203 = vmatmul.mubr.bf16.gmra.mrb[0].mxu0 %v3012
        %v3204 = vpop.f32.mrb[0].mxu0
        %v3205 = vadd.f32 0.0, %v3204
        %v3206 = vpop.f32.mrb[0].mxu0
        %v3207 = vpop.f32.mrb[0].mxu0
        %v3208 = vadd.f32 0.0, %v3207
        %v3209 = vpop.f32.mrb[0].mxu0
        %3210 = vmatprep.mubr.bf16.mxu0 0
        %3211 = vmatmul.mubr.bf16.gmra.mrb[0].mxu0 %v3013
        %v3212 = vpop.f32.mrb[0].mxu0
        %v3213 = vadd.f32 0.0, %v3212
        %v3214 = vpop.f32.mrb[0].mxu0
        %v3215 = vpop.f32.mrb[0].mxu0
        %v3216 = vadd.f32 0.0, %v3215
        %v3217 = vpop.f32.mrb[0].mxu0
        %3218 = vmatprep.mubr.bf16.mxu0 0
        %3219 = vmatmul.mubr.bf16.gmra.mrb[0].mxu0 %v3014
        %v3220 = vpop.f32.mrb[0].mxu0
        %v3221 = vadd.f32 0.0, %v3220
        %v3222 = vpop.f32.mrb[0].mxu0
        %v3223 = vpop.f32.mrb[0].mxu0
        %v3224 = vadd.f32 0.0, %v3223
        %v3225 = vpop.f32.mrb[0].mxu0
        %3226 = vmatprep.mubr.bf16.mxu0 0
        %3227 = vmatmul.mubr.bf16.gmra.mrb[0].mxu0 %v3015
        %v3228 = vpop.f32.mrb[0].mxu0
        %v3229 = vadd.f32 0.0, %v3228
        %v3230 = vpop.f32.mrb[0].mxu0
        %v3231 = vpop.f32.mrb[0].mxu0
        %v3232 = vadd.f32 0.0, %v3231
        %v3233 = vpop.f32.mrb[0].mxu0
        %3234 = vmatprep.mubr.bf16.mxu0 0
        %3235 = vmatmul.mubr.bf16.gmra.mrb[0].mxu0 %v3016
        %v3236 = vpop.f32.mrb[0].mxu0
        %v3237 = vadd.f32 0.0, %v3236
        %v3238 = vpop.f32.mrb[0].mxu0
        %v3239 = vpop.f32.mrb[0].mxu0
        %v3240 = vadd.f32 0.0, %v3239
        %v3241 = vpop.f32.mrb[0].mxu0
        %3242 = vdwg.mxu0
        %v3243 = vadd.f32 %v2937, %v3117
        %v3244 = vadd.f32 %v2938, %v3120
        %v3245 = vadd.f32 %v2939, %v3125
        %v3246 = vadd.f32 %v2940, %v3128
        %v3247 = vadd.f32 %v2941, %v3133
        %v3248 = vadd.f32 %v2942, %v3136
        %v3249 = vadd.f32 %v2943, %v3141
        %v3250 = vadd.f32 %v2944, %v3144
        %v3251 = vadd.f32 %v2945, %v3149
        %v3252 = vadd.f32 %v2946, %v3152
        %v3253 = vadd.f32 %v2947, %v3157
        %v3254 = vadd.f32 %v2948, %v3160
        %v3255 = vadd.f32 %v2949, %v3165
        %v3256 = vadd.f32 %v2950, %v3168
        %v3257 = vadd.f32 %v2951, %v3173
        %v3258 = vadd.f32 %v2952, %v3176
        %v3259 = vadd.f32 %v2953, %v3181
        %v3260 = vadd.f32 %v2954, %v3184
        %v3261 = vadd.f32 %v2955, %v3189
        %v3262 = vadd.f32 %v2956, %v3192
        %v3263 = vadd.f32 %v2957, %v3197
        %v3264 = vadd.f32 %v2958, %v3200
        %v3265 = vadd.f32 %v2959, %v3205
        %v3266 = vadd.f32 %v2960, %v3208
        %v3267 = vadd.f32 %v2961, %v3213
        %v3268 = vadd.f32 %v2962, %v3216
        %v3269 = vadd.f32 %v2963, %v3221
        %v3270 = vadd.f32 %v2964, %v3224
        %v3271 = vadd.f32 %v2965, %v3229
        %v3272 = vadd.f32 %v2966, %v3232
        %v3273 = vadd.f32 %v2967, %v3237
        %v3274 = vadd.f32 %v2968, %v3240
        %v3275 = vld [vmem:[#allocation2 + $0x12] sm:$0xff]
        %v3276 = vld [vmem:[#allocation2 + $0x1a] sm:$0xff]
        %v3277 = vld [vmem:[#allocation2 + $0x22] sm:$0xff]
        %v3278 = vld [vmem:[#allocation2 + $0x2a] sm:$0xff]
        %v3279 = vld [vmem:[#allocation2 + $0x32] sm:$0xff]
        %v3280 = vld [vmem:[#allocation2 + $0x3a] sm:$0xff]
        %v3281 = vld [vmem:[#allocation2 + $0x42] sm:$0xff]
        %v3282 = vld [vmem:[#allocation2 + $0x4a] sm:$0xff]
        %v3283 = vld [vmem:[#allocation2 + $0x52] sm:$0xff]
        %v3284 = vld [vmem:[#allocation2 + $0x5a] sm:$0xff]
        %v3285 = vld [vmem:[#allocation2 + $0x62] sm:$0xff]
        %v3286 = vld [vmem:[#allocation2 + $0x6a] sm:$0xff]
        %v3287 = vld [vmem:[#allocation2 + $0x72] sm:$0xff]
        %v3288 = vld [vmem:[#allocation2 + $0x7a] sm:$0xff]
        %v3289 = vld [vmem:[#allocation2 + $0x82] sm:$0xff]
        %v3290 = vld [vmem:[#allocation2 + $0x8a] sm:$0xff]
        %v3291 = vld [vmem:[#allocation2 + $0x92] sm:$0xff]
        %v3292 = vld [vmem:[#allocation2 + $0x9a] sm:$0xff]
        %v3293 = vld [vmem:[#allocation2 + $0xa2] sm:$0xff]
        %v3294 = vld [vmem:[#allocation2 + $0xaa] sm:$0xff]
        %v3295 = vld [vmem:[#allocation2 + $0xb2] sm:$0xff]
        %v3296 = vld [vmem:[#allocation2 + $0xba] sm:$0xff]
        %v3297 = vld [vmem:[#allocation2 + $0xc2] sm:$0xff]
        %v3298 = vld [vmem:[#allocation2 + $0xca] sm:$0xff]
        %v3299 = vld [vmem:[#allocation2 + $0xd2] sm:$0xff]
        %v3300 = vld [vmem:[#allocation2 + $0xda] sm:$0xff]
        %v3301 = vld [vmem:[#allocation2 + $0xe2] sm:$0xff]
        %v3302 = vld [vmem:[#allocation2 + $0xea] sm:$0xff]
        %v3303 = vld [vmem:[#allocation2 + $0xf2] sm:$0xff]
        %v3304 = vld [vmem:[#allocation2 + $0xfa] sm:$0xff]
        %v3305 = vld [vmem:[#allocation2 + $0x102] sm:$0xff]
        %v3306 = vld [vmem:[#allocation2 + $0x10a] sm:$0xff]
        %v3307 = vsel %vm1330, 1, 0
        %v3308 = vsel %vm1331, 1, 0
        %v3309 = vsel %vm1332, 1, 0
        %v3310 = vsel %vm1333, 1, 0
        %v3311 = vsel %vm1334, 1, 0
        %v3312 = vsel %vm1335, 1, 0
        %v3313 = vsel %vm1336, 1, 0
        %v3314 = vsel %vm1337, 1, 0
        %v3315 = vsel %vm1338, 1, 0
        %v3316 = vsel %vm1339, 1, 0
        %v3317 = vsel %vm1340, 1, 0
        %v3318 = vsel %vm1341, 1, 0
        %v3319 = vsel %vm1342, 1, 0
        %v3320 = vsel %vm1343, 1, 0
        %v3321 = vsel %vm1344, 1, 0
        %v3322 = vsel %vm1345, 1, 0
        %v3323 = vsel %vm1346, 1, 0
        %v3324 = vsel %vm1347, 1, 0
        %v3325 = vsel %vm1348, 1, 0
        %v3326 = vsel %vm1349, 1, 0
        %v3327 = vsel %vm1350, 1, 0
        %v3328 = vsel %vm1351, 1, 0
        %v3329 = vsel %vm1352, 1, 0
        %v3330 = vsel %vm1353, 1, 0
        %v3331 = vsel %vm1354, 1, 0
        %v3332 = vsel %vm1355, 1, 0
        %v3333 = vsel %vm1356, 1, 0
        %v3334 = vsel %vm1357, 1, 0
        %v3335 = vsel %vm1358, 1, 0
        %v3336 = vsel %vm1359, 1, 0
        %v3337 = vsel %vm1360, 1, 0
        %v3338 = vsel %vm1361, 1, 0
        %vm3339 = vcmp.eq.s32.totalorder %v3307, 1
        %vm3340 = vcmp.eq.s32.totalorder %v3308, 1
        %vm3341 = vcmp.eq.s32.totalorder %v3309, 1
        %vm3342 = vcmp.eq.s32.totalorder %v3310, 1
        %vm3343 = vcmp.eq.s32.totalorder %v3311, 1
        %vm3344 = vcmp.eq.s32.totalorder %v3312, 1
        %vm3345 = vcmp.eq.s32.totalorder %v3313, 1
        %vm3346 = vcmp.eq.s32.totalorder %v3314, 1
        %vm3347 = vcmp.eq.s32.totalorder %v3315, 1
        %vm3348 = vcmp.eq.s32.totalorder %v3316, 1
        %vm3349 = vcmp.eq.s32.totalorder %v3317, 1
        %vm3350 = vcmp.eq.s32.totalorder %v3318, 1
        %vm3351 = vcmp.eq.s32.totalorder %v3319, 1
        %vm3352 = vcmp.eq.s32.totalorder %v3320, 1
        %vm3353 = vcmp.eq.s32.totalorder %v3321, 1
        %vm3354 = vcmp.eq.s32.totalorder %v3322, 1
        %vm3355 = vcmp.eq.s32.totalorder %v3323, 1
        %vm3356 = vcmp.eq.s32.totalorder %v3324, 1
        %vm3357 = vcmp.eq.s32.totalorder %v3325, 1
        %vm3358 = vcmp.eq.s32.totalorder %v3326, 1
        %vm3359 = vcmp.eq.s32.totalorder %v3327, 1
        %vm3360 = vcmp.eq.s32.totalorder %v3328, 1
        %vm3361 = vcmp.eq.s32.totalorder %v3329, 1
        %vm3362 = vcmp.eq.s32.totalorder %v3330, 1
        %vm3363 = vcmp.eq.s32.totalorder %v3331, 1
        %vm3364 = vcmp.eq.s32.totalorder %v3332, 1
        %vm3365 = vcmp.eq.s32.totalorder %v3333, 1
        %vm3366 = vcmp.eq.s32.totalorder %v3334, 1
        %vm3367 = vcmp.eq.s32.totalorder %v3335, 1
        %vm3368 = vcmp.eq.s32.totalorder %v3336, 1
        %vm3369 = vcmp.eq.s32.totalorder %v3337, 1
        %vm3370 = vcmp.eq.s32.totalorder %v3338, 1
        %v3371 = vsel %vm3339, %v3275, 0.0
        %v3372 = vsel %vm3340, %v3276, 0.0
        %v3373 = vsel %vm3341, %v3277, 0.0
        %v3374 = vsel %vm3342, %v3278, 0.0
        %v3375 = vsel %vm3343, %v3279, 0.0
        %v3376 = vsel %vm3344, %v3280, 0.0
        %v3377 = vsel %vm3345, %v3281, 0.0
        %v3378 = vsel %vm3346, %v3282, 0.0
        %v3379 = vsel %vm3347, %v3283, 0.0
        %v3380 = vsel %vm3348, %v3284, 0.0
        %v3381 = vsel %vm3349, %v3285, 0.0
        %v3382 = vsel %vm3350, %v3286, 0.0
        %v3383 = vsel %vm3351, %v3287, 0.0
        %v3384 = vsel %vm3352, %v3288, 0.0
        %v3385 = vsel %vm3353, %v3289, 0.0
        %v3386 = vsel %vm3354, %v3290, 0.0
        %v3387 = vsel %vm3355, %v3291, 0.0
        %v3388 = vsel %vm3356, %v3292, 0.0
        %v3389 = vsel %vm3357, %v3293, 0.0
        %v3390 = vsel %vm3358, %v3294, 0.0
        %v3391 = vsel %vm3359, %v3295, 0.0
        %v3392 = vsel %vm3360, %v3296, 0.0
        %v3393 = vsel %vm3361, %v3297, 0.0
        %v3394 = vsel %vm3362, %v3298, 0.0
        %v3395 = vsel %vm3363, %v3299, 0.0
        %v3396 = vsel %vm3364, %v3300, 0.0
        %v3397 = vsel %vm3365, %v3301, 0.0
        %v3398 = vsel %vm3366, %v3302, 0.0
        %v3399 = vsel %vm3367, %v3303, 0.0
        %v3400 = vsel %vm3368, %v3304, 0.0
        %v3401 = vsel %vm3369, %v3305, 0.0
        %v3402 = vsel %vm3370, %v3306, 0.0
        %v3403 = vpack.c.bf16 %v3372, %v3371
        %v3404 = vpack.c.bf16 %v3374, %v3373
        %v3405 = vpack.c.bf16 %v3376, %v3375
        %v3406 = vpack.c.bf16 %v3378, %v3377
        %v3407 = vpack.c.bf16 %v3380, %v3379
        %v3408 = vpack.c.bf16 %v3382, %v3381
        %v3409 = vpack.c.bf16 %v3384, %v3383
        %v3410 = vpack.c.bf16 %v3386, %v3385
        %v3411 = vpack.c.bf16 %v3388, %v3387
        %v3412 = vpack.c.bf16 %v3390, %v3389
        %v3413 = vpack.c.bf16 %v3392, %v3391
        %v3414 = vpack.c.bf16 %v3394, %v3393
        %v3415 = vpack.c.bf16 %v3396, %v3395
        %v3416 = vpack.c.bf16 %v3398, %v3397
        %v3417 = vpack.c.bf16 %v3400, %v3399
        %v3418 = vpack.c.bf16 %v3402, %v3401
        %s3419 = scalar_lea.vmem %s3, 320
        %v3420 = vld [vmem:[%s3419] sm:$0xf]
        %v3421 = vld [vmem:[%s3419 + $0x4] sm:$0xf]
        %v3422 = vld [vmem:[%s3419 + $0x8] sm:$0xf]
        %v3423 = vld [vmem:[%s3419 + $0xc] sm:$0xf]
        %v3424 = vld [vmem:[%s3419 + $0x10] sm:$0xf]
        %v3425 = vld [vmem:[%s3419 + $0x14] sm:$0xf]
        %v3426 = vld [vmem:[%s3419 + $0x18] sm:$0xf]
        %v3427 = vld [vmem:[%s3419 + $0x1c] sm:$0xf]
        %v3428 = vld [vmem:[%s3419 + $0x20] sm:$0xf]
        %v3429 = vld [vmem:[%s3419 + $0x24] sm:$0xf]
        %v3430 = vld [vmem:[%s3419 + $0x28] sm:$0xf]
        %v3431 = vld [vmem:[%s3419 + $0x2c] sm:$0xf]
        %v3432 = vld [vmem:[%s3419 + $0x30] sm:$0xf]
        %v3433 = vld [vmem:[%s3419 + $0x34] sm:$0xf]
        %v3434 = vld [vmem:[%s3419 + $0x38] sm:$0xf]
        %v3435 = vld [vmem:[%s3419 + $0x3c] sm:$0xf]
        %v3452 = vunpack.c.l.b16 %v3420
        %v3453 = vunpack.c.l.b16 %v3421
        %v3454 = vunpack.c.l.b16 %v3422
        %v3455 = vunpack.c.l.b16 %v3423
        %v3456 = vunpack.c.l.b16 %v3424
        %v3457 = vunpack.c.l.b16 %v3425
        %v3458 = vunpack.c.l.b16 %v3426
        %v3459 = vunpack.c.l.b16 %v3427
        %v3460 = vunpack.c.l.b16 %v3428
        %v3461 = vunpack.c.l.b16 %v3429
        %v3462 = vunpack.c.l.b16 %v3430
        %v3463 = vunpack.c.l.b16 %v3431
        %v3464 = vunpack.c.l.b16 %v3432
        %v3465 = vunpack.c.l.b16 %v3433
        %v3466 = vunpack.c.l.b16 %v3434
        %v3467 = vunpack.c.l.b16 %v3435
        %v3468 = vpack.c.b16 %v3453, %v3452
        %v3469 = vpack.c.b16 %v3455, %v3454
        %v3470 = vpack.c.b16 %v3457, %v3456
        %v3471 = vpack.c.b16 %v3459, %v3458
        %v3472 = vpack.c.b16 %v3461, %v3460
        %v3473 = vpack.c.b16 %v3463, %v3462
        %v3474 = vpack.c.b16 %v3465, %v3464
        %v3475 = vpack.c.b16 %v3467, %v3466
        %3484 = vmatprep.subr.bf16.mxu0 0
        %3485 = vmatpush1.bf16.msra.mxu0 %v3468
        %3486 = vmatprep.subr.bf16.mxu0 0
        %3487 = vmatpush1.bf16.msra.mxu0 %v3469
        %3488 = vmatprep.subr.bf16.mxu0 0
        %3489 = vmatpush1.bf16.msra.mxu0 %v3470
        %3490 = vmatprep.subr.bf16.mxu0 0
        %3491 = vmatpush1.bf16.msra.mxu0 %v3471
        %3492 = vmatprep.subr.bf16.mxu0 0
        %3493 = vmatpush1.bf16.msra.mxu0 %v3472
        %3494 = vmatprep.subr.bf16.mxu0 0
        %3495 = vmatpush1.bf16.msra.mxu0 %v3473
        %3496 = vmatprep.subr.bf16.mxu0 0
        %3497 = vmatpush1.bf16.msra.mxu0 %v3474
        %3498 = vmatprep.subr.bf16.mxu0 0
        %3499 = vmatpush1.bf16.msra.mxu0 %v3475
        %3500 = vmatprep.subr.bf16.mxu0 0
        %3501 = vmatpush1.bf16.msra.mxu0 0
        %3502 = vmatprep.subr.bf16.mxu0 0
        %3503 = vmatpush1.bf16.msra.mxu0 0
        %3504 = vmatprep.subr.bf16.mxu0 0
        %3505 = vmatpush1.bf16.msra.mxu0 0
        %3506 = vmatprep.subr.bf16.mxu0 0
        %3507 = vmatpush1.bf16.msra.mxu0 0
        %3508 = vmatprep.subr.bf16.mxu0 0
        %3509 = vmatpush1.bf16.msra.mxu0 0
        %3510 = vmatprep.subr.bf16.mxu0 0
        %3511 = vmatpush1.bf16.msra.mxu0 0
        %3512 = vmatprep.subr.bf16.mxu0 0
        %3513 = vmatpush1.bf16.msra.mxu0 0
        %3514 = vmatprep.subr.bf16.mxu0 0
        %3515 = vmatpush1.bf16.msra.mxu0 0
        %3516 = vmatprep.mubr.bf16.mxu0 0
        %3517 = vmatmul.mubr.bf16.gmra.mrb[0].mxu0 %v3403
        %v3518 = vpop.f32.mrb[0].mxu0
        %v3519 = vadd.f32 0.0, %v3518
        %v3520 = vpop.f32.mrb[0].mxu0
        %v3521 = vpop.f32.mrb[0].mxu0
        %v3522 = vadd.f32 0.0, %v3521
        %v3523 = vpop.f32.mrb[0].mxu0
        %3524 = vmatprep.mubr.bf16.mxu0 0
        %3525 = vmatmul.mubr.bf16.gmra.mrb[0].mxu0 %v3404
        %v3526 = vpop.f32.mrb[0].mxu0
        %v3527 = vadd.f32 0.0, %v3526
        %v3528 = vpop.f32.mrb[0].mxu0
        %v3529 = vpop.f32.mrb[0].mxu0
        %v3530 = vadd.f32 0.0, %v3529
        %v3531 = vpop.f32.mrb[0].mxu0
        %3532 = vmatprep.mubr.bf16.mxu0 0
        %3533 = vmatmul.mubr.bf16.gmra.mrb[0].mxu0 %v3405
        %v3534 = vpop.f32.mrb[0].mxu0
        %v3535 = vadd.f32 0.0, %v3534
        %v3536 = vpop.f32.mrb[0].mxu0
        %v3537 = vpop.f32.mrb[0].mxu0
        %v3538 = vadd.f32 0.0, %v3537
        %v3539 = vpop.f32.mrb[0].mxu0
        %3540 = vmatprep.mubr.bf16.mxu0 0
        %3541 = vmatmul.mubr.bf16.gmra.mrb[0].mxu0 %v3406
        %v3542 = vpop.f32.mrb[0].mxu0
        %v3543 = vadd.f32 0.0, %v3542
        %v3544 = vpop.f32.mrb[0].mxu0
        %v3545 = vpop.f32.mrb[0].mxu0
        %v3546 = vadd.f32 0.0, %v3545
        %v3547 = vpop.f32.mrb[0].mxu0
        %3548 = vmatprep.mubr.bf16.mxu0 0
        %3549 = vmatmul.mubr.bf16.gmra.mrb[0].mxu0 %v3407
        %v3550 = vpop.f32.mrb[0].mxu0
        %v3551 = vadd.f32 0.0, %v3550
        %v3552 = vpop.f32.mrb[0].mxu0
        %v3553 = vpop.f32.mrb[0].mxu0
        %v3554 = vadd.f32 0.0, %v3553
        %v3555 = vpop.f32.mrb[0].mxu0
        %3556 = vmatprep.mubr.bf16.mxu0 0
        %3557 = vmatmul.mubr.bf16.gmra.mrb[0].mxu0 %v3408
        %v3558 = vpop.f32.mrb[0].mxu0
        %v3559 = vadd.f32 0.0, %v3558
        %v3560 = vpop.f32.mrb[0].mxu0
        %v3561 = vpop.f32.mrb[0].mxu0
        %v3562 = vadd.f32 0.0, %v3561
        %v3563 = vpop.f32.mrb[0].mxu0
        %3564 = vmatprep.mubr.bf16.mxu0 0
        %3565 = vmatmul.mubr.bf16.gmra.mrb[0].mxu0 %v3409
        %v3566 = vpop.f32.mrb[0].mxu0
        %v3567 = vadd.f32 0.0, %v3566
        %v3568 = vpop.f32.mrb[0].mxu0
        %v3569 = vpop.f32.mrb[0].mxu0
        %v3570 = vadd.f32 0.0, %v3569
        %v3571 = vpop.f32.mrb[0].mxu0
        %3572 = vmatprep.mubr.bf16.mxu0 0
        %3573 = vmatmul.mubr.bf16.gmra.mrb[0].mxu0 %v3410
        %v3574 = vpop.f32.mrb[0].mxu0
        %v3575 = vadd.f32 0.0, %v3574
        %v3576 = vpop.f32.mrb[0].mxu0
        %v3577 = vpop.f32.mrb[0].mxu0
        %v3578 = vadd.f32 0.0, %v3577
        %v3579 = vpop.f32.mrb[0].mxu0
        %3580 = vmatprep.mubr.bf16.mxu0 0
        %3581 = vmatmul.mubr.bf16.gmra.mrb[0].mxu0 %v3411
        %v3582 = vpop.f32.mrb[0].mxu0
        %v3583 = vadd.f32 0.0, %v3582
        %v3584 = vpop.f32.mrb[0].mxu0
        %v3585 = vpop.f32.mrb[0].mxu0
        %v3586 = vadd.f32 0.0, %v3585
        %v3587 = vpop.f32.mrb[0].mxu0
        %3588 = vmatprep.mubr.bf16.mxu0 0
        %3589 = vmatmul.mubr.bf16.gmra.mrb[0].mxu0 %v3412
        %v3590 = vpop.f32.mrb[0].mxu0
        %v3591 = vadd.f32 0.0, %v3590
        %v3592 = vpop.f32.mrb[0].mxu0
        %v3593 = vpop.f32.mrb[0].mxu0
        %v3594 = vadd.f32 0.0, %v3593
        %v3595 = vpop.f32.mrb[0].mxu0
        %3596 = vmatprep.mubr.bf16.mxu0 0
        %3597 = vmatmul.mubr.bf16.gmra.mrb[0].mxu0 %v3413
        %v3598 = vpop.f32.mrb[0].mxu0
        %v3599 = vadd.f32 0.0, %v3598
        %v3600 = vpop.f32.mrb[0].mxu0
        %v3601 = vpop.f32.mrb[0].mxu0
        %v3602 = vadd.f32 0.0, %v3601
        %v3603 = vpop.f32.mrb[0].mxu0
        %3604 = vmatprep.mubr.bf16.mxu0 0
        %3605 = vmatmul.mubr.bf16.gmra.mrb[0].mxu0 %v3414
        %v3606 = vpop.f32.mrb[0].mxu0
        %v3607 = vadd.f32 0.0, %v3606
        %v3608 = vpop.f32.mrb[0].mxu0
        %v3609 = vpop.f32.mrb[0].mxu0
        %v3610 = vadd.f32 0.0, %v3609
        %v3611 = vpop.f32.mrb[0].mxu0
        %3612 = vmatprep.mubr.bf16.mxu0 0
        %3613 = vmatmul.mubr.bf16.gmra.mrb[0].mxu0 %v3415
        %v3614 = vpop.f32.mrb[0].mxu0
        %v3615 = vadd.f32 0.0, %v3614
        %v3616 = vpop.f32.mrb[0].mxu0
        %v3617 = vpop.f32.mrb[0].mxu0
        %v3618 = vadd.f32 0.0, %v3617
        %v3619 = vpop.f32.mrb[0].mxu0
        %3620 = vmatprep.mubr.bf16.mxu0 0
        %3621 = vmatmul.mubr.bf16.gmra.mrb[0].mxu0 %v3416
        %v3622 = vpop.f32.mrb[0].mxu0
        %v3623 = vadd.f32 0.0, %v3622
        %v3624 = vpop.f32.mrb[0].mxu0
        %v3625 = vpop.f32.mrb[0].mxu0
        %v3626 = vadd.f32 0.0, %v3625
        %v3627 = vpop.f32.mrb[0].mxu0
        %3628 = vmatprep.mubr.bf16.mxu0 0
        %3629 = vmatmul.mubr.bf16.gmra.mrb[0].mxu0 %v3417
        %v3630 = vpop.f32.mrb[0].mxu0
        %v3631 = vadd.f32 0.0, %v3630
        %v3632 = vpop.f32.mrb[0].mxu0
        %v3633 = vpop.f32.mrb[0].mxu0
        %v3634 = vadd.f32 0.0, %v3633
        %v3635 = vpop.f32.mrb[0].mxu0
        %3636 = vmatprep.mubr.bf16.mxu0 0
        %3637 = vmatmul.mubr.bf16.gmra.mrb[0].mxu0 %v3418
        %v3638 = vpop.f32.mrb[0].mxu0
        %v3639 = vadd.f32 0.0, %v3638
        %v3640 = vpop.f32.mrb[0].mxu0
        %v3641 = vpop.f32.mrb[0].mxu0
        %v3642 = vadd.f32 0.0, %v3641
        %v3643 = vpop.f32.mrb[0].mxu0
        %3644 = vdwg.mxu0
        %v3645 = vadd.f32 %v3243, %v3519
        %v3646 = vadd.f32 %v3244, %v3522
        %v3647 = vadd.f32 %v3245, %v3527
        %v3648 = vadd.f32 %v3246, %v3530
        %v3649 = vadd.f32 %v3247, %v3535
        %v3650 = vadd.f32 %v3248, %v3538
        %v3651 = vadd.f32 %v3249, %v3543
        %v3652 = vadd.f32 %v3250, %v3546
        %v3653 = vadd.f32 %v3251, %v3551
        %v3654 = vadd.f32 %v3252, %v3554
        %v3655 = vadd.f32 %v3253, %v3559
        %v3656 = vadd.f32 %v3254, %v3562
        %v3657 = vadd.f32 %v3255, %v3567
        %v3658 = vadd.f32 %v3256, %v3570
        %v3659 = vadd.f32 %v3257, %v3575
        %v3660 = vadd.f32 %v3258, %v3578
        %v3661 = vadd.f32 %v3259, %v3583
        %v3662 = vadd.f32 %v3260, %v3586
        %v3663 = vadd.f32 %v3261, %v3591
        %v3664 = vadd.f32 %v3262, %v3594
        %v3665 = vadd.f32 %v3263, %v3599
        %v3666 = vadd.f32 %v3264, %v3602
        %v3667 = vadd.f32 %v3265, %v3607
        %v3668 = vadd.f32 %v3266, %v3610
        %v3669 = vadd.f32 %v3267, %v3615
        %v3670 = vadd.f32 %v3268, %v3618
        %v3671 = vadd.f32 %v3269, %v3623
        %v3672 = vadd.f32 %v3270, %v3626
        %v3673 = vadd.f32 %v3271, %v3631
        %v3674 = vadd.f32 %v3272, %v3634
        %v3675 = vadd.f32 %v3273, %v3639
        %v3676 = vadd.f32 %v3274, %v3642
        %v3677 = vld [vmem:[#allocation2 + $0x20] sm:$0xff]
        %v3678 = vld [vmem:[#allocation2 + $0x28] sm:$0xff]
        %v3679 = vld [vmem:[#allocation2 + $0x30] sm:$0xff]
        %v3680 = vld [vmem:[#allocation2 + $0x38] sm:$0xff]
        %v3681 = vld [vmem:[#allocation2 + $0x40] sm:$0xff]
        %v3682 = vld [vmem:[#allocation2 + $0x48] sm:$0xff]
        %v3683 = vld [vmem:[#allocation2 + $0x50] sm:$0xff]
        %v3684 = vld [vmem:[#allocation2 + $0x58] sm:$0xff]
        %v3685 = vld [vmem:[#allocation2 + $0x60] sm:$0xff]
        %v3686 = vld [vmem:[#allocation2 + $0x68] sm:$0xff]
        %v3687 = vld [vmem:[#allocation2 + $0x70] sm:$0xff]
        %v3688 = vld [vmem:[#allocation2 + $0x78] sm:$0xff]
        %v3689 = vld [vmem:[#allocation2 + $0x80] sm:$0xff]
        %v3690 = vld [vmem:[#allocation2 + $0x88] sm:$0xff]
        %v3691 = vld [vmem:[#allocation2 + $0x90] sm:$0xff]
        %v3692 = vld [vmem:[#allocation2 + $0x98] sm:$0xff]
        %v3693 = vld [vmem:[#allocation2 + $0xa0] sm:$0xff]
        %v3694 = vld [vmem:[#allocation2 + $0xa8] sm:$0xff]
        %v3695 = vld [vmem:[#allocation2 + $0xb0] sm:$0xff]
        %v3696 = vld [vmem:[#allocation2 + $0xb8] sm:$0xff]
        %v3697 = vld [vmem:[#allocation2 + $0xc0] sm:$0xff]
        %v3698 = vld [vmem:[#allocation2 + $0xc8] sm:$0xff]
        %v3699 = vld [vmem:[#allocation2 + $0xd0] sm:$0xff]
        %v3700 = vld [vmem:[#allocation2 + $0xd8] sm:$0xff]
        %v3701 = vld [vmem:[#allocation2 + $0xe0] sm:$0xff]
        %v3702 = vld [vmem:[#allocation2 + $0xe8] sm:$0xff]
        %v3703 = vld [vmem:[#allocation2 + $0xf0] sm:$0xff]
        %v3704 = vld [vmem:[#allocation2 + $0xf8] sm:$0xff]
        %v3705 = vld [vmem:[#allocation2 + $0x100] sm:$0xff]
        %v3706 = vld [vmem:[#allocation2 + $0x108] sm:$0xff]
        %v3707 = vld [vmem:[#allocation2 + $0x110] sm:$0xff]
        %v3708 = vld [vmem:[#allocation2 + $0x118] sm:$0xff]
        %vm3709 = vmand %vm1266, %vm1298
        %vm3710 = vmand %vm1267, %vm1299
        %vm3711 = vmand %vm1268, %vm1300
        %vm3712 = vmand %vm1269, %vm1301
        %vm3713 = vmand %vm1270, %vm1302
        %vm3714 = vmand %vm1271, %vm1303
        %vm3715 = vmand %vm1272, %vm1304
        %vm3716 = vmand %vm1273, %vm1305
        %vm3717 = vmand %vm1274, %vm1306
        %vm3718 = vmand %vm1275, %vm1307
        %vm3719 = vmand %vm1276, %vm1308
        %vm3720 = vmand %vm1277, %vm1309
        %vm3721 = vmand %vm1278, %vm1310
        %vm3722 = vmand %vm1279, %vm1311
        %vm3723 = vmand %vm1280, %vm1312
        %vm3724 = vmand %vm1281, %vm1313
        %vm3725 = vmand %vm1282, %vm1314
        %vm3726 = vmand %vm1283, %vm1315
        %vm3727 = vmand %vm1284, %vm1316
        %vm3728 = vmand %vm1285, %vm1317
        %vm3729 = vmand %vm1286, %vm1318
        %vm3730 = vmand %vm1287, %vm1319
        %vm3731 = vmand %vm1288, %vm1320
        %vm3732 = vmand %vm1289, %vm1321
        %vm3733 = vmand %vm1290, %vm1322
        %vm3734 = vmand %vm1291, %vm1323
        %vm3735 = vmand %vm1292, %vm1324
        %vm3736 = vmand %vm1293, %vm1325
        %vm3737 = vmand %vm1294, %vm1326
        %vm3738 = vmand %vm1295, %vm1327
        %vm3739 = vmand %vm1296, %vm1328
        %vm3740 = vmand %vm1297, %vm1329
        %v3741 = vsel %vm3709, 1, 0
        %v3742 = vsel %vm3710, 1, 0
        %v3743 = vsel %vm3711, 1, 0
        %v3744 = vsel %vm3712, 1, 0
        %v3745 = vsel %vm3713, 1, 0
        %v3746 = vsel %vm3714, 1, 0
        %v3747 = vsel %vm3715, 1, 0
        %v3748 = vsel %vm3716, 1, 0
        %v3749 = vsel %vm3717, 1, 0
        %v3750 = vsel %vm3718, 1, 0
        %v3751 = vsel %vm3719, 1, 0
        %v3752 = vsel %vm3720, 1, 0
        %v3753 = vsel %vm3721, 1, 0
        %v3754 = vsel %vm3722, 1, 0
        %v3755 = vsel %vm3723, 1, 0
        %v3756 = vsel %vm3724, 1, 0
        %v3757 = vsel %vm3725, 1, 0
        %v3758 = vsel %vm3726, 1, 0
        %v3759 = vsel %vm3727, 1, 0
        %v3760 = vsel %vm3728, 1, 0
        %v3761 = vsel %vm3729, 1, 0
        %v3762 = vsel %vm3730, 1, 0
        %v3763 = vsel %vm3731, 1, 0
        %v3764 = vsel %vm3732, 1, 0
        %v3765 = vsel %vm3733, 1, 0
        %v3766 = vsel %vm3734, 1, 0
        %v3767 = vsel %vm3735, 1, 0
        %v3768 = vsel %vm3736, 1, 0
        %v3769 = vsel %vm3737, 1, 0
        %v3770 = vsel %vm3738, 1, 0
        %v3771 = vsel %vm3739, 1, 0
        %v3772 = vsel %vm3740, 1, 0
        %vm3773 = vcmp.eq.s32.totalorder %v3741, 1
        %vm3774 = vcmp.eq.s32.totalorder %v3742, 1
        %vm3775 = vcmp.eq.s32.totalorder %v3743, 1
        %vm3776 = vcmp.eq.s32.totalorder %v3744, 1
        %vm3777 = vcmp.eq.s32.totalorder %v3745, 1
        %vm3778 = vcmp.eq.s32.totalorder %v3746, 1
        %vm3779 = vcmp.eq.s32.totalorder %v3747, 1
        %vm3780 = vcmp.eq.s32.totalorder %v3748, 1
        %vm3781 = vcmp.eq.s32.totalorder %v3749, 1
        %vm3782 = vcmp.eq.s32.totalorder %v3750, 1
        %vm3783 = vcmp.eq.s32.totalorder %v3751, 1
        %vm3784 = vcmp.eq.s32.totalorder %v3752, 1
        %vm3785 = vcmp.eq.s32.totalorder %v3753, 1
        %vm3786 = vcmp.eq.s32.totalorder %v3754, 1
        %vm3787 = vcmp.eq.s32.totalorder %v3755, 1
        %vm3788 = vcmp.eq.s32.totalorder %v3756, 1
        %vm3789 = vcmp.eq.s32.totalorder %v3757, 1
        %vm3790 = vcmp.eq.s32.totalorder %v3758, 1
        %vm3791 = vcmp.eq.s32.totalorder %v3759, 1
        %vm3792 = vcmp.eq.s32.totalorder %v3760, 1
        %vm3793 = vcmp.eq.s32.totalorder %v3761, 1
        %vm3794 = vcmp.eq.s32.totalorder %v3762, 1
        %vm3795 = vcmp.eq.s32.totalorder %v3763, 1
        %vm3796 = vcmp.eq.s32.totalorder %v3764, 1
        %vm3797 = vcmp.eq.s32.totalorder %v3765, 1
        %vm3798 = vcmp.eq.s32.totalorder %v3766, 1
        %vm3799 = vcmp.eq.s32.totalorder %v3767, 1
        %vm3800 = vcmp.eq.s32.totalorder %v3768, 1
        %vm3801 = vcmp.eq.s32.totalorder %v3769, 1
        %vm3802 = vcmp.eq.s32.totalorder %v3770, 1
        %vm3803 = vcmp.eq.s32.totalorder %v3771, 1
        %vm3804 = vcmp.eq.s32.totalorder %v3772, 1
        %v3805 = vsel %vm3773, %v3677, 0.0
        %v3806 = vsel %vm3774, %v3678, 0.0
        %v3807 = vsel %vm3775, %v3679, 0.0
        %v3808 = vsel %vm3776, %v3680, 0.0
        %v3809 = vsel %vm3777, %v3681, 0.0
        %v3810 = vsel %vm3778, %v3682, 0.0
        %v3811 = vsel %vm3779, %v3683, 0.0
        %v3812 = vsel %vm3780, %v3684, 0.0
        %v3813 = vsel %vm3781, %v3685, 0.0
        %v3814 = vsel %vm3782, %v3686, 0.0
        %v3815 = vsel %vm3783, %v3687, 0.0
        %v3816 = vsel %vm3784, %v3688, 0.0
        %v3817 = vsel %vm3785, %v3689, 0.0
        %v3818 = vsel %vm3786, %v3690, 0.0
        %v3819 = vsel %vm3787, %v3691, 0.0
        %v3820 = vsel %vm3788, %v3692, 0.0
        %v3821 = vsel %vm3789, %v3693, 0.0
        %v3822 = vsel %vm3790, %v3694, 0.0
        %v3823 = vsel %vm3791, %v3695, 0.0
        %v3824 = vsel %vm3792, %v3696, 0.0
        %v3825 = vsel %vm3793, %v3697, 0.0
        %v3826 = vsel %vm3794, %v3698, 0.0
        %v3827 = vsel %vm3795, %v3699, 0.0
        %v3828 = vsel %vm3796, %v3700, 0.0
        %v3829 = vsel %vm3797, %v3701, 0.0
        %v3830 = vsel %vm3798, %v3702, 0.0
        %v3831 = vsel %vm3799, %v3703, 0.0
        %v3832 = vsel %vm3800, %v3704, 0.0
        %v3833 = vsel %vm3801, %v3705, 0.0
        %v3834 = vsel %vm3802, %v3706, 0.0
        %v3835 = vsel %vm3803, %v3707, 0.0
        %v3836 = vsel %vm3804, %v3708, 0.0
        %v3837 = vpack.c.bf16 %v3806, %v3805
        %v3838 = vpack.c.bf16 %v3808, %v3807
        %v3839 = vpack.c.bf16 %v3810, %v3809
        %v3840 = vpack.c.bf16 %v3812, %v3811
        %v3841 = vpack.c.bf16 %v3814, %v3813
        %v3842 = vpack.c.bf16 %v3816, %v3815
        %v3843 = vpack.c.bf16 %v3818, %v3817
        %v3844 = vpack.c.bf16 %v3820, %v3819
        %v3845 = vpack.c.bf16 %v3822, %v3821
        %v3846 = vpack.c.bf16 %v3824, %v3823
        %v3847 = vpack.c.bf16 %v3826, %v3825
        %v3848 = vpack.c.bf16 %v3828, %v3827
        %v3849 = vpack.c.bf16 %v3830, %v3829
        %v3850 = vpack.c.bf16 %v3832, %v3831
        %v3851 = vpack.c.bf16 %v3834, %v3833
        %v3852 = vpack.c.bf16 %v3836, %v3835
        %s3853 = scalar_lea.vmem %s3, 384
        %v3854 = vld [vmem:[%s3853] sm:$0xf]
        %v3855 = vld [vmem:[%s3853 + $0x4] sm:$0xf]
        %v3856 = vld [vmem:[%s3853 + $0x8] sm:$0xf]
        %v3857 = vld [vmem:[%s3853 + $0xc] sm:$0xf]
        %v3858 = vld [vmem:[%s3853 + $0x10] sm:$0xf]
        %v3859 = vld [vmem:[%s3853 + $0x14] sm:$0xf]
        %v3860 = vld [vmem:[%s3853 + $0x18] sm:$0xf]
        %v3861 = vld [vmem:[%s3853 + $0x1c] sm:$0xf]
        %v3862 = vld [vmem:[%s3853 + $0x20] sm:$0xf]
        %v3863 = vld [vmem:[%s3853 + $0x24] sm:$0xf]
        %v3864 = vld [vmem:[%s3853 + $0x28] sm:$0xf]
        %v3865 = vld [vmem:[%s3853 + $0x2c] sm:$0xf]
        %v3866 = vld [vmem:[%s3853 + $0x30] sm:$0xf]
        %v3867 = vld [vmem:[%s3853 + $0x34] sm:$0xf]
        %v3868 = vld [vmem:[%s3853 + $0x38] sm:$0xf]
        %v3869 = vld [vmem:[%s3853 + $0x3c] sm:$0xf]
        %v3886 = vunpack.c.l.b16 %v3854
        %v3887 = vunpack.c.l.b16 %v3855
        %v3888 = vunpack.c.l.b16 %v3856
        %v3889 = vunpack.c.l.b16 %v3857
        %v3890 = vunpack.c.l.b16 %v3858
        %v3891 = vunpack.c.l.b16 %v3859
        %v3892 = vunpack.c.l.b16 %v3860
        %v3893 = vunpack.c.l.b16 %v3861
        %v3894 = vunpack.c.l.b16 %v3862
        %v3895 = vunpack.c.l.b16 %v3863
        %v3896 = vunpack.c.l.b16 %v3864
        %v3897 = vunpack.c.l.b16 %v3865
        %v3898 = vunpack.c.l.b16 %v3866
        %v3899 = vunpack.c.l.b16 %v3867
        %v3900 = vunpack.c.l.b16 %v3868
        %v3901 = vunpack.c.l.b16 %v3869
        %v3902 = vpack.c.b16 %v3887, %v3886
        %v3903 = vpack.c.b16 %v3889, %v3888
        %v3904 = vpack.c.b16 %v3891, %v3890
        %v3905 = vpack.c.b16 %v3893, %v3892
        %v3906 = vpack.c.b16 %v3895, %v3894
        %v3907 = vpack.c.b16 %v3897, %v3896
        %v3908 = vpack.c.b16 %v3899, %v3898
        %v3909 = vpack.c.b16 %v3901, %v3900
        %3918 = vmatprep.subr.bf16.mxu0 0
        %3919 = vmatpush1.bf16.msra.mxu0 %v3902
        %3920 = vmatprep.subr.bf16.mxu0 0
        %3921 = vmatpush1.bf16.msra.mxu0 %v3903
        %3922 = vmatprep.subr.bf16.mxu0 0
        %3923 = vmatpush1.bf16.msra.mxu0 %v3904
        %3924 = vmatprep.subr.bf16.mxu0 0
        %3925 = vmatpush1.bf16.msra.mxu0 %v3905
        %3926 = vmatprep.subr.bf16.mxu0 0
        %3927 = vmatpush1.bf16.msra.mxu0 %v3906
        %3928 = vmatprep.subr.bf16.mxu0 0
        %3929 = vmatpush1.bf16.msra.mxu0 %v3907
        %3930 = vmatprep.subr.bf16.mxu0 0
        %3931 = vmatpush1.bf16.msra.mxu0 %v3908
        %3932 = vmatprep.subr.bf16.mxu0 0
        %3933 = vmatpush1.bf16.msra.mxu0 %v3909
        %3934 = vmatprep.subr.bf16.mxu0 0
        %3935 = vmatpush1.bf16.msra.mxu0 0
        %3936 = vmatprep.subr.bf16.mxu0 0
        %3937 = vmatpush1.bf16.msra.mxu0 0
        %3938 = vmatprep.subr.bf16.mxu0 0
        %3939 = vmatpush1.bf16.msra.mxu0 0
        %3940 = vmatprep.subr.bf16.mxu0 0
        %3941 = vmatpush1.bf16.msra.mxu0 0
        %3942 = vmatprep.subr.bf16.mxu0 0
        %3943 = vmatpush1.bf16.msra.mxu0 0
        %3944 = vmatprep.subr.bf16.mxu0 0
        %3945 = vmatpush1.bf16.msra.mxu0 0
        %3946 = vmatprep.subr.bf16.mxu0 0
        %3947 = vmatpush1.bf16.msra.mxu0 0
        %3948 = vmatprep.subr.bf16.mxu0 0
        %3949 = vmatpush1.bf16.msra.mxu0 0
        %3950 = vmatprep.mubr.bf16.mxu0 0
        %3951 = vmatmul.mubr.bf16.gmra.mrb[0].mxu0 %v3837
        %v3952 = vpop.f32.mrb[0].mxu0
        %v3953 = vadd.f32 0.0, %v3952
        %v3954 = vpop.f32.mrb[0].mxu0
        %v3955 = vpop.f32.mrb[0].mxu0
        %v3956 = vadd.f32 0.0, %v3955
        %v3957 = vpop.f32.mrb[0].mxu0
        %3958 = vmatprep.mubr.bf16.mxu0 0
        %3959 = vmatmul.mubr.bf16.gmra.mrb[0].mxu0 %v3838
        %v3960 = vpop.f32.mrb[0].mxu0
        %v3961 = vadd.f32 0.0, %v3960
        %v3962 = vpop.f32.mrb[0].mxu0
        %v3963 = vpop.f32.mrb[0].mxu0
        %v3964 = vadd.f32 0.0, %v3963
        %v3965 = vpop.f32.mrb[0].mxu0
        %3966 = vmatprep.mubr.bf16.mxu0 0
        %3967 = vmatmul.mubr.bf16.gmra.mrb[0].mxu0 %v3839
        %v3968 = vpop.f32.mrb[0].mxu0
        %v3969 = vadd.f32 0.0, %v3968
        %v3970 = vpop.f32.mrb[0].mxu0
        %v3971 = vpop.f32.mrb[0].mxu0
        %v3972 = vadd.f32 0.0, %v3971
        %v3973 = vpop.f32.mrb[0].mxu0
        %3974 = vmatprep.mubr.bf16.mxu0 0
        %3975 = vmatmul.mubr.bf16.gmra.mrb[0].mxu0 %v3840
        %v3976 = vpop.f32.mrb[0].mxu0
        %v3977 = vadd.f32 0.0, %v3976
        %v3978 = vpop.f32.mrb[0].mxu0
        %v3979 = vpop.f32.mrb[0].mxu0
        %v3980 = vadd.f32 0.0, %v3979
        %v3981 = vpop.f32.mrb[0].mxu0
        %3982 = vmatprep.mubr.bf16.mxu0 0
        %3983 = vmatmul.mubr.bf16.gmra.mrb[0].mxu0 %v3841
        %v3984 = vpop.f32.mrb[0].mxu0
        %v3985 = vadd.f32 0.0, %v3984
        %v3986 = vpop.f32.mrb[0].mxu0
        %v3987 = vpop.f32.mrb[0].mxu0
        %v3988 = vadd.f32 0.0, %v3987
        %v3989 = vpop.f32.mrb[0].mxu0
        %3990 = vmatprep.mubr.bf16.mxu0 0
        %3991 = vmatmul.mubr.bf16.gmra.mrb[0].mxu0 %v3842
        %v3992 = vpop.f32.mrb[0].mxu0
        %v3993 = vadd.f32 0.0, %v3992
        %v3994 = vpop.f32.mrb[0].mxu0
        %v3995 = vpop.f32.mrb[0].mxu0
        %v3996 = vadd.f32 0.0, %v3995
        %v3997 = vpop.f32.mrb[0].mxu0
        %3998 = vmatprep.mubr.bf16.mxu0 0
        %3999 = vmatmul.mubr.bf16.gmra.mrb[0].mxu0 %v3843
        %v4000 = vpop.f32.mrb[0].mxu0
        %v4001 = vadd.f32 0.0, %v4000
        %v4002 = vpop.f32.mrb[0].mxu0
        %v4003 = vpop.f32.mrb[0].mxu0
        %v4004 = vadd.f32 0.0, %v4003
        %v4005 = vpop.f32.mrb[0].mxu0
        %4006 = vmatprep.mubr.bf16.mxu0 0
        %4007 = vmatmul.mubr.bf16.gmra.mrb[0].mxu0 %v3844
        %v4008 = vpop.f32.mrb[0].mxu0
        %v4009 = vadd.f32 0.0, %v4008
        %v4010 = vpop.f32.mrb[0].mxu0
        %v4011 = vpop.f32.mrb[0].mxu0
        %v4012 = vadd.f32 0.0, %v4011
        %v4013 = vpop.f32.mrb[0].mxu0
        %4014 = vmatprep.mubr.bf16.mxu0 0
        %4015 = vmatmul.mubr.bf16.gmra.mrb[0].mxu0 %v3845
        %v4016 = vpop.f32.mrb[0].mxu0
        %v4017 = vadd.f32 0.0, %v4016
        %v4018 = vpop.f32.mrb[0].mxu0
        %v4019 = vpop.f32.mrb[0].mxu0
        %v4020 = vadd.f32 0.0, %v4019
        %v4021 = vpop.f32.mrb[0].mxu0
        %4022 = vmatprep.mubr.bf16.mxu0 0
        %4023 = vmatmul.mubr.bf16.gmra.mrb[0].mxu0 %v3846
        %v4024 = vpop.f32.mrb[0].mxu0
        %v4025 = vadd.f32 0.0, %v4024
        %v4026 = vpop.f32.mrb[0].mxu0
        %v4027 = vpop.f32.mrb[0].mxu0
        %v4028 = vadd.f32 0.0, %v4027
        %v4029 = vpop.f32.mrb[0].mxu0
        %4030 = vmatprep.mubr.bf16.mxu0 0
        %4031 = vmatmul.mubr.bf16.gmra.mrb[0].mxu0 %v3847
        %v4032 = vpop.f32.mrb[0].mxu0
        %v4033 = vadd.f32 0.0, %v4032
        %v4034 = vpop.f32.mrb[0].mxu0
        %v4035 = vpop.f32.mrb[0].mxu0
        %v4036 = vadd.f32 0.0, %v4035
        %v4037 = vpop.f32.mrb[0].mxu0
        %4038 = vmatprep.mubr.bf16.mxu0 0
        %4039 = vmatmul.mubr.bf16.gmra.mrb[0].mxu0 %v3848
        %v4040 = vpop.f32.mrb[0].mxu0
        %v4041 = vadd.f32 0.0, %v4040
        %v4042 = vpop.f32.mrb[0].mxu0
        %v4043 = vpop.f32.mrb[0].mxu0
        %v4044 = vadd.f32 0.0, %v4043
        %v4045 = vpop.f32.mrb[0].mxu0
        %4046 = vmatprep.mubr.bf16.mxu0 0
        %4047 = vmatmul.mubr.bf16.gmra.mrb[0].mxu0 %v3849
        %v4048 = vpop.f32.mrb[0].mxu0
        %v4049 = vadd.f32 0.0, %v4048
        %v4050 = vpop.f32.mrb[0].mxu0
        %v4051 = vpop.f32.mrb[0].mxu0
        %v4052 = vadd.f32 0.0, %v4051
        %v4053 = vpop.f32.mrb[0].mxu0
        %4054 = vmatprep.mubr.bf16.mxu0 0
        %4055 = vmatmul.mubr.bf16.gmra.mrb[0].mxu0 %v3850
        %v4056 = vpop.f32.mrb[0].mxu0
        %v4057 = vadd.f32 0.0, %v4056
        %v4058 = vpop.f32.mrb[0].mxu0
        %v4059 = vpop.f32.mrb[0].mxu0
        %v4060 = vadd.f32 0.0, %v4059
        %v4061 = vpop.f32.mrb[0].mxu0
        %4062 = vmatprep.mubr.bf16.mxu0 0
        %4063 = vmatmul.mubr.bf16.gmra.mrb[0].mxu0 %v3851
        %v4064 = vpop.f32.mrb[0].mxu0
        %v4065 = vadd.f32 0.0, %v4064
        %v4066 = vpop.f32.mrb[0].mxu0
        %v4067 = vpop.f32.mrb[0].mxu0
        %v4068 = vadd.f32 0.0, %v4067
        %v4069 = vpop.f32.mrb[0].mxu0
        %4070 = vmatprep.mubr.bf16.mxu0 0
        %4071 = vmatmul.mubr.bf16.gmra.mrb[0].mxu0 %v3852
        %v4072 = vpop.f32.mrb[0].mxu0
        %v4073 = vadd.f32 0.0, %v4072
        %v4074 = vpop.f32.mrb[0].mxu0
        %v4075 = vpop.f32.mrb[0].mxu0
        %v4076 = vadd.f32 0.0, %v4075
        %v4077 = vpop.f32.mrb[0].mxu0
        %4078 = vdwg.mxu0
        %v4079 = vadd.f32 %v3645, %v3953
        %v4080 = vadd.f32 %v3646, %v3956
        %v4081 = vadd.f32 %v3647, %v3961
        %v4082 = vadd.f32 %v3648, %v3964
        %v4083 = vadd.f32 %v3649, %v3969
        %v4084 = vadd.f32 %v3650, %v3972
        %v4085 = vadd.f32 %v3651, %v3977
        %v4086 = vadd.f32 %v3652, %v3980
        %v4087 = vadd.f32 %v3653, %v3985
        %v4088 = vadd.f32 %v3654, %v3988
        %v4089 = vadd.f32 %v3655, %v3993
        %v4090 = vadd.f32 %v3656, %v3996
        %v4091 = vadd.f32 %v3657, %v4001
        %v4092 = vadd.f32 %v3658, %v4004
        %v4093 = vadd.f32 %v3659, %v4009
        %v4094 = vadd.f32 %v3660, %v4012
        %v4095 = vadd.f32 %v3661, %v4017
        %v4096 = vadd.f32 %v3662, %v4020
        %v4097 = vadd.f32 %v3663, %v4025
        %v4098 = vadd.f32 %v3664, %v4028
        %v4099 = vadd.f32 %v3665, %v4033
        %v4100 = vadd.f32 %v3666, %v4036
        %v4101 = vadd.f32 %v3667, %v4041
        %v4102 = vadd.f32 %v3668, %v4044
        %v4103 = vadd.f32 %v3669, %v4049
        %v4104 = vadd.f32 %v3670, %v4052
        %v4105 = vadd.f32 %v3671, %v4057
        %v4106 = vadd.f32 %v3672, %v4060
        %v4107 = vadd.f32 %v3673, %v4065
        %v4108 = vadd.f32 %v3674, %v4068
        %v4109 = vadd.f32 %v3675, %v4073
        %v4110 = vadd.f32 %v3676, %v4076
        %v4111 = vld [vmem:[#allocation2 + $0x21] sm:$0xff]
        %v4112 = vld [vmem:[#allocation2 + $0x29] sm:$0xff]
        %v4113 = vld [vmem:[#allocation2 + $0x31] sm:$0xff]
        %v4114 = vld [vmem:[#allocation2 + $0x39] sm:$0xff]
        %v4115 = vld [vmem:[#allocation2 + $0x41] sm:$0xff]
        %v4116 = vld [vmem:[#allocation2 + $0x49] sm:$0xff]
        %v4117 = vld [vmem:[#allocation2 + $0x51] sm:$0xff]
        %v4118 = vld [vmem:[#allocation2 + $0x59] sm:$0xff]
        %v4119 = vld [vmem:[#allocation2 + $0x61] sm:$0xff]
        %v4120 = vld [vmem:[#allocation2 + $0x69] sm:$0xff]
        %v4121 = vld [vmem:[#allocation2 + $0x71] sm:$0xff]
        %v4122 = vld [vmem:[#allocation2 + $0x79] sm:$0xff]
        %v4123 = vld [vmem:[#allocation2 + $0x81] sm:$0xff]
        %v4124 = vld [vmem:[#allocation2 + $0x89] sm:$0xff]
        %v4125 = vld [vmem:[#allocation2 + $0x91] sm:$0xff]
        %v4126 = vld [vmem:[#allocation2 + $0x99] sm:$0xff]
        %v4127 = vld [vmem:[#allocation2 + $0xa1] sm:$0xff]
        %v4128 = vld [vmem:[#allocation2 + $0xa9] sm:$0xff]
        %v4129 = vld [vmem:[#allocation2 + $0xb1] sm:$0xff]
        %v4130 = vld [vmem:[#allocation2 + $0xb9] sm:$0xff]
        %v4131 = vld [vmem:[#allocation2 + $0xc1] sm:$0xff]
        %v4132 = vld [vmem:[#allocation2 + $0xc9] sm:$0xff]
        %v4133 = vld [vmem:[#allocation2 + $0xd1] sm:$0xff]
        %v4134 = vld [vmem:[#allocation2 + $0xd9] sm:$0xff]
        %v4135 = vld [vmem:[#allocation2 + $0xe1] sm:$0xff]
        %v4136 = vld [vmem:[#allocation2 + $0xe9] sm:$0xff]
        %v4137 = vld [vmem:[#allocation2 + $0xf1] sm:$0xff]
        %v4138 = vld [vmem:[#allocation2 + $0xf9] sm:$0xff]
        %v4139 = vld [vmem:[#allocation2 + $0x101] sm:$0xff]
        %v4140 = vld [vmem:[#allocation2 + $0x109] sm:$0xff]
        %v4141 = vld [vmem:[#allocation2 + $0x111] sm:$0xff]
        %v4142 = vld [vmem:[#allocation2 + $0x119] sm:$0xff]
        %v4143 = vsel %vm1266, 1, 0
        %v4144 = vsel %vm1267, 1, 0
        %v4145 = vsel %vm1268, 1, 0
        %v4146 = vsel %vm1269, 1, 0
        %v4147 = vsel %vm1270, 1, 0
        %v4148 = vsel %vm1271, 1, 0
        %v4149 = vsel %vm1272, 1, 0
        %v4150 = vsel %vm1273, 1, 0
        %v4151 = vsel %vm1274, 1, 0
        %v4152 = vsel %vm1275, 1, 0
        %v4153 = vsel %vm1276, 1, 0
        %v4154 = vsel %vm1277, 1, 0
        %v4155 = vsel %vm1278, 1, 0
        %v4156 = vsel %vm1279, 1, 0
        %v4157 = vsel %vm1280, 1, 0
        %v4158 = vsel %vm1281, 1, 0
        %v4159 = vsel %vm1282, 1, 0
        %v4160 = vsel %vm1283, 1, 0
        %v4161 = vsel %vm1284, 1, 0
        %v4162 = vsel %vm1285, 1, 0
        %v4163 = vsel %vm1286, 1, 0
        %v4164 = vsel %vm1287, 1, 0
        %v4165 = vsel %vm1288, 1, 0
        %v4166 = vsel %vm1289, 1, 0
        %v4167 = vsel %vm1290, 1, 0
        %v4168 = vsel %vm1291, 1, 0
        %v4169 = vsel %vm1292, 1, 0
        %v4170 = vsel %vm1293, 1, 0
        %v4171 = vsel %vm1294, 1, 0
        %v4172 = vsel %vm1295, 1, 0
        %v4173 = vsel %vm1296, 1, 0
        %v4174 = vsel %vm1297, 1, 0
        %vm4175 = vcmp.eq.s32.totalorder %v4143, 1
        %vm4176 = vcmp.eq.s32.totalorder %v4144, 1
        %vm4177 = vcmp.eq.s32.totalorder %v4145, 1
        %vm4178 = vcmp.eq.s32.totalorder %v4146, 1
        %vm4179 = vcmp.eq.s32.totalorder %v4147, 1
        %vm4180 = vcmp.eq.s32.totalorder %v4148, 1
        %vm4181 = vcmp.eq.s32.totalorder %v4149, 1
        %vm4182 = vcmp.eq.s32.totalorder %v4150, 1
        %vm4183 = vcmp.eq.s32.totalorder %v4151, 1
        %vm4184 = vcmp.eq.s32.totalorder %v4152, 1
        %vm4185 = vcmp.eq.s32.totalorder %v4153, 1
        %vm4186 = vcmp.eq.s32.totalorder %v4154, 1
        %vm4187 = vcmp.eq.s32.totalorder %v4155, 1
        %vm4188 = vcmp.eq.s32.totalorder %v4156, 1
        %vm4189 = vcmp.eq.s32.totalorder %v4157, 1
        %vm4190 = vcmp.eq.s32.totalorder %v4158, 1
        %vm4191 = vcmp.eq.s32.totalorder %v4159, 1
        %vm4192 = vcmp.eq.s32.totalorder %v4160, 1
        %vm4193 = vcmp.eq.s32.totalorder %v4161, 1
        %vm4194 = vcmp.eq.s32.totalorder %v4162, 1
        %vm4195 = vcmp.eq.s32.totalorder %v4163, 1
        %vm4196 = vcmp.eq.s32.totalorder %v4164, 1
        %vm4197 = vcmp.eq.s32.totalorder %v4165, 1
        %vm4198 = vcmp.eq.s32.totalorder %v4166, 1
        %vm4199 = vcmp.eq.s32.totalorder %v4167, 1
        %vm4200 = vcmp.eq.s32.totalorder %v4168, 1
        %vm4201 = vcmp.eq.s32.totalorder %v4169, 1
        %vm4202 = vcmp.eq.s32.totalorder %v4170, 1
        %vm4203 = vcmp.eq.s32.totalorder %v4171, 1
        %vm4204 = vcmp.eq.s32.totalorder %v4172, 1
        %vm4205 = vcmp.eq.s32.totalorder %v4173, 1
        %vm4206 = vcmp.eq.s32.totalorder %v4174, 1
        %v4207 = vsel %vm4175, %v4111, 0.0
        %v4208 = vsel %vm4176, %v4112, 0.0
        %v4209 = vsel %vm4177, %v4113, 0.0
        %v4210 = vsel %vm4178, %v4114, 0.0
        %v4211 = vsel %vm4179, %v4115, 0.0
        %v4212 = vsel %vm4180, %v4116, 0.0
        %v4213 = vsel %vm4181, %v4117, 0.0
        %v4214 = vsel %vm4182, %v4118, 0.0
        %v4215 = vsel %vm4183, %v4119, 0.0
        %v4216 = vsel %vm4184, %v4120, 0.0
        %v4217 = vsel %vm4185, %v4121, 0.0
        %v4218 = vsel %vm4186, %v4122, 0.0
        %v4219 = vsel %vm4187, %v4123, 0.0
        %v4220 = vsel %vm4188, %v4124, 0.0
        %v4221 = vsel %vm4189, %v4125, 0.0
        %v4222 = vsel %vm4190, %v4126, 0.0
        %v4223 = vsel %vm4191, %v4127, 0.0
        %v4224 = vsel %vm4192, %v4128, 0.0
        %v4225 = vsel %vm4193, %v4129, 0.0
        %v4226 = vsel %vm4194, %v4130, 0.0
        %v4227 = vsel %vm4195, %v4131, 0.0
        %v4228 = vsel %vm4196, %v4132, 0.0
        %v4229 = vsel %vm4197, %v4133, 0.0
        %v4230 = vsel %vm4198, %v4134, 0.0
        %v4231 = vsel %vm4199, %v4135, 0.0
        %v4232 = vsel %vm4200, %v4136, 0.0
        %v4233 = vsel %vm4201, %v4137, 0.0
        %v4234 = vsel %vm4202, %v4138, 0.0
        %v4235 = vsel %vm4203, %v4139, 0.0
        %v4236 = vsel %vm4204, %v4140, 0.0
        %v4237 = vsel %vm4205, %v4141, 0.0
        %v4238 = vsel %vm4206, %v4142, 0.0
        %v4239 = vpack.c.bf16 %v4208, %v4207
        %v4240 = vpack.c.bf16 %v4210, %v4209
        %v4241 = vpack.c.bf16 %v4212, %v4211
        %v4242 = vpack.c.bf16 %v4214, %v4213
        %v4243 = vpack.c.bf16 %v4216, %v4215
        %v4244 = vpack.c.bf16 %v4218, %v4217
        %v4245 = vpack.c.bf16 %v4220, %v4219
        %v4246 = vpack.c.bf16 %v4222, %v4221
        %v4247 = vpack.c.bf16 %v4224, %v4223
        %v4248 = vpack.c.bf16 %v4226, %v4225
        %v4249 = vpack.c.bf16 %v4228, %v4227
        %v4250 = vpack.c.bf16 %v4230, %v4229
        %v4251 = vpack.c.bf16 %v4232, %v4231
        %v4252 = vpack.c.bf16 %v4234, %v4233
        %v4253 = vpack.c.bf16 %v4236, %v4235
        %v4254 = vpack.c.bf16 %v4238, %v4237
        %s4255 = scalar_lea.vmem %s3, 448
        %v4256 = vld [vmem:[%s4255] sm:$0xf]
        %v4257 = vld [vmem:[%s4255 + $0x4] sm:$0xf]
        %v4258 = vld [vmem:[%s4255 + $0x8] sm:$0xf]
        %v4259 = vld [vmem:[%s4255 + $0xc] sm:$0xf]
        %v4260 = vld [vmem:[%s4255 + $0x10] sm:$0xf]
        %v4261 = vld [vmem:[%s4255 + $0x14] sm:$0xf]
        %v4262 = vld [vmem:[%s4255 + $0x18] sm:$0xf]
        %v4263 = vld [vmem:[%s4255 + $0x1c] sm:$0xf]
        %v4264 = vld [vmem:[%s4255 + $0x20] sm:$0xf]
        %v4265 = vld [vmem:[%s4255 + $0x24] sm:$0xf]
        %v4266 = vld [vmem:[%s4255 + $0x28] sm:$0xf]
        %v4267 = vld [vmem:[%s4255 + $0x2c] sm:$0xf]
        %v4268 = vld [vmem:[%s4255 + $0x30] sm:$0xf]
        %v4269 = vld [vmem:[%s4255 + $0x34] sm:$0xf]
        %v4270 = vld [vmem:[%s4255 + $0x38] sm:$0xf]
        %v4271 = vld [vmem:[%s4255 + $0x3c] sm:$0xf]
        %v4288 = vunpack.c.l.b16 %v4256
        %v4289 = vunpack.c.l.b16 %v4257
        %v4290 = vunpack.c.l.b16 %v4258
        %v4291 = vunpack.c.l.b16 %v4259
        %v4292 = vunpack.c.l.b16 %v4260
        %v4293 = vunpack.c.l.b16 %v4261
        %v4294 = vunpack.c.l.b16 %v4262
        %v4295 = vunpack.c.l.b16 %v4263
        %v4296 = vunpack.c.l.b16 %v4264
        %v4297 = vunpack.c.l.b16 %v4265
        %v4298 = vunpack.c.l.b16 %v4266
        %v4299 = vunpack.c.l.b16 %v4267
        %v4300 = vunpack.c.l.b16 %v4268
        %v4301 = vunpack.c.l.b16 %v4269
        %v4302 = vunpack.c.l.b16 %v4270
        %v4303 = vunpack.c.l.b16 %v4271
        %v4304 = vpack.c.b16 %v4289, %v4288
        %v4305 = vpack.c.b16 %v4291, %v4290
        %v4306 = vpack.c.b16 %v4293, %v4292
        %v4307 = vpack.c.b16 %v4295, %v4294
        %v4308 = vpack.c.b16 %v4297, %v4296
        %v4309 = vpack.c.b16 %v4299, %v4298
        %v4310 = vpack.c.b16 %v4301, %v4300
        %v4311 = vpack.c.b16 %v4303, %v4302
        %4320 = vmatprep.subr.bf16.mxu0 0
        %4321 = vmatpush1.bf16.msra.mxu0 %v4304
        %4322 = vmatprep.subr.bf16.mxu0 0
        %4323 = vmatpush1.bf16.msra.mxu0 %v4305
        %4324 = vmatprep.subr.bf16.mxu0 0
        %4325 = vmatpush1.bf16.msra.mxu0 %v4306
        %4326 = vmatprep.subr.bf16.mxu0 0
        %4327 = vmatpush1.bf16.msra.mxu0 %v4307
        %4328 = vmatprep.subr.bf16.mxu0 0
        %4329 = vmatpush1.bf16.msra.mxu0 %v4308
        %4330 = vmatprep.subr.bf16.mxu0 0
        %4331 = vmatpush1.bf16.msra.mxu0 %v4309
        %4332 = vmatprep.subr.bf16.mxu0 0
        %4333 = vmatpush1.bf16.msra.mxu0 %v4310
        %4334 = vmatprep.subr.bf16.mxu0 0
        %4335 = vmatpush1.bf16.msra.mxu0 %v4311
        %4336 = vmatprep.subr.bf16.mxu0 0
        %4337 = vmatpush1.bf16.msra.mxu0 0
        %4338 = vmatprep.subr.bf16.mxu0 0
        %4339 = vmatpush1.bf16.msra.mxu0 0
        %4340 = vmatprep.subr.bf16.mxu0 0
        %4341 = vmatpush1.bf16.msra.mxu0 0
        %4342 = vmatprep.subr.bf16.mxu0 0
        %4343 = vmatpush1.bf16.msra.mxu0 0
        %4344 = vmatprep.subr.bf16.mxu0 0
        %4345 = vmatpush1.bf16.msra.mxu0 0
        %4346 = vmatprep.subr.bf16.mxu0 0
        %4347 = vmatpush1.bf16.msra.mxu0 0
        %4348 = vmatprep.subr.bf16.mxu0 0
        %4349 = vmatpush1.bf16.msra.mxu0 0
        %4350 = vmatprep.subr.bf16.mxu0 0
        %4351 = vmatpush1.bf16.msra.mxu0 0
        %4352 = vmatprep.mubr.bf16.mxu0 0
        %4353 = vmatmul.mubr.bf16.gmra.mrb[0].mxu0 %v4239
        %v4354 = vpop.f32.mrb[0].mxu0
        %v4355 = vadd.f32 0.0, %v4354
        %v4356 = vpop.f32.mrb[0].mxu0
        %v4357 = vpop.f32.mrb[0].mxu0
        %v4358 = vadd.f32 0.0, %v4357
        %v4359 = vpop.f32.mrb[0].mxu0
        %4360 = vmatprep.mubr.bf16.mxu0 0
        %4361 = vmatmul.mubr.bf16.gmra.mrb[0].mxu0 %v4240
        %v4362 = vpop.f32.mrb[0].mxu0
        %v4363 = vadd.f32 0.0, %v4362
        %v4364 = vpop.f32.mrb[0].mxu0
        %v4365 = vpop.f32.mrb[0].mxu0
        %v4366 = vadd.f32 0.0, %v4365
        %v4367 = vpop.f32.mrb[0].mxu0
        %4368 = vmatprep.mubr.bf16.mxu0 0
        %4369 = vmatmul.mubr.bf16.gmra.mrb[0].mxu0 %v4241
        %v4370 = vpop.f32.mrb[0].mxu0
        %v4371 = vadd.f32 0.0, %v4370
        %v4372 = vpop.f32.mrb[0].mxu0
        %v4373 = vpop.f32.mrb[0].mxu0
        %v4374 = vadd.f32 0.0, %v4373
        %v4375 = vpop.f32.mrb[0].mxu0
        %4376 = vmatprep.mubr.bf16.mxu0 0
        %4377 = vmatmul.mubr.bf16.gmra.mrb[0].mxu0 %v4242
        %v4378 = vpop.f32.mrb[0].mxu0
        %v4379 = vadd.f32 0.0, %v4378
        %v4380 = vpop.f32.mrb[0].mxu0
        %v4381 = vpop.f32.mrb[0].mxu0
        %v4382 = vadd.f32 0.0, %v4381
        %v4383 = vpop.f32.mrb[0].mxu0
        %4384 = vmatprep.mubr.bf16.mxu0 0
        %4385 = vmatmul.mubr.bf16.gmra.mrb[0].mxu0 %v4243
        %v4386 = vpop.f32.mrb[0].mxu0
        %v4387 = vadd.f32 0.0, %v4386
        %v4388 = vpop.f32.mrb[0].mxu0
        %v4389 = vpop.f32.mrb[0].mxu0
        %v4390 = vadd.f32 0.0, %v4389
        %v4391 = vpop.f32.mrb[0].mxu0
        %4392 = vmatprep.mubr.bf16.mxu0 0
        %4393 = vmatmul.mubr.bf16.gmra.mrb[0].mxu0 %v4244
        %v4394 = vpop.f32.mrb[0].mxu0
        %v4395 = vadd.f32 0.0, %v4394
        %v4396 = vpop.f32.mrb[0].mxu0
        %v4397 = vpop.f32.mrb[0].mxu0
        %v4398 = vadd.f32 0.0, %v4397
        %v4399 = vpop.f32.mrb[0].mxu0
        %4400 = vmatprep.mubr.bf16.mxu0 0
        %4401 = vmatmul.mubr.bf16.gmra.mrb[0].mxu0 %v4245
        %v4402 = vpop.f32.mrb[0].mxu0
        %v4403 = vadd.f32 0.0, %v4402
        %v4404 = vpop.f32.mrb[0].mxu0
        %v4405 = vpop.f32.mrb[0].mxu0
        %v4406 = vadd.f32 0.0, %v4405
        %v4407 = vpop.f32.mrb[0].mxu0
        %4408 = vmatprep.mubr.bf16.mxu0 0
        %4409 = vmatmul.mubr.bf16.gmra.mrb[0].mxu0 %v4246
        %v4410 = vpop.f32.mrb[0].mxu0
        %v4411 = vadd.f32 0.0, %v4410
        %v4412 = vpop.f32.mrb[0].mxu0
        %v4413 = vpop.f32.mrb[0].mxu0
        %v4414 = vadd.f32 0.0, %v4413
        %v4415 = vpop.f32.mrb[0].mxu0
        %4416 = vmatprep.mubr.bf16.mxu0 0
        %4417 = vmatmul.mubr.bf16.gmra.mrb[0].mxu0 %v4247
        %v4418 = vpop.f32.mrb[0].mxu0
        %v4419 = vadd.f32 0.0, %v4418
        %v4420 = vpop.f32.mrb[0].mxu0
        %v4421 = vpop.f32.mrb[0].mxu0
        %v4422 = vadd.f32 0.0, %v4421
        %v4423 = vpop.f32.mrb[0].mxu0
        %4424 = vmatprep.mubr.bf16.mxu0 0
        %4425 = vmatmul.mubr.bf16.gmra.mrb[0].mxu0 %v4248
        %v4426 = vpop.f32.mrb[0].mxu0
        %v4427 = vadd.f32 0.0, %v4426
        %v4428 = vpop.f32.mrb[0].mxu0
        %v4429 = vpop.f32.mrb[0].mxu0
        %v4430 = vadd.f32 0.0, %v4429
        %v4431 = vpop.f32.mrb[0].mxu0
        %4432 = vmatprep.mubr.bf16.mxu0 0
        %4433 = vmatmul.mubr.bf16.gmra.mrb[0].mxu0 %v4249
        %v4434 = vpop.f32.mrb[0].mxu0
        %v4435 = vadd.f32 0.0, %v4434
        %v4436 = vpop.f32.mrb[0].mxu0
        %v4437 = vpop.f32.mrb[0].mxu0
        %v4438 = vadd.f32 0.0, %v4437
        %v4439 = vpop.f32.mrb[0].mxu0
        %4440 = vmatprep.mubr.bf16.mxu0 0
        %4441 = vmatmul.mubr.bf16.gmra.mrb[0].mxu0 %v4250
        %v4442 = vpop.f32.mrb[0].mxu0
        %v4443 = vadd.f32 0.0, %v4442
        %v4444 = vpop.f32.mrb[0].mxu0
        %v4445 = vpop.f32.mrb[0].mxu0
        %v4446 = vadd.f32 0.0, %v4445
        %v4447 = vpop.f32.mrb[0].mxu0
        %4448 = vmatprep.mubr.bf16.mxu0 0
        %4449 = vmatmul.mubr.bf16.gmra.mrb[0].mxu0 %v4251
        %v4450 = vpop.f32.mrb[0].mxu0
        %v4451 = vadd.f32 0.0, %v4450
        %v4452 = vpop.f32.mrb[0].mxu0
        %v4453 = vpop.f32.mrb[0].mxu0
        %v4454 = vadd.f32 0.0, %v4453
        %v4455 = vpop.f32.mrb[0].mxu0
        %4456 = vmatprep.mubr.bf16.mxu0 0
        %4457 = vmatmul.mubr.bf16.gmra.mrb[0].mxu0 %v4252
        %v4458 = vpop.f32.mrb[0].mxu0
        %v4459 = vadd.f32 0.0, %v4458
        %v4460 = vpop.f32.mrb[0].mxu0
        %v4461 = vpop.f32.mrb[0].mxu0
        %v4462 = vadd.f32 0.0, %v4461
        %v4463 = vpop.f32.mrb[0].mxu0
        %4464 = vmatprep.mubr.bf16.mxu0 0
        %4465 = vmatmul.mubr.bf16.gmra.mrb[0].mxu0 %v4253
        %v4466 = vpop.f32.mrb[0].mxu0
        %v4467 = vadd.f32 0.0, %v4466
        %v4468 = vpop.f32.mrb[0].mxu0
        %v4469 = vpop.f32.mrb[0].mxu0
        %v4470 = vadd.f32 0.0, %v4469
        %v4471 = vpop.f32.mrb[0].mxu0
        %4472 = vmatprep.mubr.bf16.mxu0 0
        %4473 = vmatmul.mubr.bf16.gmra.mrb[0].mxu0 %v4254
        %v4474 = vpop.f32.mrb[0].mxu0
        %v4475 = vadd.f32 0.0, %v4474
        %v4476 = vpop.f32.mrb[0].mxu0
        %v4477 = vpop.f32.mrb[0].mxu0
        %v4478 = vadd.f32 0.0, %v4477
        %v4479 = vpop.f32.mrb[0].mxu0
        %4480 = vdwg.mxu0
        %v4481 = vadd.f32 %v4079, %v4355
        %v4482 = vadd.f32 %v4080, %v4358
        %v4483 = vadd.f32 %v4081, %v4363
        %v4484 = vadd.f32 %v4082, %v4366
        %v4485 = vadd.f32 %v4083, %v4371
        %v4486 = vadd.f32 %v4084, %v4374
        %v4487 = vadd.f32 %v4085, %v4379
        %v4488 = vadd.f32 %v4086, %v4382
        %v4489 = vadd.f32 %v4087, %v4387
        %v4490 = vadd.f32 %v4088, %v4390
        %v4491 = vadd.f32 %v4089, %v4395
        %v4492 = vadd.f32 %v4090, %v4398
        %v4493 = vadd.f32 %v4091, %v4403
        %v4494 = vadd.f32 %v4092, %v4406
        %v4495 = vadd.f32 %v4093, %v4411
        %v4496 = vadd.f32 %v4094, %v4414
        %v4497 = vadd.f32 %v4095, %v4419
        %v4498 = vadd.f32 %v4096, %v4422
        %v4499 = vadd.f32 %v4097, %v4427
        %v4500 = vadd.f32 %v4098, %v4430
        %v4501 = vadd.f32 %v4099, %v4435
        %v4502 = vadd.f32 %v4100, %v4438
        %v4503 = vadd.f32 %v4101, %v4443
        %v4504 = vadd.f32 %v4102, %v4446
        %v4505 = vadd.f32 %v4103, %v4451
        %v4506 = vadd.f32 %v4104, %v4454
        %v4507 = vadd.f32 %v4105, %v4459
        %v4508 = vadd.f32 %v4106, %v4462
        %v4509 = vadd.f32 %v4107, %v4467
        %v4510 = vadd.f32 %v4108, %v4470
        %v4511 = vadd.f32 %v4109, %v4475
        %v4512 = vadd.f32 %v4110, %v4478
        %v4513 = vld [vmem:[#allocation2 + $0x22] sm:$0xff]
        %v4514 = vld [vmem:[#allocation2 + $0x2a] sm:$0xff]
        %v4515 = vld [vmem:[#allocation2 + $0x32] sm:$0xff]
        %v4516 = vld [vmem:[#allocation2 + $0x3a] sm:$0xff]
        %v4517 = vld [vmem:[#allocation2 + $0x42] sm:$0xff]
        %v4518 = vld [vmem:[#allocation2 + $0x4a] sm:$0xff]
        %v4519 = vld [vmem:[#allocation2 + $0x52] sm:$0xff]
        %v4520 = vld [vmem:[#allocation2 + $0x5a] sm:$0xff]
        %v4521 = vld [vmem:[#allocation2 + $0x62] sm:$0xff]
        %v4522 = vld [vmem:[#allocation2 + $0x6a] sm:$0xff]
        %v4523 = vld [vmem:[#allocation2 + $0x72] sm:$0xff]
        %v4524 = vld [vmem:[#allocation2 + $0x7a] sm:$0xff]
        %v4525 = vld [vmem:[#allocation2 + $0x82] sm:$0xff]
        %v4526 = vld [vmem:[#allocation2 + $0x8a] sm:$0xff]
        %v4527 = vld [vmem:[#allocation2 + $0x92] sm:$0xff]
        %v4528 = vld [vmem:[#allocation2 + $0x9a] sm:$0xff]
        %v4529 = vld [vmem:[#allocation2 + $0xa2] sm:$0xff]
        %v4530 = vld [vmem:[#allocation2 + $0xaa] sm:$0xff]
        %v4531 = vld [vmem:[#allocation2 + $0xb2] sm:$0xff]
        %v4532 = vld [vmem:[#allocation2 + $0xba] sm:$0xff]
        %v4533 = vld [vmem:[#allocation2 + $0xc2] sm:$0xff]
        %v4534 = vld [vmem:[#allocation2 + $0xca] sm:$0xff]
        %v4535 = vld [vmem:[#allocation2 + $0xd2] sm:$0xff]
        %v4536 = vld [vmem:[#allocation2 + $0xda] sm:$0xff]
        %v4537 = vld [vmem:[#allocation2 + $0xe2] sm:$0xff]
        %v4538 = vld [vmem:[#allocation2 + $0xea] sm:$0xff]
        %v4539 = vld [vmem:[#allocation2 + $0xf2] sm:$0xff]
        %v4540 = vld [vmem:[#allocation2 + $0xfa] sm:$0xff]
        %v4541 = vld [vmem:[#allocation2 + $0x102] sm:$0xff]
        %v4542 = vld [vmem:[#allocation2 + $0x10a] sm:$0xff]
        %v4543 = vld [vmem:[#allocation2 + $0x112] sm:$0xff]
        %v4544 = vld [vmem:[#allocation2 + $0x11a] sm:$0xff]
        %vm4545 = vmand %vm1266, %vm1330
        %vm4546 = vmand %vm1267, %vm1331
        %vm4547 = vmand %vm1268, %vm1332
        %vm4548 = vmand %vm1269, %vm1333
        %vm4549 = vmand %vm1270, %vm1334
        %vm4550 = vmand %vm1271, %vm1335
        %vm4551 = vmand %vm1272, %vm1336
        %vm4552 = vmand %vm1273, %vm1337
        %vm4553 = vmand %vm1274, %vm1338
        %vm4554 = vmand %vm1275, %vm1339
        %vm4555 = vmand %vm1276, %vm1340
        %vm4556 = vmand %vm1277, %vm1341
        %vm4557 = vmand %vm1278, %vm1342
        %vm4558 = vmand %vm1279, %vm1343
        %vm4559 = vmand %vm1280, %vm1344
        %vm4560 = vmand %vm1281, %vm1345
        %vm4561 = vmand %vm1282, %vm1346
        %vm4562 = vmand %vm1283, %vm1347
        %vm4563 = vmand %vm1284, %vm1348
        %vm4564 = vmand %vm1285, %vm1349
        %vm4565 = vmand %vm1286, %vm1350
        %vm4566 = vmand %vm1287, %vm1351
        %vm4567 = vmand %vm1288, %vm1352
        %vm4568 = vmand %vm1289, %vm1353
        %vm4569 = vmand %vm1290, %vm1354
        %vm4570 = vmand %vm1291, %vm1355
        %vm4571 = vmand %vm1292, %vm1356
        %vm4572 = vmand %vm1293, %vm1357
        %vm4573 = vmand %vm1294, %vm1358
        %vm4574 = vmand %vm1295, %vm1359
        %vm4575 = vmand %vm1296, %vm1360
        %vm4576 = vmand %vm1297, %vm1361
        %v4577 = vsel %vm4545, 1, 0
        %v4578 = vsel %vm4546, 1, 0
        %v4579 = vsel %vm4547, 1, 0
        %v4580 = vsel %vm4548, 1, 0
        %v4581 = vsel %vm4549, 1, 0
        %v4582 = vsel %vm4550, 1, 0
        %v4583 = vsel %vm4551, 1, 0
        %v4584 = vsel %vm4552, 1, 0
        %v4585 = vsel %vm4553, 1, 0
        %v4586 = vsel %vm4554, 1, 0
        %v4587 = vsel %vm4555, 1, 0
        %v4588 = vsel %vm4556, 1, 0
        %v4589 = vsel %vm4557, 1, 0
        %v4590 = vsel %vm4558, 1, 0
        %v4591 = vsel %vm4559, 1, 0
        %v4592 = vsel %vm4560, 1, 0
        %v4593 = vsel %vm4561, 1, 0
        %v4594 = vsel %vm4562, 1, 0
        %v4595 = vsel %vm4563, 1, 0
        %v4596 = vsel %vm4564, 1, 0
        %v4597 = vsel %vm4565, 1, 0
        %v4598 = vsel %vm4566, 1, 0
        %v4599 = vsel %vm4567, 1, 0
        %v4600 = vsel %vm4568, 1, 0
        %v4601 = vsel %vm4569, 1, 0
        %v4602 = vsel %vm4570, 1, 0
        %v4603 = vsel %vm4571, 1, 0
        %v4604 = vsel %vm4572, 1, 0
        %v4605 = vsel %vm4573, 1, 0
        %v4606 = vsel %vm4574, 1, 0
        %v4607 = vsel %vm4575, 1, 0
        %v4608 = vsel %vm4576, 1, 0
        %vm4609 = vcmp.eq.s32.totalorder %v4577, 1
        %vm4610 = vcmp.eq.s32.totalorder %v4578, 1
        %vm4611 = vcmp.eq.s32.totalorder %v4579, 1
        %vm4612 = vcmp.eq.s32.totalorder %v4580, 1
        %vm4613 = vcmp.eq.s32.totalorder %v4581, 1
        %vm4614 = vcmp.eq.s32.totalorder %v4582, 1
        %vm4615 = vcmp.eq.s32.totalorder %v4583, 1
        %vm4616 = vcmp.eq.s32.totalorder %v4584, 1
        %vm4617 = vcmp.eq.s32.totalorder %v4585, 1
        %vm4618 = vcmp.eq.s32.totalorder %v4586, 1
        %vm4619 = vcmp.eq.s32.totalorder %v4587, 1
        %vm4620 = vcmp.eq.s32.totalorder %v4588, 1
        %vm4621 = vcmp.eq.s32.totalorder %v4589, 1
        %vm4622 = vcmp.eq.s32.totalorder %v4590, 1
        %vm4623 = vcmp.eq.s32.totalorder %v4591, 1
        %vm4624 = vcmp.eq.s32.totalorder %v4592, 1
        %vm4625 = vcmp.eq.s32.totalorder %v4593, 1
        %vm4626 = vcmp.eq.s32.totalorder %v4594, 1
        %vm4627 = vcmp.eq.s32.totalorder %v4595, 1
        %vm4628 = vcmp.eq.s32.totalorder %v4596, 1
        %vm4629 = vcmp.eq.s32.totalorder %v4597, 1
        %vm4630 = vcmp.eq.s32.totalorder %v4598, 1
        %vm4631 = vcmp.eq.s32.totalorder %v4599, 1
        %vm4632 = vcmp.eq.s32.totalorder %v4600, 1
        %vm4633 = vcmp.eq.s32.totalorder %v4601, 1
        %vm4634 = vcmp.eq.s32.totalorder %v4602, 1
        %vm4635 = vcmp.eq.s32.totalorder %v4603, 1
        %vm4636 = vcmp.eq.s32.totalorder %v4604, 1
        %vm4637 = vcmp.eq.s32.totalorder %v4605, 1
        %vm4638 = vcmp.eq.s32.totalorder %v4606, 1
        %vm4639 = vcmp.eq.s32.totalorder %v4607, 1
        %vm4640 = vcmp.eq.s32.totalorder %v4608, 1
        %v4641 = vsel %vm4609, %v4513, 0.0
        %v4642 = vsel %vm4610, %v4514, 0.0
        %v4643 = vsel %vm4611, %v4515, 0.0
        %v4644 = vsel %vm4612, %v4516, 0.0
        %v4645 = vsel %vm4613, %v4517, 0.0
        %v4646 = vsel %vm4614, %v4518, 0.0
        %v4647 = vsel %vm4615, %v4519, 0.0
        %v4648 = vsel %vm4616, %v4520, 0.0
        %v4649 = vsel %vm4617, %v4521, 0.0
        %v4650 = vsel %vm4618, %v4522, 0.0
        %v4651 = vsel %vm4619, %v4523, 0.0
        %v4652 = vsel %vm4620, %v4524, 0.0
        %v4653 = vsel %vm4621, %v4525, 0.0
        %v4654 = vsel %vm4622, %v4526, 0.0
        %v4655 = vsel %vm4623, %v4527, 0.0
        %v4656 = vsel %vm4624, %v4528, 0.0
        %v4657 = vsel %vm4625, %v4529, 0.0
        %v4658 = vsel %vm4626, %v4530, 0.0
        %v4659 = vsel %vm4627, %v4531, 0.0
        %v4660 = vsel %vm4628, %v4532, 0.0
        %v4661 = vsel %vm4629, %v4533, 0.0
        %v4662 = vsel %vm4630, %v4534, 0.0
        %v4663 = vsel %vm4631, %v4535, 0.0
        %v4664 = vsel %vm4632, %v4536, 0.0
        %v4665 = vsel %vm4633, %v4537, 0.0
        %v4666 = vsel %vm4634, %v4538, 0.0
        %v4667 = vsel %vm4635, %v4539, 0.0
        %v4668 = vsel %vm4636, %v4540, 0.0
        %v4669 = vsel %vm4637, %v4541, 0.0
        %v4670 = vsel %vm4638, %v4542, 0.0
        %v4671 = vsel %vm4639, %v4543, 0.0
        %v4672 = vsel %vm4640, %v4544, 0.0
        %v4673 = vpack.c.bf16 %v4642, %v4641
        %v4674 = vpack.c.bf16 %v4644, %v4643
        %v4675 = vpack.c.bf16 %v4646, %v4645
        %v4676 = vpack.c.bf16 %v4648, %v4647
        %v4677 = vpack.c.bf16 %v4650, %v4649
        %v4678 = vpack.c.bf16 %v4652, %v4651
        %v4679 = vpack.c.bf16 %v4654, %v4653
        %v4680 = vpack.c.bf16 %v4656, %v4655
        %v4681 = vpack.c.bf16 %v4658, %v4657
        %v4682 = vpack.c.bf16 %v4660, %v4659
        %v4683 = vpack.c.bf16 %v4662, %v4661
        %v4684 = vpack.c.bf16 %v4664, %v4663
        %v4685 = vpack.c.bf16 %v4666, %v4665
        %v4686 = vpack.c.bf16 %v4668, %v4667
        %v4687 = vpack.c.bf16 %v4670, %v4669
        %v4688 = vpack.c.bf16 %v4672, %v4671
        %s4689 = scalar_lea.vmem %s3, 512
        %v4690 = vld [vmem:[%s4689] sm:$0xf]
        %v4691 = vld [vmem:[%s4689 + $0x4] sm:$0xf]
        %v4692 = vld [vmem:[%s4689 + $0x8] sm:$0xf]
        %v4693 = vld [vmem:[%s4689 + $0xc] sm:$0xf]
        %v4694 = vld [vmem:[%s4689 + $0x10] sm:$0xf]
        %v4695 = vld [vmem:[%s4689 + $0x14] sm:$0xf]
        %v4696 = vld [vmem:[%s4689 + $0x18] sm:$0xf]
        %v4697 = vld [vmem:[%s4689 + $0x1c] sm:$0xf]
        %v4698 = vld [vmem:[%s4689 + $0x20] sm:$0xf]
        %v4699 = vld [vmem:[%s4689 + $0x24] sm:$0xf]
        %v4700 = vld [vmem:[%s4689 + $0x28] sm:$0xf]
        %v4701 = vld [vmem:[%s4689 + $0x2c] sm:$0xf]
        %v4702 = vld [vmem:[%s4689 + $0x30] sm:$0xf]
        %v4703 = vld [vmem:[%s4689 + $0x34] sm:$0xf]
        %v4704 = vld [vmem:[%s4689 + $0x38] sm:$0xf]
        %v4705 = vld [vmem:[%s4689 + $0x3c] sm:$0xf]
        %v4722 = vunpack.c.l.b16 %v4690
        %v4723 = vunpack.c.l.b16 %v4691
        %v4724 = vunpack.c.l.b16 %v4692
        %v4725 = vunpack.c.l.b16 %v4693
        %v4726 = vunpack.c.l.b16 %v4694
        %v4727 = vunpack.c.l.b16 %v4695
        %v4728 = vunpack.c.l.b16 %v4696
        %v4729 = vunpack.c.l.b16 %v4697
        %v4730 = vunpack.c.l.b16 %v4698
        %v4731 = vunpack.c.l.b16 %v4699
        %v4732 = vunpack.c.l.b16 %v4700
        %v4733 = vunpack.c.l.b16 %v4701
        %v4734 = vunpack.c.l.b16 %v4702
        %v4735 = vunpack.c.l.b16 %v4703
        %v4736 = vunpack.c.l.b16 %v4704
        %v4737 = vunpack.c.l.b16 %v4705
        %v4738 = vpack.c.b16 %v4723, %v4722
        %v4739 = vpack.c.b16 %v4725, %v4724
        %v4740 = vpack.c.b16 %v4727, %v4726
        %v4741 = vpack.c.b16 %v4729, %v4728
        %v4742 = vpack.c.b16 %v4731, %v4730
        %v4743 = vpack.c.b16 %v4733, %v4732
        %v4744 = vpack.c.b16 %v4735, %v4734
        %v4745 = vpack.c.b16 %v4737, %v4736
        %4754 = vmatprep.subr.bf16.mxu0 0
        %4755 = vmatpush1.bf16.msra.mxu0 %v4738
        %4756 = vmatprep.subr.bf16.mxu0 0
        %4757 = vmatpush1.bf16.msra.mxu0 %v4739
        %4758 = vmatprep.subr.bf16.mxu0 0
        %4759 = vmatpush1.bf16.msra.mxu0 %v4740
        %4760 = vmatprep.subr.bf16.mxu0 0
        %4761 = vmatpush1.bf16.msra.mxu0 %v4741
        %4762 = vmatprep.subr.bf16.mxu0 0
        %4763 = vmatpush1.bf16.msra.mxu0 %v4742
        %4764 = vmatprep.subr.bf16.mxu0 0
        %4765 = vmatpush1.bf16.msra.mxu0 %v4743
        %4766 = vmatprep.subr.bf16.mxu0 0
        %4767 = vmatpush1.bf16.msra.mxu0 %v4744
        %4768 = vmatprep.subr.bf16.mxu0 0
        %4769 = vmatpush1.bf16.msra.mxu0 %v4745
        %4770 = vmatprep.subr.bf16.mxu0 0
        %4771 = vmatpush1.bf16.msra.mxu0 0
        %4772 = vmatprep.subr.bf16.mxu0 0
        %4773 = vmatpush1.bf16.msra.mxu0 0
        %4774 = vmatprep.subr.bf16.mxu0 0
        %4775 = vmatpush1.bf16.msra.mxu0 0
        %4776 = vmatprep.subr.bf16.mxu0 0
        %4777 = vmatpush1.bf16.msra.mxu0 0
        %4778 = vmatprep.subr.bf16.mxu0 0
        %4779 = vmatpush1.bf16.msra.mxu0 0
        %4780 = vmatprep.subr.bf16.mxu0 0
        %4781 = vmatpush1.bf16.msra.mxu0 0
        %4782 = vmatprep.subr.bf16.mxu0 0
        %4783 = vmatpush1.bf16.msra.mxu0 0
        %4784 = vmatprep.subr.bf16.mxu0 0
        %4785 = vmatpush1.bf16.msra.mxu0 0
        %4786 = vmatprep.mubr.bf16.mxu0 0
        %4787 = vmatmul.mubr.bf16.gmra.mrb[0].mxu0 %v4673
        %v4788 = vpop.f32.mrb[0].mxu0
        %v4789 = vadd.f32 0.0, %v4788
        %v4790 = vpop.f32.mrb[0].mxu0
        %v4791 = vpop.f32.mrb[0].mxu0
        %v4792 = vadd.f32 0.0, %v4791
        %v4793 = vpop.f32.mrb[0].mxu0
        %4794 = vmatprep.mubr.bf16.mxu0 0
        %4795 = vmatmul.mubr.bf16.gmra.mrb[0].mxu0 %v4674
        %v4796 = vpop.f32.mrb[0].mxu0
        %v4797 = vadd.f32 0.0, %v4796
        %v4798 = vpop.f32.mrb[0].mxu0
        %v4799 = vpop.f32.mrb[0].mxu0
        %v4800 = vadd.f32 0.0, %v4799
        %v4801 = vpop.f32.mrb[0].mxu0
        %4802 = vmatprep.mubr.bf16.mxu0 0
        %4803 = vmatmul.mubr.bf16.gmra.mrb[0].mxu0 %v4675
        %v4804 = vpop.f32.mrb[0].mxu0
        %v4805 = vadd.f32 0.0, %v4804
        %v4806 = vpop.f32.mrb[0].mxu0
        %v4807 = vpop.f32.mrb[0].mxu0
        %v4808 = vadd.f32 0.0, %v4807
        %v4809 = vpop.f32.mrb[0].mxu0
        %4810 = vmatprep.mubr.bf16.mxu0 0
        %4811 = vmatmul.mubr.bf16.gmra.mrb[0].mxu0 %v4676
        %v4812 = vpop.f32.mrb[0].mxu0
        %v4813 = vadd.f32 0.0, %v4812
        %v4814 = vpop.f32.mrb[0].mxu0
        %v4815 = vpop.f32.mrb[0].mxu0
        %v4816 = vadd.f32 0.0, %v4815
        %v4817 = vpop.f32.mrb[0].mxu0
        %4818 = vmatprep.mubr.bf16.mxu0 0
        %4819 = vmatmul.mubr.bf16.gmra.mrb[0].mxu0 %v4677
        %v4820 = vpop.f32.mrb[0].mxu0
        %v4821 = vadd.f32 0.0, %v4820
        %v4822 = vpop.f32.mrb[0].mxu0
        %v4823 = vpop.f32.mrb[0].mxu0
        %v4824 = vadd.f32 0.0, %v4823
        %v4825 = vpop.f32.mrb[0].mxu0
        %4826 = vmatprep.mubr.bf16.mxu0 0
        %4827 = vmatmul.mubr.bf16.gmra.mrb[0].mxu0 %v4678
        %v4828 = vpop.f32.mrb[0].mxu0
        %v4829 = vadd.f32 0.0, %v4828
        %v4830 = vpop.f32.mrb[0].mxu0
        %v4831 = vpop.f32.mrb[0].mxu0
        %v4832 = vadd.f32 0.0, %v4831
        %v4833 = vpop.f32.mrb[0].mxu0
        %4834 = vmatprep.mubr.bf16.mxu0 0
        %4835 = vmatmul.mubr.bf16.gmra.mrb[0].mxu0 %v4679
        %v4836 = vpop.f32.mrb[0].mxu0
        %v4837 = vadd.f32 0.0, %v4836
        %v4838 = vpop.f32.mrb[0].mxu0
        %v4839 = vpop.f32.mrb[0].mxu0
        %v4840 = vadd.f32 0.0, %v4839
        %v4841 = vpop.f32.mrb[0].mxu0
        %4842 = vmatprep.mubr.bf16.mxu0 0
        %4843 = vmatmul.mubr.bf16.gmra.mrb[0].mxu0 %v4680
        %v4844 = vpop.f32.mrb[0].mxu0
        %v4845 = vadd.f32 0.0, %v4844
        %v4846 = vpop.f32.mrb[0].mxu0
        %v4847 = vpop.f32.mrb[0].mxu0
        %v4848 = vadd.f32 0.0, %v4847
        %v4849 = vpop.f32.mrb[0].mxu0
        %4850 = vmatprep.mubr.bf16.mxu0 0
        %4851 = vmatmul.mubr.bf16.gmra.mrb[0].mxu0 %v4681
        %v4852 = vpop.f32.mrb[0].mxu0
        %v4853 = vadd.f32 0.0, %v4852
        %v4854 = vpop.f32.mrb[0].mxu0
        %v4855 = vpop.f32.mrb[0].mxu0
        %v4856 = vadd.f32 0.0, %v4855
        %v4857 = vpop.f32.mrb[0].mxu0
        %4858 = vmatprep.mubr.bf16.mxu0 0
        %4859 = vmatmul.mubr.bf16.gmra.mrb[0].mxu0 %v4682
        %v4860 = vpop.f32.mrb[0].mxu0
        %v4861 = vadd.f32 0.0, %v4860
        %v4862 = vpop.f32.mrb[0].mxu0
        %v4863 = vpop.f32.mrb[0].mxu0
        %v4864 = vadd.f32 0.0, %v4863
        %v4865 = vpop.f32.mrb[0].mxu0
        %4866 = vmatprep.mubr.bf16.mxu0 0
        %4867 = vmatmul.mubr.bf16.gmra.mrb[0].mxu0 %v4683
        %v4868 = vpop.f32.mrb[0].mxu0
        %v4869 = vadd.f32 0.0, %v4868
        %v4870 = vpop.f32.mrb[0].mxu0
        %v4871 = vpop.f32.mrb[0].mxu0
        %v4872 = vadd.f32 0.0, %v4871
        %v4873 = vpop.f32.mrb[0].mxu0
        %4874 = vmatprep.mubr.bf16.mxu0 0
        %4875 = vmatmul.mubr.bf16.gmra.mrb[0].mxu0 %v4684
        %v4876 = vpop.f32.mrb[0].mxu0
        %v4877 = vadd.f32 0.0, %v4876
        %v4878 = vpop.f32.mrb[0].mxu0
        %v4879 = vpop.f32.mrb[0].mxu0
        %v4880 = vadd.f32 0.0, %v4879
        %v4881 = vpop.f32.mrb[0].mxu0
        %4882 = vmatprep.mubr.bf16.mxu0 0
        %4883 = vmatmul.mubr.bf16.gmra.mrb[0].mxu0 %v4685
        %v4884 = vpop.f32.mrb[0].mxu0
        %v4885 = vadd.f32 0.0, %v4884
        %v4886 = vpop.f32.mrb[0].mxu0
        %v4887 = vpop.f32.mrb[0].mxu0
        %v4888 = vadd.f32 0.0, %v4887
        %v4889 = vpop.f32.mrb[0].mxu0
        %4890 = vmatprep.mubr.bf16.mxu0 0
        %4891 = vmatmul.mubr.bf16.gmra.mrb[0].mxu0 %v4686
        %v4892 = vpop.f32.mrb[0].mxu0
        %v4893 = vadd.f32 0.0, %v4892
        %v4894 = vpop.f32.mrb[0].mxu0
        %v4895 = vpop.f32.mrb[0].mxu0
        %v4896 = vadd.f32 0.0, %v4895
        %v4897 = vpop.f32.mrb[0].mxu0
        %4898 = vmatprep.mubr.bf16.mxu0 0
        %4899 = vmatmul.mubr.bf16.gmra.mrb[0].mxu0 %v4687
        %v4900 = vpop.f32.mrb[0].mxu0
        %v4901 = vadd.f32 0.0, %v4900
        %v4902 = vpop.f32.mrb[0].mxu0
        %v4903 = vpop.f32.mrb[0].mxu0
        %v4904 = vadd.f32 0.0, %v4903
        %v4905 = vpop.f32.mrb[0].mxu0
        %4906 = vmatprep.mubr.bf16.mxu0 0
        %4907 = vmatmul.mubr.bf16.gmra.mrb[0].mxu0 %v4688
        %v4908 = vpop.f32.mrb[0].mxu0
        %v4909 = vadd.f32 0.0, %v4908
        %v4910 = vpop.f32.mrb[0].mxu0
        %v4911 = vpop.f32.mrb[0].mxu0
        %v4912 = vadd.f32 0.0, %v4911
        %v4913 = vpop.f32.mrb[0].mxu0
        %4914 = vdwg.mxu0
        %v4915 = vadd.f32 %v4481, %v4789
        %v4916 = vadd.f32 %v4482, %v4792
        %v4917 = vadd.f32 %v4483, %v4797
        %v4918 = vadd.f32 %v4484, %v4800
        %v4919 = vadd.f32 %v4485, %v4805
        %v4920 = vadd.f32 %v4486, %v4808
        %v4921 = vadd.f32 %v4487, %v4813
        %v4922 = vadd.f32 %v4488, %v4816
        %v4923 = vadd.f32 %v4489, %v4821
        %v4924 = vadd.f32 %v4490, %v4824
        %v4925 = vadd.f32 %v4491, %v4829
        %v4926 = vadd.f32 %v4492, %v4832
        %v4927 = vadd.f32 %v4493, %v4837
        %v4928 = vadd.f32 %v4494, %v4840
        %v4929 = vadd.f32 %v4495, %v4845
        %v4930 = vadd.f32 %v4496, %v4848
        %v4931 = vadd.f32 %v4497, %v4853
        %v4932 = vadd.f32 %v4498, %v4856
        %v4933 = vadd.f32 %v4499, %v4861
        %v4934 = vadd.f32 %v4500, %v4864
        %v4935 = vadd.f32 %v4501, %v4869
        %v4936 = vadd.f32 %v4502, %v4872
        %v4937 = vadd.f32 %v4503, %v4877
        %v4938 = vadd.f32 %v4504, %v4880
        %v4939 = vadd.f32 %v4505, %v4885
        %v4940 = vadd.f32 %v4506, %v4888
        %v4941 = vadd.f32 %v4507, %v4893
        %v4942 = vadd.f32 %v4508, %v4896
        %v4943 = vadd.f32 %v4509, %v4901
        %v4944 = vadd.f32 %v4510, %v4904
        %v4945 = vadd.f32 %v4511, %v4909
        %v4946 = vadd.f32 %v4512, %v4912
        %v4947 = vld [vmem:[%s5] sm:$0x1]
        %v4949 = vlaneseq
        %v4950 = vshrl.u32 %v4949, 7
        %v4951 = vsub.s32 0, %v4950
        %v4952 = vrot.slane %v4947, %v4951
        %v4954 = vadd.f32 %v4915, %v4952
        %v4955 = vadd.f32 %v4916, %v4952
        %v4956 = vadd.f32 %v4917, %v4952
        %v4957 = vadd.f32 %v4918, %v4952
        %v4958 = vadd.f32 %v4919, %v4952
        %v4959 = vadd.f32 %v4920, %v4952
        %v4960 = vadd.f32 %v4921, %v4952
        %v4961 = vadd.f32 %v4922, %v4952
        %v4962 = vadd.f32 %v4923, %v4952
        %v4963 = vadd.f32 %v4924, %v4952
        %v4964 = vadd.f32 %v4925, %v4952
        %v4965 = vadd.f32 %v4926, %v4952
        %v4966 = vadd.f32 %v4927, %v4952
        %v4967 = vadd.f32 %v4928, %v4952
        %v4968 = vadd.f32 %v4929, %v4952
        %v4969 = vadd.f32 %v4930, %v4952
        %v4970 = vadd.f32 %v4931, %v4952
        %v4971 = vadd.f32 %v4932, %v4952
        %v4972 = vadd.f32 %v4933, %v4952
        %v4973 = vadd.f32 %v4934, %v4952
        %v4974 = vadd.f32 %v4935, %v4952
        %v4975 = vadd.f32 %v4936, %v4952
        %v4976 = vadd.f32 %v4937, %v4952
        %v4977 = vadd.f32 %v4938, %v4952
        %v4978 = vadd.f32 %v4939, %v4952
        %v4979 = vadd.f32 %v4940, %v4952
        %v4980 = vadd.f32 %v4941, %v4952
        %v4981 = vadd.f32 %v4942, %v4952
        %v4982 = vadd.f32 %v4943, %v4952
        %v4983 = vadd.f32 %v4944, %v4952
        %v4984 = vadd.f32 %v4945, %v4952
        %v4985 = vadd.f32 %v4946, %v4952
        %v4986 = vxor.u32 %v4954, 2147483648
        %v4987 = vxor.u32 %v4955, 2147483648
        %v4988 = vxor.u32 %v4956, 2147483648
        %v4989 = vxor.u32 %v4957, 2147483648
        %v4990 = vxor.u32 %v4958, 2147483648
        %v4991 = vxor.u32 %v4959, 2147483648
        %v4992 = vxor.u32 %v4960, 2147483648
        %v4993 = vxor.u32 %v4961, 2147483648
        %v4994 = vxor.u32 %v4962, 2147483648
        %v4995 = vxor.u32 %v4963, 2147483648
        %v4996 = vxor.u32 %v4964, 2147483648
        %v4997 = vxor.u32 %v4965, 2147483648
        %v4998 = vxor.u32 %v4966, 2147483648
        %v4999 = vxor.u32 %v4967, 2147483648
        %v5000 = vxor.u32 %v4968, 2147483648
        %v5001 = vxor.u32 %v4969, 2147483648
        %v5002 = vxor.u32 %v4970, 2147483648
        %v5003 = vxor.u32 %v4971, 2147483648
        %v5004 = vxor.u32 %v4972, 2147483648
        %v5005 = vxor.u32 %v4973, 2147483648
        %v5006 = vxor.u32 %v4974, 2147483648
        %v5007 = vxor.u32 %v4975, 2147483648
        %v5008 = vxor.u32 %v4976, 2147483648
        %v5009 = vxor.u32 %v4977, 2147483648
        %v5010 = vxor.u32 %v4978, 2147483648
        %v5011 = vxor.u32 %v4979, 2147483648
        %v5012 = vxor.u32 %v4980, 2147483648
        %v5013 = vxor.u32 %v4981, 2147483648
        %v5014 = vxor.u32 %v4982, 2147483648
        %v5015 = vxor.u32 %v4983, 2147483648
        %v5016 = vxor.u32 %v4984, 2147483648
        %v5017 = vxor.u32 %v4985, 2147483648
        %v5018 = vmul.f32 %v4986, 1.442695
        %v5019 = vpow.pop %v5018
        %v5020 = vmul.f32 %v4987, 1.442695
        %v5021 = vpow.pop %v5020
        %v5022 = vmul.f32 %v4988, 1.442695
        %v5023 = vpow.pop %v5022
        %v5024 = vmul.f32 %v4989, 1.442695
        %v5025 = vpow.pop %v5024
        %v5026 = vmul.f32 %v4990, 1.442695
        %v5027 = vpow.pop %v5026
        %v5028 = vmul.f32 %v4991, 1.442695
        %v5029 = vpow.pop %v5028
        %v5030 = vmul.f32 %v4992, 1.442695
        %v5031 = vpow.pop %v5030
        %v5032 = vmul.f32 %v4993, 1.442695
        %v5033 = vpow.pop %v5032
        %v5034 = vmul.f32 %v4994, 1.442695
        %v5035 = vpow.pop %v5034
        %v5036 = vmul.f32 %v4995, 1.442695
        %v5037 = vpow.pop %v5036
        %v5038 = vmul.f32 %v4996, 1.442695
        %v5039 = vpow.pop %v5038
        %v5040 = vmul.f32 %v4997, 1.442695
        %v5041 = vpow.pop %v5040
        %v5042 = vmul.f32 %v4998, 1.442695
        %v5043 = vpow.pop %v5042
        %v5044 = vmul.f32 %v4999, 1.442695
        %v5045 = vpow.pop %v5044
        %v5046 = vmul.f32 %v5000, 1.442695
        %v5047 = vpow.pop %v5046
        %v5048 = vmul.f32 %v5001, 1.442695
        %v5049 = vpow.pop %v5048
        %v5050 = vmul.f32 %v5002, 1.442695
        %v5051 = vpow.pop %v5050
        %v5052 = vmul.f32 %v5003, 1.442695
        %v5053 = vpow.pop %v5052
        %v5054 = vmul.f32 %v5004, 1.442695
        %v5055 = vpow.pop %v5054
        %v5056 = vmul.f32 %v5005, 1.442695
        %v5057 = vpow.pop %v5056
        %v5058 = vmul.f32 %v5006, 1.442695
        %v5059 = vpow.pop %v5058
        %v5060 = vmul.f32 %v5007, 1.442695
        %v5061 = vpow.pop %v5060
        %v5062 = vmul.f32 %v5008, 1.442695
        %v5063 = vpow.pop %v5062
        %v5064 = vmul.f32 %v5009, 1.442695
        %v5065 = vpow.pop %v5064
        %v5066 = vmul.f32 %v5010, 1.442695
        %v5067 = vpow.pop %v5066
        %v5068 = vmul.f32 %v5011, 1.442695
        %v5069 = vpow.pop %v5068
        %v5070 = vmul.f32 %v5012, 1.442695
        %v5071 = vpow.pop %v5070
        %v5072 = vmul.f32 %v5013, 1.442695
        %v5073 = vpow.pop %v5072
        %v5074 = vmul.f32 %v5014, 1.442695
        %v5075 = vpow.pop %v5074
        %v5076 = vmul.f32 %v5015, 1.442695
        %v5077 = vpow.pop %v5076
        %v5078 = vmul.f32 %v5016, 1.442695
        %v5079 = vpow.pop %v5078
        %v5080 = vmul.f32 %v5017, 1.442695
        %v5081 = vpow.pop %v5080
        %v5082 = vadd.f32 %v5019, 1.0
        %v5083 = vadd.f32 %v5021, 1.0
        %v5084 = vadd.f32 %v5023, 1.0
        %v5085 = vadd.f32 %v5025, 1.0
        %v5086 = vadd.f32 %v5027, 1.0
        %v5087 = vadd.f32 %v5029, 1.0
        %v5088 = vadd.f32 %v5031, 1.0
        %v5089 = vadd.f32 %v5033, 1.0
        %v5090 = vadd.f32 %v5035, 1.0
        %v5091 = vadd.f32 %v5037, 1.0
        %v5092 = vadd.f32 %v5039, 1.0
        %v5093 = vadd.f32 %v5041, 1.0
        %v5094 = vadd.f32 %v5043, 1.0
        %v5095 = vadd.f32 %v5045, 1.0
        %v5096 = vadd.f32 %v5047, 1.0
        %v5097 = vadd.f32 %v5049, 1.0
        %v5098 = vadd.f32 %v5051, 1.0
        %v5099 = vadd.f32 %v5053, 1.0
        %v5100 = vadd.f32 %v5055, 1.0
        %v5101 = vadd.f32 %v5057, 1.0
        %v5102 = vadd.f32 %v5059, 1.0
        %v5103 = vadd.f32 %v5061, 1.0
        %v5104 = vadd.f32 %v5063, 1.0
        %v5105 = vadd.f32 %v5065, 1.0
        %v5106 = vadd.f32 %v5067, 1.0
        %v5107 = vadd.f32 %v5069, 1.0
        %v5108 = vadd.f32 %v5071, 1.0
        %v5109 = vadd.f32 %v5073, 1.0
        %v5110 = vadd.f32 %v5075, 1.0
        %v5111 = vadd.f32 %v5077, 1.0
        %v5112 = vadd.f32 %v5079, 1.0
        %v5113 = vadd.f32 %v5081, 1.0
        %v5114 = vrcp.pop %v5082
        %v5115 = vmul.f32 1.0, %v5114
        %v5116 = vrcp.pop %v5083
        %v5117 = vmul.f32 1.0, %v5116
        %v5118 = vrcp.pop %v5084
        %v5119 = vmul.f32 1.0, %v5118
        %v5120 = vrcp.pop %v5085
        %v5121 = vmul.f32 1.0, %v5120
        %v5122 = vrcp.pop %v5086
        %v5123 = vmul.f32 1.0, %v5122
        %v5124 = vrcp.pop %v5087
        %v5125 = vmul.f32 1.0, %v5124
        %v5126 = vrcp.pop %v5088
        %v5127 = vmul.f32 1.0, %v5126
        %v5128 = vrcp.pop %v5089
        %v5129 = vmul.f32 1.0, %v5128
        %v5130 = vrcp.pop %v5090
        %v5131 = vmul.f32 1.0, %v5130
        %v5132 = vrcp.pop %v5091
        %v5133 = vmul.f32 1.0, %v5132
        %v5134 = vrcp.pop %v5092
        %v5135 = vmul.f32 1.0, %v5134
        %v5136 = vrcp.pop %v5093
        %v5137 = vmul.f32 1.0, %v5136
        %v5138 = vrcp.pop %v5094
        %v5139 = vmul.f32 1.0, %v5138
        %v5140 = vrcp.pop %v5095
        %v5141 = vmul.f32 1.0, %v5140
        %v5142 = vrcp.pop %v5096
        %v5143 = vmul.f32 1.0, %v5142
        %v5144 = vrcp.pop %v5097
        %v5145 = vmul.f32 1.0, %v5144
        %v5146 = vrcp.pop %v5098
        %v5147 = vmul.f32 1.0, %v5146
        %v5148 = vrcp.pop %v5099
        %v5149 = vmul.f32 1.0, %v5148
        %v5150 = vrcp.pop %v5100
        %v5151 = vmul.f32 1.0, %v5150
        %v5152 = vrcp.pop %v5101
        %v5153 = vmul.f32 1.0, %v5152
        %v5154 = vrcp.pop %v5102
        %v5155 = vmul.f32 1.0, %v5154
        %v5156 = vrcp.pop %v5103
        %v5157 = vmul.f32 1.0, %v5156
        %v5158 = vrcp.pop %v5104
        %v5159 = vmul.f32 1.0, %v5158
        %v5160 = vrcp.pop %v5105
        %v5161 = vmul.f32 1.0, %v5160
        %v5162 = vrcp.pop %v5106
        %v5163 = vmul.f32 1.0, %v5162
        %v5164 = vrcp.pop %v5107
        %v5165 = vmul.f32 1.0, %v5164
        %v5166 = vrcp.pop %v5108
        %v5167 = vmul.f32 1.0, %v5166
        %v5168 = vrcp.pop %v5109
        %v5169 = vmul.f32 1.0, %v5168
        %v5170 = vrcp.pop %v5110
        %v5171 = vmul.f32 1.0, %v5170
        %v5172 = vrcp.pop %v5111
        %v5173 = vmul.f32 1.0, %v5172
        %v5174 = vrcp.pop %v5112
        %v5175 = vmul.f32 1.0, %v5174
        %v5176 = vrcp.pop %v5113
        %v5177 = vmul.f32 1.0, %v5176
        %v5178 = vmul.f32 %v4954, %v5115
        %v5179 = vmul.f32 %v4955, %v5117
        %v5180 = vmul.f32 %v4956, %v5119
        %v5181 = vmul.f32 %v4957, %v5121
        %v5182 = vmul.f32 %v4958, %v5123
        %v5183 = vmul.f32 %v4959, %v5125
        %v5184 = vmul.f32 %v4960, %v5127
        %v5185 = vmul.f32 %v4961, %v5129
        %v5186 = vmul.f32 %v4962, %v5131
        %v5187 = vmul.f32 %v4963, %v5133
        %v5188 = vmul.f32 %v4964, %v5135
        %v5189 = vmul.f32 %v4965, %v5137
        %v5190 = vmul.f32 %v4966, %v5139
        %v5191 = vmul.f32 %v4967, %v5141
        %v5192 = vmul.f32 %v4968, %v5143
        %v5193 = vmul.f32 %v4969, %v5145
        %v5194 = vmul.f32 %v4970, %v5147
        %v5195 = vmul.f32 %v4971, %v5149
        %v5196 = vmul.f32 %v4972, %v5151
        %v5197 = vmul.f32 %v4973, %v5153
        %v5198 = vmul.f32 %v4974, %v5155
        %v5199 = vmul.f32 %v4975, %v5157
        %v5200 = vmul.f32 %v4976, %v5159
        %v5201 = vmul.f32 %v4977, %v5161
        %v5202 = vmul.f32 %v4978, %v5163
        %v5203 = vmul.f32 %v4979, %v5165
        %v5204 = vmul.f32 %v4980, %v5167
        %v5205 = vmul.f32 %v4981, %v5169
        %v5206 = vmul.f32 %v4982, %v5171
        %v5207 = vmul.f32 %v4983, %v5173
        %v5208 = vmul.f32 %v4984, %v5175
        %v5209 = vmul.f32 %v4985, %v5177
        %v5210 = vld [vmem:[%s7] sm:$0xff]
        %v5211 = vld [vmem:[%s7 + $0x8] sm:$0xff]
        %v5212 = vld [vmem:[%s7 + $0x10] sm:$0xff]
        %v5213 = vld [vmem:[%s7 + $0x18] sm:$0xff]
        %v5214 = vld [vmem:[%s7 + $0x20] sm:$0xff]
        %v5215 = vld [vmem:[%s7 + $0x28] sm:$0xff]
        %v5216 = vld [vmem:[%s7 + $0x30] sm:$0xff]
        %v5217 = vld [vmem:[%s7 + $0x38] sm:$0xff]
        %v5218 = vpack.c.bf16 %v5179, %v5178
        %v5219 = vpack.c.bf16 %v5181, %v5180
        %v5220 = vpack.c.bf16 %v5183, %v5182
        %v5221 = vpack.c.bf16 %v5185, %v5184
        %v5222 = vpack.c.bf16 %v5187, %v5186
        %v5223 = vpack.c.bf16 %v5189, %v5188
        %v5224 = vpack.c.bf16 %v5191, %v5190
        %v5225 = vpack.c.bf16 %v5193, %v5192
        %v5226 = vpack.c.bf16 %v5195, %v5194
        %v5227 = vpack.c.bf16 %v5197, %v5196
        %v5228 = vpack.c.bf16 %v5199, %v5198
        %v5229 = vpack.c.bf16 %v5201, %v5200
        %v5230 = vpack.c.bf16 %v5203, %v5202
        %v5231 = vpack.c.bf16 %v5205, %v5204
        %v5232 = vpack.c.bf16 %v5207, %v5206
        %v5233 = vpack.c.bf16 %v5209, %v5208
        %v5242 = vunpack.c.l.b16 %v5210
        %v5243 = vunpack.c.h.b16 %v5210
        %v5244 = vunpack.c.l.b16 %v5211
        %v5245 = vunpack.c.h.b16 %v5211
        %v5246 = vunpack.c.l.b16 %v5212
        %v5247 = vunpack.c.h.b16 %v5212
        %v5248 = vunpack.c.l.b16 %v5213
        %v5249 = vunpack.c.h.b16 %v5213
        %v5250 = vunpack.c.l.b16 %v5214
        %v5251 = vunpack.c.h.b16 %v5214
        %v5252 = vunpack.c.l.b16 %v5215
        %v5253 = vunpack.c.h.b16 %v5215
        %v5254 = vunpack.c.l.b16 %v5216
        %v5255 = vunpack.c.h.b16 %v5216
        %v5256 = vunpack.c.l.b16 %v5217
        %v5257 = vunpack.c.h.b16 %v5217
        %v5258 = vpack.c.b16 %v5244, %v5242
        %v5259 = vpack.c.b16 %v5245, %v5243
        %v5260 = vpack.c.b16 %v5248, %v5246
        %v5261 = vpack.c.b16 %v5249, %v5247
        %v5262 = vpack.c.b16 %v5252, %v5250
        %v5263 = vpack.c.b16 %v5253, %v5251
        %v5264 = vpack.c.b16 %v5256, %v5254
        %v5265 = vpack.c.b16 %v5257, %v5255
        %5274 = vmatprep.subr.bf16.mxu0 0
        %5275 = vmatpush1.bf16.msra.mxu0 %v5218
        %5276 = vmatprep.subr.bf16.mxu0 0
        %5277 = vmatpush1.bf16.msra.mxu0 %v5219
        %5278 = vmatprep.subr.bf16.mxu0 0
        %5279 = vmatpush1.bf16.msra.mxu0 %v5220
        %5280 = vmatprep.subr.bf16.mxu0 0
        %5281 = vmatpush1.bf16.msra.mxu0 %v5221
        %5282 = vmatprep.subr.bf16.mxu0 0
        %5283 = vmatpush1.bf16.msra.mxu0 %v5222
        %5284 = vmatprep.subr.bf16.mxu0 0
        %5285 = vmatpush1.bf16.msra.mxu0 %v5223
        %5286 = vmatprep.subr.bf16.mxu0 0
        %5287 = vmatpush1.bf16.msra.mxu0 %v5224
        %5288 = vmatprep.subr.bf16.mxu0 0
        %5289 = vmatpush1.bf16.msra.mxu0 %v5225
        %5290 = vmatprep.subr.bf16.mxu0 0
        %5291 = vmatpush1.bf16.msra.mxu0 %v5226
        %5292 = vmatprep.subr.bf16.mxu0 0
        %5293 = vmatpush1.bf16.msra.mxu0 %v5227
        %5294 = vmatprep.subr.bf16.mxu0 0
        %5295 = vmatpush1.bf16.msra.mxu0 %v5228
        %5296 = vmatprep.subr.bf16.mxu0 0
        %5297 = vmatpush1.bf16.msra.mxu0 %v5229
        %5298 = vmatprep.subr.bf16.mxu0 0
        %5299 = vmatpush1.bf16.msra.mxu0 %v5230
        %5300 = vmatprep.subr.bf16.mxu0 0
        %5301 = vmatpush1.bf16.msra.mxu0 %v5231
        %5302 = vmatprep.subr.bf16.mxu0 0
        %5303 = vmatpush1.bf16.msra.mxu0 %v5232
        %5304 = vmatprep.subr.bf16.mxu0 0
        %5305 = vmatpush1.bf16.msra.mxu0 %v5233
        %5306 = vmatprep.mubr.bf16.mxu0 %v5259
        %5307 = vmatmul.mubr.bf16.gmra.mrb[0].mxu0 %v5258
        %v5308 = vpop.f32.mrb[0].mxu0
        %v5309 = vadd.f32 0.0, %v5308
        %v5310 = vpop.f32.mrb[0].mxu0
        %v5311 = vpop.f32.mrb[0].mxu0
        %v5312 = vadd.f32 0.0, %v5311
        %v5313 = vpop.f32.mrb[0].mxu0
        %5314 = vmatprep.mubr.bf16.mxu0 %v5261
        %5315 = vmatmul.mubr.bf16.gmra.mrb[0].mxu0 %v5260
        %v5316 = vpop.f32.mrb[0].mxu0
        %v5317 = vadd.f32 0.0, %v5316
        %v5318 = vpop.f32.mrb[0].mxu0
        %v5319 = vpop.f32.mrb[0].mxu0
        %v5320 = vadd.f32 0.0, %v5319
        %v5321 = vpop.f32.mrb[0].mxu0
        %5322 = vmatprep.mubr.bf16.mxu0 %v5263
        %5323 = vmatmul.mubr.bf16.gmra.mrb[0].mxu0 %v5262
        %v5324 = vpop.f32.mrb[0].mxu0
        %v5325 = vadd.f32 0.0, %v5324
        %v5326 = vpop.f32.mrb[0].mxu0
        %v5327 = vpop.f32.mrb[0].mxu0
        %v5328 = vadd.f32 0.0, %v5327
        %v5329 = vpop.f32.mrb[0].mxu0
        %5330 = vmatprep.mubr.bf16.mxu0 %v5265
        %5331 = vmatmul.mubr.bf16.gmra.mrb[0].mxu0 %v5264
        %v5332 = vpop.f32.mrb[0].mxu0
        %v5333 = vadd.f32 0.0, %v5332
        %v5334 = vpop.f32.mrb[0].mxu0
        %v5335 = vpop.f32.mrb[0].mxu0
        %v5336 = vadd.f32 0.0, %v5335
        %v5337 = vpop.f32.mrb[0].mxu0
        %5338 = vdwg.mxu0
        %5339 = vst [vmem:[#allocation2 + $0x11] sm:$0xff] %v5309
        %5340 = vst [vmem:[#allocation2 + $0x19] sm:$0xff] %v5312
        %5341 = vst [vmem:[#allocation2 + $0x21] sm:$0xff] %v5317
        %5342 = vst [vmem:[#allocation2 + $0x29] sm:$0xff] %v5320
        %5343 = vst [vmem:[#allocation2 + $0x31] sm:$0xff] %v5325
        %5344 = vst [vmem:[#allocation2 + $0x39] sm:$0xff] %v5328
        %5345 = vst [vmem:[#allocation2 + $0x41] sm:$0xff] %v5333
        %5346 = vst [vmem:[#allocation2 + $0x49] sm:$0xff] %v5336
        %v5347 = vand.u32 %v1138, 7
        %v5348 = vand.u32 %v1139, 7
        %v5349 = vand.u32 %v1140, 7
        %v5350 = vand.u32 %v1141, 7
        %v5351 = vand.u32 %v1142, 7
        %v5352 = vand.u32 %v1143, 7
        %v5353 = vand.u32 %v1144, 7
        %v5354 = vand.u32 %v1145, 7
        %v5355 = vshra.s32 %v1138, 3
        %v5356 = vshra.s32 %v1139, 3
        %v5357 = vshra.s32 %v1140, 3
        %v5358 = vshra.s32 %v1141, 3
        %v5359 = vshra.s32 %v1142, 3
        %v5360 = vshra.s32 %v1143, 3
        %v5361 = vshra.s32 %v1144, 3
        %v5362 = vshra.s32 %v1145, 3
        %vm5363 = vcmp.ge.s32.totalorder %v5355, 1
        %vm5364 = vcmp.ge.s32.totalorder %v5356, 1
        %vm5365 = vcmp.ge.s32.totalorder %v5357, 1
        %vm5366 = vcmp.ge.s32.totalorder %v5358, 1
        %vm5367 = vcmp.ge.s32.totalorder %v5359, 1
        %vm5368 = vcmp.ge.s32.totalorder %v5360, 1
        %vm5369 = vcmp.ge.s32.totalorder %v5361, 1
        %vm5370 = vcmp.ge.s32.totalorder %v5362, 1
        %vm5371 = vcmp.le.s32.totalorder %v5355, 6
        %vm5372 = vcmp.le.s32.totalorder %v5356, 6
        %vm5373 = vcmp.le.s32.totalorder %v5357, 6
        %vm5374 = vcmp.le.s32.totalorder %v5358, 6
        %vm5375 = vcmp.le.s32.totalorder %v5359, 6
        %vm5376 = vcmp.le.s32.totalorder %v5360, 6
        %vm5377 = vcmp.le.s32.totalorder %v5361, 6
        %vm5378 = vcmp.le.s32.totalorder %v5362, 6
        %vm5379 = vcmp.ge.s32.totalorder %v5347, 1
        %vm5380 = vcmp.ge.s32.totalorder %v5348, 1
        %vm5381 = vcmp.ge.s32.totalorder %v5349, 1
        %vm5382 = vcmp.ge.s32.totalorder %v5350, 1
        %vm5383 = vcmp.ge.s32.totalorder %v5351, 1
        %vm5384 = vcmp.ge.s32.totalorder %v5352, 1
        %vm5385 = vcmp.ge.s32.totalorder %v5353, 1
        %vm5386 = vcmp.ge.s32.totalorder %v5354, 1
        %vm5387 = vcmp.le.s32.totalorder %v5347, 6
        %vm5388 = vcmp.le.s32.totalorder %v5348, 6
        %vm5389 = vcmp.le.s32.totalorder %v5349, 6
        %vm5390 = vcmp.le.s32.totalorder %v5350, 6
        %vm5391 = vcmp.le.s32.totalorder %v5351, 6
        %vm5392 = vcmp.le.s32.totalorder %v5352, 6
        %vm5393 = vcmp.le.s32.totalorder %v5353, 6
        %vm5394 = vcmp.le.s32.totalorder %v5354, 6
        %v5395 = vld [vmem:[#allocation2 + $0x8] sm:$0xff]
        %v5396 = vld [vmem:[#allocation2 + $0x10] sm:$0xff]
        %v5397 = vld [vmem:[#allocation2 + $0x18] sm:$0xff]
        %v5398 = vld [vmem:[#allocation2 + $0x20] sm:$0xff]
        %v5399 = vld [vmem:[#allocation2 + $0x28] sm:$0xff]
        %v5400 = vld [vmem:[#allocation2 + $0x30] sm:$0xff]
        %v5401 = vld [vmem:[#allocation2 + $0x38] sm:$0xff]
        %v5402 = vld [vmem:[#allocation2 + $0x40] sm:$0xff]
        %vm5403 = vmand %vm5363, %vm5379
        %vm5404 = vmand %vm5364, %vm5380
        %vm5405 = vmand %vm5365, %vm5381
        %vm5406 = vmand %vm5366, %vm5382
        %vm5407 = vmand %vm5367, %vm5383
        %vm5408 = vmand %vm5368, %vm5384
        %vm5409 = vmand %vm5369, %vm5385
        %vm5410 = vmand %vm5370, %vm5386
        %v5411 = vsel %vm5403, 1, 0
        %v5412 = vsel %vm5404, 1, 0
        %v5413 = vsel %vm5405, 1, 0
        %v5414 = vsel %vm5406, 1, 0
        %v5415 = vsel %vm5407, 1, 0
        %v5416 = vsel %vm5408, 1, 0
        %v5417 = vsel %vm5409, 1, 0
        %v5418 = vsel %vm5410, 1, 0
        %vm5419 = vcmp.eq.s32.totalorder %v5411, 1
        %vm5420 = vcmp.eq.s32.totalorder %v5412, 1
        %vm5421 = vcmp.eq.s32.totalorder %v5413, 1
        %vm5422 = vcmp.eq.s32.totalorder %v5414, 1
        %vm5423 = vcmp.eq.s32.totalorder %v5415, 1
        %vm5424 = vcmp.eq.s32.totalorder %v5416, 1
        %vm5425 = vcmp.eq.s32.totalorder %v5417, 1
        %vm5426 = vcmp.eq.s32.totalorder %v5418, 1
        %v5427 = vsel %vm5419, %v5395, 0.0
        %v5428 = vsel %vm5420, %v5396, 0.0
        %v5429 = vsel %vm5421, %v5397, 0.0
        %v5430 = vsel %vm5422, %v5398, 0.0
        %v5431 = vsel %vm5423, %v5399, 0.0
        %v5432 = vsel %vm5424, %v5400, 0.0
        %v5433 = vsel %vm5425, %v5401, 0.0
        %v5434 = vsel %vm5426, %v5402, 0.0
        %v5435 = vld [vmem:[%s9] sm:$0x1]
        %v5436 = vlaneseq
        %v5437 = vshrl.u32 %v5436, 7
        %v5438 = vsub.s32 0, %v5437
        %v5439 = vrot.slane %v5435, %v5438
        %v5440 = vmul.f32 %v5427, %v5439
        %v5441 = vmul.f32 %v5428, %v5439
        %v5442 = vmul.f32 %v5429, %v5439
        %v5443 = vmul.f32 %v5430, %v5439
        %v5444 = vmul.f32 %v5431, %v5439
        %v5445 = vmul.f32 %v5432, %v5439
        %v5446 = vmul.f32 %v5433, %v5439
        %v5447 = vmul.f32 %v5434, %v5439
        %v5448 = vadd.f32 %v5440, 0.0
        %v5449 = vadd.f32 %v5441, 0.0
        %v5450 = vadd.f32 %v5442, 0.0
        %v5451 = vadd.f32 %v5443, 0.0
        %v5452 = vadd.f32 %v5444, 0.0
        %v5453 = vadd.f32 %v5445, 0.0
        %v5454 = vadd.f32 %v5446, 0.0
        %v5455 = vadd.f32 %v5447, 0.0
        %v5456 = vld [vmem:[#allocation2 + $0x9] sm:$0xff]
        %v5457 = vld [vmem:[#allocation2 + $0x11] sm:$0xff]
        %v5458 = vld [vmem:[#allocation2 + $0x19] sm:$0xff]
        %v5459 = vld [vmem:[#allocation2 + $0x21] sm:$0xff]
        %v5460 = vld [vmem:[#allocation2 + $0x29] sm:$0xff]
        %v5461 = vld [vmem:[#allocation2 + $0x31] sm:$0xff]
        %v5462 = vld [vmem:[#allocation2 + $0x39] sm:$0xff]
        %v5463 = vld [vmem:[#allocation2 + $0x41] sm:$0xff]
        %v5464 = vsel %vm5363, 1, 0
        %v5465 = vsel %vm5364, 1, 0
        %v5466 = vsel %vm5365, 1, 0
        %v5467 = vsel %vm5366, 1, 0
        %v5468 = vsel %vm5367, 1, 0
        %v5469 = vsel %vm5368, 1, 0
        %v5470 = vsel %vm5369, 1, 0
        %v5471 = vsel %vm5370, 1, 0
        %vm5472 = vcmp.eq.s32.totalorder %v5464, 1
        %vm5473 = vcmp.eq.s32.totalorder %v5465, 1
        %vm5474 = vcmp.eq.s32.totalorder %v5466, 1
        %vm5475 = vcmp.eq.s32.totalorder %v5467, 1
        %vm5476 = vcmp.eq.s32.totalorder %v5468, 1
        %vm5477 = vcmp.eq.s32.totalorder %v5469, 1
        %vm5478 = vcmp.eq.s32.totalorder %v5470, 1
        %vm5479 = vcmp.eq.s32.totalorder %v5471, 1
        %v5480 = vsel %vm5472, %v5456, 0.0
        %v5481 = vsel %vm5473, %v5457, 0.0
        %v5482 = vsel %vm5474, %v5458, 0.0
        %v5483 = vsel %vm5475, %v5459, 0.0
        %v5484 = vsel %vm5476, %v5460, 0.0
        %v5485 = vsel %vm5477, %v5461, 0.0
        %v5486 = vsel %vm5478, %v5462, 0.0
        %v5487 = vsel %vm5479, %v5463, 0.0
        %v5488 = vld [vmem:[%s9 + $0x1] sm:$0x1]
        %v5489 = vlaneseq
        %v5490 = vshrl.u32 %v5489, 7
        %v5491 = vsub.s32 0, %v5490
        %v5492 = vrot.slane %v5488, %v5491
        %v5493 = vmul.f32 %v5480, %v5492
        %v5494 = vmul.f32 %v5481, %v5492
        %v5495 = vmul.f32 %v5482, %v5492
        %v5496 = vmul.f32 %v5483, %v5492
        %v5497 = vmul.f32 %v5484, %v5492
        %v5498 = vmul.f32 %v5485, %v5492
        %v5499 = vmul.f32 %v5486, %v5492
        %v5500 = vmul.f32 %v5487, %v5492
        %v5501 = vadd.f32 %v5448, %v5493
        %v5502 = vadd.f32 %v5449, %v5494
        %v5503 = vadd.f32 %v5450, %v5495
        %v5504 = vadd.f32 %v5451, %v5496
        %v5505 = vadd.f32 %v5452, %v5497
        %v5506 = vadd.f32 %v5453, %v5498
        %v5507 = vadd.f32 %v5454, %v5499
        %v5508 = vadd.f32 %v5455, %v5500
        %v5509 = vld [vmem:[#allocation2 + $0xa] sm:$0xff]
        %v5510 = vld [vmem:[#allocation2 + $0x12] sm:$0xff]
        %v5511 = vld [vmem:[#allocation2 + $0x1a] sm:$0xff]
        %v5512 = vld [vmem:[#allocation2 + $0x22] sm:$0xff]
        %v5513 = vld [vmem:[#allocation2 + $0x2a] sm:$0xff]
        %v5514 = vld [vmem:[#allocation2 + $0x32] sm:$0xff]
        %v5515 = vld [vmem:[#allocation2 + $0x3a] sm:$0xff]
        %v5516 = vld [vmem:[#allocation2 + $0x42] sm:$0xff]
        %vm5517 = vmand %vm5363, %vm5387
        %vm5518 = vmand %vm5364, %vm5388
        %vm5519 = vmand %vm5365, %vm5389
        %vm5520 = vmand %vm5366, %vm5390
        %vm5521 = vmand %vm5367, %vm5391
        %vm5522 = vmand %vm5368, %vm5392
        %vm5523 = vmand %vm5369, %vm5393
        %vm5524 = vmand %vm5370, %vm5394
        %v5525 = vsel %vm5517, 1, 0
        %v5526 = vsel %vm5518, 1, 0
        %v5527 = vsel %vm5519, 1, 0
        %v5528 = vsel %vm5520, 1, 0
        %v5529 = vsel %vm5521, 1, 0
        %v5530 = vsel %vm5522, 1, 0
        %v5531 = vsel %vm5523, 1, 0
        %v5532 = vsel %vm5524, 1, 0
        %vm5533 = vcmp.eq.s32.totalorder %v5525, 1
        %vm5534 = vcmp.eq.s32.totalorder %v5526, 1
        %vm5535 = vcmp.eq.s32.totalorder %v5527, 1
        %vm5536 = vcmp.eq.s32.totalorder %v5528, 1
        %vm5537 = vcmp.eq.s32.totalorder %v5529, 1
        %vm5538 = vcmp.eq.s32.totalorder %v5530, 1
        %vm5539 = vcmp.eq.s32.totalorder %v5531, 1
        %vm5540 = vcmp.eq.s32.totalorder %v5532, 1
        %v5541 = vsel %vm5533, %v5509, 0.0
        %v5542 = vsel %vm5534, %v5510, 0.0
        %v5543 = vsel %vm5535, %v5511, 0.0
        %v5544 = vsel %vm5536, %v5512, 0.0
        %v5545 = vsel %vm5537, %v5513, 0.0
        %v5546 = vsel %vm5538, %v5514, 0.0
        %v5547 = vsel %vm5539, %v5515, 0.0
        %v5548 = vsel %vm5540, %v5516, 0.0
        %v5549 = vld [vmem:[%s9 + $0x2] sm:$0x1]
        %v5550 = vlaneseq
        %v5551 = vshrl.u32 %v5550, 7
        %v5552 = vsub.s32 0, %v5551
        %v5553 = vrot.slane %v5549, %v5552
        %v5554 = vmul.f32 %v5541, %v5553
        %v5555 = vmul.f32 %v5542, %v5553
        %v5556 = vmul.f32 %v5543, %v5553
        %v5557 = vmul.f32 %v5544, %v5553
        %v5558 = vmul.f32 %v5545, %v5553
        %v5559 = vmul.f32 %v5546, %v5553
        %v5560 = vmul.f32 %v5547, %v5553
        %v5561 = vmul.f32 %v5548, %v5553
        %v5562 = vadd.f32 %v5501, %v5554
        %v5563 = vadd.f32 %v5502, %v5555
        %v5564 = vadd.f32 %v5503, %v5556
        %v5565 = vadd.f32 %v5504, %v5557
        %v5566 = vadd.f32 %v5505, %v5558
        %v5567 = vadd.f32 %v5506, %v5559
        %v5568 = vadd.f32 %v5507, %v5560
        %v5569 = vadd.f32 %v5508, %v5561
        %v5570 = vld [vmem:[#allocation2 + $0x48] sm:$0xff]
        %v5571 = vsel %vm5379, 1, 0
        %v5572 = vsel %vm5380, 1, 0
        %v5573 = vsel %vm5381, 1, 0
        %v5574 = vsel %vm5382, 1, 0
        %v5575 = vsel %vm5383, 1, 0
        %v5576 = vsel %vm5384, 1, 0
        %v5577 = vsel %vm5385, 1, 0
        %v5578 = vsel %vm5386, 1, 0
        %vm5579 = vcmp.eq.s32.totalorder %v5571, 1
        %vm5580 = vcmp.eq.s32.totalorder %v5572, 1
        %vm5581 = vcmp.eq.s32.totalorder %v5573, 1
        %vm5582 = vcmp.eq.s32.totalorder %v5574, 1
        %vm5583 = vcmp.eq.s32.totalorder %v5575, 1
        %vm5584 = vcmp.eq.s32.totalorder %v5576, 1
        %vm5585 = vcmp.eq.s32.totalorder %v5577, 1
        %vm5586 = vcmp.eq.s32.totalorder %v5578, 1
        %v5587 = vsel %vm5579, %v5396, 0.0
        %v5588 = vsel %vm5580, %v5397, 0.0
        %v5589 = vsel %vm5581, %v5398, 0.0
        %v5590 = vsel %vm5582, %v5399, 0.0
        %v5591 = vsel %vm5583, %v5400, 0.0
        %v5592 = vsel %vm5584, %v5401, 0.0
        %v5593 = vsel %vm5585, %v5402, 0.0
        %v5594 = vsel %vm5586, %v5570, 0.0
        %v5595 = vld [vmem:[%s9 + $0x3] sm:$0x1]
        %v5596 = vlaneseq
        %v5597 = vshrl.u32 %v5596, 7
        %v5598 = vsub.s32 0, %v5597
        %v5599 = vrot.slane %v5595, %v5598
        %v5600 = vmul.f32 %v5587, %v5599
        %v5601 = vmul.f32 %v5588, %v5599
        %v5602 = vmul.f32 %v5589, %v5599
        %v5603 = vmul.f32 %v5590, %v5599
        %v5604 = vmul.f32 %v5591, %v5599
        %v5605 = vmul.f32 %v5592, %v5599
        %v5606 = vmul.f32 %v5593, %v5599
        %v5607 = vmul.f32 %v5594, %v5599
        %v5608 = vadd.f32 %v5562, %v5600
        %v5609 = vadd.f32 %v5563, %v5601
        %v5610 = vadd.f32 %v5564, %v5602
        %v5611 = vadd.f32 %v5565, %v5603
        %v5612 = vadd.f32 %v5566, %v5604
        %v5613 = vadd.f32 %v5567, %v5605
        %v5614 = vadd.f32 %v5568, %v5606
        %v5615 = vadd.f32 %v5569, %v5607
        %v5616 = vld [vmem:[#allocation2 + $0x49] sm:$0xff]
        %v5617 = vld [vmem:[%s9 + $0x4] sm:$0x1]
        %v5618 = vlaneseq
        %v5619 = vshrl.u32 %v5618, 7
        %v5620 = vsub.s32 0, %v5619
        %v5621 = vrot.slane %v5617, %v5620
        %v5622 = vmul.f32 %v5457, %v5621
        %v5623 = vmul.f32 %v5458, %v5621
        %v5624 = vmul.f32 %v5459, %v5621
        %v5625 = vmul.f32 %v5460, %v5621
        %v5626 = vmul.f32 %v5461, %v5621
        %v5627 = vmul.f32 %v5462, %v5621
        %v5628 = vmul.f32 %v5463, %v5621
        %v5629 = vmul.f32 %v5616, %v5621
        %v5630 = vadd.f32 %v5608, %v5622
        %v5631 = vadd.f32 %v5609, %v5623
        %v5632 = vadd.f32 %v5610, %v5624
        %v5633 = vadd.f32 %v5611, %v5625
        %v5634 = vadd.f32 %v5612, %v5626
        %v5635 = vadd.f32 %v5613, %v5627
        %v5636 = vadd.f32 %v5614, %v5628
        %v5637 = vadd.f32 %v5615, %v5629
        %v5638 = vld [vmem:[#allocation2 + $0x4a] sm:$0xff]
        %v5639 = vsel %vm5387, 1, 0
        %v5640 = vsel %vm5388, 1, 0
        %v5641 = vsel %vm5389, 1, 0
        %v5642 = vsel %vm5390, 1, 0
        %v5643 = vsel %vm5391, 1, 0
        %v5644 = vsel %vm5392, 1, 0
        %v5645 = vsel %vm5393, 1, 0
        %v5646 = vsel %vm5394, 1, 0
        %vm5647 = vcmp.eq.s32.totalorder %v5639, 1
        %vm5648 = vcmp.eq.s32.totalorder %v5640, 1
        %vm5649 = vcmp.eq.s32.totalorder %v5641, 1
        %vm5650 = vcmp.eq.s32.totalorder %v5642, 1
        %vm5651 = vcmp.eq.s32.totalorder %v5643, 1
        %vm5652 = vcmp.eq.s32.totalorder %v5644, 1
        %vm5653 = vcmp.eq.s32.totalorder %v5645, 1
        %vm5654 = vcmp.eq.s32.totalorder %v5646, 1
        %v5655 = vsel %vm5647, %v5510, 0.0
        %v5656 = vsel %vm5648, %v5511, 0.0
        %v5657 = vsel %vm5649, %v5512, 0.0
        %v5658 = vsel %vm5650, %v5513, 0.0
        %v5659 = vsel %vm5651, %v5514, 0.0
        %v5660 = vsel %vm5652, %v5515, 0.0
        %v5661 = vsel %vm5653, %v5516, 0.0
        %v5662 = vsel %vm5654, %v5638, 0.0
        %v5663 = vld [vmem:[%s9 + $0x5] sm:$0x1]
        %v5664 = vlaneseq
        %v5665 = vshrl.u32 %v5664, 7
        %v5666 = vsub.s32 0, %v5665
        %v5667 = vrot.slane %v5663, %v5666
        %v5668 = vmul.f32 %v5655, %v5667
        %v5669 = vmul.f32 %v5656, %v5667
        %v5670 = vmul.f32 %v5657, %v5667
        %v5671 = vmul.f32 %v5658, %v5667
        %v5672 = vmul.f32 %v5659, %v5667
        %v5673 = vmul.f32 %v5660, %v5667
        %v5674 = vmul.f32 %v5661, %v5667
        %v5675 = vmul.f32 %v5662, %v5667
        %v5676 = vadd.f32 %v5630, %v5668
        %v5677 = vadd.f32 %v5631, %v5669
        %v5678 = vadd.f32 %v5632, %v5670
        %v5679 = vadd.f32 %v5633, %v5671
        %v5680 = vadd.f32 %v5634, %v5672
        %v5681 = vadd.f32 %v5635, %v5673
        %v5682 = vadd.f32 %v5636, %v5674
        %v5683 = vadd.f32 %v5637, %v5675
        %v5684 = vld [vmem:[#allocation2 + $0x50] sm:$0xff]
        %vm5685 = vmand %vm5371, %vm5379
        %vm5686 = vmand %vm5372, %vm5380
        %vm5687 = vmand %vm5373, %vm5381
        %vm5688 = vmand %vm5374, %vm5382
        %vm5689 = vmand %vm5375, %vm5383
        %vm5690 = vmand %vm5376, %vm5384
        %vm5691 = vmand %vm5377, %vm5385
        %vm5692 = vmand %vm5378, %vm5386
        %v5693 = vsel %vm5685, 1, 0
        %v5694 = vsel %vm5686, 1, 0
        %v5695 = vsel %vm5687, 1, 0
        %v5696 = vsel %vm5688, 1, 0
        %v5697 = vsel %vm5689, 1, 0
        %v5698 = vsel %vm5690, 1, 0
        %v5699 = vsel %vm5691, 1, 0
        %v5700 = vsel %vm5692, 1, 0
        %vm5701 = vcmp.eq.s32.totalorder %v5693, 1
        %vm5702 = vcmp.eq.s32.totalorder %v5694, 1
        %vm5703 = vcmp.eq.s32.totalorder %v5695, 1
        %vm5704 = vcmp.eq.s32.totalorder %v5696, 1
        %vm5705 = vcmp.eq.s32.totalorder %v5697, 1
        %vm5706 = vcmp.eq.s32.totalorder %v5698, 1
        %vm5707 = vcmp.eq.s32.totalorder %v5699, 1
        %vm5708 = vcmp.eq.s32.totalorder %v5700, 1
        %v5709 = vsel %vm5701, %v5397, 0.0
        %v5710 = vsel %vm5702, %v5398, 0.0
        %v5711 = vsel %vm5703, %v5399, 0.0
        %v5712 = vsel %vm5704, %v5400, 0.0
        %v5713 = vsel %vm5705, %v5401, 0.0
        %v5714 = vsel %vm5706, %v5402, 0.0
        %v5715 = vsel %vm5707, %v5570, 0.0
        %v5716 = vsel %vm5708, %v5684, 0.0
        %v5717 = vld [vmem:[%s9 + $0x6] sm:$0x1]
        %v5718 = vlaneseq
        %v5719 = vshrl.u32 %v5718, 7
        %v5720 = vsub.s32 0, %v5719
        %v5721 = vrot.slane %v5717, %v5720
        %v5722 = vmul.f32 %v5709, %v5721
        %v5723 = vmul.f32 %v5710, %v5721
        %v5724 = vmul.f32 %v5711, %v5721
        %v5725 = vmul.f32 %v5712, %v5721
        %v5726 = vmul.f32 %v5713, %v5721
        %v5727 = vmul.f32 %v5714, %v5721
        %v5728 = vmul.f32 %v5715, %v5721
        %v5729 = vmul.f32 %v5716, %v5721
        %v5730 = vadd.f32 %v5676, %v5722
        %v5731 = vadd.f32 %v5677, %v5723
        %v5732 = vadd.f32 %v5678, %v5724
        %v5733 = vadd.f32 %v5679, %v5725
        %v5734 = vadd.f32 %v5680, %v5726
        %v5735 = vadd.f32 %v5681, %v5727
        %v5736 = vadd.f32 %v5682, %v5728
        %v5737 = vadd.f32 %v5683, %v5729
        %v5738 = vld [vmem:[#allocation2 + $0x51] sm:$0xff]
        %v5739 = vsel %vm5371, 1, 0
        %v5740 = vsel %vm5372, 1, 0
        %v5741 = vsel %vm5373, 1, 0
        %v5742 = vsel %vm5374, 1, 0
        %v5743 = vsel %vm5375, 1, 0
        %v5744 = vsel %vm5376, 1, 0
        %v5745 = vsel %vm5377, 1, 0
        %v5746 = vsel %vm5378, 1, 0
        %vm5747 = vcmp.eq.s32.totalorder %v5739, 1
        %vm5748 = vcmp.eq.s32.totalorder %v5740, 1
        %vm5749 = vcmp.eq.s32.totalorder %v5741, 1
        %vm5750 = vcmp.eq.s32.totalorder %v5742, 1
        %vm5751 = vcmp.eq.s32.totalorder %v5743, 1
        %vm5752 = vcmp.eq.s32.totalorder %v5744, 1
        %vm5753 = vcmp.eq.s32.totalorder %v5745, 1
        %vm5754 = vcmp.eq.s32.totalorder %v5746, 1
        %v5755 = vsel %vm5747, %v5458, 0.0
        %v5756 = vsel %vm5748, %v5459, 0.0
        %v5757 = vsel %vm5749, %v5460, 0.0
        %v5758 = vsel %vm5750, %v5461, 0.0
        %v5759 = vsel %vm5751, %v5462, 0.0
        %v5760 = vsel %vm5752, %v5463, 0.0
        %v5761 = vsel %vm5753, %v5616, 0.0
        %v5762 = vsel %vm5754, %v5738, 0.0
        %v5763 = vld [vmem:[%s9 + $0x7] sm:$0x1]
        %v5764 = vlaneseq
        %v5765 = vshrl.u32 %v5764, 7
        %v5766 = vsub.s32 0, %v5765
        %v5767 = vrot.slane %v5763, %v5766
        %v5768 = vmul.f32 %v5755, %v5767
        %v5769 = vmul.f32 %v5756, %v5767
        %v5770 = vmul.f32 %v5757, %v5767
        %v5771 = vmul.f32 %v5758, %v5767
        %v5772 = vmul.f32 %v5759, %v5767
        %v5773 = vmul.f32 %v5760, %v5767
        %v5774 = vmul.f32 %v5761, %v5767
        %v5775 = vmul.f32 %v5762, %v5767
        %v5776 = vadd.f32 %v5730, %v5768
        %v5777 = vadd.f32 %v5731, %v5769
        %v5778 = vadd.f32 %v5732, %v5770
        %v5779 = vadd.f32 %v5733, %v5771
        %v5780 = vadd.f32 %v5734, %v5772
        %v5781 = vadd.f32 %v5735, %v5773
        %v5782 = vadd.f32 %v5736, %v5774
        %v5783 = vadd.f32 %v5737, %v5775
        %v5784 = vld [vmem:[#allocation2 + $0x52] sm:$0xff]
        %vm5785 = vmand %vm5371, %vm5387
        %vm5786 = vmand %vm5372, %vm5388
        %vm5787 = vmand %vm5373, %vm5389
        %vm5788 = vmand %vm5374, %vm5390
        %vm5789 = vmand %vm5375, %vm5391
        %vm5790 = vmand %vm5376, %vm5392
        %vm5791 = vmand %vm5377, %vm5393
        %vm5792 = vmand %vm5378, %vm5394
        %v5793 = vsel %vm5785, 1, 0
        %v5794 = vsel %vm5786, 1, 0
        %v5795 = vsel %vm5787, 1, 0
        %v5796 = vsel %vm5788, 1, 0
        %v5797 = vsel %vm5789, 1, 0
        %v5798 = vsel %vm5790, 1, 0
        %v5799 = vsel %vm5791, 1, 0
        %v5800 = vsel %vm5792, 1, 0
        %vm5801 = vcmp.eq.s32.totalorder %v5793, 1
        %vm5802 = vcmp.eq.s32.totalorder %v5794, 1
        %vm5803 = vcmp.eq.s32.totalorder %v5795, 1
        %vm5804 = vcmp.eq.s32.totalorder %v5796, 1
        %vm5805 = vcmp.eq.s32.totalorder %v5797, 1
        %vm5806 = vcmp.eq.s32.totalorder %v5798, 1
        %vm5807 = vcmp.eq.s32.totalorder %v5799, 1
        %vm5808 = vcmp.eq.s32.totalorder %v5800, 1
        %v5809 = vsel %vm5801, %v5511, 0.0
        %v5810 = vsel %vm5802, %v5512, 0.0
        %v5811 = vsel %vm5803, %v5513, 0.0
        %v5812 = vsel %vm5804, %v5514, 0.0
        %v5813 = vsel %vm5805, %v5515, 0.0
        %v5814 = vsel %vm5806, %v5516, 0.0
        %v5815 = vsel %vm5807, %v5638, 0.0
        %v5816 = vsel %vm5808, %v5784, 0.0
        %v5817 = vld [vmem:[%s9 + $0x8] sm:$0x1]
        %v5818 = vlaneseq
        %v5819 = vshrl.u32 %v5818, 7
        %v5820 = vsub.s32 0, %v5819
        %v5821 = vrot.slane %v5817, %v5820
        %v5822 = vmul.f32 %v5809, %v5821
        %v5823 = vmul.f32 %v5810, %v5821
        %v5824 = vmul.f32 %v5811, %v5821
        %v5825 = vmul.f32 %v5812, %v5821
        %v5826 = vmul.f32 %v5813, %v5821
        %v5827 = vmul.f32 %v5814, %v5821
        %v5828 = vmul.f32 %v5815, %v5821
        %v5829 = vmul.f32 %v5816, %v5821
        %v5830 = vadd.f32 %v5776, %v5822
        %v5831 = vadd.f32 %v5777, %v5823
        %v5832 = vadd.f32 %v5778, %v5824
        %v5833 = vadd.f32 %v5779, %v5825
        %v5834 = vadd.f32 %v5780, %v5826
        %v5835 = vadd.f32 %v5781, %v5827
        %v5836 = vadd.f32 %v5782, %v5828
        %v5837 = vadd.f32 %v5783, %v5829
        %v5838 = vld [vmem:[%s11] sm:$0x1]
        %v5840 = vlaneseq
        %v5841 = vshrl.u32 %v5840, 7
        %v5842 = vsub.s32 0, %v5841
        %v5843 = vrot.slane %v5838, %v5842
        %v5845 = vadd.f32 %v5830, %v5843
        %v5846 = vadd.f32 %v5831, %v5843
        %v5847 = vadd.f32 %v5832, %v5843
        %v5848 = vadd.f32 %v5833, %v5843
        %v5849 = vadd.f32 %v5834, %v5843
        %v5850 = vadd.f32 %v5835, %v5843
        %v5851 = vadd.f32 %v5836, %v5843
        %v5852 = vadd.f32 %v5837, %v5843
        %v5853 = vxor.u32 %v5845, 2147483648
        %v5854 = vxor.u32 %v5846, 2147483648
        %v5855 = vxor.u32 %v5847, 2147483648
        %v5856 = vxor.u32 %v5848, 2147483648
        %v5857 = vxor.u32 %v5849, 2147483648
        %v5858 = vxor.u32 %v5850, 2147483648
        %v5859 = vxor.u32 %v5851, 2147483648
        %v5860 = vxor.u32 %v5852, 2147483648
        %v5861 = vmul.f32 %v5853, 1.442695
        %v5862 = vpow.pop %v5861
        %v5863 = vmul.f32 %v5854, 1.442695
        %v5864 = vpow.pop %v5863
        %v5865 = vmul.f32 %v5855, 1.442695
        %v5866 = vpow.pop %v5865
        %v5867 = vmul.f32 %v5856, 1.442695
        %v5868 = vpow.pop %v5867
        %v5869 = vmul.f32 %v5857, 1.442695
        %v5870 = vpow.pop %v5869
        %v5871 = vmul.f32 %v5858, 1.442695
        %v5872 = vpow.pop %v5871
        %v5873 = vmul.f32 %v5859, 1.442695
        %v5874 = vpow.pop %v5873
        %v5875 = vmul.f32 %v5860, 1.442695
        %v5876 = vpow.pop %v5875
        %v5877 = vadd.f32 %v5862, 1.0
        %v5878 = vadd.f32 %v5864, 1.0
        %v5879 = vadd.f32 %v5866, 1.0
        %v5880 = vadd.f32 %v5868, 1.0
        %v5881 = vadd.f32 %v5870, 1.0
        %v5882 = vadd.f32 %v5872, 1.0
        %v5883 = vadd.f32 %v5874, 1.0
        %v5884 = vadd.f32 %v5876, 1.0
        %v5885 = vrcp.pop %v5877
        %v5886 = vmul.f32 1.0, %v5885
        %v5887 = vrcp.pop %v5878
        %v5888 = vmul.f32 1.0, %v5887
        %v5889 = vrcp.pop %v5879
        %v5890 = vmul.f32 1.0, %v5889
        %v5891 = vrcp.pop %v5880
        %v5892 = vmul.f32 1.0, %v5891
        %v5893 = vrcp.pop %v5881
        %v5894 = vmul.f32 1.0, %v5893
        %v5895 = vrcp.pop %v5882
        %v5896 = vmul.f32 1.0, %v5895
        %v5897 = vrcp.pop %v5883
        %v5898 = vmul.f32 1.0, %v5897
        %v5899 = vrcp.pop %v5884
        %v5900 = vmul.f32 1.0, %v5899
        %v5901 = vmul.f32 %v5845, %v5886
        %v5902 = vmul.f32 %v5846, %v5888
        %v5903 = vmul.f32 %v5847, %v5890
        %v5904 = vmul.f32 %v5848, %v5892
        %v5905 = vmul.f32 %v5849, %v5894
        %v5906 = vmul.f32 %v5850, %v5896
        %v5907 = vmul.f32 %v5851, %v5898
        %v5908 = vmul.f32 %v5852, %v5900
        %v5909 = vadd.f32 %v5901, %v5902
        %v5910 = vadd.f32 %v5909, %v5903
        %v5911 = vadd.f32 %v5910, %v5904
        %v5912 = vadd.f32 %v5911, %v5905
        %v5913 = vadd.f32 %v5912, %v5906
        %v5914 = vadd.f32 %v5913, %v5907
        %v5915 = vadd.f32 %v5914, %v5908
        %v5916 = vrot.slane %v5915, 4
        %v5917 = vadd.f32 %v5915, %v5916
        %v5918 = vrot.slane %v5917, 2
        %v5919 = vadd.f32 %v5917, %v5918
        %v5920 = vrot.slane %v5919, 1
        %v5921 = vadd.f32 %v5919, %v5920
        %v5922 = vrcp.pop 64.0
        %v5923 = vmul.f32 %v5921, %v5922
        %v5924 = vpack.c.bf16 %v5923, %v5923
        %v5925 = vld [vmem:[%s13] sm:$0xf]
        %v5926 = vld [vmem:[%s13 + $0x4] sm:$0xf]
        %v5927 = vld [vmem:[%s13 + $0x8] sm:$0xf]
        %v5928 = vld [vmem:[%s13 + $0xc] sm:$0xf]
        %v5929 = vld [vmem:[%s13 + $0x10] sm:$0xf]
        %v5930 = vld [vmem:[%s13 + $0x14] sm:$0xf]
        %v5931 = vld [vmem:[%s13 + $0x18] sm:$0xf]
        %v5932 = vld [vmem:[%s13 + $0x1c] sm:$0xf]
        %v5933 = vld [vmem:[%s13 + $0x20] sm:$0xf]
        %v5934 = vld [vmem:[%s13 + $0x24] sm:$0xf]
        %v5935 = vld [vmem:[%s13 + $0x28] sm:$0xf]
        %v5936 = vld [vmem:[%s13 + $0x2c] sm:$0xf]
        %v5937 = vld [vmem:[%s13 + $0x30] sm:$0xf]
        %v5938 = vld [vmem:[%s13 + $0x34] sm:$0xf]
        %v5939 = vld [vmem:[%s13 + $0x38] sm:$0xf]
        %v5940 = vld [vmem:[%s13 + $0x3c] sm:$0xf]
        %v5941 = vld [vmem:[%s15] sm:$0x1]
        %v5958 = vunpack.c.l.b16 %v5925
        %v5959 = vunpack.c.l.b16 %v5926
        %v5960 = vunpack.c.l.b16 %v5927
        %v5961 = vunpack.c.l.b16 %v5928
        %v5962 = vunpack.c.l.b16 %v5929
        %v5963 = vunpack.c.l.b16 %v5930
        %v5964 = vunpack.c.l.b16 %v5931
        %v5965 = vunpack.c.l.b16 %v5932
        %v5966 = vunpack.c.l.b16 %v5933
        %v5967 = vunpack.c.l.b16 %v5934
        %v5968 = vunpack.c.l.b16 %v5935
        %v5969 = vunpack.c.l.b16 %v5936
        %v5970 = vunpack.c.l.b16 %v5937
        %v5971 = vunpack.c.l.b16 %v5938
        %v5972 = vunpack.c.l.b16 %v5939
        %v5973 = vunpack.c.l.b16 %v5940
        %v5974 = vpack.c.b16 %v5959, %v5958
        %v5975 = vpack.c.b16 %v5961, %v5960
        %v5976 = vpack.c.b16 %v5963, %v5962
        %v5977 = vpack.c.b16 %v5965, %v5964
        %v5978 = vpack.c.b16 %v5967, %v5966
        %v5979 = vpack.c.b16 %v5969, %v5968
        %v5980 = vpack.c.b16 %v5971, %v5970
        %v5981 = vpack.c.b16 %v5973, %v5972
        %5990 = vmatprep.subr.bf16.mxu0 0
        %5991 = vmatpush1.bf16.msra.mxu0 %v5974
        %5992 = vmatprep.subr.bf16.mxu0 0
        %5993 = vmatpush1.bf16.msra.mxu0 %v5975
        %5994 = vmatprep.subr.bf16.mxu0 0
        %5995 = vmatpush1.bf16.msra.mxu0 %v5976
        %5996 = vmatprep.subr.bf16.mxu0 0
        %5997 = vmatpush1.bf16.msra.mxu0 %v5977
        %5998 = vmatprep.subr.bf16.mxu0 0
        %5999 = vmatpush1.bf16.msra.mxu0 %v5978
        %6000 = vmatprep.subr.bf16.mxu0 0
        %6001 = vmatpush1.bf16.msra.mxu0 %v5979
        %6002 = vmatprep.subr.bf16.mxu0 0
        %6003 = vmatpush1.bf16.msra.mxu0 %v5980
        %6004 = vmatprep.subr.bf16.mxu0 0
        %6005 = vmatpush1.bf16.msra.mxu0 %v5981
        %6006 = vmatprep.subr.bf16.mxu0 0
        %6007 = vmatpush1.bf16.msra.mxu0 0
        %6008 = vmatprep.subr.bf16.mxu0 0
        %6009 = vmatpush1.bf16.msra.mxu0 0
        %6010 = vmatprep.subr.bf16.mxu0 0
        %6011 = vmatpush1.bf16.msra.mxu0 0
        %6012 = vmatprep.subr.bf16.mxu0 0
        %6013 = vmatpush1.bf16.msra.mxu0 0
        %6014 = vmatprep.subr.bf16.mxu0 0
        %6015 = vmatpush1.bf16.msra.mxu0 0
        %6016 = vmatprep.subr.bf16.mxu0 0
        %6017 = vmatpush1.bf16.msra.mxu0 0
        %6018 = vmatprep.subr.bf16.mxu0 0
        %6019 = vmatpush1.bf16.msra.mxu0 0
        %6020 = vmatprep.subr.bf16.mxu0 0
        %6021 = vmatpush1.bf16.msra.mxu0 0
        %6022 = vmatprep.mubr.bf16.mxu0 0
        %6023 = vmatmul.mubr.bf16.gmra.mrb[0].mxu0 %v5924
        %v6024 = vpop.f32.mrb[0].mxu0
        %v6025 = vadd.f32 %v5941, %v6024
        %v6026 = vpop.f32.mrb[0].mxu0
        %v6027 = vpop.f32.mrb[0].mxu0
        %v6028 = vpop.f32.mrb[0].mxu0
        %6029 = vdwg.mxu0
        %v6030 = vxor.u32 %v6025, 2147483648
        %v6031 = vmul.f32 %v6030, 1.442695
        %v6032 = vpow.pop %v6031
        %v6033 = vadd.f32 %v6032, 1.0
        %v6034 = vrcp.pop %v6033
        %v6035 = vmul.f32 1.0, %v6034
        %v6036 = vmul.f32 %v6025, %v6035
        %v6037 = vpack.c.bf16 %v6036, %v6036
        %v6038 = vld [vmem:[%s17] sm:$0xf]
        %v6039 = vld [vmem:[%s17 + $0x4] sm:$0xf]
        %v6040 = vld [vmem:[%s17 + $0x8] sm:$0xf]
        %v6041 = vld [vmem:[%s17 + $0xc] sm:$0xf]
        %v6042 = vld [vmem:[%s17 + $0x10] sm:$0xf]
        %v6043 = vld [vmem:[%s17 + $0x14] sm:$0xf]
        %v6044 = vld [vmem:[%s17 + $0x18] sm:$0xf]
        %v6045 = vld [vmem:[%s17 + $0x1c] sm:$0xf]
        %v6046 = vld [vmem:[%s17 + $0x20] sm:$0xf]
        %v6047 = vld [vmem:[%s17 + $0x24] sm:$0xf]
        %v6048 = vld [vmem:[%s17 + $0x28] sm:$0xf]
        %v6049 = vld [vmem:[%s17 + $0x2c] sm:$0xf]
        %v6050 = vld [vmem:[%s17 + $0x30] sm:$0xf]
        %v6051 = vld [vmem:[%s17 + $0x34] sm:$0xf]
        %v6052 = vld [vmem:[%s17 + $0x38] sm:$0xf]
        %v6053 = vld [vmem:[%s17 + $0x3c] sm:$0xf]
        %v6054 = vld [vmem:[%s19] sm:$0x1]
        %v6071 = vunpack.c.l.b16 %v6038
        %v6072 = vunpack.c.l.b16 %v6039
        %v6073 = vunpack.c.l.b16 %v6040
        %v6074 = vunpack.c.l.b16 %v6041
        %v6075 = vunpack.c.l.b16 %v6042
        %v6076 = vunpack.c.l.b16 %v6043
        %v6077 = vunpack.c.l.b16 %v6044
        %v6078 = vunpack.c.l.b16 %v6045
        %v6079 = vunpack.c.l.b16 %v6046
        %v6080 = vunpack.c.l.b16 %v6047
        %v6081 = vunpack.c.l.b16 %v6048
        %v6082 = vunpack.c.l.b16 %v6049
        %v6083 = vunpack.c.l.b16 %v6050
        %v6084 = vunpack.c.l.b16 %v6051
        %v6085 = vunpack.c.l.b16 %v6052
        %v6086 = vunpack.c.l.b16 %v6053
        %v6087 = vpack.c.b16 %v6072, %v6071
        %v6088 = vpack.c.b16 %v6074, %v6073
        %v6089 = vpack.c.b16 %v6076, %v6075
        %v6090 = vpack.c.b16 %v6078, %v6077
        %v6091 = vpack.c.b16 %v6080, %v6079
        %v6092 = vpack.c.b16 %v6082, %v6081
        %v6093 = vpack.c.b16 %v6084, %v6083
        %v6094 = vpack.c.b16 %v6086, %v6085
        %6103 = vmatprep.subr.bf16.mxu0 0
        %6104 = vmatpush1.bf16.msra.mxu0 %v6087
        %6105 = vmatprep.subr.bf16.mxu0 0
        %6106 = vmatpush1.bf16.msra.mxu0 %v6088
        %6107 = vmatprep.subr.bf16.mxu0 0
        %6108 = vmatpush1.bf16.msra.mxu0 %v6089
        %6109 = vmatprep.subr.bf16.mxu0 0
        %6110 = vmatpush1.bf16.msra.mxu0 %v6090
        %6111 = vmatprep.subr.bf16.mxu0 0
        %6112 = vmatpush1.bf16.msra.mxu0 %v6091
        %6113 = vmatprep.subr.bf16.mxu0 0
        %6114 = vmatpush1.bf16.msra.mxu0 %v6092
        %6115 = vmatprep.subr.bf16.mxu0 0
        %6116 = vmatpush1.bf16.msra.mxu0 %v6093
        %6117 = vmatprep.subr.bf16.mxu0 0
        %6118 = vmatpush1.bf16.msra.mxu0 %v6094
        %6119 = vmatprep.subr.bf16.mxu0 0
        %6120 = vmatpush1.bf16.msra.mxu0 0
        %6121 = vmatprep.subr.bf16.mxu0 0
        %6122 = vmatpush1.bf16.msra.mxu0 0
        %6123 = vmatprep.subr.bf16.mxu0 0
        %6124 = vmatpush1.bf16.msra.mxu0 0
        %6125 = vmatprep.subr.bf16.mxu0 0
        %6126 = vmatpush1.bf16.msra.mxu0 0
        %6127 = vmatprep.subr.bf16.mxu0 0
        %6128 = vmatpush1.bf16.msra.mxu0 0
        %6129 = vmatprep.subr.bf16.mxu0 0
        %6130 = vmatpush1.bf16.msra.mxu0 0
        %6131 = vmatprep.subr.bf16.mxu0 0
        %6132 = vmatpush1.bf16.msra.mxu0 0
        %6133 = vmatprep.subr.bf16.mxu0 0
        %6134 = vmatpush1.bf16.msra.mxu0 0
        %6135 = vmatprep.mubr.bf16.mxu0 0
        %6136 = vmatmul.mubr.bf16.gmra.mrb[0].mxu0 %v6037
        %v6137 = vpop.f32.mrb[0].mxu0
        %v6138 = vadd.f32 %v6054, %v6137
        %v6139 = vpop.f32.mrb[0].mxu0
        %v6140 = vpop.f32.mrb[0].mxu0
        %v6141 = vpop.f32.mrb[0].mxu0
        %6142 = vdwg.mxu0
        %v6143 = vxor.u32 %v6138, 2147483648
        %v6144 = vmul.f32 %v6143, 1.442695
        %v6145 = vpow.pop %v6144
        %v6146 = vadd.f32 %v6145, 1.0
        %v6147 = vrcp.pop %v6146
        %v6148 = vmul.f32 1.0, %v6147
        %v6149 = vlaneseq
        %v6150 = vshrl.u32 %v6149, 7
        %v6151 = vsub.s32 0, %v6150
        %v6152 = vrot.slane %v6148, %v6151
        %v6153 = vmul.f32 %v5901, %v6152
        %v6154 = vmul.f32 %v5902, %v6152
        %v6155 = vmul.f32 %v5903, %v6152
        %v6156 = vmul.f32 %v5904, %v6152
        %v6157 = vmul.f32 %v5905, %v6152
        %v6158 = vmul.f32 %v5906, %v6152
        %v6159 = vmul.f32 %v5907, %v6152
        %v6160 = vmul.f32 %v5908, %v6152
        %v6161 = vpack.c.bf16 %v6154, %v6153
        %v6162 = vpack.c.bf16 %v6156, %v6155
        %v6163 = vpack.c.bf16 %v6158, %v6157
        %v6164 = vpack.c.bf16 %v6160, %v6159
        %v6165 = vld [vmem:[%s21] sm:$0xf]
        %v6166 = vld [vmem:[%s21 + $0x4] sm:$0xf]
        %v6167 = vld [vmem:[%s21 + $0x8] sm:$0xf]
        %v6168 = vld [vmem:[%s21 + $0xc] sm:$0xf]
        %v6169 = vld [vmem:[%s21 + $0x10] sm:$0xf]
        %v6170 = vld [vmem:[%s21 + $0x14] sm:$0xf]
        %v6171 = vld [vmem:[%s21 + $0x18] sm:$0xf]
        %v6172 = vld [vmem:[%s21 + $0x1c] sm:$0xf]
        %v6173 = vld [vmem:[%s21 + $0x20] sm:$0xf]
        %v6174 = vld [vmem:[%s21 + $0x24] sm:$0xf]
        %v6175 = vld [vmem:[%s21 + $0x28] sm:$0xf]
        %v6176 = vld [vmem:[%s21 + $0x2c] sm:$0xf]
        %v6177 = vld [vmem:[%s21 + $0x30] sm:$0xf]
        %v6178 = vld [vmem:[%s21 + $0x34] sm:$0xf]
        %v6179 = vld [vmem:[%s21 + $0x38] sm:$0xf]
        %v6180 = vld [vmem:[%s21 + $0x3c] sm:$0xf]
        %v6181 = vld [vmem:[%s23] sm:$0x1]
        %v6183 = vlaneseq
        %v6184 = vshrl.u32 %v6183, 7
        %v6185 = vsub.s32 0, %v6184
        %v6186 = vrot.slane %v6181, %v6185
        %v6204 = vunpack.c.l.b16 %v6165
        %v6205 = vunpack.c.l.b16 %v6166
        %v6206 = vunpack.c.l.b16 %v6167
        %v6207 = vunpack.c.l.b16 %v6168
        %v6208 = vunpack.c.l.b16 %v6169
        %v6209 = vunpack.c.l.b16 %v6170
        %v6210 = vunpack.c.l.b16 %v6171
        %v6211 = vunpack.c.l.b16 %v6172
        %v6212 = vunpack.c.l.b16 %v6173
        %v6213 = vunpack.c.l.b16 %v6174
        %v6214 = vunpack.c.l.b16 %v6175
        %v6215 = vunpack.c.l.b16 %v6176
        %v6216 = vunpack.c.l.b16 %v6177
        %v6217 = vunpack.c.l.b16 %v6178
        %v6218 = vunpack.c.l.b16 %v6179
        %v6219 = vunpack.c.l.b16 %v6180
        %v6220 = vpack.c.b16 %v6205, %v6204
        %v6221 = vpack.c.b16 %v6207, %v6206
        %v6222 = vpack.c.b16 %v6209, %v6208
        %v6223 = vpack.c.b16 %v6211, %v6210
        %v6224 = vpack.c.b16 %v6213, %v6212
        %v6225 = vpack.c.b16 %v6215, %v6214
        %v6226 = vpack.c.b16 %v6217, %v6216
        %v6227 = vpack.c.b16 %v6219, %v6218
        %6236 = vmatprep.subr.bf16.mxu0 0
        %6237 = vmatpush1.bf16.msra.mxu0 %v6220
        %6238 = vmatprep.subr.bf16.mxu0 0
        %6239 = vmatpush1.bf16.msra.mxu0 %v6221
        %6240 = vmatprep.subr.bf16.mxu0 0
        %6241 = vmatpush1.bf16.msra.mxu0 %v6222
        %6242 = vmatprep.subr.bf16.mxu0 0
        %6243 = vmatpush1.bf16.msra.mxu0 %v6223
        %6244 = vmatprep.subr.bf16.mxu0 0
        %6245 = vmatpush1.bf16.msra.mxu0 %v6224
        %6246 = vmatprep.subr.bf16.mxu0 0
        %6247 = vmatpush1.bf16.msra.mxu0 %v6225
        %6248 = vmatprep.subr.bf16.mxu0 0
        %6249 = vmatpush1.bf16.msra.mxu0 %v6226
        %6250 = vmatprep.subr.bf16.mxu0 0
        %6251 = vmatpush1.bf16.msra.mxu0 %v6227
        %6252 = vmatprep.subr.bf16.mxu0 0
        %6253 = vmatpush1.bf16.msra.mxu0 0
        %6254 = vmatprep.subr.bf16.mxu0 0
        %6255 = vmatpush1.bf16.msra.mxu0 0
        %6256 = vmatprep.subr.bf16.mxu0 0
        %6257 = vmatpush1.bf16.msra.mxu0 0
        %6258 = vmatprep.subr.bf16.mxu0 0
        %6259 = vmatpush1.bf16.msra.mxu0 0
        %6260 = vmatprep.subr.bf16.mxu0 0
        %6261 = vmatpush1.bf16.msra.mxu0 0
        %6262 = vmatprep.subr.bf16.mxu0 0
        %6263 = vmatpush1.bf16.msra.mxu0 0
        %6264 = vmatprep.subr.bf16.mxu0 0
        %6265 = vmatpush1.bf16.msra.mxu0 0
        %6266 = vmatprep.subr.bf16.mxu0 0
        %6267 = vmatpush1.bf16.msra.mxu0 0
        %6268 = vmatprep.mubr.bf16.mxu0 0
        %6269 = vmatmul.mubr.bf16.gmra.mrb[0].mxu0 %v6161
        %v6270 = vpop.f32.mrb[0].mxu0
        %v6271 = vadd.f32 %v6186, %v6270
        %v6272 = vpop.f32.mrb[0].mxu0
        %v6273 = vpop.f32.mrb[0].mxu0
        %v6274 = vadd.f32 %v6186, %v6273
        %v6275 = vpop.f32.mrb[0].mxu0
        %6276 = vmatprep.mubr.bf16.mxu0 0
        %6277 = vmatmul.mubr.bf16.gmra.mrb[0].mxu0 %v6162
        %v6278 = vpop.f32.mrb[0].mxu0
        %v6279 = vadd.f32 %v6186, %v6278
        %v6280 = vpop.f32.mrb[0].mxu0
        %v6281 = vpop.f32.mrb[0].mxu0
        %v6282 = vadd.f32 %v6186, %v6281
        %v6283 = vpop.f32.mrb[0].mxu0
        %6284 = vmatprep.mubr.bf16.mxu0 0
        %6285 = vmatmul.mubr.bf16.gmra.mrb[0].mxu0 %v6163
        %v6286 = vpop.f32.mrb[0].mxu0
        %v6287 = vadd.f32 %v6186, %v6286
        %v6288 = vpop.f32.mrb[0].mxu0
        %v6289 = vpop.f32.mrb[0].mxu0
        %v6290 = vadd.f32 %v6186, %v6289
        %v6291 = vpop.f32.mrb[0].mxu0
        %6292 = vmatprep.mubr.bf16.mxu0 0
        %6293 = vmatmul.mubr.bf16.gmra.mrb[0].mxu0 %v6164
        %v6294 = vpop.f32.mrb[0].mxu0
        %v6295 = vadd.f32 %v6186, %v6294
        %v6296 = vpop.f32.mrb[0].mxu0
        %v6297 = vpop.f32.mrb[0].mxu0
        %v6298 = vadd.f32 %v6186, %v6297
        %v6299 = vpop.f32.mrb[0].mxu0
        %6300 = vdwg.mxu0
        %v6301 = vadd.f32 %v6271, %v5309
        %v6302 = vadd.f32 %v6274, %v5312
        %v6303 = vadd.f32 %v6279, %v5317
        %v6304 = vadd.f32 %v6282, %v5320
        %v6305 = vadd.f32 %v6287, %v5325
        %v6306 = vadd.f32 %v6290, %v5328
        %v6307 = vadd.f32 %v6295, %v5333
        %v6308 = vadd.f32 %v6298, %v5336
        %v6309 = vpack.c.bf16 %v6302, %v6301
        %v6310 = vpack.c.bf16 %v6304, %v6303
        %v6311 = vpack.c.bf16 %v6306, %v6305
        %v6312 = vpack.c.bf16 %v6308, %v6307
        %v6313 = vld [vmem:[%s25] sm:$0xf]
        %v6314 = vld [vmem:[%s25 + $0x4] sm:$0xf]
        %v6315 = vld [vmem:[%s25 + $0x8] sm:$0xf]
        %v6316 = vld [vmem:[%s25 + $0xc] sm:$0xf]
        %v6317 = vld [vmem:[%s25 + $0x10] sm:$0xf]
        %v6318 = vld [vmem:[%s25 + $0x14] sm:$0xf]
        %v6319 = vld [vmem:[%s25 + $0x18] sm:$0xf]
        %v6320 = vld [vmem:[%s25 + $0x1c] sm:$0xf]
        %v6321 = vld [vmem:[%s25 + $0x20] sm:$0xf]
        %v6322 = vld [vmem:[%s25 + $0x24] sm:$0xf]
        %v6323 = vld [vmem:[%s25 + $0x28] sm:$0xf]
        %v6324 = vld [vmem:[%s25 + $0x2c] sm:$0xf]
        %v6325 = vld [vmem:[%s25 + $0x30] sm:$0xf]
        %v6326 = vld [vmem:[%s25 + $0x34] sm:$0xf]
        %v6327 = vld [vmem:[%s25 + $0x38] sm:$0xf]
        %v6328 = vld [vmem:[%s25 + $0x3c] sm:$0xf]
        %v6329 = vld [vmem:[%s27] sm:$0x1]
        %v6331 = vlaneseq
        %v6332 = vshrl.u32 %v6331, 7
        %v6333 = vsub.s32 0, %v6332
        %v6334 = vrot.slane %v6329, %v6333
        %v6352 = vunpack.c.l.b16 %v6313
        %v6353 = vunpack.c.l.b16 %v6314
        %v6354 = vunpack.c.l.b16 %v6315
        %v6355 = vunpack.c.l.b16 %v6316
        %v6356 = vunpack.c.l.b16 %v6317
        %v6357 = vunpack.c.l.b16 %v6318
        %v6358 = vunpack.c.l.b16 %v6319
        %v6359 = vunpack.c.l.b16 %v6320
        %v6360 = vunpack.c.l.b16 %v6321
        %v6361 = vunpack.c.l.b16 %v6322
        %v6362 = vunpack.c.l.b16 %v6323
        %v6363 = vunpack.c.l.b16 %v6324
        %v6364 = vunpack.c.l.b16 %v6325
        %v6365 = vunpack.c.l.b16 %v6326
        %v6366 = vunpack.c.l.b16 %v6327
        %v6367 = vunpack.c.l.b16 %v6328
        %v6368 = vpack.c.b16 %v6353, %v6352
        %v6369 = vpack.c.b16 %v6355, %v6354
        %v6370 = vpack.c.b16 %v6357, %v6356
        %v6371 = vpack.c.b16 %v6359, %v6358
        %v6372 = vpack.c.b16 %v6361, %v6360
        %v6373 = vpack.c.b16 %v6363, %v6362
        %v6374 = vpack.c.b16 %v6365, %v6364
        %v6375 = vpack.c.b16 %v6367, %v6366
        %6384 = vmatprep.subr.bf16.mxu0 0
        %6385 = vmatpush1.bf16.msra.mxu0 %v6368
        %6386 = vmatprep.subr.bf16.mxu0 0
        %6387 = vmatpush1.bf16.msra.mxu0 %v6369
        %6388 = vmatprep.subr.bf16.mxu0 0
        %6389 = vmatpush1.bf16.msra.mxu0 %v6370
        %6390 = vmatprep.subr.bf16.mxu0 0
        %6391 = vmatpush1.bf16.msra.mxu0 %v6371
        %6392 = vmatprep.subr.bf16.mxu0 0
        %6393 = vmatpush1.bf16.msra.mxu0 %v6372
        %6394 = vmatprep.subr.bf16.mxu0 0
        %6395 = vmatpush1.bf16.msra.mxu0 %v6373
        %6396 = vmatprep.subr.bf16.mxu0 0
        %6397 = vmatpush1.bf16.msra.mxu0 %v6374
        %6398 = vmatprep.subr.bf16.mxu0 0
        %6399 = vmatpush1.bf16.msra.mxu0 %v6375
        %6400 = vmatprep.subr.bf16.mxu0 0
        %6401 = vmatpush1.bf16.msra.mxu0 0
        %6402 = vmatprep.subr.bf16.mxu0 0
        %6403 = vmatpush1.bf16.msra.mxu0 0
        %6404 = vmatprep.subr.bf16.mxu0 0
        %6405 = vmatpush1.bf16.msra.mxu0 0
        %6406 = vmatprep.subr.bf16.mxu0 0
        %6407 = vmatpush1.bf16.msra.mxu0 0
        %6408 = vmatprep.subr.bf16.mxu0 0
        %6409 = vmatpush1.bf16.msra.mxu0 0
        %6410 = vmatprep.subr.bf16.mxu0 0
        %6411 = vmatpush1.bf16.msra.mxu0 0
        %6412 = vmatprep.subr.bf16.mxu0 0
        %6413 = vmatpush1.bf16.msra.mxu0 0
        %6414 = vmatprep.subr.bf16.mxu0 0
        %6415 = vmatpush1.bf16.msra.mxu0 0
        %6416 = vmatprep.mubr.bf16.mxu0 0
        %6417 = vmatmul.mubr.bf16.gmra.mrb[0].mxu0 %v6309
        %v6418 = vpop.f32.mrb[0].mxu0
        %v6419 = vadd.f32 %v6334, %v6418
        %v6420 = vpop.f32.mrb[0].mxu0
        %v6421 = vpop.f32.mrb[0].mxu0
        %v6422 = vadd.f32 %v6334, %v6421
        %v6423 = vpop.f32.mrb[0].mxu0
        %6424 = vmatprep.mubr.bf16.mxu0 0
        %6425 = vmatmul.mubr.bf16.gmra.mrb[0].mxu0 %v6310
        %v6426 = vpop.f32.mrb[0].mxu0
        %v6427 = vadd.f32 %v6334, %v6426
        %v6428 = vpop.f32.mrb[0].mxu0
        %v6429 = vpop.f32.mrb[0].mxu0
        %v6430 = vadd.f32 %v6334, %v6429
        %v6431 = vpop.f32.mrb[0].mxu0
        %6432 = vmatprep.mubr.bf16.mxu0 0
        %6433 = vmatmul.mubr.bf16.gmra.mrb[0].mxu0 %v6311
        %v6434 = vpop.f32.mrb[0].mxu0
        %v6435 = vadd.f32 %v6334, %v6434
        %v6436 = vpop.f32.mrb[0].mxu0
        %v6437 = vpop.f32.mrb[0].mxu0
        %v6438 = vadd.f32 %v6334, %v6437
        %v6439 = vpop.f32.mrb[0].mxu0
        %6440 = vmatprep.mubr.bf16.mxu0 0
        %6441 = vmatmul.mubr.bf16.gmra.mrb[0].mxu0 %v6312
        %v6442 = vpop.f32.mrb[0].mxu0
        %v6443 = vadd.f32 %v6334, %v6442
        %v6444 = vpop.f32.mrb[0].mxu0
        %v6445 = vpop.f32.mrb[0].mxu0
        %v6446 = vadd.f32 %v6334, %v6445
        %v6447 = vpop.f32.mrb[0].mxu0
        %6448 = vdwg.mxu0
        %v6449 = vxor.u32 %v6419, 2147483648
        %v6450 = vxor.u32 %v6422, 2147483648
        %v6451 = vxor.u32 %v6427, 2147483648
        %v6452 = vxor.u32 %v6430, 2147483648
        %v6453 = vxor.u32 %v6435, 2147483648
        %v6454 = vxor.u32 %v6438, 2147483648
        %v6455 = vxor.u32 %v6443, 2147483648
        %v6456 = vxor.u32 %v6446, 2147483648
        %v6457 = vmul.f32 %v6449, 1.442695
        %v6458 = vpow.pop %v6457
        %v6459 = vmul.f32 %v6450, 1.442695
        %v6460 = vpow.pop %v6459
        %v6461 = vmul.f32 %v6451, 1.442695
        %v6462 = vpow.pop %v6461
        %v6463 = vmul.f32 %v6452, 1.442695
        %v6464 = vpow.pop %v6463
        %v6465 = vmul.f32 %v6453, 1.442695
        %v6466 = vpow.pop %v6465
        %v6467 = vmul.f32 %v6454, 1.442695
        %v6468 = vpow.pop %v6467
        %v6469 = vmul.f32 %v6455, 1.442695
        %v6470 = vpow.pop %v6469
        %v6471 = vmul.f32 %v6456, 1.442695
        %v6472 = vpow.pop %v6471
        %v6473 = vadd.f32 %v6458, 1.0
        %v6474 = vadd.f32 %v6460, 1.0
        %v6475 = vadd.f32 %v6462, 1.0
        %v6476 = vadd.f32 %v6464, 1.0
        %v6477 = vadd.f32 %v6466, 1.0
        %v6478 = vadd.f32 %v6468, 1.0
        %v6479 = vadd.f32 %v6470, 1.0
        %v6480 = vadd.f32 %v6472, 1.0
        %v6481 = vrcp.pop %v6473
        %v6482 = vmul.f32 1.0, %v6481
        %v6483 = vrcp.pop %v6474
        %v6484 = vmul.f32 1.0, %v6483
        %v6485 = vrcp.pop %v6475
        %v6486 = vmul.f32 1.0, %v6485
        %v6487 = vrcp.pop %v6476
        %v6488 = vmul.f32 1.0, %v6487
        %v6489 = vrcp.pop %v6477
        %v6490 = vmul.f32 1.0, %v6489
        %v6491 = vrcp.pop %v6478
        %v6492 = vmul.f32 1.0, %v6491
        %v6493 = vrcp.pop %v6479
        %v6494 = vmul.f32 1.0, %v6493
        %v6495 = vrcp.pop %v6480
        %v6496 = vmul.f32 1.0, %v6495
        %v6497 = vmul.f32 %v6419, %v6482
        %v6498 = vmul.f32 %v6422, %v6484
        %v6499 = vmul.f32 %v6427, %v6486
        %v6500 = vmul.f32 %v6430, %v6488
        %v6501 = vmul.f32 %v6435, %v6490
        %v6502 = vmul.f32 %v6438, %v6492
        %v6503 = vmul.f32 %v6443, %v6494
        %v6504 = vmul.f32 %v6446, %v6496
        %6505 = vst [vmem:[#allocation2 + $0x11] sm:$0xff] %v6497
        %6506 = vst [vmem:[#allocation2 + $0x19] sm:$0xff] %v6498
        %6507 = vst [vmem:[#allocation2 + $0x21] sm:$0xff] %v6499
        %6508 = vst [vmem:[#allocation2 + $0x29] sm:$0xff] %v6500
        %6509 = vst [vmem:[#allocation2 + $0x31] sm:$0xff] %v6501
        %6510 = vst [vmem:[#allocation2 + $0x39] sm:$0xff] %v6502
        %6511 = vst [vmem:[#allocation2 + $0x41] sm:$0xff] %v6503
        %6512 = vst [vmem:[#allocation2 + $0x49] sm:$0xff] %v6504
        %v6513 = vld [vmem:[#allocation2 + $0x8] sm:$0xff]
        %v6514 = vld [vmem:[#allocation2 + $0x10] sm:$0xff]
        %v6515 = vld [vmem:[#allocation2 + $0x18] sm:$0xff]
        %v6516 = vld [vmem:[#allocation2 + $0x20] sm:$0xff]
        %v6517 = vld [vmem:[#allocation2 + $0x28] sm:$0xff]
        %v6518 = vld [vmem:[#allocation2 + $0x30] sm:$0xff]
        %v6519 = vld [vmem:[#allocation2 + $0x38] sm:$0xff]
        %v6520 = vld [vmem:[#allocation2 + $0x40] sm:$0xff]
        %v6521 = vsel %vm5419, %v6513, 0.0
        %v6522 = vsel %vm5420, %v6514, 0.0
        %v6523 = vsel %vm5421, %v6515, 0.0
        %v6524 = vsel %vm5422, %v6516, 0.0
        %v6525 = vsel %vm5423, %v6517, 0.0
        %v6526 = vsel %vm5424, %v6518, 0.0
        %v6527 = vsel %vm5425, %v6519, 0.0
        %v6528 = vsel %vm5426, %v6520, 0.0
        %v6529 = vld [vmem:[%s29] sm:$0x1]
        %v6530 = vlaneseq
        %v6531 = vshrl.u32 %v6530, 7
        %v6532 = vsub.s32 0, %v6531
        %v6533 = vrot.slane %v6529, %v6532
        %v6534 = vmul.f32 %v6521, %v6533
        %v6535 = vmul.f32 %v6522, %v6533
        %v6536 = vmul.f32 %v6523, %v6533
        %v6537 = vmul.f32 %v6524, %v6533
        %v6538 = vmul.f32 %v6525, %v6533
        %v6539 = vmul.f32 %v6526, %v6533
        %v6540 = vmul.f32 %v6527, %v6533
        %v6541 = vmul.f32 %v6528, %v6533
        %v6542 = vadd.f32 %v6534, 0.0
        %v6543 = vadd.f32 %v6535, 0.0
        %v6544 = vadd.f32 %v6536, 0.0
        %v6545 = vadd.f32 %v6537, 0.0
        %v6546 = vadd.f32 %v6538, 0.0
        %v6547 = vadd.f32 %v6539, 0.0
        %v6548 = vadd.f32 %v6540, 0.0
        %v6549 = vadd.f32 %v6541, 0.0
        %v6550 = vld [vmem:[#allocation2 + $0x9] sm:$0xff]
        %v6551 = vld [vmem:[#allocation2 + $0x11] sm:$0xff]
        %v6552 = vld [vmem:[#allocation2 + $0x19] sm:$0xff]
        %v6553 = vld [vmem:[#allocation2 + $0x21] sm:$0xff]
        %v6554 = vld [vmem:[#allocation2 + $0x29] sm:$0xff]
        %v6555 = vld [vmem:[#allocation2 + $0x31] sm:$0xff]
        %v6556 = vld [vmem:[#allocation2 + $0x39] sm:$0xff]
        %v6557 = vld [vmem:[#allocation2 + $0x41] sm:$0xff]
        %v6558 = vsel %vm5472, %v6550, 0.0
        %v6559 = vsel %vm5473, %v6551, 0.0
        %v6560 = vsel %vm5474, %v6552, 0.0
        %v6561 = vsel %vm5475, %v6553, 0.0
        %v6562 = vsel %vm5476, %v6554, 0.0
        %v6563 = vsel %vm5477, %v6555, 0.0
        %v6564 = vsel %vm5478, %v6556, 0.0
        %v6565 = vsel %vm5479, %v6557, 0.0
        %v6566 = vld [vmem:[%s29 + $0x1] sm:$0x1]
        %v6567 = vlaneseq
        %v6568 = vshrl.u32 %v6567, 7
        %v6569 = vsub.s32 0, %v6568
        %v6570 = vrot.slane %v6566, %v6569
        %v6571 = vmul.f32 %v6558, %v6570
        %v6572 = vmul.f32 %v6559, %v6570
        %v6573 = vmul.f32 %v6560, %v6570
        %v6574 = vmul.f32 %v6561, %v6570
        %v6575 = vmul.f32 %v6562, %v6570
        %v6576 = vmul.f32 %v6563, %v6570
        %v6577 = vmul.f32 %v6564, %v6570
        %v6578 = vmul.f32 %v6565, %v6570
        %v6579 = vadd.f32 %v6542, %v6571
        %v6580 = vadd.f32 %v6543, %v6572
        %v6581 = vadd.f32 %v6544, %v6573
        %v6582 = vadd.f32 %v6545, %v6574
        %v6583 = vadd.f32 %v6546, %v6575
        %v6584 = vadd.f32 %v6547, %v6576
        %v6585 = vadd.f32 %v6548, %v6577
        %v6586 = vadd.f32 %v6549, %v6578
        %v6587 = vld [vmem:[#allocation2 + $0xa] sm:$0xff]
        %v6588 = vld [vmem:[#allocation2 + $0x12] sm:$0xff]
        %v6589 = vld [vmem:[#allocation2 + $0x1a] sm:$0xff]
        %v6590 = vld [vmem:[#allocation2 + $0x22] sm:$0xff]
        %v6591 = vld [vmem:[#allocation2 + $0x2a] sm:$0xff]
        %v6592 = vld [vmem:[#allocation2 + $0x32] sm:$0xff]
        %v6593 = vld [vmem:[#allocation2 + $0x3a] sm:$0xff]
        %v6594 = vld [vmem:[#allocation2 + $0x42] sm:$0xff]
        %v6595 = vsel %vm5533, %v6587, 0.0
        %v6596 = vsel %vm5534, %v6588, 0.0
        %v6597 = vsel %vm5535, %v6589, 0.0
        %v6598 = vsel %vm5536, %v6590, 0.0
        %v6599 = vsel %vm5537, %v6591, 0.0
        %v6600 = vsel %vm5538, %v6592, 0.0
        %v6601 = vsel %vm5539, %v6593, 0.0
        %v6602 = vsel %vm5540, %v6594, 0.0
        %v6603 = vld [vmem:[%s29 + $0x2] sm:$0x1]
        %v6604 = vlaneseq
        %v6605 = vshrl.u32 %v6604, 7
        %v6606 = vsub.s32 0, %v6605
        %v6607 = vrot.slane %v6603, %v6606
        %v6608 = vmul.f32 %v6595, %v6607
        %v6609 = vmul.f32 %v6596, %v6607
        %v6610 = vmul.f32 %v6597, %v6607
        %v6611 = vmul.f32 %v6598, %v6607
        %v6612 = vmul.f32 %v6599, %v6607
        %v6613 = vmul.f32 %v6600, %v6607
        %v6614 = vmul.f32 %v6601, %v6607
        %v6615 = vmul.f32 %v6602, %v6607
        %v6616 = vadd.f32 %v6579, %v6608
        %v6617 = vadd.f32 %v6580, %v6609
        %v6618 = vadd.f32 %v6581, %v6610
        %v6619 = vadd.f32 %v6582, %v6611
        %v6620 = vadd.f32 %v6583, %v6612
        %v6621 = vadd.f32 %v6584, %v6613
        %v6622 = vadd.f32 %v6585, %v6614
        %v6623 = vadd.f32 %v6586, %v6615
        %v6624 = vld [vmem:[#allocation2 + $0x48] sm:$0xff]
        %v6625 = vsel %vm5579, %v6514, 0.0
        %v6626 = vsel %vm5580, %v6515, 0.0
        %v6627 = vsel %vm5581, %v6516, 0.0
        %v6628 = vsel %vm5582, %v6517, 0.0
        %v6629 = vsel %vm5583, %v6518, 0.0
        %v6630 = vsel %vm5584, %v6519, 0.0
        %v6631 = vsel %vm5585, %v6520, 0.0
        %v6632 = vsel %vm5586, %v6624, 0.0
        %v6633 = vld [vmem:[%s29 + $0x3] sm:$0x1]
        %v6634 = vlaneseq
        %v6635 = vshrl.u32 %v6634, 7
        %v6636 = vsub.s32 0, %v6635
        %v6637 = vrot.slane %v6633, %v6636
        %v6638 = vmul.f32 %v6625, %v6637
        %v6639 = vmul.f32 %v6626, %v6637
        %v6640 = vmul.f32 %v6627, %v6637
        %v6641 = vmul.f32 %v6628, %v6637
        %v6642 = vmul.f32 %v6629, %v6637
        %v6643 = vmul.f32 %v6630, %v6637
        %v6644 = vmul.f32 %v6631, %v6637
        %v6645 = vmul.f32 %v6632, %v6637
        %v6646 = vadd.f32 %v6616, %v6638
        %v6647 = vadd.f32 %v6617, %v6639
        %v6648 = vadd.f32 %v6618, %v6640
        %v6649 = vadd.f32 %v6619, %v6641
        %v6650 = vadd.f32 %v6620, %v6642
        %v6651 = vadd.f32 %v6621, %v6643
        %v6652 = vadd.f32 %v6622, %v6644
        %v6653 = vadd.f32 %v6623, %v6645
        %v6654 = vld [vmem:[#allocation2 + $0x49] sm:$0xff]
        %v6655 = vld [vmem:[%s29 + $0x4] sm:$0x1]
        %v6656 = vlaneseq
        %v6657 = vshrl.u32 %v6656, 7
        %v6658 = vsub.s32 0, %v6657
        %v6659 = vrot.slane %v6655, %v6658
        %v6660 = vmul.f32 %v6551, %v6659
        %v6661 = vmul.f32 %v6552, %v6659
        %v6662 = vmul.f32 %v6553, %v6659
        %v6663 = vmul.f32 %v6554, %v6659
        %v6664 = vmul.f32 %v6555, %v6659
        %v6665 = vmul.f32 %v6556, %v6659
        %v6666 = vmul.f32 %v6557, %v6659
        %v6667 = vmul.f32 %v6654, %v6659
        %v6668 = vadd.f32 %v6646, %v6660
        %v6669 = vadd.f32 %v6647, %v6661
        %v6670 = vadd.f32 %v6648, %v6662
        %v6671 = vadd.f32 %v6649, %v6663
        %v6672 = vadd.f32 %v6650, %v6664
        %v6673 = vadd.f32 %v6651, %v6665
        %v6674 = vadd.f32 %v6652, %v6666
        %v6675 = vadd.f32 %v6653, %v6667
        %v6676 = vld [vmem:[#allocation2 + $0x4a] sm:$0xff]
        %v6677 = vsel %vm5647, %v6588, 0.0
        %v6678 = vsel %vm5648, %v6589, 0.0
        %v6679 = vsel %vm5649, %v6590, 0.0
        %v6680 = vsel %vm5650, %v6591, 0.0
        %v6681 = vsel %vm5651, %v6592, 0.0
        %v6682 = vsel %vm5652, %v6593, 0.0
        %v6683 = vsel %vm5653, %v6594, 0.0
        %v6684 = vsel %vm5654, %v6676, 0.0
        %v6685 = vld [vmem:[%s29 + $0x5] sm:$0x1]
        %v6686 = vlaneseq
        %v6687 = vshrl.u32 %v6686, 7
        %v6688 = vsub.s32 0, %v6687
        %v6689 = vrot.slane %v6685, %v6688
        %v6690 = vmul.f32 %v6677, %v6689
        %v6691 = vmul.f32 %v6678, %v6689
        %v6692 = vmul.f32 %v6679, %v6689
        %v6693 = vmul.f32 %v6680, %v6689
        %v6694 = vmul.f32 %v6681, %v6689
        %v6695 = vmul.f32 %v6682, %v6689
        %v6696 = vmul.f32 %v6683, %v6689
        %v6697 = vmul.f32 %v6684, %v6689
        %v6698 = vadd.f32 %v6668, %v6690
        %v6699 = vadd.f32 %v6669, %v6691
        %v6700 = vadd.f32 %v6670, %v6692
        %v6701 = vadd.f32 %v6671, %v6693
        %v6702 = vadd.f32 %v6672, %v6694
        %v6703 = vadd.f32 %v6673, %v6695
        %v6704 = vadd.f32 %v6674, %v6696
        %v6705 = vadd.f32 %v6675, %v6697
        %v6706 = vld [vmem:[#allocation2 + $0x50] sm:$0xff]
        %v6707 = vsel %vm5701, %v6515, 0.0
        %v6708 = vsel %vm5702, %v6516, 0.0
        %v6709 = vsel %vm5703, %v6517, 0.0
        %v6710 = vsel %vm5704, %v6518, 0.0
        %v6711 = vsel %vm5705, %v6519, 0.0
        %v6712 = vsel %vm5706, %v6520, 0.0
        %v6713 = vsel %vm5707, %v6624, 0.0
        %v6714 = vsel %vm5708, %v6706, 0.0
        %v6715 = vld [vmem:[%s29 + $0x6] sm:$0x1]
        %v6716 = vlaneseq
        %v6717 = vshrl.u32 %v6716, 7
        %v6718 = vsub.s32 0, %v6717
        %v6719 = vrot.slane %v6715, %v6718
        %v6720 = vmul.f32 %v6707, %v6719
        %v6721 = vmul.f32 %v6708, %v6719
        %v6722 = vmul.f32 %v6709, %v6719
        %v6723 = vmul.f32 %v6710, %v6719
        %v6724 = vmul.f32 %v6711, %v6719
        %v6725 = vmul.f32 %v6712, %v6719
        %v6726 = vmul.f32 %v6713, %v6719
        %v6727 = vmul.f32 %v6714, %v6719
        %v6728 = vadd.f32 %v6698, %v6720
        %v6729 = vadd.f32 %v6699, %v6721
        %v6730 = vadd.f32 %v6700, %v6722
        %v6731 = vadd.f32 %v6701, %v6723
        %v6732 = vadd.f32 %v6702, %v6724
        %v6733 = vadd.f32 %v6703, %v6725
        %v6734 = vadd.f32 %v6704, %v6726
        %v6735 = vadd.f32 %v6705, %v6727
        %v6736 = vld [vmem:[#allocation2 + $0x51] sm:$0xff]
        %v6737 = vsel %vm5747, %v6552, 0.0
        %v6738 = vsel %vm5748, %v6553, 0.0
        %v6739 = vsel %vm5749, %v6554, 0.0
        %v6740 = vsel %vm5750, %v6555, 0.0
        %v6741 = vsel %vm5751, %v6556, 0.0
        %v6742 = vsel %vm5752, %v6557, 0.0
        %v6743 = vsel %vm5753, %v6654, 0.0
        %v6744 = vsel %vm5754, %v6736, 0.0
        %v6745 = vld [vmem:[%s29 + $0x7] sm:$0x1]
        %v6746 = vlaneseq
        %v6747 = vshrl.u32 %v6746, 7
        %v6748 = vsub.s32 0, %v6747
        %v6749 = vrot.slane %v6745, %v6748
        %v6750 = vmul.f32 %v6737, %v6749
        %v6751 = vmul.f32 %v6738, %v6749
        %v6752 = vmul.f32 %v6739, %v6749
        %v6753 = vmul.f32 %v6740, %v6749
        %v6754 = vmul.f32 %v6741, %v6749
        %v6755 = vmul.f32 %v6742, %v6749
        %v6756 = vmul.f32 %v6743, %v6749
        %v6757 = vmul.f32 %v6744, %v6749
        %v6758 = vadd.f32 %v6728, %v6750
        %v6759 = vadd.f32 %v6729, %v6751
        %v6760 = vadd.f32 %v6730, %v6752
        %v6761 = vadd.f32 %v6731, %v6753
        %v6762 = vadd.f32 %v6732, %v6754
        %v6763 = vadd.f32 %v6733, %v6755
        %v6764 = vadd.f32 %v6734, %v6756
        %v6765 = vadd.f32 %v6735, %v6757
        %v6766 = vld [vmem:[#allocation2 + $0x52] sm:$0xff]
        %v6767 = vsel %vm5801, %v6589, 0.0
        %v6768 = vsel %vm5802, %v6590, 0.0
        %v6769 = vsel %vm5803, %v6591, 0.0
        %v6770 = vsel %vm5804, %v6592, 0.0
        %v6771 = vsel %vm5805, %v6593, 0.0
        %v6772 = vsel %vm5806, %v6594, 0.0
        %v6773 = vsel %vm5807, %v6676, 0.0
        %v6774 = vsel %vm5808, %v6766, 0.0
        %v6775 = vld [vmem:[%s29 + $0x8] sm:$0x1]
        %v6776 = vlaneseq
        %v6777 = vshrl.u32 %v6776, 7
        %v6778 = vsub.s32 0, %v6777
        %v6779 = vrot.slane %v6775, %v6778
        %v6780 = vmul.f32 %v6767, %v6779
        %v6781 = vmul.f32 %v6768, %v6779
        %v6782 = vmul.f32 %v6769, %v6779
        %v6783 = vmul.f32 %v6770, %v6779
        %v6784 = vmul.f32 %v6771, %v6779
        %v6785 = vmul.f32 %v6772, %v6779
        %v6786 = vmul.f32 %v6773, %v6779
        %v6787 = vmul.f32 %v6774, %v6779
        %v6788 = vadd.f32 %v6758, %v6780
        %v6789 = vadd.f32 %v6759, %v6781
        %v6790 = vadd.f32 %v6760, %v6782
        %v6791 = vadd.f32 %v6761, %v6783
        %v6792 = vadd.f32 %v6762, %v6784
        %v6793 = vadd.f32 %v6763, %v6785
        %v6794 = vadd.f32 %v6764, %v6786
        %v6795 = vadd.f32 %v6765, %v6787
        %v6796 = vld [vmem:[%s31] sm:$0x1]
        %v6798 = vlaneseq
        %v6799 = vshrl.u32 %v6798, 7
        %v6800 = vsub.s32 0, %v6799
        %v6801 = vrot.slane %v6796, %v6800
        %v6803 = vadd.f32 %v6788, %v6801
        %v6804 = vadd.f32 %v6789, %v6801
        %v6805 = vadd.f32 %v6790, %v6801
        %v6806 = vadd.f32 %v6791, %v6801
        %v6807 = vadd.f32 %v6792, %v6801
        %v6808 = vadd.f32 %v6793, %v6801
        %v6809 = vadd.f32 %v6794, %v6801
        %v6810 = vadd.f32 %v6795, %v6801
        %v6811 = vxor.u32 %v6803, 2147483648
        %v6812 = vxor.u32 %v6804, 2147483648
        %v6813 = vxor.u32 %v6805, 2147483648
        %v6814 = vxor.u32 %v6806, 2147483648
        %v6815 = vxor.u32 %v6807, 2147483648
        %v6816 = vxor.u32 %v6808, 2147483648
        %v6817 = vxor.u32 %v6809, 2147483648
        %v6818 = vxor.u32 %v6810, 2147483648
        %v6819 = vmul.f32 %v6811, 1.442695
        %v6820 = vpow.pop %v6819
        %v6821 = vmul.f32 %v6812, 1.442695
        %v6822 = vpow.pop %v6821
        %v6823 = vmul.f32 %v6813, 1.442695
        %v6824 = vpow.pop %v6823
        %v6825 = vmul.f32 %v6814, 1.442695
        %v6826 = vpow.pop %v6825
        %v6827 = vmul.f32 %v6815, 1.442695
        %v6828 = vpow.pop %v6827
        %v6829 = vmul.f32 %v6816, 1.442695
        %v6830 = vpow.pop %v6829
        %v6831 = vmul.f32 %v6817, 1.442695
        %v6832 = vpow.pop %v6831
        %v6833 = vmul.f32 %v6818, 1.442695
        %v6834 = vpow.pop %v6833
        %v6835 = vadd.f32 %v6820, 1.0
        %v6836 = vadd.f32 %v6822, 1.0
        %v6837 = vadd.f32 %v6824, 1.0
        %v6838 = vadd.f32 %v6826, 1.0
        %v6839 = vadd.f32 %v6828, 1.0
        %v6840 = vadd.f32 %v6830, 1.0
        %v6841 = vadd.f32 %v6832, 1.0
        %v6842 = vadd.f32 %v6834, 1.0
        %v6843 = vrcp.pop %v6835
        %v6844 = vmul.f32 1.0, %v6843
        %v6845 = vrcp.pop %v6836
        %v6846 = vmul.f32 1.0, %v6845
        %v6847 = vrcp.pop %v6837
        %v6848 = vmul.f32 1.0, %v6847
        %v6849 = vrcp.pop %v6838
        %v6850 = vmul.f32 1.0, %v6849
        %v6851 = vrcp.pop %v6839
        %v6852 = vmul.f32 1.0, %v6851
        %v6853 = vrcp.pop %v6840
        %v6854 = vmul.f32 1.0, %v6853
        %v6855 = vrcp.pop %v6841
        %v6856 = vmul.f32 1.0, %v6855
        %v6857 = vrcp.pop %v6842
        %v6858 = vmul.f32 1.0, %v6857
        %v6859 = vmul.f32 %v6803, %v6844
        %v6860 = vmul.f32 %v6804, %v6846
        %v6861 = vmul.f32 %v6805, %v6848
        %v6862 = vmul.f32 %v6806, %v6850
        %v6863 = vmul.f32 %v6807, %v6852
        %v6864 = vmul.f32 %v6808, %v6854
        %v6865 = vmul.f32 %v6809, %v6856
        %v6866 = vmul.f32 %v6810, %v6858
        %v6867 = vld [vmem:[%s33] sm:$0xf]
        %v6868 = vld [vmem:[%s33 + $0x4] sm:$0xf]
        %v6869 = vpack.c.bf16 %v6860, %v6859
        %v6870 = vpack.c.bf16 %v6862, %v6861
        %v6871 = vpack.c.bf16 %v6864, %v6863
        %v6872 = vpack.c.bf16 %v6866, %v6865
        %v6875 = vunpack.c.l.b16 %v6867
        %v6876 = vunpack.c.l.b16 %v6868
        %v6877 = vpack.c.b16 %v6876, %v6875
        %vm6878 = vcmask 523264
        %v6880 = vsel %vm6878, %v6877, 0
        %6882 = vmatprep.subr.bf16.mxu0 0
        %6883 = vmatpush1.bf16.msra.mxu0 %v6869
        %6884 = vmatprep.subr.bf16.mxu0 0
        %6885 = vmatpush1.bf16.msra.mxu0 %v6870
        %6886 = vmatprep.subr.bf16.mxu0 0
        %6887 = vmatpush1.bf16.msra.mxu0 %v6871
        %6888 = vmatprep.subr.bf16.mxu0 0
        %6889 = vmatpush1.bf16.msra.mxu0 %v6872
        %6890 = vmatprep.subr.bf16.mxu0 0
        %6891 = vmatpush1.bf16.msra.mxu0 0
        %6892 = vmatprep.subr.bf16.mxu0 0
        %6893 = vmatpush1.bf16.msra.mxu0 0
        %6894 = vmatprep.subr.bf16.mxu0 0
        %6895 = vmatpush1.bf16.msra.mxu0 0
        %6896 = vmatprep.subr.bf16.mxu0 0
        %6897 = vmatpush1.bf16.msra.mxu0 0
        %6898 = vmatprep.subr.bf16.mxu0 0
        %6899 = vmatpush1.bf16.msra.mxu0 0
        %6900 = vmatprep.subr.bf16.mxu0 0
        %6901 = vmatpush1.bf16.msra.mxu0 0
        %6902 = vmatprep.subr.bf16.mxu0 0
        %6903 = vmatpush1.bf16.msra.mxu0 0
        %6904 = vmatprep.subr.bf16.mxu0 0
        %6905 = vmatpush1.bf16.msra.mxu0 0
        %6906 = vmatprep.subr.bf16.mxu0 0
        %6907 = vmatpush1.bf16.msra.mxu0 0
        %6908 = vmatprep.subr.bf16.mxu0 0
        %6909 = vmatpush1.bf16.msra.mxu0 0
        %6910 = vmatprep.subr.bf16.mxu0 0
        %6911 = vmatpush1.bf16.msra.mxu0 0
        %6912 = vmatprep.subr.bf16.mxu0 0
        %6913 = vmatpush1.bf16.msra.mxu0 0
        %6914 = vmatprep.mubr.bf16.mxu0 0
        %6915 = vmatmul.mubr.bf16.gmra.mrb[0].mxu0 %v6880
        %v6916 = vpop.f32.mrb[0].mxu0
        %v6917 = vadd.f32 0.0, %v6916
        %v6918 = vpop.f32.mrb[0].mxu0
        %v6919 = vpop.f32.mrb[0].mxu0
        %v6920 = vadd.f32 0.0, %v6919
        %v6921 = vpop.f32.mrb[0].mxu0
        %6922 = vdwg.mxu0
        %v6923 = vadd.f32 %v6917, %v6920
        %v6924 = vrot.slane %v6923, 4
        %v6925 = vadd.f32 %v6923, %v6924
        %v6926 = vrot.slane %v6925, 2
        %v6927 = vadd.f32 %v6925, %v6926
        %v6928 = vrot.slane %v6927, 1
        %v6929 = vadd.f32 %v6927, %v6928
        %v6930 = vrcp.pop 16.0
        %v6931 = vmul.f32 %v6929, %v6930
        %v6932 = vpack.c.bf16 %v6931, %v6931
        %v6933 = vld [vmem:[%s35] sm:$0xf]
        %v6934 = vld [vmem:[%s35 + $0x4] sm:$0xf]
        %v6935 = vld [vmem:[%s35 + $0x8] sm:$0xf]
        %v6936 = vld [vmem:[%s35 + $0xc] sm:$0xf]
        %v6937 = vld [vmem:[%s35 + $0x10] sm:$0xf]
        %v6938 = vld [vmem:[%s35 + $0x14] sm:$0xf]
        %v6939 = vld [vmem:[%s35 + $0x18] sm:$0xf]
        %v6940 = vld [vmem:[%s35 + $0x1c] sm:$0xf]
        %v6941 = vld [vmem:[%s35 + $0x20] sm:$0xf]
        %v6942 = vld [vmem:[%s35 + $0x24] sm:$0xf]
        %v6943 = vld [vmem:[%s35 + $0x28] sm:$0xf]
        %v6944 = vld [vmem:[%s35 + $0x2c] sm:$0xf]
        %v6945 = vld [vmem:[%s35 + $0x30] sm:$0xf]
        %v6946 = vld [vmem:[%s35 + $0x34] sm:$0xf]
        %v6947 = vld [vmem:[%s35 + $0x38] sm:$0xf]
        %v6948 = vld [vmem:[%s35 + $0x3c] sm:$0xf]
        %v6949 = vld [vmem:[%s37] sm:$0x1]
        %v6966 = vunpack.c.l.b16 %v6933
        %v6967 = vunpack.c.l.b16 %v6934
        %v6968 = vunpack.c.l.b16 %v6935
        %v6969 = vunpack.c.l.b16 %v6936
        %v6970 = vunpack.c.l.b16 %v6937
        %v6971 = vunpack.c.l.b16 %v6938
        %v6972 = vunpack.c.l.b16 %v6939
        %v6973 = vunpack.c.l.b16 %v6940
        %v6974 = vunpack.c.l.b16 %v6941
        %v6975 = vunpack.c.l.b16 %v6942
        %v6976 = vunpack.c.l.b16 %v6943
        %v6977 = vunpack.c.l.b16 %v6944
        %v6978 = vunpack.c.l.b16 %v6945
        %v6979 = vunpack.c.l.b16 %v6946
        %v6980 = vunpack.c.l.b16 %v6947
        %v6981 = vunpack.c.l.b16 %v6948
        %v6982 = vpack.c.b16 %v6967, %v6966
        %v6983 = vpack.c.b16 %v6969, %v6968
        %v6984 = vpack.c.b16 %v6971, %v6970
        %v6985 = vpack.c.b16 %v6973, %v6972
        %v6986 = vpack.c.b16 %v6975, %v6974
        %v6987 = vpack.c.b16 %v6977, %v6976
        %v6988 = vpack.c.b16 %v6979, %v6978
        %v6989 = vpack.c.b16 %v6981, %v6980
        %6998 = vmatprep.subr.bf16.mxu0 0
        %6999 = vmatpush1.bf16.msra.mxu0 %v6982
        %7000 = vmatprep.subr.bf16.mxu0 0
        %7001 = vmatpush1.bf16.msra.mxu0 %v6983
        %7002 = vmatprep.subr.bf16.mxu0 0
        %7003 = vmatpush1.bf16.msra.mxu0 %v6984
        %7004 = vmatprep.subr.bf16.mxu0 0
        %7005 = vmatpush1.bf16.msra.mxu0 %v6985
        %7006 = vmatprep.subr.bf16.mxu0 0
        %7007 = vmatpush1.bf16.msra.mxu0 %v6986
        %7008 = vmatprep.subr.bf16.mxu0 0
        %7009 = vmatpush1.bf16.msra.mxu0 %v6987
        %7010 = vmatprep.subr.bf16.mxu0 0
        %7011 = vmatpush1.bf16.msra.mxu0 %v6988
        %7012 = vmatprep.subr.bf16.mxu0 0
        %7013 = vmatpush1.bf16.msra.mxu0 %v6989
        %7014 = vmatprep.subr.bf16.mxu0 0
        %7015 = vmatpush1.bf16.msra.mxu0 0
        %7016 = vmatprep.subr.bf16.mxu0 0
        %7017 = vmatpush1.bf16.msra.mxu0 0
        %7018 = vmatprep.subr.bf16.mxu0 0
        %7019 = vmatpush1.bf16.msra.mxu0 0
        %7020 = vmatprep.subr.bf16.mxu0 0
        %7021 = vmatpush1.bf16.msra.mxu0 0
        %7022 = vmatprep.subr.bf16.mxu0 0
        %7023 = vmatpush1.bf16.msra.mxu0 0
        %7024 = vmatprep.subr.bf16.mxu0 0
        %7025 = vmatpush1.bf16.msra.mxu0 0
        %7026 = vmatprep.subr.bf16.mxu0 0
        %7027 = vmatpush1.bf16.msra.mxu0 0
        %7028 = vmatprep.subr.bf16.mxu0 0
        %7029 = vmatpush1.bf16.msra.mxu0 0
        %7030 = vmatprep.mubr.bf16.mxu0 0
        %7031 = vmatmul.mubr.bf16.gmra.mrb[0].mxu0 %v6932
        %v7032 = vpop.f32.mrb[0].mxu0
        %v7033 = vadd.f32 %v6949, %v7032
        %v7034 = vpop.f32.mrb[0].mxu0
        %v7035 = vpop.f32.mrb[0].mxu0
        %v7036 = vpop.f32.mrb[0].mxu0
        %7037 = vdwg.mxu0
        %v7038 = vxor.u32 %v7033, 2147483648
        %v7039 = vmul.f32 %v7038, 1.442695
        %v7040 = vpow.pop %v7039
        %v7041 = vadd.f32 %v7040, 1.0
        %v7042 = vrcp.pop %v7041
        %v7043 = vmul.f32 1.0, %v7042
        %v7044 = vmul.f32 %v7033, %v7043
        %v7045 = vpack.c.bf16 %v7044, %v7044
        %v7046 = vld [vmem:[%s39] sm:$0xf]
        %v7047 = vld [vmem:[%s39 + $0x4] sm:$0xf]
        %v7048 = vld [vmem:[%s39 + $0x8] sm:$0xf]
        %v7049 = vld [vmem:[%s39 + $0xc] sm:$0xf]
        %v7050 = vld [vmem:[%s39 + $0x10] sm:$0xf]
        %v7051 = vld [vmem:[%s39 + $0x14] sm:$0xf]
        %v7052 = vld [vmem:[%s39 + $0x18] sm:$0xf]
        %v7053 = vld [vmem:[%s39 + $0x1c] sm:$0xf]
        %v7054 = vld [vmem:[%s39 + $0x20] sm:$0xf]
        %v7055 = vld [vmem:[%s39 + $0x24] sm:$0xf]
        %v7056 = vld [vmem:[%s39 + $0x28] sm:$0xf]
        %v7057 = vld [vmem:[%s39 + $0x2c] sm:$0xf]
        %v7058 = vld [vmem:[%s39 + $0x30] sm:$0xf]
        %v7059 = vld [vmem:[%s39 + $0x34] sm:$0xf]
        %v7060 = vld [vmem:[%s39 + $0x38] sm:$0xf]
        %v7061 = vld [vmem:[%s39 + $0x3c] sm:$0xf]
        %v7062 = vld [vmem:[%s41] sm:$0x1]
        %v7079 = vunpack.c.l.b16 %v7046
        %v7080 = vunpack.c.l.b16 %v7047
        %v7081 = vunpack.c.l.b16 %v7048
        %v7082 = vunpack.c.l.b16 %v7049
        %v7083 = vunpack.c.l.b16 %v7050
        %v7084 = vunpack.c.l.b16 %v7051
        %v7085 = vunpack.c.l.b16 %v7052
        %v7086 = vunpack.c.l.b16 %v7053
        %v7087 = vunpack.c.l.b16 %v7054
        %v7088 = vunpack.c.l.b16 %v7055
        %v7089 = vunpack.c.l.b16 %v7056
        %v7090 = vunpack.c.l.b16 %v7057
        %v7091 = vunpack.c.l.b16 %v7058
        %v7092 = vunpack.c.l.b16 %v7059
        %v7093 = vunpack.c.l.b16 %v7060
        %v7094 = vunpack.c.l.b16 %v7061
        %v7095 = vpack.c.b16 %v7080, %v7079
        %v7096 = vpack.c.b16 %v7082, %v7081
        %v7097 = vpack.c.b16 %v7084, %v7083
        %v7098 = vpack.c.b16 %v7086, %v7085
        %v7099 = vpack.c.b16 %v7088, %v7087
        %v7100 = vpack.c.b16 %v7090, %v7089
        %v7101 = vpack.c.b16 %v7092, %v7091
        %v7102 = vpack.c.b16 %v7094, %v7093
        %7111 = vmatprep.subr.bf16.mxu0 0
        %7112 = vmatpush1.bf16.msra.mxu0 %v7095
        %7113 = vmatprep.subr.bf16.mxu0 0
        %7114 = vmatpush1.bf16.msra.mxu0 %v7096
        %7115 = vmatprep.subr.bf16.mxu0 0
        %7116 = vmatpush1.bf16.msra.mxu0 %v7097
        %7117 = vmatprep.subr.bf16.mxu0 0
        %7118 = vmatpush1.bf16.msra.mxu0 %v7098
        %7119 = vmatprep.subr.bf16.mxu0 0
        %7120 = vmatpush1.bf16.msra.mxu0 %v7099
        %7121 = vmatprep.subr.bf16.mxu0 0
        %7122 = vmatpush1.bf16.msra.mxu0 %v7100
        %7123 = vmatprep.subr.bf16.mxu0 0
        %7124 = vmatpush1.bf16.msra.mxu0 %v7101
        %7125 = vmatprep.subr.bf16.mxu0 0
        %7126 = vmatpush1.bf16.msra.mxu0 %v7102
        %7127 = vmatprep.subr.bf16.mxu0 0
        %7128 = vmatpush1.bf16.msra.mxu0 0
        %7129 = vmatprep.subr.bf16.mxu0 0
        %7130 = vmatpush1.bf16.msra.mxu0 0
        %7131 = vmatprep.subr.bf16.mxu0 0
        %7132 = vmatpush1.bf16.msra.mxu0 0
        %7133 = vmatprep.subr.bf16.mxu0 0
        %7134 = vmatpush1.bf16.msra.mxu0 0
        %7135 = vmatprep.subr.bf16.mxu0 0
        %7136 = vmatpush1.bf16.msra.mxu0 0
        %7137 = vmatprep.subr.bf16.mxu0 0
        %7138 = vmatpush1.bf16.msra.mxu0 0
        %7139 = vmatprep.subr.bf16.mxu0 0
        %7140 = vmatpush1.bf16.msra.mxu0 0
        %7141 = vmatprep.subr.bf16.mxu0 0
        %7142 = vmatpush1.bf16.msra.mxu0 0
        %7143 = vmatprep.mubr.bf16.mxu0 0
        %7144 = vmatmul.mubr.bf16.gmra.mrb[0].mxu0 %v7045
        %v7145 = vpop.f32.mrb[0].mxu0
        %v7146 = vadd.f32 %v7062, %v7145
        %v7147 = vpop.f32.mrb[0].mxu0
        %v7148 = vpop.f32.mrb[0].mxu0
        %v7149 = vpop.f32.mrb[0].mxu0
        %7150 = vdwg.mxu0
        %v7151 = vxor.u32 %v7146, 2147483648
        %v7152 = vmul.f32 %v7151, 1.442695
        %v7153 = vpow.pop %v7152
        %v7154 = vadd.f32 %v7153, 1.0
        %v7155 = vrcp.pop %v7154
        %v7156 = vmul.f32 1.0, %v7155
        %v7157 = vlaneseq
        %v7158 = vshrl.u32 %v7157, 7
        %v7159 = vsub.s32 0, %v7158
        %v7160 = vrot.slane %v7156, %v7159
        %v7161 = vmul.f32 %v6917, %v7160
        %v7162 = vmul.f32 %v6920, %v7160
        %v7163 = vpack.c.bf16 %v7162, %v7161
        %v7164 = vld [vmem:[%s43] sm:$0xf]
        %v7165 = vld [vmem:[%s43 + $0x4] sm:$0xf]
        %v7166 = vld [vmem:[%s43 + $0x8] sm:$0xf]
        %v7167 = vld [vmem:[%s43 + $0xc] sm:$0xf]
        %v7168 = vld [vmem:[%s43 + $0x10] sm:$0xf]
        %v7169 = vld [vmem:[%s43 + $0x14] sm:$0xf]
        %v7170 = vld [vmem:[%s43 + $0x18] sm:$0xf]
        %v7171 = vld [vmem:[%s43 + $0x1c] sm:$0xf]
        %v7172 = vld [vmem:[%s43 + $0x20] sm:$0xf]
        %v7173 = vld [vmem:[%s43 + $0x24] sm:$0xf]
        %v7174 = vld [vmem:[%s43 + $0x28] sm:$0xf]
        %v7175 = vld [vmem:[%s43 + $0x2c] sm:$0xf]
        %v7176 = vld [vmem:[%s43 + $0x30] sm:$0xf]
        %v7177 = vld [vmem:[%s43 + $0x34] sm:$0xf]
        %v7178 = vld [vmem:[%s43 + $0x38] sm:$0xf]
        %v7179 = vld [vmem:[%s43 + $0x3c] sm:$0xf]
        %v7180 = vld [vmem:[%s45] sm:$0x1]
        %v7182 = vlaneseq
        %v7183 = vshrl.u32 %v7182, 7
        %v7184 = vsub.s32 0, %v7183
        %v7185 = vrot.slane %v7180, %v7184
        %v7203 = vunpack.c.l.b16 %v7164
        %v7204 = vunpack.c.l.b16 %v7165
        %v7205 = vunpack.c.l.b16 %v7166
        %v7206 = vunpack.c.l.b16 %v7167
        %v7207 = vunpack.c.l.b16 %v7168
        %v7208 = vunpack.c.l.b16 %v7169
        %v7209 = vunpack.c.l.b16 %v7170
        %v7210 = vunpack.c.l.b16 %v7171
        %v7211 = vunpack.c.l.b16 %v7172
        %v7212 = vunpack.c.l.b16 %v7173
        %v7213 = vunpack.c.l.b16 %v7174
        %v7214 = vunpack.c.l.b16 %v7175
        %v7215 = vunpack.c.l.b16 %v7176
        %v7216 = vunpack.c.l.b16 %v7177
        %v7217 = vunpack.c.l.b16 %v7178
        %v7218 = vunpack.c.l.b16 %v7179
        %v7219 = vpack.c.b16 %v7204, %v7203
        %v7220 = vpack.c.b16 %v7206, %v7205
        %v7221 = vpack.c.b16 %v7208, %v7207
        %v7222 = vpack.c.b16 %v7210, %v7209
        %v7223 = vpack.c.b16 %v7212, %v7211
        %v7224 = vpack.c.b16 %v7214, %v7213
        %v7225 = vpack.c.b16 %v7216, %v7215
        %v7226 = vpack.c.b16 %v7218, %v7217
        %7235 = vmatprep.subr.bf16.mxu0 0
        %7236 = vmatpush1.bf16.msra.mxu0 %v7219
        %7237 = vmatprep.subr.bf16.mxu0 0
        %7238 = vmatpush1.bf16.msra.mxu0 %v7220
        %7239 = vmatprep.subr.bf16.mxu0 0
        %7240 = vmatpush1.bf16.msra.mxu0 %v7221
        %7241 = vmatprep.subr.bf16.mxu0 0
        %7242 = vmatpush1.bf16.msra.mxu0 %v7222
        %7243 = vmatprep.subr.bf16.mxu0 0
        %7244 = vmatpush1.bf16.msra.mxu0 %v7223
        %7245 = vmatprep.subr.bf16.mxu0 0
        %7246 = vmatpush1.bf16.msra.mxu0 %v7224
        %7247 = vmatprep.subr.bf16.mxu0 0
        %7248 = vmatpush1.bf16.msra.mxu0 %v7225
        %7249 = vmatprep.subr.bf16.mxu0 0
        %7250 = vmatpush1.bf16.msra.mxu0 %v7226
        %7251 = vmatprep.subr.bf16.mxu0 0
        %7252 = vmatpush1.bf16.msra.mxu0 0
        %7253 = vmatprep.subr.bf16.mxu0 0
        %7254 = vmatpush1.bf16.msra.mxu0 0
        %7255 = vmatprep.subr.bf16.mxu0 0
        %7256 = vmatpush1.bf16.msra.mxu0 0
        %7257 = vmatprep.subr.bf16.mxu0 0
        %7258 = vmatpush1.bf16.msra.mxu0 0
        %7259 = vmatprep.subr.bf16.mxu0 0
        %7260 = vmatpush1.bf16.msra.mxu0 0
        %7261 = vmatprep.subr.bf16.mxu0 0
        %7262 = vmatpush1.bf16.msra.mxu0 0
        %7263 = vmatprep.subr.bf16.mxu0 0
        %7264 = vmatpush1.bf16.msra.mxu0 0
        %7265 = vmatprep.subr.bf16.mxu0 0
        %7266 = vmatpush1.bf16.msra.mxu0 0
        %7267 = vmatprep.mubr.bf16.mxu0 0
        %7268 = vmatmul.mubr.bf16.gmra.mrb[0].mxu0 %v7163
        %v7269 = vpop.f32.mrb[0].mxu0
        %v7270 = vadd.f32 %v7185, %v7269
        %v7271 = vpop.f32.mrb[0].mxu0
        %v7272 = vpop.f32.mrb[0].mxu0
        %v7273 = vadd.f32 %v7185, %v7272
        %v7274 = vpop.f32.mrb[0].mxu0
        %7275 = vdwg.mxu0
        %v7276 = vpack.c.bf16 %v7273, %v7270
        %v7277 = vld [vmem:[%s47] sm:$0xf]
        %v7278 = vld [vmem:[%s47 + $0x4] sm:$0xf]
        %v7279 = vld [vmem:[%s47 + $0x8] sm:$0xf]
        %v7280 = vld [vmem:[%s47 + $0xc] sm:$0xf]
        %v7281 = vld [vmem:[%s47 + $0x10] sm:$0xf]
        %v7282 = vld [vmem:[%s47 + $0x14] sm:$0xf]
        %v7283 = vld [vmem:[%s47 + $0x18] sm:$0xf]
        %v7284 = vld [vmem:[%s47 + $0x1c] sm:$0xf]
        %v7285 = vld [vmem:[%s47 + $0x20] sm:$0xf]
        %v7286 = vld [vmem:[%s47 + $0x24] sm:$0xf]
        %v7287 = vld [vmem:[%s47 + $0x28] sm:$0xf]
        %v7288 = vld [vmem:[%s47 + $0x2c] sm:$0xf]
        %v7289 = vld [vmem:[%s47 + $0x30] sm:$0xf]
        %v7290 = vld [vmem:[%s47 + $0x34] sm:$0xf]
        %v7291 = vld [vmem:[%s47 + $0x38] sm:$0xf]
        %v7292 = vld [vmem:[%s47 + $0x3c] sm:$0xf]
        %v7293 = vld [vmem:[%s49] sm:$0x1]
        %v7295 = vlaneseq
        %v7296 = vshrl.u32 %v7295, 7
        %v7297 = vsub.s32 0, %v7296
        %v7298 = vrot.slane %v7293, %v7297
        %v7316 = vunpack.c.l.b16 %v7277
        %v7317 = vunpack.c.l.b16 %v7278
        %v7318 = vunpack.c.l.b16 %v7279
        %v7319 = vunpack.c.l.b16 %v7280
        %v7320 = vunpack.c.l.b16 %v7281
        %v7321 = vunpack.c.l.b16 %v7282
        %v7322 = vunpack.c.l.b16 %v7283
        %v7323 = vunpack.c.l.b16 %v7284
        %v7324 = vunpack.c.l.b16 %v7285
        %v7325 = vunpack.c.l.b16 %v7286
        %v7326 = vunpack.c.l.b16 %v7287
        %v7327 = vunpack.c.l.b16 %v7288
        %v7328 = vunpack.c.l.b16 %v7289
        %v7329 = vunpack.c.l.b16 %v7290
        %v7330 = vunpack.c.l.b16 %v7291
        %v7331 = vunpack.c.l.b16 %v7292
        %v7332 = vpack.c.b16 %v7317, %v7316
        %v7333 = vpack.c.b16 %v7319, %v7318
        %v7334 = vpack.c.b16 %v7321, %v7320
        %v7335 = vpack.c.b16 %v7323, %v7322
        %v7336 = vpack.c.b16 %v7325, %v7324
        %v7337 = vpack.c.b16 %v7327, %v7326
        %v7338 = vpack.c.b16 %v7329, %v7328
        %v7339 = vpack.c.b16 %v7331, %v7330
        %7348 = vmatprep.subr.bf16.mxu0 0
        %7349 = vmatpush1.bf16.msra.mxu0 %v7332
        %7350 = vmatprep.subr.bf16.mxu0 0
        %7351 = vmatpush1.bf16.msra.mxu0 %v7333
        %7352 = vmatprep.subr.bf16.mxu0 0
        %7353 = vmatpush1.bf16.msra.mxu0 %v7334
        %7354 = vmatprep.subr.bf16.mxu0 0
        %7355 = vmatpush1.bf16.msra.mxu0 %v7335
        %7356 = vmatprep.subr.bf16.mxu0 0
        %7357 = vmatpush1.bf16.msra.mxu0 %v7336
        %7358 = vmatprep.subr.bf16.mxu0 0
        %7359 = vmatpush1.bf16.msra.mxu0 %v7337
        %7360 = vmatprep.subr.bf16.mxu0 0
        %7361 = vmatpush1.bf16.msra.mxu0 %v7338
        %7362 = vmatprep.subr.bf16.mxu0 0
        %7363 = vmatpush1.bf16.msra.mxu0 %v7339
        %7364 = vmatprep.subr.bf16.mxu0 0
        %7365 = vmatpush1.bf16.msra.mxu0 0
        %7366 = vmatprep.subr.bf16.mxu0 0
        %7367 = vmatpush1.bf16.msra.mxu0 0
        %7368 = vmatprep.subr.bf16.mxu0 0
        %7369 = vmatpush1.bf16.msra.mxu0 0
        %7370 = vmatprep.subr.bf16.mxu0 0
        %7371 = vmatpush1.bf16.msra.mxu0 0
        %7372 = vmatprep.subr.bf16.mxu0 0
        %7373 = vmatpush1.bf16.msra.mxu0 0
        %7374 = vmatprep.subr.bf16.mxu0 0
        %7375 = vmatpush1.bf16.msra.mxu0 0
        %7376 = vmatprep.subr.bf16.mxu0 0
        %7377 = vmatpush1.bf16.msra.mxu0 0
        %7378 = vmatprep.subr.bf16.mxu0 0
        %7379 = vmatpush1.bf16.msra.mxu0 0
        %7380 = vmatprep.mubr.bf16.mxu0 0
        %7381 = vmatmul.mubr.bf16.gmra.mrb[0].mxu0 %v7276
        %v7382 = vpop.f32.mrb[0].mxu0
        %v7383 = vadd.f32 %v7298, %v7382
        %v7384 = vpop.f32.mrb[0].mxu0
        %v7385 = vpop.f32.mrb[0].mxu0
        %v7386 = vadd.f32 %v7298, %v7385
        %v7387 = vpop.f32.mrb[0].mxu0
        %7388 = vdwg.mxu0
        %v7389 = vxor.u32 %v7383, 2147483648
        %v7390 = vxor.u32 %v7386, 2147483648
        %v7391 = vmul.f32 %v7389, 1.442695
        %v7392 = vpow.pop %v7391
        %v7393 = vmul.f32 %v7390, 1.442695
        %v7394 = vpow.pop %v7393
        %v7395 = vadd.f32 %v7392, 1.0
        %v7396 = vadd.f32 %v7394, 1.0
        %v7397 = vrcp.pop %v7395
        %v7398 = vmul.f32 1.0, %v7397
        %v7399 = vrcp.pop %v7396
        %v7400 = vmul.f32 1.0, %v7399
        %v7401 = vmul.f32 %v7383, %v7398
        %v7402 = vmul.f32 %v7386, %v7400
        %7403 = vst [vmem:[#allocation2 + $0x11] sm:$0xff] %v7401
        %7404 = vst [vmem:[#allocation2 + $0x19] sm:$0xff] %v7402
        %v7405 = vand.u32 %v1138, 3
        %v7406 = vand.u32 %v1139, 3
        %v7407 = vshra.s32 %v1138, 2
        %v7408 = vshra.s32 %v1139, 2
        %vm7409 = vcmp.ge.s32.totalorder %v7407, 1
        %vm7410 = vcmp.ge.s32.totalorder %v7408, 1
        %vm7411 = vcmp.le.s32.totalorder %v7407, 2
        %vm7412 = vcmp.le.s32.totalorder %v7408, 2
        %vm7413 = vcmp.ge.s32.totalorder %v7405, 1
        %vm7414 = vcmp.ge.s32.totalorder %v7406, 1
        %vm7415 = vcmp.le.s32.totalorder %v7405, 2
        %vm7416 = vcmp.le.s32.totalorder %v7406, 2
        %v7417 = vld [vmem:[#allocation2 + $0xc] sm:$0xff]
        %v7418 = vld [vmem:[#allocation2 + $0x14] sm:$0xff]
        %vm7419 = vmand %vm7409, %vm7413
        %vm7420 = vmand %vm7410, %vm7414
        %v7421 = vsel %vm7419, 1, 0
        %v7422 = vsel %vm7420, 1, 0
        %vm7423 = vcmp.eq.s32.totalorder %v7421, 1
        %vm7424 = vcmp.eq.s32.totalorder %v7422, 1
        %v7425 = vsel %vm7423, %v7417, 0.0
        %v7426 = vsel %vm7424, %v7418, 0.0
        %v7427 = vld [vmem:[%s51] sm:$0x1]
        %v7428 = vlaneseq
        %v7429 = vshrl.u32 %v7428, 7
        %v7430 = vsub.s32 0, %v7429
        %v7431 = vrot.slane %v7427, %v7430
        %v7432 = vmul.f32 %v7425, %v7431
        %v7433 = vmul.f32 %v7426, %v7431
        %v7434 = vadd.f32 %v7432, 0.0
        %v7435 = vadd.f32 %v7433, 0.0
        %v7436 = vld [vmem:[#allocation2 + $0xd] sm:$0xff]
        %v7437 = vld [vmem:[#allocation2 + $0x15] sm:$0xff]
        %v7438 = vsel %vm7409, 1, 0
        %v7439 = vsel %vm7410, 1, 0
        %vm7440 = vcmp.eq.s32.totalorder %v7438, 1
        %vm7441 = vcmp.eq.s32.totalorder %v7439, 1
        %v7442 = vsel %vm7440, %v7436, 0.0
        %v7443 = vsel %vm7441, %v7437, 0.0
        %v7444 = vld [vmem:[%s51 + $0x1] sm:$0x1]
        %v7445 = vlaneseq
        %v7446 = vshrl.u32 %v7445, 7
        %v7447 = vsub.s32 0, %v7446
        %v7448 = vrot.slane %v7444, %v7447
        %v7449 = vmul.f32 %v7442, %v7448
        %v7450 = vmul.f32 %v7443, %v7448
        %v7451 = vadd.f32 %v7434, %v7449
        %v7452 = vadd.f32 %v7435, %v7450
        %v7453 = vld [vmem:[#allocation2 + $0xe] sm:$0xff]
        %v7454 = vld [vmem:[#allocation2 + $0x16] sm:$0xff]
        %vm7455 = vmand %vm7409, %vm7415
        %vm7456 = vmand %vm7410, %vm7416
        %v7457 = vsel %vm7455, 1, 0
        %v7458 = vsel %vm7456, 1, 0
        %vm7459 = vcmp.eq.s32.totalorder %v7457, 1
        %vm7460 = vcmp.eq.s32.totalorder %v7458, 1
        %v7461 = vsel %vm7459, %v7453, 0.0
        %v7462 = vsel %vm7460, %v7454, 0.0
        %v7463 = vld [vmem:[%s51 + $0x2] sm:$0x1]
        %v7464 = vlaneseq
        %v7465 = vshrl.u32 %v7464, 7
        %v7466 = vsub.s32 0, %v7465
        %v7467 = vrot.slane %v7463, %v7466
        %v7468 = vmul.f32 %v7461, %v7467
        %v7469 = vmul.f32 %v7462, %v7467
        %v7470 = vadd.f32 %v7451, %v7468
        %v7471 = vadd.f32 %v7452, %v7469
        %v7472 = vld [vmem:[#allocation2 + $0x10] sm:$0xff]
        %v7473 = vld [vmem:[#allocation2 + $0x18] sm:$0xff]
        %v7474 = vsel %vm7413, 1, 0
        %v7475 = vsel %vm7414, 1, 0
        %vm7476 = vcmp.eq.s32.totalorder %v7474, 1
        %vm7477 = vcmp.eq.s32.totalorder %v7475, 1
        %v7478 = vsel %vm7476, %v7472, 0.0
        %v7479 = vsel %vm7477, %v7473, 0.0
        %v7480 = vld [vmem:[%s51 + $0x3] sm:$0x1]
        %v7481 = vlaneseq
        %v7482 = vshrl.u32 %v7481, 7
        %v7483 = vsub.s32 0, %v7482
        %v7484 = vrot.slane %v7480, %v7483
        %v7485 = vmul.f32 %v7478, %v7484
        %v7486 = vmul.f32 %v7479, %v7484
        %v7487 = vadd.f32 %v7470, %v7485
        %v7488 = vadd.f32 %v7471, %v7486
        %v7489 = vld [vmem:[#allocation2 + $0x11] sm:$0xff]
        %v7490 = vld [vmem:[#allocation2 + $0x19] sm:$0xff]
        %v7491 = vld [vmem:[%s51 + $0x4] sm:$0x1]
        %v7492 = vlaneseq
        %v7493 = vshrl.u32 %v7492, 7
        %v7494 = vsub.s32 0, %v7493
        %v7495 = vrot.slane %v7491, %v7494
        %v7496 = vmul.f32 %v7489, %v7495
        %v7497 = vmul.f32 %v7490, %v7495
        %v7498 = vadd.f32 %v7487, %v7496
        %v7499 = vadd.f32 %v7488, %v7497
        %v7500 = vld [vmem:[#allocation2 + $0x12] sm:$0xff]
        %v7501 = vld [vmem:[#allocation2 + $0x1a] sm:$0xff]
        %v7502 = vsel %vm7415, 1, 0
        %v7503 = vsel %vm7416, 1, 0
        %vm7504 = vcmp.eq.s32.totalorder %v7502, 1
        %vm7505 = vcmp.eq.s32.totalorder %v7503, 1
        %v7506 = vsel %vm7504, %v7500, 0.0
        %v7507 = vsel %vm7505, %v7501, 0.0
        %v7508 = vld [vmem:[%s51 + $0x5] sm:$0x1]
        %v7509 = vlaneseq
        %v7510 = vshrl.u32 %v7509, 7
        %v7511 = vsub.s32 0, %v7510
        %v7512 = vrot.slane %v7508, %v7511
        %v7513 = vmul.f32 %v7506, %v7512
        %v7514 = vmul.f32 %v7507, %v7512
        %v7515 = vadd.f32 %v7498, %v7513
        %v7516 = vadd.f32 %v7499, %v7514
        %v7517 = vld [vmem:[#allocation2 + $0x1c] sm:$0xff]
        %vm7518 = vmand %vm7411, %vm7413
        %vm7519 = vmand %vm7412, %vm7414
        %v7520 = vsel %vm7518, 1, 0
        %v7521 = vsel %vm7519, 1, 0
        %vm7522 = vcmp.eq.s32.totalorder %v7520, 1
        %vm7523 = vcmp.eq.s32.totalorder %v7521, 1
        %v7524 = vsel %vm7522, %v7418, 0.0
        %v7525 = vsel %vm7523, %v7517, 0.0
        %v7526 = vld [vmem:[%s51 + $0x6] sm:$0x1]
        %v7527 = vlaneseq
        %v7528 = vshrl.u32 %v7527, 7
        %v7529 = vsub.s32 0, %v7528
        %v7530 = vrot.slane %v7526, %v7529
        %v7531 = vmul.f32 %v7524, %v7530
        %v7532 = vmul.f32 %v7525, %v7530
        %v7533 = vadd.f32 %v7515, %v7531
        %v7534 = vadd.f32 %v7516, %v7532
        %v7535 = vld [vmem:[#allocation2 + $0x1d] sm:$0xff]
        %v7536 = vsel %vm7411, 1, 0
        %v7537 = vsel %vm7412, 1, 0
        %vm7538 = vcmp.eq.s32.totalorder %v7536, 1
        %vm7539 = vcmp.eq.s32.totalorder %v7537, 1
        %v7540 = vsel %vm7538, %v7437, 0.0
        %v7541 = vsel %vm7539, %v7535, 0.0
        %v7542 = vld [vmem:[%s51 + $0x7] sm:$0x1]
        %v7543 = vlaneseq
        %v7544 = vshrl.u32 %v7543, 7
        %v7545 = vsub.s32 0, %v7544
        %v7546 = vrot.slane %v7542, %v7545
        %v7547 = vmul.f32 %v7540, %v7546
        %v7548 = vmul.f32 %v7541, %v7546
        %v7549 = vadd.f32 %v7533, %v7547
        %v7550 = vadd.f32 %v7534, %v7548
        %v7551 = vld [vmem:[#allocation2 + $0x1e] sm:$0xff]
        %vm7552 = vmand %vm7411, %vm7415
        %vm7553 = vmand %vm7412, %vm7416
        %v7554 = vsel %vm7552, 1, 0
        %v7555 = vsel %vm7553, 1, 0
        %vm7556 = vcmp.eq.s32.totalorder %v7554, 1
        %vm7557 = vcmp.eq.s32.totalorder %v7555, 1
        %v7558 = vsel %vm7556, %v7454, 0.0
        %v7559 = vsel %vm7557, %v7551, 0.0
        %v7560 = vld [vmem:[%s51 + $0x8] sm:$0x1]
        %v7561 = vlaneseq
        %v7562 = vshrl.u32 %v7561, 7
        %v7563 = vsub.s32 0, %v7562
        %v7564 = vrot.slane %v7560, %v7563
        %v7565 = vmul.f32 %v7558, %v7564
        %v7566 = vmul.f32 %v7559, %v7564
        %v7567 = vadd.f32 %v7549, %v7565
        %v7568 = vadd.f32 %v7550, %v7566
        %v7569 = vld [vmem:[%s53] sm:$0x1]
        %v7571 = vlaneseq
        %v7572 = vshrl.u32 %v7571, 7
        %v7573 = vsub.s32 0, %v7572
        %v7574 = vrot.slane %v7569, %v7573
        %v7576 = vadd.f32 %v7567, %v7574
        %v7577 = vadd.f32 %v7568, %v7574
        %v7578 = vxor.u32 %v7576, 2147483648
        %v7579 = vxor.u32 %v7577, 2147483648
        %v7580 = vmul.f32 %v7578, 1.442695
        %v7581 = vpow.pop %v7580
        %v7582 = vmul.f32 %v7579, 1.442695
        %v7583 = vpow.pop %v7582
        %v7584 = vadd.f32 %v7581, 1.0
        %v7585 = vadd.f32 %v7583, 1.0
        %v7586 = vrcp.pop %v7584
        %v7587 = vmul.f32 1.0, %v7586
        %v7588 = vrcp.pop %v7585
        %v7589 = vmul.f32 1.0, %v7588
        %v7590 = vmul.f32 %v7576, %v7587
        %v7591 = vmul.f32 %v7577, %v7589
        %v7592 = vadd.f32 %v7590, %v7591
        %v7593 = vrot.slane %v7592, 4
        %v7594 = vadd.f32 %v7592, %v7593
        %v7595 = vrot.slane %v7594, 2
        %v7596 = vadd.f32 %v7594, %v7595
        %v7597 = vrot.slane %v7596, 1
        %v7598 = vadd.f32 %v7596, %v7597
        %v7599 = vmul.f32 %v7598, %v6930
        %v7600 = vpack.c.bf16 %v7599, %v7599
        %v7601 = vld [vmem:[%s55] sm:$0xf]
        %v7602 = vld [vmem:[%s55 + $0x4] sm:$0xf]
        %v7603 = vld [vmem:[%s55 + $0x8] sm:$0xf]
        %v7604 = vld [vmem:[%s55 + $0xc] sm:$0xf]
        %v7605 = vld [vmem:[%s55 + $0x10] sm:$0xf]
        %v7606 = vld [vmem:[%s55 + $0x14] sm:$0xf]
        %v7607 = vld [vmem:[%s55 + $0x18] sm:$0xf]
        %v7608 = vld [vmem:[%s55 + $0x1c] sm:$0xf]
        %v7609 = vld [vmem:[%s55 + $0x20] sm:$0xf]
        %v7610 = vld [vmem:[%s55 + $0x24] sm:$0xf]
        %v7611 = vld [vmem:[%s55 + $0x28] sm:$0xf]
        %v7612 = vld [vmem:[%s55 + $0x2c] sm:$0xf]
        %v7613 = vld [vmem:[%s55 + $0x30] sm:$0xf]
        %v7614 = vld [vmem:[%s55 + $0x34] sm:$0xf]
        %v7615 = vld [vmem:[%s55 + $0x38] sm:$0xf]
        %v7616 = vld [vmem:[%s55 + $0x3c] sm:$0xf]
        %v7617 = vld [vmem:[%s57] sm:$0x1]
        %v7634 = vunpack.c.l.b16 %v7601
        %v7635 = vunpack.c.l.b16 %v7602
        %v7636 = vunpack.c.l.b16 %v7603
        %v7637 = vunpack.c.l.b16 %v7604
        %v7638 = vunpack.c.l.b16 %v7605
        %v7639 = vunpack.c.l.b16 %v7606
        %v7640 = vunpack.c.l.b16 %v7607
        %v7641 = vunpack.c.l.b16 %v7608
        %v7642 = vunpack.c.l.b16 %v7609
        %v7643 = vunpack.c.l.b16 %v7610
        %v7644 = vunpack.c.l.b16 %v7611
        %v7645 = vunpack.c.l.b16 %v7612
        %v7646 = vunpack.c.l.b16 %v7613
        %v7647 = vunpack.c.l.b16 %v7614
        %v7648 = vunpack.c.l.b16 %v7615
        %v7649 = vunpack.c.l.b16 %v7616
        %v7650 = vpack.c.b16 %v7635, %v7634
        %v7651 = vpack.c.b16 %v7637, %v7636
        %v7652 = vpack.c.b16 %v7639, %v7638
        %v7653 = vpack.c.b16 %v7641, %v7640
        %v7654 = vpack.c.b16 %v7643, %v7642
        %v7655 = vpack.c.b16 %v7645, %v7644
        %v7656 = vpack.c.b16 %v7647, %v7646
        %v7657 = vpack.c.b16 %v7649, %v7648
        %7666 = vmatprep.subr.bf16.mxu0 0
        %7667 = vmatpush1.bf16.msra.mxu0 %v7650
        %7668 = vmatprep.subr.bf16.mxu0 0
        %7669 = vmatpush1.bf16.msra.mxu0 %v7651
        %7670 = vmatprep.subr.bf16.mxu0 0
        %7671 = vmatpush1.bf16.msra.mxu0 %v7652
        %7672 = vmatprep.subr.bf16.mxu0 0
        %7673 = vmatpush1.bf16.msra.mxu0 %v7653
        %7674 = vmatprep.subr.bf16.mxu0 0
        %7675 = vmatpush1.bf16.msra.mxu0 %v7654
        %7676 = vmatprep.subr.bf16.mxu0 0
        %7677 = vmatpush1.bf16.msra.mxu0 %v7655
        %7678 = vmatprep.subr.bf16.mxu0 0
        %7679 = vmatpush1.bf16.msra.mxu0 %v7656
        %7680 = vmatprep.subr.bf16.mxu0 0
        %7681 = vmatpush1.bf16.msra.mxu0 %v7657
        %7682 = vmatprep.subr.bf16.mxu0 0
        %7683 = vmatpush1.bf16.msra.mxu0 0
        %7684 = vmatprep.subr.bf16.mxu0 0
        %7685 = vmatpush1.bf16.msra.mxu0 0
        %7686 = vmatprep.subr.bf16.mxu0 0
        %7687 = vmatpush1.bf16.msra.mxu0 0
        %7688 = vmatprep.subr.bf16.mxu0 0
        %7689 = vmatpush1.bf16.msra.mxu0 0
        %7690 = vmatprep.subr.bf16.mxu0 0
        %7691 = vmatpush1.bf16.msra.mxu0 0
        %7692 = vmatprep.subr.bf16.mxu0 0
        %7693 = vmatpush1.bf16.msra.mxu0 0
        %7694 = vmatprep.subr.bf16.mxu0 0
        %7695 = vmatpush1.bf16.msra.mxu0 0
        %7696 = vmatprep.subr.bf16.mxu0 0
        %7697 = vmatpush1.bf16.msra.mxu0 0
        %7698 = vmatprep.mubr.bf16.mxu0 0
        %7699 = vmatmul.mubr.bf16.gmra.mrb[0].mxu0 %v7600
        %v7700 = vpop.f32.mrb[0].mxu0
        %v7701 = vadd.f32 %v7617, %v7700
        %v7702 = vpop.f32.mrb[0].mxu0
        %v7703 = vpop.f32.mrb[0].mxu0
        %v7704 = vpop.f32.mrb[0].mxu0
        %7705 = vdwg.mxu0
        %v7706 = vxor.u32 %v7701, 2147483648
        %v7707 = vmul.f32 %v7706, 1.442695
        %v7708 = vpow.pop %v7707
        %v7709 = vadd.f32 %v7708, 1.0
        %v7710 = vrcp.pop %v7709
        %v7711 = vmul.f32 1.0, %v7710
        %v7712 = vmul.f32 %v7701, %v7711
        %v7713 = vpack.c.bf16 %v7712, %v7712
        %v7714 = vld [vmem:[%s59] sm:$0xf]
        %v7715 = vld [vmem:[%s59 + $0x4] sm:$0xf]
        %v7716 = vld [vmem:[%s59 + $0x8] sm:$0xf]
        %v7717 = vld [vmem:[%s59 + $0xc] sm:$0xf]
        %v7718 = vld [vmem:[%s59 + $0x10] sm:$0xf]
        %v7719 = vld [vmem:[%s59 + $0x14] sm:$0xf]
        %v7720 = vld [vmem:[%s59 + $0x18] sm:$0xf]
        %v7721 = vld [vmem:[%s59 + $0x1c] sm:$0xf]
        %v7722 = vld [vmem:[%s59 + $0x20] sm:$0xf]
        %v7723 = vld [vmem:[%s59 + $0x24] sm:$0xf]
        %v7724 = vld [vmem:[%s59 + $0x28] sm:$0xf]
        %v7725 = vld [vmem:[%s59 + $0x2c] sm:$0xf]
        %v7726 = vld [vmem:[%s59 + $0x30] sm:$0xf]
        %v7727 = vld [vmem:[%s59 + $0x34] sm:$0xf]
        %v7728 = vld [vmem:[%s59 + $0x38] sm:$0xf]
        %v7729 = vld [vmem:[%s59 + $0x3c] sm:$0xf]
        %v7730 = vld [vmem:[%s61] sm:$0x1]
        %v7747 = vunpack.c.l.b16 %v7714
        %v7748 = vunpack.c.l.b16 %v7715
        %v7749 = vunpack.c.l.b16 %v7716
        %v7750 = vunpack.c.l.b16 %v7717
        %v7751 = vunpack.c.l.b16 %v7718
        %v7752 = vunpack.c.l.b16 %v7719
        %v7753 = vunpack.c.l.b16 %v7720
        %v7754 = vunpack.c.l.b16 %v7721
        %v7755 = vunpack.c.l.b16 %v7722
        %v7756 = vunpack.c.l.b16 %v7723
        %v7757 = vunpack.c.l.b16 %v7724
        %v7758 = vunpack.c.l.b16 %v7725
        %v7759 = vunpack.c.l.b16 %v7726
        %v7760 = vunpack.c.l.b16 %v7727
        %v7761 = vunpack.c.l.b16 %v7728
        %v7762 = vunpack.c.l.b16 %v7729
        %v7763 = vpack.c.b16 %v7748, %v7747
        %v7764 = vpack.c.b16 %v7750, %v7749
        %v7765 = vpack.c.b16 %v7752, %v7751
        %v7766 = vpack.c.b16 %v7754, %v7753
        %v7767 = vpack.c.b16 %v7756, %v7755
        %v7768 = vpack.c.b16 %v7758, %v7757
        %v7769 = vpack.c.b16 %v7760, %v7759
        %v7770 = vpack.c.b16 %v7762, %v7761
        %7779 = vmatprep.subr.bf16.mxu0 0
        %7780 = vmatpush1.bf16.msra.mxu0 %v7763
        %7781 = vmatprep.subr.bf16.mxu0 0
        %7782 = vmatpush1.bf16.msra.mxu0 %v7764
        %7783 = vmatprep.subr.bf16.mxu0 0
        %7784 = vmatpush1.bf16.msra.mxu0 %v7765
        %7785 = vmatprep.subr.bf16.mxu0 0
        %7786 = vmatpush1.bf16.msra.mxu0 %v7766
        %7787 = vmatprep.subr.bf16.mxu0 0
        %7788 = vmatpush1.bf16.msra.mxu0 %v7767
        %7789 = vmatprep.subr.bf16.mxu0 0
        %7790 = vmatpush1.bf16.msra.mxu0 %v7768
        %7791 = vmatprep.subr.bf16.mxu0 0
        %7792 = vmatpush1.bf16.msra.mxu0 %v7769
        %7793 = vmatprep.subr.bf16.mxu0 0
        %7794 = vmatpush1.bf16.msra.mxu0 %v7770
        %7795 = vmatprep.subr.bf16.mxu0 0
        %7796 = vmatpush1.bf16.msra.mxu0 0
        %7797 = vmatprep.subr.bf16.mxu0 0
        %7798 = vmatpush1.bf16.msra.mxu0 0
        %7799 = vmatprep.subr.bf16.mxu0 0
        %7800 = vmatpush1.bf16.msra.mxu0 0
        %7801 = vmatprep.subr.bf16.mxu0 0
        %7802 = vmatpush1.bf16.msra.mxu0 0
        %7803 = vmatprep.subr.bf16.mxu0 0
        %7804 = vmatpush1.bf16.msra.mxu0 0
        %7805 = vmatprep.subr.bf16.mxu0 0
        %7806 = vmatpush1.bf16.msra.mxu0 0
        %7807 = vmatprep.subr.bf16.mxu0 0
        %7808 = vmatpush1.bf16.msra.mxu0 0
        %7809 = vmatprep.subr.bf16.mxu0 0
        %7810 = vmatpush1.bf16.msra.mxu0 0
        %7811 = vmatprep.mubr.bf16.mxu0 0
        %7812 = vmatmul.mubr.bf16.gmra.mrb[0].mxu0 %v7713
        %v7813 = vpop.f32.mrb[0].mxu0
        %v7814 = vadd.f32 %v7730, %v7813
        %v7815 = vpop.f32.mrb[0].mxu0
        %v7816 = vpop.f32.mrb[0].mxu0
        %v7817 = vpop.f32.mrb[0].mxu0
        %7818 = vdwg.mxu0
        %v7819 = vxor.u32 %v7814, 2147483648
        %v7820 = vmul.f32 %v7819, 1.442695
        %v7821 = vpow.pop %v7820
        %v7822 = vadd.f32 %v7821, 1.0
        %v7823 = vrcp.pop %v7822
        %v7824 = vmul.f32 1.0, %v7823
        %v7825 = vlaneseq
        %v7826 = vshrl.u32 %v7825, 7
        %v7827 = vsub.s32 0, %v7826
        %v7828 = vrot.slane %v7824, %v7827
        %v7829 = vmul.f32 %v7590, %v7828
        %v7830 = vmul.f32 %v7591, %v7828
        %v7831 = vpack.c.bf16 %v7830, %v7829
        %v7832 = vld [vmem:[%s63] sm:$0xf]
        %v7833 = vld [vmem:[%s63 + $0x4] sm:$0xf]
        %v7834 = vld [vmem:[%s63 + $0x8] sm:$0xf]
        %v7835 = vld [vmem:[%s63 + $0xc] sm:$0xf]
        %v7836 = vld [vmem:[%s63 + $0x10] sm:$0xf]
        %v7837 = vld [vmem:[%s63 + $0x14] sm:$0xf]
        %v7838 = vld [vmem:[%s63 + $0x18] sm:$0xf]
        %v7839 = vld [vmem:[%s63 + $0x1c] sm:$0xf]
        %v7840 = vld [vmem:[%s63 + $0x20] sm:$0xf]
        %v7841 = vld [vmem:[%s63 + $0x24] sm:$0xf]
        %v7842 = vld [vmem:[%s63 + $0x28] sm:$0xf]
        %v7843 = vld [vmem:[%s63 + $0x2c] sm:$0xf]
        %v7844 = vld [vmem:[%s63 + $0x30] sm:$0xf]
        %v7845 = vld [vmem:[%s63 + $0x34] sm:$0xf]
        %v7846 = vld [vmem:[%s63 + $0x38] sm:$0xf]
        %v7847 = vld [vmem:[%s63 + $0x3c] sm:$0xf]
        %v7848 = vld [vmem:[%s65] sm:$0x1]
        %v7850 = vlaneseq
        %v7851 = vshrl.u32 %v7850, 7
        %v7852 = vsub.s32 0, %v7851
        %v7853 = vrot.slane %v7848, %v7852
        %v7871 = vunpack.c.l.b16 %v7832
        %v7872 = vunpack.c.l.b16 %v7833
        %v7873 = vunpack.c.l.b16 %v7834
        %v7874 = vunpack.c.l.b16 %v7835
        %v7875 = vunpack.c.l.b16 %v7836
        %v7876 = vunpack.c.l.b16 %v7837
        %v7877 = vunpack.c.l.b16 %v7838
        %v7878 = vunpack.c.l.b16 %v7839
        %v7879 = vunpack.c.l.b16 %v7840
        %v7880 = vunpack.c.l.b16 %v7841
        %v7881 = vunpack.c.l.b16 %v7842
        %v7882 = vunpack.c.l.b16 %v7843
        %v7883 = vunpack.c.l.b16 %v7844
        %v7884 = vunpack.c.l.b16 %v7845
        %v7885 = vunpack.c.l.b16 %v7846
        %v7886 = vunpack.c.l.b16 %v7847
        %v7887 = vpack.c.b16 %v7872, %v7871
        %v7888 = vpack.c.b16 %v7874, %v7873
        %v7889 = vpack.c.b16 %v7876, %v7875
        %v7890 = vpack.c.b16 %v7878, %v7877
        %v7891 = vpack.c.b16 %v7880, %v7879
        %v7892 = vpack.c.b16 %v7882, %v7881
        %v7893 = vpack.c.b16 %v7884, %v7883
        %v7894 = vpack.c.b16 %v7886, %v7885
        %7903 = vmatprep.subr.bf16.mxu0 0
        %7904 = vmatpush1.bf16.msra.mxu0 %v7887
        %7905 = vmatprep.subr.bf16.mxu0 0
        %7906 = vmatpush1.bf16.msra.mxu0 %v7888
        %7907 = vmatprep.subr.bf16.mxu0 0
        %7908 = vmatpush1.bf16.msra.mxu0 %v7889
        %7909 = vmatprep.subr.bf16.mxu0 0
        %7910 = vmatpush1.bf16.msra.mxu0 %v7890
        %7911 = vmatprep.subr.bf16.mxu0 0
        %7912 = vmatpush1.bf16.msra.mxu0 %v7891
        %7913 = vmatprep.subr.bf16.mxu0 0
        %7914 = vmatpush1.bf16.msra.mxu0 %v7892
        %7915 = vmatprep.subr.bf16.mxu0 0
        %7916 = vmatpush1.bf16.msra.mxu0 %v7893
        %7917 = vmatprep.subr.bf16.mxu0 0
        %7918 = vmatpush1.bf16.msra.mxu0 %v7894
        %7919 = vmatprep.subr.bf16.mxu0 0
        %7920 = vmatpush1.bf16.msra.mxu0 0
        %7921 = vmatprep.subr.bf16.mxu0 0
        %7922 = vmatpush1.bf16.msra.mxu0 0
        %7923 = vmatprep.subr.bf16.mxu0 0
        %7924 = vmatpush1.bf16.msra.mxu0 0
        %7925 = vmatprep.subr.bf16.mxu0 0
        %7926 = vmatpush1.bf16.msra.mxu0 0
        %7927 = vmatprep.subr.bf16.mxu0 0
        %7928 = vmatpush1.bf16.msra.mxu0 0
        %7929 = vmatprep.subr.bf16.mxu0 0
        %7930 = vmatpush1.bf16.msra.mxu0 0
        %7931 = vmatprep.subr.bf16.mxu0 0
        %7932 = vmatpush1.bf16.msra.mxu0 0
        %7933 = vmatprep.subr.bf16.mxu0 0
        %7934 = vmatpush1.bf16.msra.mxu0 0
        %7935 = vmatprep.mubr.bf16.mxu0 0
        %7936 = vmatmul.mubr.bf16.gmra.mrb[0].mxu0 %v7831
        %v7937 = vpop.f32.mrb[0].mxu0
        %v7938 = vadd.f32 %v7853, %v7937
        %v7939 = vpop.f32.mrb[0].mxu0
        %v7940 = vpop.f32.mrb[0].mxu0
        %v7941 = vadd.f32 %v7853, %v7940
        %v7942 = vpop.f32.mrb[0].mxu0
        %7943 = vdwg.mxu0
        %v7944 = vadd.f32 %v7938, %v7270
        %v7945 = vadd.f32 %v7941, %v7273
        %v7946 = vpack.c.bf16 %v7945, %v7944
        %v7947 = vld [vmem:[%s67] sm:$0xf]
        %v7948 = vld [vmem:[%s67 + $0x4] sm:$0xf]
        %v7949 = vld [vmem:[%s67 + $0x8] sm:$0xf]
        %v7950 = vld [vmem:[%s67 + $0xc] sm:$0xf]
        %v7951 = vld [vmem:[%s67 + $0x10] sm:$0xf]
        %v7952 = vld [vmem:[%s67 + $0x14] sm:$0xf]
        %v7953 = vld [vmem:[%s67 + $0x18] sm:$0xf]
        %v7954 = vld [vmem:[%s67 + $0x1c] sm:$0xf]
        %v7955 = vld [vmem:[%s67 + $0x20] sm:$0xf]
        %v7956 = vld [vmem:[%s67 + $0x24] sm:$0xf]
        %v7957 = vld [vmem:[%s67 + $0x28] sm:$0xf]
        %v7958 = vld [vmem:[%s67 + $0x2c] sm:$0xf]
        %v7959 = vld [vmem:[%s67 + $0x30] sm:$0xf]
        %v7960 = vld [vmem:[%s67 + $0x34] sm:$0xf]
        %v7961 = vld [vmem:[%s67 + $0x38] sm:$0xf]
        %v7962 = vld [vmem:[%s67 + $0x3c] sm:$0xf]
        %v7963 = vld [vmem:[%s69] sm:$0x1]
        %v7965 = vlaneseq
        %v7966 = vshrl.u32 %v7965, 7
        %v7967 = vsub.s32 0, %v7966
        %v7968 = vrot.slane %v7963, %v7967
        %v7986 = vunpack.c.l.b16 %v7947
        %v7987 = vunpack.c.l.b16 %v7948
        %v7988 = vunpack.c.l.b16 %v7949
        %v7989 = vunpack.c.l.b16 %v7950
        %v7990 = vunpack.c.l.b16 %v7951
        %v7991 = vunpack.c.l.b16 %v7952
        %v7992 = vunpack.c.l.b16 %v7953
        %v7993 = vunpack.c.l.b16 %v7954
        %v7994 = vunpack.c.l.b16 %v7955
        %v7995 = vunpack.c.l.b16 %v7956
        %v7996 = vunpack.c.l.b16 %v7957
        %v7997 = vunpack.c.l.b16 %v7958
        %v7998 = vunpack.c.l.b16 %v7959
        %v7999 = vunpack.c.l.b16 %v7960
        %v8000 = vunpack.c.l.b16 %v7961
        %v8001 = vunpack.c.l.b16 %v7962
        %v8002 = vpack.c.b16 %v7987, %v7986
        %v8003 = vpack.c.b16 %v7989, %v7988
        %v8004 = vpack.c.b16 %v7991, %v7990
        %v8005 = vpack.c.b16 %v7993, %v7992
        %v8006 = vpack.c.b16 %v7995, %v7994
        %v8007 = vpack.c.b16 %v7997, %v7996
        %v8008 = vpack.c.b16 %v7999, %v7998
        %v8009 = vpack.c.b16 %v8001, %v8000
        %8018 = vmatprep.subr.bf16.mxu0 0
        %8019 = vmatpush1.bf16.msra.mxu0 %v8002
        %8020 = vmatprep.subr.bf16.mxu0 0
        %8021 = vmatpush1.bf16.msra.mxu0 %v8003
        %8022 = vmatprep.subr.bf16.mxu0 0
        %8023 = vmatpush1.bf16.msra.mxu0 %v8004
        %8024 = vmatprep.subr.bf16.mxu0 0
        %8025 = vmatpush1.bf16.msra.mxu0 %v8005
        %8026 = vmatprep.subr.bf16.mxu0 0
        %8027 = vmatpush1.bf16.msra.mxu0 %v8006
        %8028 = vmatprep.subr.bf16.mxu0 0
        %8029 = vmatpush1.bf16.msra.mxu0 %v8007
        %8030 = vmatprep.subr.bf16.mxu0 0
        %8031 = vmatpush1.bf16.msra.mxu0 %v8008
        %8032 = vmatprep.subr.bf16.mxu0 0
        %8033 = vmatpush1.bf16.msra.mxu0 %v8009
        %8034 = vmatprep.subr.bf16.mxu0 0
        %8035 = vmatpush1.bf16.msra.mxu0 0
        %8036 = vmatprep.subr.bf16.mxu0 0
        %8037 = vmatpush1.bf16.msra.mxu0 0
        %8038 = vmatprep.subr.bf16.mxu0 0
        %8039 = vmatpush1.bf16.msra.mxu0 0
        %8040 = vmatprep.subr.bf16.mxu0 0
        %8041 = vmatpush1.bf16.msra.mxu0 0
        %8042 = vmatprep.subr.bf16.mxu0 0
        %8043 = vmatpush1.bf16.msra.mxu0 0
        %8044 = vmatprep.subr.bf16.mxu0 0
        %8045 = vmatpush1.bf16.msra.mxu0 0
        %8046 = vmatprep.subr.bf16.mxu0 0
        %8047 = vmatpush1.bf16.msra.mxu0 0
        %8048 = vmatprep.subr.bf16.mxu0 0
        %8049 = vmatpush1.bf16.msra.mxu0 0
        %8050 = vmatprep.mubr.bf16.mxu0 0
        %8051 = vmatmul.mubr.bf16.gmra.mrb[0].mxu0 %v7946
        %v8052 = vpop.f32.mrb[0].mxu0
        %v8053 = vadd.f32 %v7968, %v8052
        %v8054 = vpop.f32.mrb[0].mxu0
        %v8055 = vpop.f32.mrb[0].mxu0
        %v8056 = vadd.f32 %v7968, %v8055
        %v8057 = vpop.f32.mrb[0].mxu0
        %8058 = vdwg.mxu0
        %v8059 = vxor.u32 %v8053, 2147483648
        %v8060 = vxor.u32 %v8056, 2147483648
        %v8061 = vmul.f32 %v8059, 1.442695
        %v8062 = vpow.pop %v8061
        %v8063 = vmul.f32 %v8060, 1.442695
        %v8064 = vpow.pop %v8063
        %v8065 = vadd.f32 %v8062, 1.0
        %v8066 = vadd.f32 %v8064, 1.0
        %v8067 = vrcp.pop %v8065
        %v8068 = vmul.f32 1.0, %v8067
        %v8069 = vrcp.pop %v8066
        %v8070 = vmul.f32 1.0, %v8069
        %v8071 = vmul.f32 %v8053, %v8068
        %v8072 = vmul.f32 %v8056, %v8070
        %8073 = vst [vmem:[%s1064] sm:$0xff] %v8071
        %8074 = vst [vmem:[%s1064 + $0x8] sm:$0xff] %v8072
        %s8075 = sand.u32 %s833, 1
        %s8076 = scalar_lea.sflag [#allocation4], %s8075
        %s8077 = sand.u32 %s833, 1
        %s8078 = smul.addr %s8077, 16
        %s8079 = scalar_lea.vmem [#allocation3], %s8078
        // Predicated region
        $region161: #{_lambda_.1} parent=159 // pred_check
          %p8080 = pneg %p843
        $region162: #{_lambda_.1} parent=159 // pred_check_branch
          %8082 = sbr.rel (%p8080) target = $region164
        $region163: #{_lambda_.1} parent=159 // pred_region
          %s8083 = smul.u32 2, %s85
          %s8085 = ssub.s32 256, 256
          %8086 = vsyncadd %s8076, %s8085
          %s8087 = smul.addr %s8083, 128
          %s8088 = scalar_lea.hbm %s71, %s8087
          %s8089 = sshll.u32 %s8079, 4
          %s8090 = int_to_ptr.vmem [resolvable:$true] %s8089
          %8095 = dma.vmem_to_hbm [thread:$0]  %s8090, 256, %s8088, %s8076, 128, 128, 8
        $region164: #{_lambda_.1} parent=159 // pred_fallthru
          _
      $region160: #{_lambda_.1} parent=5 // pred_fallthru
        _
      %p8096 = scmp.le.s32.totalorder 2, %s80
      // Predicated region
      $region165: #{_lambda_.1} parent=5 // pred_check
        %p8097 = pneg %p8096
      $region166: #{_lambda_.1} parent=5 // pred_check_branch
        %8099 = sbr.rel (%p8097) target = $region168
      $region167: #{_lambda_.1} parent=5 // pred_region
        %s8100 = ssub.s32 %s80, 2
        // Predicated region
        $region169: #{_lambda_.1} parent=167 // pred_check
          %p8101 = pneg %p849
        $region170: #{_lambda_.1} parent=167 // pred_check_branch
          %8103 = sbr.rel (%p8101) target = $region172
        $region171: #{_lambda_.1} parent=167 // pred_region
          %s8104 = sand.u32 %s834, 1
          %s8105 = scalar_lea.sflag [#allocation4], %s8104
          %s8106 = sand.u32 %s834, 1
          %s8107 = smul.addr %s8106, 16
          %s8108 = scalar_lea.vmem [#allocation3], %s8107
          %8109 = dma.done %s8105, 256
        $region172: #{_lambda_.1} parent=167 // pred_fallthru
          _
      $region168: #{_lambda_.1} parent=5 // pred_fallthru
        _
    $region6: #{_lambda_.1} parent=1 // loop_footer
      %s84 = sadd.s32 1, %s80
    $region7: #{_lambda_.1} parent=1 // loop_footer_branch
      %79 = sbr.rel target = $region3
    $region8: #{_lambda_.1} parent=1 // loop_exit
      _
    %8110 = vsyncpa [#allocation4], 1
    %s8111 = scalar_lea.sflag [#allocation4], 1
    %8112 = vsyncpa %s8111, 1

</llo_original>
